<compile_context>
chip_gen: v6e
topology: v6e:2x2x1
jax: 0.10.0
libtpu: 0.0.40
codegen_flags: <defaults>
</compile_context>

<pallas_src>
import jax
import jax.numpy as jnp
from jax.experimental import pallas as pl

NUM_BLOCKS = 18   # ResNet.make_layer builds 18 ResidualBlocks
C = 10            # channels
L = 18            # sequence length (= BatchNorm1d num_features)
EPS = 1e-5        # PyTorch BatchNorm default eps
INV_N = 1.0 / C   # BatchNorm "batch" dim is the 10 channels
HT_COLS = 32      # head/tail slab lanes: [c1w_aug | bn g | bn b | c2w^T | lw | tail bias]


def _bn_train(x, gamma, beta):
    # x: (L, C). Training-mode BatchNorm1d: stats over the C=10 lane entries
    # (the PyTorch "batch" dim), biased variance. Two independent single-pass
    # reductions, folded into a per-row (L, 1) scale/shift so the full-tile
    # VPU work is one multiply + one add; rsqrt goes to the EUP slot.
    s1 = jnp.sum(x, axis=1, keepdims=True)
    s2 = jnp.sum(x * x, axis=1, keepdims=True)
    mean = s1 * INV_N
    var = jnp.maximum(s2 * INV_N - mean * mean, 0.0)
    scale = gamma * jax.lax.rsqrt(var + EPS)   # (L, 1)
    shift = beta - mean * scale                # (L, 1)
    return x * scale + shift


def resnet_kernel(x_ref, cw_ref, bn_ref, ht_ref, o_ref):
    # Constants hoisted once (JAX does not CSE broadcast_in_dim).
    zero_row = jnp.zeros((1, C), jnp.float32)
    ones_col = jnp.ones((L, 1), jnp.float32)

    # Unpack the head/tail slab (one DMA); value slices are register relayouts,
    # done once outside the block loop.
    ht = ht_ref[...]                                   # (18, 32)
    c1w_aug = ht[0:C + 1, 0:C]                         # (11, 10) conv1 W^T + bias row
    bng = ht[:, C:C + 1]                               # (18, 1)  head BN gamma
    bnb = ht[:, C + 1:C + 2]                           # (18, 1)  head BN beta
    c2wt = ht[0:C, C + 2:C + 3]                        # (10, 1)  conv2 W^T
    lw = ht[0:C, C + 3:C + 3 + L]                      # (10, 18) linear W
    tail_b = ht[0:C, C + 3 + L:C + 4 + L]              # (10, 1)  folded conv2/linear bias

    def conv3(v, w_aug):
        # Fused Conv1d(k=3, padding=1) in (L, C) layout: a single
        # (18, 31) @ (31, 10) MXU matmul. Halo shifts are register-level
        # slice+concat with a zero row; the ones column folds the bias in.
        v_prev = jnp.concatenate([zero_row, v[:L - 1, :]], axis=0)   # x[l-1, :]
        v_next = jnp.concatenate([v[1:, :], zero_row], axis=0)       # x[l+1, :]
        vcat = jnp.concatenate([v_prev, v, v_next, ones_col], axis=1)
        return jnp.dot(vcat, w_aug, preferred_element_type=jnp.float32)

    # conv1: Conv1d(10, 10, k=1) with bias folded via ones column; BN; ReLU.
    x = x_ref[...]                                     # (L, C) = (18, 10)
    x_aug = jnp.concatenate([x, ones_col], axis=1)     # (18, 11)
    out = jnp.dot(x_aug, c1w_aug, preferred_element_type=jnp.float32)
    out = jnp.maximum(_bn_train(out, bng, bnb), 0.0)

    # layer1: 18 residual blocks (statically unrolled).
    for i in range(NUM_BLOCKS):
        residual = out
        h = conv3(out, cw_ref[2 * i])
        h = jnp.maximum(_bn_train(h, bn_ref[2 * i, 0], bn_ref[2 * i, 1]), 0.0)
        h = conv3(h, cw_ref[2 * i + 1])
        h = _bn_train(h, bn_ref[2 * i + 1, 0], bn_ref[2 * i + 1, 1])
        out = jnp.maximum(h + residual, 0.0)

    # conv2: Conv1d(10, 1, k=1) -> (18, 1); linear + transpose(0, 1) -> (10, 1).
    # Both biases are pre-folded into tail_b on the host.
    out2 = jnp.dot(out, c2wt, preferred_element_type=jnp.float32)          # (18, 1)
    o_ref[...] = jnp.dot(lw, out2, preferred_element_type=jnp.float32) + tail_b


def _full_spec(shape):
    zeros = (0,) * len(shape)
    return pl.BlockSpec(shape, lambda *args, z=zeros: z)


def init_params(key):
    ks = jax.random.split(key, 10)

    def u(k, shape, fan_in):
        bound = 1.0 / jnp.sqrt(jnp.float32(fan_in))
        return jax.random.uniform(k, shape, jnp.float32, -bound, bound)

    p = {}
    # Conv1d(10, 10, k=1): weight (10, 10, 1) stored squeezed (10, 10)
    p["c1w"] = u(ks[0], (C, C), C)
    p["c1b"] = u(ks[1], (C,), C)
    # BatchNorm1d(18) defaults (fresh module): gamma=1, beta=0
    p["bng"] = jnp.ones((L,), jnp.float32)
    p["bnb"] = jnp.zeros((L,), jnp.float32)
    # 18 residual blocks: 2x Conv1d(10, 10, k=3, pad=1) + 2x BatchNorm1d(18)
    p["rw1"] = u(ks[2], (NUM_BLOCKS, C, C, 3), 3 * C)
    p["rb1"] = u(ks[3], (NUM_BLOCKS, C), 3 * C)
    p["rg1"] = jnp.ones((NUM_BLOCKS, L), jnp.float32)
    p["rbe1"] = jnp.zeros((NUM_BLOCKS, L), jnp.float32)
    p["rw2"] = u(ks[4], (NUM_BLOCKS, C, C, 3), 3 * C)
    p["rb2"] = u(ks[5], (NUM_BLOCKS, C), 3 * C)
    p["rg2"] = jnp.ones((NUM_BLOCKS, L), jnp.float32)
    p["rbe2"] = jnp.zeros((NUM_BLOCKS, L), jnp.float32)
    # Conv1d(10, 1, k=1)
    p["c2w"] = u(ks[6], (1, C), C)
    p["c2b"] = u(ks[7], (1,), C)
    # Linear(18, 10)
    p["lw"] = u(ks[8], (C, L), L)
    p["lb"] = u(ks[9], (C,), L)
    return p


def pack_params(p):
    """One-time host-side packing into 3 slabs (hoisted out of the forward)."""
    # Residual conv-weight slab: (2*NB, 3C+1, C). Rows 0:10/10:20/20:30 are the
    # transposed taps w[:,:,k]^T; row 30 is the bias row (matches the ones col).
    def pack_conv(w, b):                                    # (NB,Cout,Cin,3), (NB,Cout)
        taps = [jnp.transpose(w[..., k], (0, 2, 1)) for k in range(3)]  # (NB,Cin,Cout)
        return jnp.concatenate(taps + [b[:, None, :]], axis=1)          # (NB, 31, 10)

    cw = jnp.stack([pack_conv(p["rw1"], p["rb1"]),
                    pack_conv(p["rw2"], p["rb2"])], axis=1)             # (NB, 2, 31, 10)
    cw = cw.reshape(2 * NUM_BLOCKS, 3 * C + 1, C)

    # Residual BN slab: (2*NB, 2, L, 1); [:, 0] = gamma, [:, 1] = beta columns.
    def pack_bn(g, b):                                                  # (NB, L) each
        return jnp.stack([g, b], axis=1)[..., None]                     # (NB, 2, L, 1)

    bn_slab = jnp.stack([pack_bn(p["rg1"], p["rbe1"]),
                         pack_bn(p["rg2"], p["rbe2"])], axis=1)         # (NB, 2, 2, L, 1)
    bn_slab = bn_slab.reshape(2 * NUM_BLOCKS, 2, L, 1)

    # Head/tail slab (L, 32).
    ht = jnp.zeros((L, HT_COLS), jnp.float32)
    c1w_aug = jnp.concatenate([p["c1w"].T, p["c1b"][None, :]], axis=0)  # (11, 10)
    ht = ht.at[0:C + 1, 0:C].set(c1w_aug)
    ht = ht.at[:, C].set(p["bng"])
    ht = ht.at[:, C + 1].set(p["bnb"])
    ht = ht.at[0:C, C + 2].set(p["c2w"][0])
    ht = ht.at[0:C, C + 3:C + 3 + L].set(p["lw"])
    # y = lw @ (out @ c2w^T) + (c2b * rowsum(lw) + lb): fold both tail biases.
    tail_b = p["c2b"][0] * jnp.sum(p["lw"], axis=1) + p["lb"]           # (10,)
    ht = ht.at[0:C, C + 3 + L].set(tail_b)
    return cw, bn_slab, ht


@jax.jit
def resnet_forward(x, packed):
    cw, bn_slab, ht = packed
    return pl.pallas_call(
        resnet_kernel,
        out_shape=jax.ShapeDtypeStruct((C, 1), jnp.float32),
        in_specs=[_full_spec((L, C)), _full_spec(cw.shape),
                  _full_spec(bn_slab.shape), _full_spec(ht.shape)],
        out_specs=_full_spec((C, 1)),
    )(x.T, cw, bn_slab, ht)


def reference_forward(x, p):
    # Pure-JAX reference mirroring the PyTorch forward (PyTorch (C, L) layout).
    def bn(x, g, b):
        m = jnp.mean(x, axis=0, keepdims=True)
        v = jnp.mean((x - m) ** 2, axis=0, keepdims=True)
        return (x - m) / jnp.sqrt(v + EPS) * g[None, :] + b[None, :]

    def conv3(x, w, b):
        xp = jnp.pad(x, ((0, 0), (1, 1)))
        out = b[:, None]
        for k in range(3):
            out = out + w[:, :, k] @ xp[:, k:k + L]
        return out

    out = p["c1w"] @ x + p["c1b"][:, None]
    out = jnp.maximum(bn(out, p["bng"], p["bnb"]), 0.0)
    for i in range(NUM_BLOCKS):
        res = out
        h = conv3(out, p["rw1"][i], p["rb1"][i])
        h = jnp.maximum(bn(h, p["rg1"][i], p["rbe1"][i]), 0.0)
        h = conv3(h, p["rw2"][i], p["rb2"][i])
        h = bn(h, p["rg2"][i], p["rbe2"][i])
        out = jnp.maximum(h + res, 0.0)
    out2 = p["c2w"] @ out + p["c2b"][:, None]       # (1, 18)
    y = out2 @ p["lw"].T + p["lb"][None, :]         # (1, 10)
    return y.T                                      # (10, 1)


if __name__ == "__main__":
    key = jax.random.PRNGKey(0)
    xkey, pkey = jax.random.split(key)
    # PyTorch unbatched Conv1d input: (channels=10, length=18); length must be 18
    # because BatchNorm1d(18) treats the (10, 18) activations as (batch, features).
    x = jax.random.normal(xkey, (C, L), jnp.float32)
    params = init_params(pkey)
    packed = pack_params(params)        # one-time host-side packing (cacheable)

    out = jax.block_until_ready(resnet_forward(x, packed))
    ref = reference_forward(x, params)

    assert out.shape == (C, 1), out.shape
    assert jnp.allclose(out, ref, rtol=1e-4, atol=1e-4), (out, ref)
    print("KERNEL_OK")
</pallas_src>

<mosaic_0001>
module attributes {stable_mosaic.version = 11 : i64} {
  func.func @resnet_kernel(%arg0: memref<18x10xf32, #tpu.memory_space<vmem>>, %arg1: memref<36x31x10xf32, #tpu.memory_space<vmem>>, %arg2: memref<36x2x18x1xf32, #tpu.memory_space<vmem>>, %arg3: memref<18x32xf32, #tpu.memory_space<vmem>>, %arg4: memref<10x1xf32, #tpu.memory_space<vmem>>) attributes {dimension_semantics = [], scalar_prefetch = 0 : i64, scratch_operands = 0 : i64, tpu.core_type = #tpu.core_type<tc>} {
    %cst = arith.constant 0.000000e+00 : f32
    %0 = vector.broadcast %cst : f32 to vector<1x10xf32>
    %cst_0 = arith.constant 1.000000e+00 : f32
    %1 = vector.broadcast %cst_0 : f32 to vector<18x1xf32>
    %c0 = arith.constant 0 : index
    %c0_1 = arith.constant 0 : index
    %2 = vector.load %arg3[%c0, %c0_1] : memref<18x32xf32, #tpu.memory_space<vmem>>, vector<18x32xf32>
    %3 = vector.extract_strided_slice %2 {offsets = [0, 0], sizes = [11, 10], strides = [1, 1]} : vector<18x32xf32> to vector<11x10xf32>
    %4 = vector.extract_strided_slice %2 {offsets = [0, 10], sizes = [18, 1], strides = [1, 1]} : vector<18x32xf32> to vector<18x1xf32>
    %5 = vector.extract_strided_slice %2 {offsets = [0, 11], sizes = [18, 1], strides = [1, 1]} : vector<18x32xf32> to vector<18x1xf32>
    %6 = vector.extract_strided_slice %2 {offsets = [0, 12], sizes = [10, 1], strides = [1, 1]} : vector<18x32xf32> to vector<10x1xf32>
    %7 = vector.extract_strided_slice %2 {offsets = [0, 13], sizes = [10, 18], strides = [1, 1]} : vector<18x32xf32> to vector<10x18xf32>
    %8 = vector.extract_strided_slice %2 {offsets = [0, 31], sizes = [10, 1], strides = [1, 1]} : vector<18x32xf32> to vector<10x1xf32>
    %c0_2 = arith.constant 0 : index
    %c0_3 = arith.constant 0 : index
    %9 = vector.load %arg0[%c0_2, %c0_3] : memref<18x10xf32, #tpu.memory_space<vmem>>, vector<18x10xf32>
    %10 = tpu.concatenate %9, %1 in 1 : vector<18x10xf32>, vector<18x1xf32> -> vector<18x11xf32>
    %cst_4 = arith.constant dense<0.000000e+00> : vector<18x10xf32>
    %11 = tpu.matmul %10, %3, %cst_4 {dimension_numbers = #tpu.dot_dimension_numbers<[1], [0], [0], [1], [0, 0, 1, 1], [], []>} : vector<18x11xf32>, vector<11x10xf32>, vector<18x10xf32> -> vector<18x10xf32>
    %cst_5 = arith.constant dense<0.000000e+00> : vector<18xf32>
    %12 = vector.multi_reduction <add>, %11, %cst_5 [1] : vector<18x10xf32> to vector<18xf32>
    %13 = vector.shape_cast %12 : vector<18xf32> to vector<18x1xf32>
    %14 = arith.mulf %11, %11 : vector<18x10xf32>
    %cst_6 = arith.constant dense<0.000000e+00> : vector<18xf32>
    %15 = vector.multi_reduction <add>, %14, %cst_6 [1] : vector<18x10xf32> to vector<18xf32>
    %16 = vector.shape_cast %15 : vector<18xf32> to vector<18x1xf32>
    %cst_7 = arith.constant 1.000000e-01 : f32
    %17 = vector.broadcast %cst_7 : f32 to vector<18x1xf32>
    %18 = arith.mulf %13, %17 : vector<18x1xf32>
    %cst_8 = arith.constant 1.000000e-01 : f32
    %19 = vector.broadcast %cst_8 : f32 to vector<18x1xf32>
    %20 = arith.mulf %16, %19 : vector<18x1xf32>
    %21 = arith.mulf %18, %18 : vector<18x1xf32>
    %22 = arith.subf %20, %21 : vector<18x1xf32>
    %cst_9 = arith.constant 0.000000e+00 : f32
    %23 = vector.broadcast %cst_9 : f32 to vector<18x1xf32>
    %24 = arith.maximumf %22, %23 : vector<18x1xf32>
    %cst_10 = arith.constant 9.99999974E-6 : f32
    %25 = vector.broadcast %cst_10 : f32 to vector<18x1xf32>
    %26 = arith.addf %24, %25 : vector<18x1xf32>
    %27 = math.rsqrt %26 : vector<18x1xf32>
    %28 = arith.mulf %4, %27 : vector<18x1xf32>
    %29 = arith.mulf %18, %28 : vector<18x1xf32>
    %30 = arith.subf %5, %29 : vector<18x1xf32>
    %31 = vector.broadcast %28 : vector<18x1xf32> to vector<18x10xf32>
    %32 = arith.mulf %11, %31 : vector<18x10xf32>
    %33 = vector.broadcast %30 : vector<18x1xf32> to vector<18x10xf32>
    %34 = arith.addf %32, %33 : vector<18x10xf32>
    %cst_11 = arith.constant 0.000000e+00 : f32
    %35 = vector.broadcast %cst_11 : f32 to vector<18x10xf32>
    %36 = arith.maximumf %34, %35 : vector<18x10xf32>
    %c0_12 = arith.constant 0 : index
    %c0_13 = arith.constant 0 : index
    %c0_14 = arith.constant 0 : index
    %37 = vector.load %arg1[%c0_12, %c0_13, %c0_14] : memref<36x31x10xf32, #tpu.memory_space<vmem>>, vector<1x31x10xf32>
    %38 = vector.shape_cast %37 : vector<1x31x10xf32> to vector<31x10xf32>
    %39 = vector.extract_strided_slice %36 {offsets = [0, 0], sizes = [17, 10], strides = [1, 1]} : vector<18x10xf32> to vector<17x10xf32>
    %40 = tpu.concatenate %0, %39 in 0 : vector<1x10xf32>, vector<17x10xf32> -> vector<18x10xf32>
    %41 = vector.extract_strided_slice %36 {offsets = [1, 0], sizes = [17, 10], strides = [1, 1]} : vector<18x10xf32> to vector<17x10xf32>
    %42 = tpu.concatenate %41, %0 in 0 : vector<17x10xf32>, vector<1x10xf32> -> vector<18x10xf32>
    %43 = tpu.concatenate %40, %36, %42, %1 in 1 : vector<18x10xf32>, vector<18x10xf32>, vector<18x10xf32>, vector<18x1xf32> -> vector<18x31xf32>
    %cst_15 = arith.constant dense<0.000000e+00> : vector<18x10xf32>
    %44 = tpu.matmul %43, %38, %cst_15 {dimension_numbers = #tpu.dot_dimension_numbers<[1], [0], [0], [1], [0, 0, 1, 1], [], []>} : vector<18x31xf32>, vector<31x10xf32>, vector<18x10xf32> -> vector<18x10xf32>
    %c0_16 = arith.constant 0 : index
    %c0_17 = arith.constant 0 : index
    %c0_18 = arith.constant 0 : index
    %c0_19 = arith.constant 0 : index
    %45 = vector.load %arg2[%c0_16, %c0_17, %c0_18, %c0_19] : memref<36x2x18x1xf32, #tpu.memory_space<vmem>>, vector<1x1x18x1xf32>
    %46 = vector.shape_cast %45 : vector<1x1x18x1xf32> to vector<18x1xf32>
    %c0_20 = arith.constant 0 : index
    %c1 = arith.constant 1 : index
    %c0_21 = arith.constant 0 : index
    %c0_22 = arith.constant 0 : index
    %47 = vector.load %arg2[%c0_20, %c1, %c0_21, %c0_22] : memref<36x2x18x1xf32, #tpu.memory_space<vmem>>, vector<1x1x18x1xf32>
    %48 = vector.shape_cast %47 : vector<1x1x18x1xf32> to vector<18x1xf32>
    %cst_23 = arith.constant dense<0.000000e+00> : vector<18xf32>
    %49 = vector.multi_reduction <add>, %44, %cst_23 [1] : vector<18x10xf32> to vector<18xf32>
    %50 = vector.shape_cast %49 : vector<18xf32> to vector<18x1xf32>
    %51 = arith.mulf %44, %44 : vector<18x10xf32>
    %cst_24 = arith.constant dense<0.000000e+00> : vector<18xf32>
    %52 = vector.multi_reduction <add>, %51, %cst_24 [1] : vector<18x10xf32> to vector<18xf32>
    %53 = vector.shape_cast %52 : vector<18xf32> to vector<18x1xf32>
    %cst_25 = arith.constant 1.000000e-01 : f32
    %54 = vector.broadcast %cst_25 : f32 to vector<18x1xf32>
    %55 = arith.mulf %50, %54 : vector<18x1xf32>
    %cst_26 = arith.constant 1.000000e-01 : f32
    %56 = vector.broadcast %cst_26 : f32 to vector<18x1xf32>
    %57 = arith.mulf %53, %56 : vector<18x1xf32>
    %58 = arith.mulf %55, %55 : vector<18x1xf32>
    %59 = arith.subf %57, %58 : vector<18x1xf32>
    %cst_27 = arith.constant 0.000000e+00 : f32
    %60 = vector.broadcast %cst_27 : f32 to vector<18x1xf32>
    %61 = arith.maximumf %59, %60 : vector<18x1xf32>
    %cst_28 = arith.constant 9.99999974E-6 : f32
    %62 = vector.broadcast %cst_28 : f32 to vector<18x1xf32>
    %63 = arith.addf %61, %62 : vector<18x1xf32>
    %64 = math.rsqrt %63 : vector<18x1xf32>
    %65 = arith.mulf %46, %64 : vector<18x1xf32>
    %66 = arith.mulf %55, %65 : vector<18x1xf32>
    %67 = arith.subf %48, %66 : vector<18x1xf32>
    %68 = vector.broadcast %65 : vector<18x1xf32> to vector<18x10xf32>
    %69 = arith.mulf %44, %68 : vector<18x10xf32>
    %70 = vector.broadcast %67 : vector<18x1xf32> to vector<18x10xf32>
    %71 = arith.addf %69, %70 : vector<18x10xf32>
    %cst_29 = arith.constant 0.000000e+00 : f32
    %72 = vector.broadcast %cst_29 : f32 to vector<18x10xf32>
    %73 = arith.maximumf %71, %72 : vector<18x10xf32>
    %c1_30 = arith.constant 1 : index
    %c0_31 = arith.constant 0 : index
    %c0_32 = arith.constant 0 : index
    %74 = vector.load %arg1[%c1_30, %c0_31, %c0_32] : memref<36x31x10xf32, #tpu.memory_space<vmem>>, vector<1x31x10xf32>
    %75 = vector.shape_cast %74 : vector<1x31x10xf32> to vector<31x10xf32>
    %76 = vector.extract_strided_slice %73 {offsets = [0, 0], sizes = [17, 10], strides = [1, 1]} : vector<18x10xf32> to vector<17x10xf32>
    %77 = tpu.concatenate %0, %76 in 0 : vector<1x10xf32>, vector<17x10xf32> -> vector<18x10xf32>
    %78 = vector.extract_strided_slice %73 {offsets = [1, 0], sizes = [17, 10], strides = [1, 1]} : vector<18x10xf32> to vector<17x10xf32>
    %79 = tpu.concatenate %78, %0 in 0 : vector<17x10xf32>, vector<1x10xf32> -> vector<18x10xf32>
    %80 = tpu.concatenate %77, %73, %79, %1 in 1 : vector<18x10xf32>, vector<18x10xf32>, vector<18x10xf32>, vector<18x1xf32> -> vector<18x31xf32>
    %cst_33 = arith.constant dense<0.000000e+00> : vector<18x10xf32>
    %81 = tpu.matmul %80, %75, %cst_33 {dimension_numbers = #tpu.dot_dimension_numbers<[1], [0], [0], [1], [0, 0, 1, 1], [], []>} : vector<18x31xf32>, vector<31x10xf32>, vector<18x10xf32> -> vector<18x10xf32>
    %c1_34 = arith.constant 1 : index
    %c0_35 = arith.constant 0 : index
    %c0_36 = arith.constant 0 : index
    %c0_37 = arith.constant 0 : index
    %82 = vector.load %arg2[%c1_34, %c0_35, %c0_36, %c0_37] : memref<36x2x18x1xf32, #tpu.memory_space<vmem>>, vector<1x1x18x1xf32>
    %83 = vector.shape_cast %82 : vector<1x1x18x1xf32> to vector<18x1xf32>
    %c1_38 = arith.constant 1 : index
    %c1_39 = arith.constant 1 : index
    %c0_40 = arith.constant 0 : index
    %c0_41 = arith.constant 0 : index
    %84 = vector.load %arg2[%c1_38, %c1_39, %c0_40, %c0_41] : memref<36x2x18x1xf32, #tpu.memory_space<vmem>>, vector<1x1x18x1xf32>
    %85 = vector.shape_cast %84 : vector<1x1x18x1xf32> to vector<18x1xf32>
    %cst_42 = arith.constant dense<0.000000e+00> : vector<18xf32>
    %86 = vector.multi_reduction <add>, %81, %cst_42 [1] : vector<18x10xf32> to vector<18xf32>
    %87 = vector.shape_cast %86 : vector<18xf32> to vector<18x1xf32>
    %88 = arith.mulf %81, %81 : vector<18x10xf32>
    %cst_43 = arith.constant dense<0.000000e+00> : vector<18xf32>
    %89 = vector.multi_reduction <add>, %88, %cst_43 [1] : vector<18x10xf32> to vector<18xf32>
    %90 = vector.shape_cast %89 : vector<18xf32> to vector<18x1xf32>
    %cst_44 = arith.constant 1.000000e-01 : f32
    %91 = vector.broadcast %cst_44 : f32 to vector<18x1xf32>
    %92 = arith.mulf %87, %91 : vector<18x1xf32>
    %cst_45 = arith.constant 1.000000e-01 : f32
    %93 = vector.broadcast %cst_45 : f32 to vector<18x1xf32>
    %94 = arith.mulf %90, %93 : vector<18x1xf32>
    %95 = arith.mulf %92, %92 : vector<18x1xf32>
    %96 = arith.subf %94, %95 : vector<18x1xf32>
    %cst_46 = arith.constant 0.000000e+00 : f32
    %97 = vector.broadcast %cst_46 : f32 to vector<18x1xf32>
    %98 = arith.maximumf %96, %97 : vector<18x1xf32>
    %cst_47 = arith.constant 9.99999974E-6 : f32
    %99 = vector.broadcast %cst_47 : f32 to vector<18x1xf32>
    %100 = arith.addf %98, %99 : vector<18x1xf32>
    %101 = math.rsqrt %100 : vector<18x1xf32>
    %102 = arith.mulf %83, %101 : vector<18x1xf32>
    %103 = arith.mulf %92, %102 : vector<18x1xf32>
    %104 = arith.subf %85, %103 : vector<18x1xf32>
    %105 = vector.broadcast %102 : vector<18x1xf32> to vector<18x10xf32>
    %106 = arith.mulf %81, %105 : vector<18x10xf32>
    %107 = vector.broadcast %104 : vector<18x1xf32> to vector<18x10xf32>
    %108 = arith.addf %106, %107 : vector<18x10xf32>
    %109 = arith.addf %108, %36 : vector<18x10xf32>
    %cst_48 = arith.constant 0.000000e+00 : f32
    %110 = vector.broadcast %cst_48 : f32 to vector<18x10xf32>
    %111 = arith.maximumf %109, %110 : vector<18x10xf32>
    %c2 = arith.constant 2 : index
    %c0_49 = arith.constant 0 : index
    %c0_50 = arith.constant 0 : index
    %112 = vector.load %arg1[%c2, %c0_49, %c0_50] : memref<36x31x10xf32, #tpu.memory_space<vmem>>, vector<1x31x10xf32>
    %113 = vector.shape_cast %112 : vector<1x31x10xf32> to vector<31x10xf32>
    %114 = vector.extract_strided_slice %111 {offsets = [0, 0], sizes = [17, 10], strides = [1, 1]} : vector<18x10xf32> to vector<17x10xf32>
    %115 = tpu.concatenate %0, %114 in 0 : vector<1x10xf32>, vector<17x10xf32> -> vector<18x10xf32>
    %116 = vector.extract_strided_slice %111 {offsets = [1, 0], sizes = [17, 10], strides = [1, 1]} : vector<18x10xf32> to vector<17x10xf32>
    %117 = tpu.concatenate %116, %0 in 0 : vector<17x10xf32>, vector<1x10xf32> -> vector<18x10xf32>
    %118 = tpu.concatenate %115, %111, %117, %1 in 1 : vector<18x10xf32>, vector<18x10xf32>, vector<18x10xf32>, vector<18x1xf32> -> vector<18x31xf32>
    %cst_51 = arith.constant dense<0.000000e+00> : vector<18x10xf32>
    %119 = tpu.matmul %118, %113, %cst_51 {dimension_numbers = #tpu.dot_dimension_numbers<[1], [0], [0], [1], [0, 0, 1, 1], [], []>} : vector<18x31xf32>, vector<31x10xf32>, vector<18x10xf32> -> vector<18x10xf32>
    %c2_52 = arith.constant 2 : index
    %c0_53 = arith.constant 0 : index
    %c0_54 = arith.constant 0 : index
    %c0_55 = arith.constant 0 : index
    %120 = vector.load %arg2[%c2_52, %c0_53, %c0_54, %c0_55] : memref<36x2x18x1xf32, #tpu.memory_space<vmem>>, vector<1x1x18x1xf32>
    %121 = vector.shape_cast %120 : vector<1x1x18x1xf32> to vector<18x1xf32>
    %c2_56 = arith.constant 2 : index
    %c1_57 = arith.constant 1 : index
    %c0_58 = arith.constant 0 : index
    %c0_59 = arith.constant 0 : index
    %122 = vector.load %arg2[%c2_56, %c1_57, %c0_58, %c0_59] : memref<36x2x18x1xf32, #tpu.memory_space<vmem>>, vector<1x1x18x1xf32>
    %123 = vector.shape_cast %122 : vector<1x1x18x1xf32> to vector<18x1xf32>
    %cst_60 = arith.constant dense<0.000000e+00> : vector<18xf32>
    %124 = vector.multi_reduction <add>, %119, %cst_60 [1] : vector<18x10xf32> to vector<18xf32>
    %125 = vector.shape_cast %124 : vector<18xf32> to vector<18x1xf32>
    %126 = arith.mulf %119, %119 : vector<18x10xf32>
    %cst_61 = arith.constant dense<0.000000e+00> : vector<18xf32>
    %127 = vector.multi_reduction <add>, %126, %cst_61 [1] : vector<18x10xf32> to vector<18xf32>
    %128 = vector.shape_cast %127 : vector<18xf32> to vector<18x1xf32>
    %cst_62 = arith.constant 1.000000e-01 : f32
    %129 = vector.broadcast %cst_62 : f32 to vector<18x1xf32>
    %130 = arith.mulf %125, %129 : vector<18x1xf32>
    %cst_63 = arith.constant 1.000000e-01 : f32
    %131 = vector.broadcast %cst_63 : f32 to vector<18x1xf32>
    %132 = arith.mulf %128, %131 : vector<18x1xf32>
    %133 = arith.mulf %130, %130 : vector<18x1xf32>
    %134 = arith.subf %132, %133 : vector<18x1xf32>
    %cst_64 = arith.constant 0.000000e+00 : f32
    %135 = vector.broadcast %cst_64 : f32 to vector<18x1xf32>
    %136 = arith.maximumf %134, %135 : vector<18x1xf32>
    %cst_65 = arith.constant 9.99999974E-6 : f32
    %137 = vector.broadcast %cst_65 : f32 to vector<18x1xf32>
    %138 = arith.addf %136, %137 : vector<18x1xf32>
    %139 = math.rsqrt %138 : vector<18x1xf32>
    %140 = arith.mulf %121, %139 : vector<18x1xf32>
    %141 = arith.mulf %130, %140 : vector<18x1xf32>
    %142 = arith.subf %123, %141 : vector<18x1xf32>
    %143 = vector.broadcast %140 : vector<18x1xf32> to vector<18x10xf32>
    %144 = arith.mulf %119, %143 : vector<18x10xf32>
    %145 = vector.broadcast %142 : vector<18x1xf32> to vector<18x10xf32>
    %146 = arith.addf %144, %145 : vector<18x10xf32>
    %cst_66 = arith.constant 0.000000e+00 : f32
    %147 = vector.broadcast %cst_66 : f32 to vector<18x10xf32>
    %148 = arith.maximumf %146, %147 : vector<18x10xf32>
    %c3 = arith.constant 3 : index
    %c0_67 = arith.constant 0 : index
    %c0_68 = arith.constant 0 : index
    %149 = vector.load %arg1[%c3, %c0_67, %c0_68] : memref<36x31x10xf32, #tpu.memory_space<vmem>>, vector<1x31x10xf32>
    %150 = vector.shape_cast %149 : vector<1x31x10xf32> to vector<31x10xf32>
    %151 = vector.extract_strided_slice %148 {offsets = [0, 0], sizes = [17, 10], strides = [1, 1]} : vector<18x10xf32> to vector<17x10xf32>
    %152 = tpu.concatenate %0, %151 in 0 : vector<1x10xf32>, vector<17x10xf32> -> vector<18x10xf32>
    %153 = vector.extract_strided_slice %148 {offsets = [1, 0], sizes = [17, 10], strides = [1, 1]} : vector<18x10xf32> to vector<17x10xf32>
    %154 = tpu.concatenate %153, %0 in 0 : vector<17x10xf32>, vector<1x10xf32> -> vector<18x10xf32>
    %155 = tpu.concatenate %152, %148, %154, %1 in 1 : vector<18x10xf32>, vector<18x10xf32>, vector<18x10xf32>, vector<18x1xf32> -> vector<18x31xf32>
    %cst_69 = arith.constant dense<0.000000e+00> : vector<18x10xf32>
    %156 = tpu.matmul %155, %150, %cst_69 {dimension_numbers = #tpu.dot_dimension_numbers<[1], [0], [0], [1], [0, 0, 1, 1], [], []>} : vector<18x31xf32>, vector<31x10xf32>, vector<18x10xf32> -> vector<18x10xf32>
    %c3_70 = arith.constant 3 : index
    %c0_71 = arith.constant 0 : index
    %c0_72 = arith.constant 0 : index
    %c0_73 = arith.constant 0 : index
    %157 = vector.load %arg2[%c3_70, %c0_71, %c0_72, %c0_73] : memref<36x2x18x1xf32, #tpu.memory_space<vmem>>, vector<1x1x18x1xf32>
    %158 = vector.shape_cast %157 : vector<1x1x18x1xf32> to vector<18x1xf32>
    %c3_74 = arith.constant 3 : index
    %c1_75 = arith.constant 1 : index
    %c0_76 = arith.constant 0 : index
    %c0_77 = arith.constant 0 : index
    %159 = vector.load %arg2[%c3_74, %c1_75, %c0_76, %c0_77] : memref<36x2x18x1xf32, #tpu.memory_space<vmem>>, vector<1x1x18x1xf32>
    %160 = vector.shape_cast %159 : vector<1x1x18x1xf32> to vector<18x1xf32>
    %cst_78 = arith.constant dense<0.000000e+00> : vector<18xf32>
    %161 = vector.multi_reduction <add>, %156, %cst_78 [1] : vector<18x10xf32> to vector<18xf32>
    %162 = vector.shape_cast %161 : vector<18xf32> to vector<18x1xf32>
    %163 = arith.mulf %156, %156 : vector<18x10xf32>
    %cst_79 = arith.constant dense<0.000000e+00> : vector<18xf32>
    %164 = vector.multi_reduction <add>, %163, %cst_79 [1] : vector<18x10xf32> to vector<18xf32>
    %165 = vector.shape_cast %164 : vector<18xf32> to vector<18x1xf32>
    %cst_80 = arith.constant 1.000000e-01 : f32
    %166 = vector.broadcast %cst_80 : f32 to vector<18x1xf32>
    %167 = arith.mulf %162, %166 : vector<18x1xf32>
    %cst_81 = arith.constant 1.000000e-01 : f32
    %168 = vector.broadcast %cst_81 : f32 to vector<18x1xf32>
    %169 = arith.mulf %165, %168 : vector<18x1xf32>
    %170 = arith.mulf %167, %167 : vector<18x1xf32>
    %171 = arith.subf %169, %170 : vector<18x1xf32>
    %cst_82 = arith.constant 0.000000e+00 : f32
    %172 = vector.broadcast %cst_82 : f32 to vector<18x1xf32>
    %173 = arith.maximumf %171, %172 : vector<18x1xf32>
    %cst_83 = arith.constant 9.99999974E-6 : f32
    %174 = vector.broadcast %cst_83 : f32 to vector<18x1xf32>
    %175 = arith.addf %173, %174 : vector<18x1xf32>
    %176 = math.rsqrt %175 : vector<18x1xf32>
    %177 = arith.mulf %158, %176 : vector<18x1xf32>
    %178 = arith.mulf %167, %177 : vector<18x1xf32>
    %179 = arith.subf %160, %178 : vector<18x1xf32>
    %180 = vector.broadcast %177 : vector<18x1xf32> to vector<18x10xf32>
    %181 = arith.mulf %156, %180 : vector<18x10xf32>
    %182 = vector.broadcast %179 : vector<18x1xf32> to vector<18x10xf32>
    %183 = arith.addf %181, %182 : vector<18x10xf32>
    %184 = arith.addf %183, %111 : vector<18x10xf32>
    %cst_84 = arith.constant 0.000000e+00 : f32
    %185 = vector.broadcast %cst_84 : f32 to vector<18x10xf32>
    %186 = arith.maximumf %184, %185 : vector<18x10xf32>
    %c4 = arith.constant 4 : index
    %c0_85 = arith.constant 0 : index
    %c0_86 = arith.constant 0 : index
    %187 = vector.load %arg1[%c4, %c0_85, %c0_86] : memref<36x31x10xf32, #tpu.memory_space<vmem>>, vector<1x31x10xf32>
    %188 = vector.shape_cast %187 : vector<1x31x10xf32> to vector<31x10xf32>
    %189 = vector.extract_strided_slice %186 {offsets = [0, 0], sizes = [17, 10], strides = [1, 1]} : vector<18x10xf32> to vector<17x10xf32>
    %190 = tpu.concatenate %0, %189 in 0 : vector<1x10xf32>, vector<17x10xf32> -> vector<18x10xf32>
    %191 = vector.extract_strided_slice %186 {offsets = [1, 0], sizes = [17, 10], strides = [1, 1]} : vector<18x10xf32> to vector<17x10xf32>
    %192 = tpu.concatenate %191, %0 in 0 : vector<17x10xf32>, vector<1x10xf32> -> vector<18x10xf32>
    %193 = tpu.concatenate %190, %186, %192, %1 in 1 : vector<18x10xf32>, vector<18x10xf32>, vector<18x10xf32>, vector<18x1xf32> -> vector<18x31xf32>
    %cst_87 = arith.constant dense<0.000000e+00> : vector<18x10xf32>
    %194 = tpu.matmul %193, %188, %cst_87 {dimension_numbers = #tpu.dot_dimension_numbers<[1], [0], [0], [1], [0, 0, 1, 1], [], []>} : vector<18x31xf32>, vector<31x10xf32>, vector<18x10xf32> -> vector<18x10xf32>
    %c4_88 = arith.constant 4 : index
    %c0_89 = arith.constant 0 : index
    %c0_90 = arith.constant 0 : index
    %c0_91 = arith.constant 0 : index
    %195 = vector.load %arg2[%c4_88, %c0_89, %c0_90, %c0_91] : memref<36x2x18x1xf32, #tpu.memory_space<vmem>>, vector<1x1x18x1xf32>
    %196 = vector.shape_cast %195 : vector<1x1x18x1xf32> to vector<18x1xf32>
    %c4_92 = arith.constant 4 : index
    %c1_93 = arith.constant 1 : index
    %c0_94 = arith.constant 0 : index
    %c0_95 = arith.constant 0 : index
    %197 = vector.load %arg2[%c4_92, %c1_93, %c0_94, %c0_95] : memref<36x2x18x1xf32, #tpu.memory_space<vmem>>, vector<1x1x18x1xf32>
    %198 = vector.shape_cast %197 : vector<1x1x18x1xf32> to vector<18x1xf32>
    %cst_96 = arith.constant dense<0.000000e+00> : vector<18xf32>
    %199 = vector.multi_reduction <add>, %194, %cst_96 [1] : vector<18x10xf32> to vector<18xf32>
    %200 = vector.shape_cast %199 : vector<18xf32> to vector<18x1xf32>
    %201 = arith.mulf %194, %194 : vector<18x10xf32>
    %cst_97 = arith.constant dense<0.000000e+00> : vector<18xf32>
    %202 = vector.multi_reduction <add>, %201, %cst_97 [1] : vector<18x10xf32> to vector<18xf32>
    %203 = vector.shape_cast %202 : vector<18xf32> to vector<18x1xf32>
    %cst_98 = arith.constant 1.000000e-01 : f32
    %204 = vector.broadcast %cst_98 : f32 to vector<18x1xf32>
    %205 = arith.mulf %200, %204 : vector<18x1xf32>
    %cst_99 = arith.constant 1.000000e-01 : f32
    %206 = vector.broadcast %cst_99 : f32 to vector<18x1xf32>
    %207 = arith.mulf %203, %206 : vector<18x1xf32>
    %208 = arith.mulf %205, %205 : vector<18x1xf32>
    %209 = arith.subf %207, %208 : vector<18x1xf32>
    %cst_100 = arith.constant 0.000000e+00 : f32
    %210 = vector.broadcast %cst_100 : f32 to vector<18x1xf32>
    %211 = arith.maximumf %209, %210 : vector<18x1xf32>
    %cst_101 = arith.constant 9.99999974E-6 : f32
    %212 = vector.broadcast %cst_101 : f32 to vector<18x1xf32>
    %213 = arith.addf %211, %212 : vector<18x1xf32>
    %214 = math.rsqrt %213 : vector<18x1xf32>
    %215 = arith.mulf %196, %214 : vector<18x1xf32>
    %216 = arith.mulf %205, %215 : vector<18x1xf32>
    %217 = arith.subf %198, %216 : vector<18x1xf32>
    %218 = vector.broadcast %215 : vector<18x1xf32> to vector<18x10xf32>
    %219 = arith.mulf %194, %218 : vector<18x10xf32>
    %220 = vector.broadcast %217 : vector<18x1xf32> to vector<18x10xf32>
    %221 = arith.addf %219, %220 : vector<18x10xf32>
    %cst_102 = arith.constant 0.000000e+00 : f32
    %222 = vector.broadcast %cst_102 : f32 to vector<18x10xf32>
    %223 = arith.maximumf %221, %222 : vector<18x10xf32>
    %c5 = arith.constant 5 : index
    %c0_103 = arith.constant 0 : index
    %c0_104 = arith.constant 0 : index
    %224 = vector.load %arg1[%c5, %c0_103, %c0_104] : memref<36x31x10xf32, #tpu.memory_space<vmem>>, vector<1x31x10xf32>
    %225 = vector.shape_cast %224 : vector<1x31x10xf32> to vector<31x10xf32>
    %226 = vector.extract_strided_slice %223 {offsets = [0, 0], sizes = [17, 10], strides = [1, 1]} : vector<18x10xf32> to vector<17x10xf32>
    %227 = tpu.concatenate %0, %226 in 0 : vector<1x10xf32>, vector<17x10xf32> -> vector<18x10xf32>
    %228 = vector.extract_strided_slice %223 {offsets = [1, 0], sizes = [17, 10], strides = [1, 1]} : vector<18x10xf32> to vector<17x10xf32>
    %229 = tpu.concatenate %228, %0 in 0 : vector<17x10xf32>, vector<1x10xf32> -> vector<18x10xf32>
    %230 = tpu.concatenate %227, %223, %229, %1 in 1 : vector<18x10xf32>, vector<18x10xf32>, vector<18x10xf32>, vector<18x1xf32> -> vector<18x31xf32>
    %cst_105 = arith.constant dense<0.000000e+00> : vector<18x10xf32>
    %231 = tpu.matmul %230, %225, %cst_105 {dimension_numbers = #tpu.dot_dimension_numbers<[1], [0], [0], [1], [0, 0, 1, 1], [], []>} : vector<18x31xf32>, vector<31x10xf32>, vector<18x10xf32> -> vector<18x10xf32>
    %c5_106 = arith.constant 5 : index
    %c0_107 = arith.constant 0 : index
    %c0_108 = arith.constant 0 : index
    %c0_109 = arith.constant 0 : index
    %232 = vector.load %arg2[%c5_106, %c0_107, %c0_108, %c0_109] : memref<36x2x18x1xf32, #tpu.memory_space<vmem>>, vector<1x1x18x1xf32>
    %233 = vector.shape_cast %232 : vector<1x1x18x1xf32> to vector<18x1xf32>
    %c5_110 = arith.constant 5 : index
    %c1_111 = arith.constant 1 : index
    %c0_112 = arith.constant 0 : index
    %c0_113 = arith.constant 0 : index
    %234 = vector.load %arg2[%c5_110, %c1_111, %c0_112, %c0_113] : memref<36x2x18x1xf32, #tpu.memory_space<vmem>>, vector<1x1x18x1xf32>
    %235 = vector.shape_cast %234 : vector<1x1x18x1xf32> to vector<18x1xf32>
    %cst_114 = arith.constant dense<0.000000e+00> : vector<18xf32>
    %236 = vector.multi_reduction <add>, %231, %cst_114 [1] : vector<18x10xf32> to vector<18xf32>
    %237 = vector.shape_cast %236 : vector<18xf32> to vector<18x1xf32>
    %238 = arith.mulf %231, %231 : vector<18x10xf32>
    %cst_115 = arith.constant dense<0.000000e+00> : vector<18xf32>
    %239 = vector.multi_reduction <add>, %238, %cst_115 [1] : vector<18x10xf32> to vector<18xf32>
    %240 = vector.shape_cast %239 : vector<18xf32> to vector<18x1xf32>
    %cst_116 = arith.constant 1.000000e-01 : f32
    %241 = vector.broadcast %cst_116 : f32 to vector<18x1xf32>
    %242 = arith.mulf %237, %241 : vector<18x1xf32>
    %cst_117 = arith.constant 1.000000e-01 : f32
    %243 = vector.broadcast %cst_117 : f32 to vector<18x1xf32>
    %244 = arith.mulf %240, %243 : vector<18x1xf32>
    %245 = arith.mulf %242, %242 : vector<18x1xf32>
    %246 = arith.subf %244, %245 : vector<18x1xf32>
    %cst_118 = arith.constant 0.000000e+00 : f32
    %247 = vector.broadcast %cst_118 : f32 to vector<18x1xf32>
    %248 = arith.maximumf %246, %247 : vector<18x1xf32>
    %cst_119 = arith.constant 9.99999974E-6 : f32
    %249 = vector.broadcast %cst_119 : f32 to vector<18x1xf32>
    %250 = arith.addf %248, %249 : vector<18x1xf32>
    %251 = math.rsqrt %250 : vector<18x1xf32>
    %252 = arith.mulf %233, %251 : vector<18x1xf32>
    %253 = arith.mulf %242, %252 : vector<18x1xf32>
    %254 = arith.subf %235, %253 : vector<18x1xf32>
    %255 = vector.broadcast %252 : vector<18x1xf32> to vector<18x10xf32>
    %256 = arith.mulf %231, %255 : vector<18x10xf32>
    %257 = vector.broadcast %254 : vector<18x1xf32> to vector<18x10xf32>
    %258 = arith.addf %256, %257 : vector<18x10xf32>
    %259 = arith.addf %258, %186 : vector<18x10xf32>
    %cst_120 = arith.constant 0.000000e+00 : f32
    %260 = vector.broadcast %cst_120 : f32 to vector<18x10xf32>
    %261 = arith.maximumf %259, %260 : vector<18x10xf32>
    %c6 = arith.constant 6 : index
    %c0_121 = arith.constant 0 : index
    %c0_122 = arith.constant 0 : index
    %262 = vector.load %arg1[%c6, %c0_121, %c0_122] : memref<36x31x10xf32, #tpu.memory_space<vmem>>, vector<1x31x10xf32>
    %263 = vector.shape_cast %262 : vector<1x31x10xf32> to vector<31x10xf32>
    %264 = vector.extract_strided_slice %261 {offsets = [0, 0], sizes = [17, 10], strides = [1, 1]} : vector<18x10xf32> to vector<17x10xf32>
    %265 = tpu.concatenate %0, %264 in 0 : vector<1x10xf32>, vector<17x10xf32> -> vector<18x10xf32>
    %266 = vector.extract_strided_slice %261 {offsets = [1, 0], sizes = [17, 10], strides = [1, 1]} : vector<18x10xf32> to vector<17x10xf32>
    %267 = tpu.concatenate %266, %0 in 0 : vector<17x10xf32>, vector<1x10xf32> -> vector<18x10xf32>
    %268 = tpu.concatenate %265, %261, %267, %1 in 1 : vector<18x10xf32>, vector<18x10xf32>, vector<18x10xf32>, vector<18x1xf32> -> vector<18x31xf32>
    %cst_123 = arith.constant dense<0.000000e+00> : vector<18x10xf32>
    %269 = tpu.matmul %268, %263, %cst_123 {dimension_numbers = #tpu.dot_dimension_numbers<[1], [0], [0], [1], [0, 0, 1, 1], [], []>} : vector<18x31xf32>, vector<31x10xf32>, vector<18x10xf32> -> vector<18x10xf32>
    %c6_124 = arith.constant 6 : index
    %c0_125 = arith.constant 0 : index
    %c0_126 = arith.constant 0 : index
    %c0_127 = arith.constant 0 : index
    %270 = vector.load %arg2[%c6_124, %c0_125, %c0_126, %c0_127] : memref<36x2x18x1xf32, #tpu.memory_space<vmem>>, vector<1x1x18x1xf32>
    %271 = vector.shape_cast %270 : vector<1x1x18x1xf32> to vector<18x1xf32>
    %c6_128 = arith.constant 6 : index
    %c1_129 = arith.constant 1 : index
    %c0_130 = arith.constant 0 : index
    %c0_131 = arith.constant 0 : index
    %272 = vector.load %arg2[%c6_128, %c1_129, %c0_130, %c0_131] : memref<36x2x18x1xf32, #tpu.memory_space<vmem>>, vector<1x1x18x1xf32>
    %273 = vector.shape_cast %272 : vector<1x1x18x1xf32> to vector<18x1xf32>
    %cst_132 = arith.constant dense<0.000000e+00> : vector<18xf32>
    %274 = vector.multi_reduction <add>, %269, %cst_132 [1] : vector<18x10xf32> to vector<18xf32>
    %275 = vector.shape_cast %274 : vector<18xf32> to vector<18x1xf32>
    %276 = arith.mulf %269, %269 : vector<18x10xf32>
    %cst_133 = arith.constant dense<0.000000e+00> : vector<18xf32>
    %277 = vector.multi_reduction <add>, %276, %cst_133 [1] : vector<18x10xf32> to vector<18xf32>
    %278 = vector.shape_cast %277 : vector<18xf32> to vector<18x1xf32>
    %cst_134 = arith.constant 1.000000e-01 : f32
    %279 = vector.broadcast %cst_134 : f32 to vector<18x1xf32>
    %280 = arith.mulf %275, %279 : vector<18x1xf32>
    %cst_135 = arith.constant 1.000000e-01 : f32
    %281 = vector.broadcast %cst_135 : f32 to vector<18x1xf32>
    %282 = arith.mulf %278, %281 : vector<18x1xf32>
    %283 = arith.mulf %280, %280 : vector<18x1xf32>
    %284 = arith.subf %282, %283 : vector<18x1xf32>
    %cst_136 = arith.constant 0.000000e+00 : f32
    %285 = vector.broadcast %cst_136 : f32 to vector<18x1xf32>
    %286 = arith.maximumf %284, %285 : vector<18x1xf32>
    %cst_137 = arith.constant 9.99999974E-6 : f32
    %287 = vector.broadcast %cst_137 : f32 to vector<18x1xf32>
    %288 = arith.addf %286, %287 : vector<18x1xf32>
    %289 = math.rsqrt %288 : vector<18x1xf32>
    %290 = arith.mulf %271, %289 : vector<18x1xf32>
    %291 = arith.mulf %280, %290 : vector<18x1xf32>
    %292 = arith.subf %273, %291 : vector<18x1xf32>
    %293 = vector.broadcast %290 : vector<18x1xf32> to vector<18x10xf32>
    %294 = arith.mulf %269, %293 : vector<18x10xf32>
    %295 = vector.broadcast %292 : vector<18x1xf32> to vector<18x10xf32>
    %296 = arith.addf %294, %295 : vector<18x10xf32>
    %cst_138 = arith.constant 0.000000e+00 : f32
    %297 = vector.broadcast %cst_138 : f32 to vector<18x10xf32>
    %298 = arith.maximumf %296, %297 : vector<18x10xf32>
    %c7 = arith.constant 7 : index
    %c0_139 = arith.constant 0 : index
    %c0_140 = arith.constant 0 : index
    %299 = vector.load %arg1[%c7, %c0_139, %c0_140] : memref<36x31x10xf32, #tpu.memory_space<vmem>>, vector<1x31x10xf32>
    %300 = vector.shape_cast %299 : vector<1x31x10xf32> to vector<31x10xf32>
    %301 = vector.extract_strided_slice %298 {offsets = [0, 0], sizes = [17, 10], strides = [1, 1]} : vector<18x10xf32> to vector<17x10xf32>
    %302 = tpu.concatenate %0, %301 in 0 : vector<1x10xf32>, vector<17x10xf32> -> vector<18x10xf32>
    %303 = vector.extract_strided_slice %298 {offsets = [1, 0], sizes = [17, 10], strides = [1, 1]} : vector<18x10xf32> to vector<17x10xf32>
    %304 = tpu.concatenate %303, %0 in 0 : vector<17x10xf32>, vector<1x10xf32> -> vector<18x10xf32>
    %305 = tpu.concatenate %302, %298, %304, %1 in 1 : vector<18x10xf32>, vector<18x10xf32>, vector<18x10xf32>, vector<18x1xf32> -> vector<18x31xf32>
    %cst_141 = arith.constant dense<0.000000e+00> : vector<18x10xf32>
    %306 = tpu.matmul %305, %300, %cst_141 {dimension_numbers = #tpu.dot_dimension_numbers<[1], [0], [0], [1], [0, 0, 1, 1], [], []>} : vector<18x31xf32>, vector<31x10xf32>, vector<18x10xf32> -> vector<18x10xf32>
    %c7_142 = arith.constant 7 : index
    %c0_143 = arith.constant 0 : index
    %c0_144 = arith.constant 0 : index
    %c0_145 = arith.constant 0 : index
    %307 = vector.load %arg2[%c7_142, %c0_143, %c0_144, %c0_145] : memref<36x2x18x1xf32, #tpu.memory_space<vmem>>, vector<1x1x18x1xf32>
    %308 = vector.shape_cast %307 : vector<1x1x18x1xf32> to vector<18x1xf32>
    %c7_146 = arith.constant 7 : index
    %c1_147 = arith.constant 1 : index
    %c0_148 = arith.constant 0 : index
    %c0_149 = arith.constant 0 : index
    %309 = vector.load %arg2[%c7_146, %c1_147, %c0_148, %c0_149] : memref<36x2x18x1xf32, #tpu.memory_space<vmem>>, vector<1x1x18x1xf32>
    %310 = vector.shape_cast %309 : vector<1x1x18x1xf32> to vector<18x1xf32>
    %cst_150 = arith.constant dense<0.000000e+00> : vector<18xf32>
    %311 = vector.multi_reduction <add>, %306, %cst_150 [1] : vector<18x10xf32> to vector<18xf32>
    %312 = vector.shape_cast %311 : vector<18xf32> to vector<18x1xf32>
    %313 = arith.mulf %306, %306 : vector<18x10xf32>
    %cst_151 = arith.constant dense<0.000000e+00> : vector<18xf32>
    %314 = vector.multi_reduction <add>, %313, %cst_151 [1] : vector<18x10xf32> to vector<18xf32>
    %315 = vector.shape_cast %314 : vector<18xf32> to vector<18x1xf32>
    %cst_152 = arith.constant 1.000000e-01 : f32
    %316 = vector.broadcast %cst_152 : f32 to vector<18x1xf32>
    %317 = arith.mulf %312, %316 : vector<18x1xf32>
    %cst_153 = arith.constant 1.000000e-01 : f32
    %318 = vector.broadcast %cst_153 : f32 to vector<18x1xf32>
    %319 = arith.mulf %315, %318 : vector<18x1xf32>
    %320 = arith.mulf %317, %317 : vector<18x1xf32>
    %321 = arith.subf %319, %320 : vector<18x1xf32>
    %cst_154 = arith.constant 0.000000e+00 : f32
    %322 = vector.broadcast %cst_154 : f32 to vector<18x1xf32>
    %323 = arith.maximumf %321, %322 : vector<18x1xf32>
    %cst_155 = arith.constant 9.99999974E-6 : f32
    %324 = vector.broadcast %cst_155 : f32 to vector<18x1xf32>
    %325 = arith.addf %323, %324 : vector<18x1xf32>
    %326 = math.rsqrt %325 : vector<18x1xf32>
    %327 = arith.mulf %308, %326 : vector<18x1xf32>
    %328 = arith.mulf %317, %327 : vector<18x1xf32>
    %329 = arith.subf %310, %328 : vector<18x1xf32>
    %330 = vector.broadcast %327 : vector<18x1xf32> to vector<18x10xf32>
    %331 = arith.mulf %306, %330 : vector<18x10xf32>
    %332 = vector.broadcast %329 : vector<18x1xf32> to vector<18x10xf32>
    %333 = arith.addf %331, %332 : vector<18x10xf32>
    %334 = arith.addf %333, %261 : vector<18x10xf32>
    %cst_156 = arith.constant 0.000000e+00 : f32
    %335 = vector.broadcast %cst_156 : f32 to vector<18x10xf32>
    %336 = arith.maximumf %334, %335 : vector<18x10xf32>
    %c8 = arith.constant 8 : index
    %c0_157 = arith.constant 0 : index
    %c0_158 = arith.constant 0 : index
    %337 = vector.load %arg1[%c8, %c0_157, %c0_158] : memref<36x31x10xf32, #tpu.memory_space<vmem>>, vector<1x31x10xf32>
    %338 = vector.shape_cast %337 : vector<1x31x10xf32> to vector<31x10xf32>
    %339 = vector.extract_strided_slice %336 {offsets = [0, 0], sizes = [17, 10], strides = [1, 1]} : vector<18x10xf32> to vector<17x10xf32>
    %340 = tpu.concatenate %0, %339 in 0 : vector<1x10xf32>, vector<17x10xf32> -> vector<18x10xf32>
    %341 = vector.extract_strided_slice %336 {offsets = [1, 0], sizes = [17, 10], strides = [1, 1]} : vector<18x10xf32> to vector<17x10xf32>
    %342 = tpu.concatenate %341, %0 in 0 : vector<17x10xf32>, vector<1x10xf32> -> vector<18x10xf32>
    %343 = tpu.concatenate %340, %336, %342, %1 in 1 : vector<18x10xf32>, vector<18x10xf32>, vector<18x10xf32>, vector<18x1xf32> -> vector<18x31xf32>
    %cst_159 = arith.constant dense<0.000000e+00> : vector<18x10xf32>
    %344 = tpu.matmul %343, %338, %cst_159 {dimension_numbers = #tpu.dot_dimension_numbers<[1], [0], [0], [1], [0, 0, 1, 1], [], []>} : vector<18x31xf32>, vector<31x10xf32>, vector<18x10xf32> -> vector<18x10xf32>
    %c8_160 = arith.constant 8 : index
    %c0_161 = arith.constant 0 : index
    %c0_162 = arith.constant 0 : index
    %c0_163 = arith.constant 0 : index
    %345 = vector.load %arg2[%c8_160, %c0_161, %c0_162, %c0_163] : memref<36x2x18x1xf32, #tpu.memory_space<vmem>>, vector<1x1x18x1xf32>
    %346 = vector.shape_cast %345 : vector<1x1x18x1xf32> to vector<18x1xf32>
    %c8_164 = arith.constant 8 : index
    %c1_165 = arith.constant 1 : index
    %c0_166 = arith.constant 0 : index
    %c0_167 = arith.constant 0 : index
    %347 = vector.load %arg2[%c8_164, %c1_165, %c0_166, %c0_167] : memref<36x2x18x1xf32, #tpu.memory_space<vmem>>, vector<1x1x18x1xf32>
    %348 = vector.shape_cast %347 : vector<1x1x18x1xf32> to vector<18x1xf32>
    %cst_168 = arith.constant dense<0.000000e+00> : vector<18xf32>
    %349 = vector.multi_reduction <add>, %344, %cst_168 [1] : vector<18x10xf32> to vector<18xf32>
    %350 = vector.shape_cast %349 : vector<18xf32> to vector<18x1xf32>
    %351 = arith.mulf %344, %344 : vector<18x10xf32>
    %cst_169 = arith.constant dense<0.000000e+00> : vector<18xf32>
    %352 = vector.multi_reduction <add>, %351, %cst_169 [1] : vector<18x10xf32> to vector<18xf32>
    %353 = vector.shape_cast %352 : vector<18xf32> to vector<18x1xf32>
    %cst_170 = arith.constant 1.000000e-01 : f32
    %354 = vector.broadcast %cst_170 : f32 to vector<18x1xf32>
    %355 = arith.mulf %350, %354 : vector<18x1xf32>
    %cst_171 = arith.constant 1.000000e-01 : f32
    %356 = vector.broadcast %cst_171 : f32 to vector<18x1xf32>
    %357 = arith.mulf %353, %356 : vector<18x1xf32>
    %358 = arith.mulf %355, %355 : vector<18x1xf32>
    %359 = arith.subf %357, %358 : vector<18x1xf32>
    %cst_172 = arith.constant 0.000000e+00 : f32
    %360 = vector.broadcast %cst_172 : f32 to vector<18x1xf32>
    %361 = arith.maximumf %359, %360 : vector<18x1xf32>
    %cst_173 = arith.constant 9.99999974E-6 : f32
    %362 = vector.broadcast %cst_173 : f32 to vector<18x1xf32>
    %363 = arith.addf %361, %362 : vector<18x1xf32>
    %364 = math.rsqrt %363 : vector<18x1xf32>
    %365 = arith.mulf %346, %364 : vector<18x1xf32>
    %366 = arith.mulf %355, %365 : vector<18x1xf32>
    %367 = arith.subf %348, %366 : vector<18x1xf32>
    %368 = vector.broadcast %365 : vector<18x1xf32> to vector<18x10xf32>
    %369 = arith.mulf %344, %368 : vector<18x10xf32>
    %370 = vector.broadcast %367 : vector<18x1xf32> to vector<18x10xf32>
    %371 = arith.addf %369, %370 : vector<18x10xf32>
    %cst_174 = arith.constant 0.000000e+00 : f32
    %372 = vector.broadcast %cst_174 : f32 to vector<18x10xf32>
    %373 = arith.maximumf %371, %372 : vector<18x10xf32>
    %c9 = arith.constant 9 : index
    %c0_175 = arith.constant 0 : index
    %c0_176 = arith.constant 0 : index
    %374 = vector.load %arg1[%c9, %c0_175, %c0_176] : memref<36x31x10xf32, #tpu.memory_space<vmem>>, vector<1x31x10xf32>
    %375 = vector.shape_cast %374 : vector<1x31x10xf32> to vector<31x10xf32>
    %376 = vector.extract_strided_slice %373 {offsets = [0, 0], sizes = [17, 10], strides = [1, 1]} : vector<18x10xf32> to vector<17x10xf32>
    %377 = tpu.concatenate %0, %376 in 0 : vector<1x10xf32>, vector<17x10xf32> -> vector<18x10xf32>
    %378 = vector.extract_strided_slice %373 {offsets = [1, 0], sizes = [17, 10], strides = [1, 1]} : vector<18x10xf32> to vector<17x10xf32>
    %379 = tpu.concatenate %378, %0 in 0 : vector<17x10xf32>, vector<1x10xf32> -> vector<18x10xf32>
    %380 = tpu.concatenate %377, %373, %379, %1 in 1 : vector<18x10xf32>, vector<18x10xf32>, vector<18x10xf32>, vector<18x1xf32> -> vector<18x31xf32>
    %cst_177 = arith.constant dense<0.000000e+00> : vector<18x10xf32>
    %381 = tpu.matmul %380, %375, %cst_177 {dimension_numbers = #tpu.dot_dimension_numbers<[1], [0], [0], [1], [0, 0, 1, 1], [], []>} : vector<18x31xf32>, vector<31x10xf32>, vector<18x10xf32> -> vector<18x10xf32>
    %c9_178 = arith.constant 9 : index
    %c0_179 = arith.constant 0 : index
    %c0_180 = arith.constant 0 : index
    %c0_181 = arith.constant 0 : index
    %382 = vector.load %arg2[%c9_178, %c0_179, %c0_180, %c0_181] : memref<36x2x18x1xf32, #tpu.memory_space<vmem>>, vector<1x1x18x1xf32>
    %383 = vector.shape_cast %382 : vector<1x1x18x1xf32> to vector<18x1xf32>
    %c9_182 = arith.constant 9 : index
    %c1_183 = arith.constant 1 : index
    %c0_184 = arith.constant 0 : index
    %c0_185 = arith.constant 0 : index
    %384 = vector.load %arg2[%c9_182, %c1_183, %c0_184, %c0_185] : memref<36x2x18x1xf32, #tpu.memory_space<vmem>>, vector<1x1x18x1xf32>
    %385 = vector.shape_cast %384 : vector<1x1x18x1xf32> to vector<18x1xf32>
    %cst_186 = arith.constant dense<0.000000e+00> : vector<18xf32>
    %386 = vector.multi_reduction <add>, %381, %cst_186 [1] : vector<18x10xf32> to vector<18xf32>
    %387 = vector.shape_cast %386 : vector<18xf32> to vector<18x1xf32>
    %388 = arith.mulf %381, %381 : vector<18x10xf32>
    %cst_187 = arith.constant dense<0.000000e+00> : vector<18xf32>
    %389 = vector.multi_reduction <add>, %388, %cst_187 [1] : vector<18x10xf32> to vector<18xf32>
    %390 = vector.shape_cast %389 : vector<18xf32> to vector<18x1xf32>
    %cst_188 = arith.constant 1.000000e-01 : f32
    %391 = vector.broadcast %cst_188 : f32 to vector<18x1xf32>
    %392 = arith.mulf %387, %391 : vector<18x1xf32>
    %cst_189 = arith.constant 1.000000e-01 : f32
    %393 = vector.broadcast %cst_189 : f32 to vector<18x1xf32>
    %394 = arith.mulf %390, %393 : vector<18x1xf32>
    %395 = arith.mulf %392, %392 : vector<18x1xf32>
    %396 = arith.subf %394, %395 : vector<18x1xf32>
    %cst_190 = arith.constant 0.000000e+00 : f32
    %397 = vector.broadcast %cst_190 : f32 to vector<18x1xf32>
    %398 = arith.maximumf %396, %397 : vector<18x1xf32>
    %cst_191 = arith.constant 9.99999974E-6 : f32
    %399 = vector.broadcast %cst_191 : f32 to vector<18x1xf32>
    %400 = arith.addf %398, %399 : vector<18x1xf32>
    %401 = math.rsqrt %400 : vector<18x1xf32>
    %402 = arith.mulf %383, %401 : vector<18x1xf32>
    %403 = arith.mulf %392, %402 : vector<18x1xf32>
    %404 = arith.subf %385, %403 : vector<18x1xf32>
    %405 = vector.broadcast %402 : vector<18x1xf32> to vector<18x10xf32>
    %406 = arith.mulf %381, %405 : vector<18x10xf32>
    %407 = vector.broadcast %404 : vector<18x1xf32> to vector<18x10xf32>
    %408 = arith.addf %406, %407 : vector<18x10xf32>
    %409 = arith.addf %408, %336 : vector<18x10xf32>
    %cst_192 = arith.constant 0.000000e+00 : f32
    %410 = vector.broadcast %cst_192 : f32 to vector<18x10xf32>
    %411 = arith.maximumf %409, %410 : vector<18x10xf32>
    %c10 = arith.constant 10 : index
    %c0_193 = arith.constant 0 : index
    %c0_194 = arith.constant 0 : index
    %412 = vector.load %arg1[%c10, %c0_193, %c0_194] : memref<36x31x10xf32, #tpu.memory_space<vmem>>, vector<1x31x10xf32>
    %413 = vector.shape_cast %412 : vector<1x31x10xf32> to vector<31x10xf32>
    %414 = vector.extract_strided_slice %411 {offsets = [0, 0], sizes = [17, 10], strides = [1, 1]} : vector<18x10xf32> to vector<17x10xf32>
    %415 = tpu.concatenate %0, %414 in 0 : vector<1x10xf32>, vector<17x10xf32> -> vector<18x10xf32>
    %416 = vector.extract_strided_slice %411 {offsets = [1, 0], sizes = [17, 10], strides = [1, 1]} : vector<18x10xf32> to vector<17x10xf32>
    %417 = tpu.concatenate %416, %0 in 0 : vector<17x10xf32>, vector<1x10xf32> -> vector<18x10xf32>
    %418 = tpu.concatenate %415, %411, %417, %1 in 1 : vector<18x10xf32>, vector<18x10xf32>, vector<18x10xf32>, vector<18x1xf32> -> vector<18x31xf32>
    %cst_195 = arith.constant dense<0.000000e+00> : vector<18x10xf32>
    %419 = tpu.matmul %418, %413, %cst_195 {dimension_numbers = #tpu.dot_dimension_numbers<[1], [0], [0], [1], [0, 0, 1, 1], [], []>} : vector<18x31xf32>, vector<31x10xf32>, vector<18x10xf32> -> vector<18x10xf32>
    %c10_196 = arith.constant 10 : index
    %c0_197 = arith.constant 0 : index
    %c0_198 = arith.constant 0 : index
    %c0_199 = arith.constant 0 : index
    %420 = vector.load %arg2[%c10_196, %c0_197, %c0_198, %c0_199] : memref<36x2x18x1xf32, #tpu.memory_space<vmem>>, vector<1x1x18x1xf32>
    %421 = vector.shape_cast %420 : vector<1x1x18x1xf32> to vector<18x1xf32>
    %c10_200 = arith.constant 10 : index
    %c1_201 = arith.constant 1 : index
    %c0_202 = arith.constant 0 : index
    %c0_203 = arith.constant 0 : index
    %422 = vector.load %arg2[%c10_200, %c1_201, %c0_202, %c0_203] : memref<36x2x18x1xf32, #tpu.memory_space<vmem>>, vector<1x1x18x1xf32>
    %423 = vector.shape_cast %422 : vector<1x1x18x1xf32> to vector<18x1xf32>
    %cst_204 = arith.constant dense<0.000000e+00> : vector<18xf32>
    %424 = vector.multi_reduction <add>, %419, %cst_204 [1] : vector<18x10xf32> to vector<18xf32>
    %425 = vector.shape_cast %424 : vector<18xf32> to vector<18x1xf32>
    %426 = arith.mulf %419, %419 : vector<18x10xf32>
    %cst_205 = arith.constant dense<0.000000e+00> : vector<18xf32>
    %427 = vector.multi_reduction <add>, %426, %cst_205 [1] : vector<18x10xf32> to vector<18xf32>
    %428 = vector.shape_cast %427 : vector<18xf32> to vector<18x1xf32>
    %cst_206 = arith.constant 1.000000e-01 : f32
    %429 = vector.broadcast %cst_206 : f32 to vector<18x1xf32>
    %430 = arith.mulf %425, %429 : vector<18x1xf32>
    %cst_207 = arith.constant 1.000000e-01 : f32
    %431 = vector.broadcast %cst_207 : f32 to vector<18x1xf32>
    %432 = arith.mulf %428, %431 : vector<18x1xf32>
    %433 = arith.mulf %430, %430 : vector<18x1xf32>
    %434 = arith.subf %432, %433 : vector<18x1xf32>
    %cst_208 = arith.constant 0.000000e+00 : f32
    %435 = vector.broadcast %cst_208 : f32 to vector<18x1xf32>
    %436 = arith.maximumf %434, %435 : vector<18x1xf32>
    %cst_209 = arith.constant 9.99999974E-6 : f32
    %437 = vector.broadcast %cst_209 : f32 to vector<18x1xf32>
    %438 = arith.addf %436, %437 : vector<18x1xf32>
    %439 = math.rsqrt %438 : vector<18x1xf32>
    %440 = arith.mulf %421, %439 : vector<18x1xf32>
    %441 = arith.mulf %430, %440 : vector<18x1xf32>
    %442 = arith.subf %423, %441 : vector<18x1xf32>
    %443 = vector.broadcast %440 : vector<18x1xf32> to vector<18x10xf32>
    %444 = arith.mulf %419, %443 : vector<18x10xf32>
    %445 = vector.broadcast %442 : vector<18x1xf32> to vector<18x10xf32>
    %446 = arith.addf %444, %445 : vector<18x10xf32>
    %cst_210 = arith.constant 0.000000e+00 : f32
    %447 = vector.broadcast %cst_210 : f32 to vector<18x10xf32>
    %448 = arith.maximumf %446, %447 : vector<18x10xf32>
    %c11 = arith.constant 11 : index
    %c0_211 = arith.constant 0 : index
    %c0_212 = arith.constant 0 : index
    %449 = vector.load %arg1[%c11, %c0_211, %c0_212] : memref<36x31x10xf32, #tpu.memory_space<vmem>>, vector<1x31x10xf32>
    %450 = vector.shape_cast %449 : vector<1x31x10xf32> to vector<31x10xf32>
    %451 = vector.extract_strided_slice %448 {offsets = [0, 0], sizes = [17, 10], strides = [1, 1]} : vector<18x10xf32> to vector<17x10xf32>
    %452 = tpu.concatenate %0, %451 in 0 : vector<1x10xf32>, vector<17x10xf32> -> vector<18x10xf32>
    %453 = vector.extract_strided_slice %448 {offsets = [1, 0], sizes = [17, 10], strides = [1, 1]} : vector<18x10xf32> to vector<17x10xf32>
    %454 = tpu.concatenate %453, %0 in 0 : vector<17x10xf32>, vector<1x10xf32> -> vector<18x10xf32>
    %455 = tpu.concatenate %452, %448, %454, %1 in 1 : vector<18x10xf32>, vector<18x10xf32>, vector<18x10xf32>, vector<18x1xf32> -> vector<18x31xf32>
    %cst_213 = arith.constant dense<0.000000e+00> : vector<18x10xf32>
    %456 = tpu.matmul %455, %450, %cst_213 {dimension_numbers = #tpu.dot_dimension_numbers<[1], [0], [0], [1], [0, 0, 1, 1], [], []>} : vector<18x31xf32>, vector<31x10xf32>, vector<18x10xf32> -> vector<18x10xf32>
    %c11_214 = arith.constant 11 : index
    %c0_215 = arith.constant 0 : index
    %c0_216 = arith.constant 0 : index
    %c0_217 = arith.constant 0 : index
    %457 = vector.load %arg2[%c11_214, %c0_215, %c0_216, %c0_217] : memref<36x2x18x1xf32, #tpu.memory_space<vmem>>, vector<1x1x18x1xf32>
    %458 = vector.shape_cast %457 : vector<1x1x18x1xf32> to vector<18x1xf32>
    %c11_218 = arith.constant 11 : index
    %c1_219 = arith.constant 1 : index
    %c0_220 = arith.constant 0 : index
    %c0_221 = arith.constant 0 : index
    %459 = vector.load %arg2[%c11_218, %c1_219, %c0_220, %c0_221] : memref<36x2x18x1xf32, #tpu.memory_space<vmem>>, vector<1x1x18x1xf32>
    %460 = vector.shape_cast %459 : vector<1x1x18x1xf32> to vector<18x1xf32>
    %cst_222 = arith.constant dense<0.000000e+00> : vector<18xf32>
    %461 = vector.multi_reduction <add>, %456, %cst_222 [1] : vector<18x10xf32> to vector<18xf32>
    %462 = vector.shape_cast %461 : vector<18xf32> to vector<18x1xf32>
    %463 = arith.mulf %456, %456 : vector<18x10xf32>
    %cst_223 = arith.constant dense<0.000000e+00> : vector<18xf32>
    %464 = vector.multi_reduction <add>, %463, %cst_223 [1] : vector<18x10xf32> to vector<18xf32>
    %465 = vector.shape_cast %464 : vector<18xf32> to vector<18x1xf32>
    %cst_224 = arith.constant 1.000000e-01 : f32
    %466 = vector.broadcast %cst_224 : f32 to vector<18x1xf32>
    %467 = arith.mulf %462, %466 : vector<18x1xf32>
    %cst_225 = arith.constant 1.000000e-01 : f32
    %468 = vector.broadcast %cst_225 : f32 to vector<18x1xf32>
    %469 = arith.mulf %465, %468 : vector<18x1xf32>
    %470 = arith.mulf %467, %467 : vector<18x1xf32>
    %471 = arith.subf %469, %470 : vector<18x1xf32>
    %cst_226 = arith.constant 0.000000e+00 : f32
    %472 = vector.broadcast %cst_226 : f32 to vector<18x1xf32>
    %473 = arith.maximumf %471, %472 : vector<18x1xf32>
    %cst_227 = arith.constant 9.99999974E-6 : f32
    %474 = vector.broadcast %cst_227 : f32 to vector<18x1xf32>
    %475 = arith.addf %473, %474 : vector<18x1xf32>
    %476 = math.rsqrt %475 : vector<18x1xf32>
    %477 = arith.mulf %458, %476 : vector<18x1xf32>
    %478 = arith.mulf %467, %477 : vector<18x1xf32>
    %479 = arith.subf %460, %478 : vector<18x1xf32>
    %480 = vector.broadcast %477 : vector<18x1xf32> to vector<18x10xf32>
    %481 = arith.mulf %456, %480 : vector<18x10xf32>
    %482 = vector.broadcast %479 : vector<18x1xf32> to vector<18x10xf32>
    %483 = arith.addf %481, %482 : vector<18x10xf32>
    %484 = arith.addf %483, %411 : vector<18x10xf32>
    %cst_228 = arith.constant 0.000000e+00 : f32
    %485 = vector.broadcast %cst_228 : f32 to vector<18x10xf32>
    %486 = arith.maximumf %484, %485 : vector<18x10xf32>
    %c12 = arith.constant 12 : index
    %c0_229 = arith.constant 0 : index
    %c0_230 = arith.constant 0 : index
    %487 = vector.load %arg1[%c12, %c0_229, %c0_230] : memref<36x31x10xf32, #tpu.memory_space<vmem>>, vector<1x31x10xf32>
    %488 = vector.shape_cast %487 : vector<1x31x10xf32> to vector<31x10xf32>
    %489 = vector.extract_strided_slice %486 {offsets = [0, 0], sizes = [17, 10], strides = [1, 1]} : vector<18x10xf32> to vector<17x10xf32>
    %490 = tpu.concatenate %0, %489 in 0 : vector<1x10xf32>, vector<17x10xf32> -> vector<18x10xf32>
    %491 = vector.extract_strided_slice %486 {offsets = [1, 0], sizes = [17, 10], strides = [1, 1]} : vector<18x10xf32> to vector<17x10xf32>
    %492 = tpu.concatenate %491, %0 in 0 : vector<17x10xf32>, vector<1x10xf32> -> vector<18x10xf32>
    %493 = tpu.concatenate %490, %486, %492, %1 in 1 : vector<18x10xf32>, vector<18x10xf32>, vector<18x10xf32>, vector<18x1xf32> -> vector<18x31xf32>
    %cst_231 = arith.constant dense<0.000000e+00> : vector<18x10xf32>
    %494 = tpu.matmul %493, %488, %cst_231 {dimension_numbers = #tpu.dot_dimension_numbers<[1], [0], [0], [1], [0, 0, 1, 1], [], []>} : vector<18x31xf32>, vector<31x10xf32>, vector<18x10xf32> -> vector<18x10xf32>
    %c12_232 = arith.constant 12 : index
    %c0_233 = arith.constant 0 : index
    %c0_234 = arith.constant 0 : index
    %c0_235 = arith.constant 0 : index
    %495 = vector.load %arg2[%c12_232, %c0_233, %c0_234, %c0_235] : memref<36x2x18x1xf32, #tpu.memory_space<vmem>>, vector<1x1x18x1xf32>
    %496 = vector.shape_cast %495 : vector<1x1x18x1xf32> to vector<18x1xf32>
    %c12_236 = arith.constant 12 : index
    %c1_237 = arith.constant 1 : index
    %c0_238 = arith.constant 0 : index
    %c0_239 = arith.constant 0 : index
    %497 = vector.load %arg2[%c12_236, %c1_237, %c0_238, %c0_239] : memref<36x2x18x1xf32, #tpu.memory_space<vmem>>, vector<1x1x18x1xf32>
    %498 = vector.shape_cast %497 : vector<1x1x18x1xf32> to vector<18x1xf32>
    %cst_240 = arith.constant dense<0.000000e+00> : vector<18xf32>
    %499 = vector.multi_reduction <add>, %494, %cst_240 [1] : vector<18x10xf32> to vector<18xf32>
    %500 = vector.shape_cast %499 : vector<18xf32> to vector<18x1xf32>
    %501 = arith.mulf %494, %494 : vector<18x10xf32>
    %cst_241 = arith.constant dense<0.000000e+00> : vector<18xf32>
    %502 = vector.multi_reduction <add>, %501, %cst_241 [1] : vector<18x10xf32> to vector<18xf32>
    %503 = vector.shape_cast %502 : vector<18xf32> to vector<18x1xf32>
    %cst_242 = arith.constant 1.000000e-01 : f32
    %504 = vector.broadcast %cst_242 : f32 to vector<18x1xf32>
    %505 = arith.mulf %500, %504 : vector<18x1xf32>
    %cst_243 = arith.constant 1.000000e-01 : f32
    %506 = vector.broadcast %cst_243 : f32 to vector<18x1xf32>
    %507 = arith.mulf %503, %506 : vector<18x1xf32>
    %508 = arith.mulf %505, %505 : vector<18x1xf32>
    %509 = arith.subf %507, %508 : vector<18x1xf32>
    %cst_244 = arith.constant 0.000000e+00 : f32
    %510 = vector.broadcast %cst_244 : f32 to vector<18x1xf32>
    %511 = arith.maximumf %509, %510 : vector<18x1xf32>
    %cst_245 = arith.constant 9.99999974E-6 : f32
    %512 = vector.broadcast %cst_245 : f32 to vector<18x1xf32>
    %513 = arith.addf %511, %512 : vector<18x1xf32>
    %514 = math.rsqrt %513 : vector<18x1xf32>
    %515 = arith.mulf %496, %514 : vector<18x1xf32>
    %516 = arith.mulf %505, %515 : vector<18x1xf32>
    %517 = arith.subf %498, %516 : vector<18x1xf32>
    %518 = vector.broadcast %515 : vector<18x1xf32> to vector<18x10xf32>
    %519 = arith.mulf %494, %518 : vector<18x10xf32>
    %520 = vector.broadcast %517 : vector<18x1xf32> to vector<18x10xf32>
    %521 = arith.addf %519, %520 : vector<18x10xf32>
    %cst_246 = arith.constant 0.000000e+00 : f32
    %522 = vector.broadcast %cst_246 : f32 to vector<18x10xf32>
    %523 = arith.maximumf %521, %522 : vector<18x10xf32>
    %c13 = arith.constant 13 : index
    %c0_247 = arith.constant 0 : index
    %c0_248 = arith.constant 0 : index
    %524 = vector.load %arg1[%c13, %c0_247, %c0_248] : memref<36x31x10xf32, #tpu.memory_space<vmem>>, vector<1x31x10xf32>
    %525 = vector.shape_cast %524 : vector<1x31x10xf32> to vector<31x10xf32>
    %526 = vector.extract_strided_slice %523 {offsets = [0, 0], sizes = [17, 10], strides = [1, 1]} : vector<18x10xf32> to vector<17x10xf32>
    %527 = tpu.concatenate %0, %526 in 0 : vector<1x10xf32>, vector<17x10xf32> -> vector<18x10xf32>
    %528 = vector.extract_strided_slice %523 {offsets = [1, 0], sizes = [17, 10], strides = [1, 1]} : vector<18x10xf32> to vector<17x10xf32>
    %529 = tpu.concatenate %528, %0 in 0 : vector<17x10xf32>, vector<1x10xf32> -> vector<18x10xf32>
    %530 = tpu.concatenate %527, %523, %529, %1 in 1 : vector<18x10xf32>, vector<18x10xf32>, vector<18x10xf32>, vector<18x1xf32> -> vector<18x31xf32>
    %cst_249 = arith.constant dense<0.000000e+00> : vector<18x10xf32>
    %531 = tpu.matmul %530, %525, %cst_249 {dimension_numbers = #tpu.dot_dimension_numbers<[1], [0], [0], [1], [0, 0, 1, 1], [], []>} : vector<18x31xf32>, vector<31x10xf32>, vector<18x10xf32> -> vector<18x10xf32>
    %c13_250 = arith.constant 13 : index
    %c0_251 = arith.constant 0 : index
    %c0_252 = arith.constant 0 : index
    %c0_253 = arith.constant 0 : index
    %532 = vector.load %arg2[%c13_250, %c0_251, %c0_252, %c0_253] : memref<36x2x18x1xf32, #tpu.memory_space<vmem>>, vector<1x1x18x1xf32>
    %533 = vector.shape_cast %532 : vector<1x1x18x1xf32> to vector<18x1xf32>
    %c13_254 = arith.constant 13 : index
    %c1_255 = arith.constant 1 : index
    %c0_256 = arith.constant 0 : index
    %c0_257 = arith.constant 0 : index
    %534 = vector.load %arg2[%c13_254, %c1_255, %c0_256, %c0_257] : memref<36x2x18x1xf32, #tpu.memory_space<vmem>>, vector<1x1x18x1xf32>
    %535 = vector.shape_cast %534 : vector<1x1x18x1xf32> to vector<18x1xf32>
    %cst_258 = arith.constant dense<0.000000e+00> : vector<18xf32>
    %536 = vector.multi_reduction <add>, %531, %cst_258 [1] : vector<18x10xf32> to vector<18xf32>
    %537 = vector.shape_cast %536 : vector<18xf32> to vector<18x1xf32>
    %538 = arith.mulf %531, %531 : vector<18x10xf32>
    %cst_259 = arith.constant dense<0.000000e+00> : vector<18xf32>
    %539 = vector.multi_reduction <add>, %538, %cst_259 [1] : vector<18x10xf32> to vector<18xf32>
    %540 = vector.shape_cast %539 : vector<18xf32> to vector<18x1xf32>
    %cst_260 = arith.constant 1.000000e-01 : f32
    %541 = vector.broadcast %cst_260 : f32 to vector<18x1xf32>
    %542 = arith.mulf %537, %541 : vector<18x1xf32>
    %cst_261 = arith.constant 1.000000e-01 : f32
    %543 = vector.broadcast %cst_261 : f32 to vector<18x1xf32>
    %544 = arith.mulf %540, %543 : vector<18x1xf32>
    %545 = arith.mulf %542, %542 : vector<18x1xf32>
    %546 = arith.subf %544, %545 : vector<18x1xf32>
    %cst_262 = arith.constant 0.000000e+00 : f32
    %547 = vector.broadcast %cst_262 : f32 to vector<18x1xf32>
    %548 = arith.maximumf %546, %547 : vector<18x1xf32>
    %cst_263 = arith.constant 9.99999974E-6 : f32
    %549 = vector.broadcast %cst_263 : f32 to vector<18x1xf32>
    %550 = arith.addf %548, %549 : vector<18x1xf32>
    %551 = math.rsqrt %550 : vector<18x1xf32>
    %552 = arith.mulf %533, %551 : vector<18x1xf32>
    %553 = arith.mulf %542, %552 : vector<18x1xf32>
    %554 = arith.subf %535, %553 : vector<18x1xf32>
    %555 = vector.broadcast %552 : vector<18x1xf32> to vector<18x10xf32>
    %556 = arith.mulf %531, %555 : vector<18x10xf32>
    %557 = vector.broadcast %554 : vector<18x1xf32> to vector<18x10xf32>
    %558 = arith.addf %556, %557 : vector<18x10xf32>
    %559 = arith.addf %558, %486 : vector<18x10xf32>
    %cst_264 = arith.constant 0.000000e+00 : f32
    %560 = vector.broadcast %cst_264 : f32 to vector<18x10xf32>
    %561 = arith.maximumf %559, %560 : vector<18x10xf32>
    %c14 = arith.constant 14 : index
    %c0_265 = arith.constant 0 : index
    %c0_266 = arith.constant 0 : index
    %562 = vector.load %arg1[%c14, %c0_265, %c0_266] : memref<36x31x10xf32, #tpu.memory_space<vmem>>, vector<1x31x10xf32>
    %563 = vector.shape_cast %562 : vector<1x31x10xf32> to vector<31x10xf32>
    %564 = vector.extract_strided_slice %561 {offsets = [0, 0], sizes = [17, 10], strides = [1, 1]} : vector<18x10xf32> to vector<17x10xf32>
    %565 = tpu.concatenate %0, %564 in 0 : vector<1x10xf32>, vector<17x10xf32> -> vector<18x10xf32>
    %566 = vector.extract_strided_slice %561 {offsets = [1, 0], sizes = [17, 10], strides = [1, 1]} : vector<18x10xf32> to vector<17x10xf32>
    %567 = tpu.concatenate %566, %0 in 0 : vector<17x10xf32>, vector<1x10xf32> -> vector<18x10xf32>
    %568 = tpu.concatenate %565, %561, %567, %1 in 1 : vector<18x10xf32>, vector<18x10xf32>, vector<18x10xf32>, vector<18x1xf32> -> vector<18x31xf32>
    %cst_267 = arith.constant dense<0.000000e+00> : vector<18x10xf32>
    %569 = tpu.matmul %568, %563, %cst_267 {dimension_numbers = #tpu.dot_dimension_numbers<[1], [0], [0], [1], [0, 0, 1, 1], [], []>} : vector<18x31xf32>, vector<31x10xf32>, vector<18x10xf32> -> vector<18x10xf32>
    %c14_268 = arith.constant 14 : index
    %c0_269 = arith.constant 0 : index
    %c0_270 = arith.constant 0 : index
    %c0_271 = arith.constant 0 : index
    %570 = vector.load %arg2[%c14_268, %c0_269, %c0_270, %c0_271] : memref<36x2x18x1xf32, #tpu.memory_space<vmem>>, vector<1x1x18x1xf32>
    %571 = vector.shape_cast %570 : vector<1x1x18x1xf32> to vector<18x1xf32>
    %c14_272 = arith.constant 14 : index
    %c1_273 = arith.constant 1 : index
    %c0_274 = arith.constant 0 : index
    %c0_275 = arith.constant 0 : index
    %572 = vector.load %arg2[%c14_272, %c1_273, %c0_274, %c0_275] : memref<36x2x18x1xf32, #tpu.memory_space<vmem>>, vector<1x1x18x1xf32>
    %573 = vector.shape_cast %572 : vector<1x1x18x1xf32> to vector<18x1xf32>
    %cst_276 = arith.constant dense<0.000000e+00> : vector<18xf32>
    %574 = vector.multi_reduction <add>, %569, %cst_276 [1] : vector<18x10xf32> to vector<18xf32>
    %575 = vector.shape_cast %574 : vector<18xf32> to vector<18x1xf32>
    %576 = arith.mulf %569, %569 : vector<18x10xf32>
    %cst_277 = arith.constant dense<0.000000e+00> : vector<18xf32>
    %577 = vector.multi_reduction <add>, %576, %cst_277 [1] : vector<18x10xf32> to vector<18xf32>
    %578 = vector.shape_cast %577 : vector<18xf32> to vector<18x1xf32>
    %cst_278 = arith.constant 1.000000e-01 : f32
    %579 = vector.broadcast %cst_278 : f32 to vector<18x1xf32>
    %580 = arith.mulf %575, %579 : vector<18x1xf32>
    %cst_279 = arith.constant 1.000000e-01 : f32
    %581 = vector.broadcast %cst_279 : f32 to vector<18x1xf32>
    %582 = arith.mulf %578, %581 : vector<18x1xf32>
    %583 = arith.mulf %580, %580 : vector<18x1xf32>
    %584 = arith.subf %582, %583 : vector<18x1xf32>
    %cst_280 = arith.constant 0.000000e+00 : f32
    %585 = vector.broadcast %cst_280 : f32 to vector<18x1xf32>
    %586 = arith.maximumf %584, %585 : vector<18x1xf32>
    %cst_281 = arith.constant 9.99999974E-6 : f32
    %587 = vector.broadcast %cst_281 : f32 to vector<18x1xf32>
    %588 = arith.addf %586, %587 : vector<18x1xf32>
    %589 = math.rsqrt %588 : vector<18x1xf32>
    %590 = arith.mulf %571, %589 : vector<18x1xf32>
    %591 = arith.mulf %580, %590 : vector<18x1xf32>
    %592 = arith.subf %573, %591 : vector<18x1xf32>
    %593 = vector.broadcast %590 : vector<18x1xf32> to vector<18x10xf32>
    %594 = arith.mulf %569, %593 : vector<18x10xf32>
    %595 = vector.broadcast %592 : vector<18x1xf32> to vector<18x10xf32>
    %596 = arith.addf %594, %595 : vector<18x10xf32>
    %cst_282 = arith.constant 0.000000e+00 : f32
    %597 = vector.broadcast %cst_282 : f32 to vector<18x10xf32>
    %598 = arith.maximumf %596, %597 : vector<18x10xf32>
    %c15 = arith.constant 15 : index
    %c0_283 = arith.constant 0 : index
    %c0_284 = arith.constant 0 : index
    %599 = vector.load %arg1[%c15, %c0_283, %c0_284] : memref<36x31x10xf32, #tpu.memory_space<vmem>>, vector<1x31x10xf32>
    %600 = vector.shape_cast %599 : vector<1x31x10xf32> to vector<31x10xf32>
    %601 = vector.extract_strided_slice %598 {offsets = [0, 0], sizes = [17, 10], strides = [1, 1]} : vector<18x10xf32> to vector<17x10xf32>
    %602 = tpu.concatenate %0, %601 in 0 : vector<1x10xf32>, vector<17x10xf32> -> vector<18x10xf32>
    %603 = vector.extract_strided_slice %598 {offsets = [1, 0], sizes = [17, 10], strides = [1, 1]} : vector<18x10xf32> to vector<17x10xf32>
    %604 = tpu.concatenate %603, %0 in 0 : vector<17x10xf32>, vector<1x10xf32> -> vector<18x10xf32>
    %605 = tpu.concatenate %602, %598, %604, %1 in 1 : vector<18x10xf32>, vector<18x10xf32>, vector<18x10xf32>, vector<18x1xf32> -> vector<18x31xf32>
    %cst_285 = arith.constant dense<0.000000e+00> : vector<18x10xf32>
    %606 = tpu.matmul %605, %600, %cst_285 {dimension_numbers = #tpu.dot_dimension_numbers<[1], [0], [0], [1], [0, 0, 1, 1], [], []>} : vector<18x31xf32>, vector<31x10xf32>, vector<18x10xf32> -> vector<18x10xf32>
    %c15_286 = arith.constant 15 : index
    %c0_287 = arith.constant 0 : index
    %c0_288 = arith.constant 0 : index
    %c0_289 = arith.constant 0 : index
    %607 = vector.load %arg2[%c15_286, %c0_287, %c0_288, %c0_289] : memref<36x2x18x1xf32, #tpu.memory_space<vmem>>, vector<1x1x18x1xf32>
    %608 = vector.shape_cast %607 : vector<1x1x18x1xf32> to vector<18x1xf32>
    %c15_290 = arith.constant 15 : index
    %c1_291 = arith.constant 1 : index
    %c0_292 = arith.constant 0 : index
    %c0_293 = arith.constant 0 : index
    %609 = vector.load %arg2[%c15_290, %c1_291, %c0_292, %c0_293] : memref<36x2x18x1xf32, #tpu.memory_space<vmem>>, vector<1x1x18x1xf32>
    %610 = vector.shape_cast %609 : vector<1x1x18x1xf32> to vector<18x1xf32>
    %cst_294 = arith.constant dense<0.000000e+00> : vector<18xf32>
    %611 = vector.multi_reduction <add>, %606, %cst_294 [1] : vector<18x10xf32> to vector<18xf32>
    %612 = vector.shape_cast %611 : vector<18xf32> to vector<18x1xf32>
    %613 = arith.mulf %606, %606 : vector<18x10xf32>
    %cst_295 = arith.constant dense<0.000000e+00> : vector<18xf32>
    %614 = vector.multi_reduction <add>, %613, %cst_295 [1] : vector<18x10xf32> to vector<18xf32>
    %615 = vector.shape_cast %614 : vector<18xf32> to vector<18x1xf32>
    %cst_296 = arith.constant 1.000000e-01 : f32
    %616 = vector.broadcast %cst_296 : f32 to vector<18x1xf32>
    %617 = arith.mulf %612, %616 : vector<18x1xf32>
    %cst_297 = arith.constant 1.000000e-01 : f32
    %618 = vector.broadcast %cst_297 : f32 to vector<18x1xf32>
    %619 = arith.mulf %615, %618 : vector<18x1xf32>
    %620 = arith.mulf %617, %617 : vector<18x1xf32>
    %621 = arith.subf %619, %620 : vector<18x1xf32>
    %cst_298 = arith.constant 0.000000e+00 : f32
    %622 = vector.broadcast %cst_298 : f32 to vector<18x1xf32>
    %623 = arith.maximumf %621, %622 : vector<18x1xf32>
    %cst_299 = arith.constant 9.99999974E-6 : f32
    %624 = vector.broadcast %cst_299 : f32 to vector<18x1xf32>
    %625 = arith.addf %623, %624 : vector<18x1xf32>
    %626 = math.rsqrt %625 : vector<18x1xf32>
    %627 = arith.mulf %608, %626 : vector<18x1xf32>
    %628 = arith.mulf %617, %627 : vector<18x1xf32>
    %629 = arith.subf %610, %628 : vector<18x1xf32>
    %630 = vector.broadcast %627 : vector<18x1xf32> to vector<18x10xf32>
    %631 = arith.mulf %606, %630 : vector<18x10xf32>
    %632 = vector.broadcast %629 : vector<18x1xf32> to vector<18x10xf32>
    %633 = arith.addf %631, %632 : vector<18x10xf32>
    %634 = arith.addf %633, %561 : vector<18x10xf32>
    %cst_300 = arith.constant 0.000000e+00 : f32
    %635 = vector.broadcast %cst_300 : f32 to vector<18x10xf32>
    %636 = arith.maximumf %634, %635 : vector<18x10xf32>
    %c16 = arith.constant 16 : index
    %c0_301 = arith.constant 0 : index
    %c0_302 = arith.constant 0 : index
    %637 = vector.load %arg1[%c16, %c0_301, %c0_302] : memref<36x31x10xf32, #tpu.memory_space<vmem>>, vector<1x31x10xf32>
    %638 = vector.shape_cast %637 : vector<1x31x10xf32> to vector<31x10xf32>
    %639 = vector.extract_strided_slice %636 {offsets = [0, 0], sizes = [17, 10], strides = [1, 1]} : vector<18x10xf32> to vector<17x10xf32>
    %640 = tpu.concatenate %0, %639 in 0 : vector<1x10xf32>, vector<17x10xf32> -> vector<18x10xf32>
    %641 = vector.extract_strided_slice %636 {offsets = [1, 0], sizes = [17, 10], strides = [1, 1]} : vector<18x10xf32> to vector<17x10xf32>
    %642 = tpu.concatenate %641, %0 in 0 : vector<17x10xf32>, vector<1x10xf32> -> vector<18x10xf32>
    %643 = tpu.concatenate %640, %636, %642, %1 in 1 : vector<18x10xf32>, vector<18x10xf32>, vector<18x10xf32>, vector<18x1xf32> -> vector<18x31xf32>
    %cst_303 = arith.constant dense<0.000000e+00> : vector<18x10xf32>
    %644 = tpu.matmul %643, %638, %cst_303 {dimension_numbers = #tpu.dot_dimension_numbers<[1], [0], [0], [1], [0, 0, 1, 1], [], []>} : vector<18x31xf32>, vector<31x10xf32>, vector<18x10xf32> -> vector<18x10xf32>
    %c16_304 = arith.constant 16 : index
    %c0_305 = arith.constant 0 : index
    %c0_306 = arith.constant 0 : index
    %c0_307 = arith.constant 0 : index
    %645 = vector.load %arg2[%c16_304, %c0_305, %c0_306, %c0_307] : memref<36x2x18x1xf32, #tpu.memory_space<vmem>>, vector<1x1x18x1xf32>
    %646 = vector.shape_cast %645 : vector<1x1x18x1xf32> to vector<18x1xf32>
    %c16_308 = arith.constant 16 : index
    %c1_309 = arith.constant 1 : index
    %c0_310 = arith.constant 0 : index
    %c0_311 = arith.constant 0 : index
    %647 = vector.load %arg2[%c16_308, %c1_309, %c0_310, %c0_311] : memref<36x2x18x1xf32, #tpu.memory_space<vmem>>, vector<1x1x18x1xf32>
    %648 = vector.shape_cast %647 : vector<1x1x18x1xf32> to vector<18x1xf32>
    %cst_312 = arith.constant dense<0.000000e+00> : vector<18xf32>
    %649 = vector.multi_reduction <add>, %644, %cst_312 [1] : vector<18x10xf32> to vector<18xf32>
    %650 = vector.shape_cast %649 : vector<18xf32> to vector<18x1xf32>
    %651 = arith.mulf %644, %644 : vector<18x10xf32>
    %cst_313 = arith.constant dense<0.000000e+00> : vector<18xf32>
    %652 = vector.multi_reduction <add>, %651, %cst_313 [1] : vector<18x10xf32> to vector<18xf32>
    %653 = vector.shape_cast %652 : vector<18xf32> to vector<18x1xf32>
    %cst_314 = arith.constant 1.000000e-01 : f32
    %654 = vector.broadcast %cst_314 : f32 to vector<18x1xf32>
    %655 = arith.mulf %650, %654 : vector<18x1xf32>
    %cst_315 = arith.constant 1.000000e-01 : f32
    %656 = vector.broadcast %cst_315 : f32 to vector<18x1xf32>
    %657 = arith.mulf %653, %656 : vector<18x1xf32>
    %658 = arith.mulf %655, %655 : vector<18x1xf32>
    %659 = arith.subf %657, %658 : vector<18x1xf32>
    %cst_316 = arith.constant 0.000000e+00 : f32
    %660 = vector.broadcast %cst_316 : f32 to vector<18x1xf32>
    %661 = arith.maximumf %659, %660 : vector<18x1xf32>
    %cst_317 = arith.constant 9.99999974E-6 : f32
    %662 = vector.broadcast %cst_317 : f32 to vector<18x1xf32>
    %663 = arith.addf %661, %662 : vector<18x1xf32>
    %664 = math.rsqrt %663 : vector<18x1xf32>
    %665 = arith.mulf %646, %664 : vector<18x1xf32>
    %666 = arith.mulf %655, %665 : vector<18x1xf32>
    %667 = arith.subf %648, %666 : vector<18x1xf32>
    %668 = vector.broadcast %665 : vector<18x1xf32> to vector<18x10xf32>
    %669 = arith.mulf %644, %668 : vector<18x10xf32>
    %670 = vector.broadcast %667 : vector<18x1xf32> to vector<18x10xf32>
    %671 = arith.addf %669, %670 : vector<18x10xf32>
    %cst_318 = arith.constant 0.000000e+00 : f32
    %672 = vector.broadcast %cst_318 : f32 to vector<18x10xf32>
    %673 = arith.maximumf %671, %672 : vector<18x10xf32>
    %c17 = arith.constant 17 : index
    %c0_319 = arith.constant 0 : index
    %c0_320 = arith.constant 0 : index
    %674 = vector.load %arg1[%c17, %c0_319, %c0_320] : memref<36x31x10xf32, #tpu.memory_space<vmem>>, vector<1x31x10xf32>
    %675 = vector.shape_cast %674 : vector<1x31x10xf32> to vector<31x10xf32>
    %676 = vector.extract_strided_slice %673 {offsets = [0, 0], sizes = [17, 10], strides = [1, 1]} : vector<18x10xf32> to vector<17x10xf32>
    %677 = tpu.concatenate %0, %676 in 0 : vector<1x10xf32>, vector<17x10xf32> -> vector<18x10xf32>
    %678 = vector.extract_strided_slice %673 {offsets = [1, 0], sizes = [17, 10], strides = [1, 1]} : vector<18x10xf32> to vector<17x10xf32>
    %679 = tpu.concatenate %678, %0 in 0 : vector<17x10xf32>, vector<1x10xf32> -> vector<18x10xf32>
    %680 = tpu.concatenate %677, %673, %679, %1 in 1 : vector<18x10xf32>, vector<18x10xf32>, vector<18x10xf32>, vector<18x1xf32> -> vector<18x31xf32>
    %cst_321 = arith.constant dense<0.000000e+00> : vector<18x10xf32>
    %681 = tpu.matmul %680, %675, %cst_321 {dimension_numbers = #tpu.dot_dimension_numbers<[1], [0], [0], [1], [0, 0, 1, 1], [], []>} : vector<18x31xf32>, vector<31x10xf32>, vector<18x10xf32> -> vector<18x10xf32>
    %c17_322 = arith.constant 17 : index
    %c0_323 = arith.constant 0 : index
    %c0_324 = arith.constant 0 : index
    %c0_325 = arith.constant 0 : index
    %682 = vector.load %arg2[%c17_322, %c0_323, %c0_324, %c0_325] : memref<36x2x18x1xf32, #tpu.memory_space<vmem>>, vector<1x1x18x1xf32>
    %683 = vector.shape_cast %682 : vector<1x1x18x1xf32> to vector<18x1xf32>
    %c17_326 = arith.constant 17 : index
    %c1_327 = arith.constant 1 : index
    %c0_328 = arith.constant 0 : index
    %c0_329 = arith.constant 0 : index
    %684 = vector.load %arg2[%c17_326, %c1_327, %c0_328, %c0_329] : memref<36x2x18x1xf32, #tpu.memory_space<vmem>>, vector<1x1x18x1xf32>
    %685 = vector.shape_cast %684 : vector<1x1x18x1xf32> to vector<18x1xf32>
    %cst_330 = arith.constant dense<0.000000e+00> : vector<18xf32>
    %686 = vector.multi_reduction <add>, %681, %cst_330 [1] : vector<18x10xf32> to vector<18xf32>
    %687 = vector.shape_cast %686 : vector<18xf32> to vector<18x1xf32>
    %688 = arith.mulf %681, %681 : vector<18x10xf32>
    %cst_331 = arith.constant dense<0.000000e+00> : vector<18xf32>
    %689 = vector.multi_reduction <add>, %688, %cst_331 [1] : vector<18x10xf32> to vector<18xf32>
    %690 = vector.shape_cast %689 : vector<18xf32> to vector<18x1xf32>
    %cst_332 = arith.constant 1.000000e-01 : f32
    %691 = vector.broadcast %cst_332 : f32 to vector<18x1xf32>
    %692 = arith.mulf %687, %691 : vector<18x1xf32>
    %cst_333 = arith.constant 1.000000e-01 : f32
    %693 = vector.broadcast %cst_333 : f32 to vector<18x1xf32>
    %694 = arith.mulf %690, %693 : vector<18x1xf32>
    %695 = arith.mulf %692, %692 : vector<18x1xf32>
    %696 = arith.subf %694, %695 : vector<18x1xf32>
    %cst_334 = arith.constant 0.000000e+00 : f32
    %697 = vector.broadcast %cst_334 : f32 to vector<18x1xf32>
    %698 = arith.maximumf %696, %697 : vector<18x1xf32>
    %cst_335 = arith.constant 9.99999974E-6 : f32
    %699 = vector.broadcast %cst_335 : f32 to vector<18x1xf32>
    %700 = arith.addf %698, %699 : vector<18x1xf32>
    %701 = math.rsqrt %700 : vector<18x1xf32>
    %702 = arith.mulf %683, %701 : vector<18x1xf32>
    %703 = arith.mulf %692, %702 : vector<18x1xf32>
    %704 = arith.subf %685, %703 : vector<18x1xf32>
    %705 = vector.broadcast %702 : vector<18x1xf32> to vector<18x10xf32>
    %706 = arith.mulf %681, %705 : vector<18x10xf32>
    %707 = vector.broadcast %704 : vector<18x1xf32> to vector<18x10xf32>
    %708 = arith.addf %706, %707 : vector<18x10xf32>
    %709 = arith.addf %708, %636 : vector<18x10xf32>
    %cst_336 = arith.constant 0.000000e+00 : f32
    %710 = vector.broadcast %cst_336 : f32 to vector<18x10xf32>
    %711 = arith.maximumf %709, %710 : vector<18x10xf32>
    %c18 = arith.constant 18 : index
    %c0_337 = arith.constant 0 : index
    %c0_338 = arith.constant 0 : index
    %712 = vector.load %arg1[%c18, %c0_337, %c0_338] : memref<36x31x10xf32, #tpu.memory_space<vmem>>, vector<1x31x10xf32>
    %713 = vector.shape_cast %712 : vector<1x31x10xf32> to vector<31x10xf32>
    %714 = vector.extract_strided_slice %711 {offsets = [0, 0], sizes = [17, 10], strides = [1, 1]} : vector<18x10xf32> to vector<17x10xf32>
    %715 = tpu.concatenate %0, %714 in 0 : vector<1x10xf32>, vector<17x10xf32> -> vector<18x10xf32>
    %716 = vector.extract_strided_slice %711 {offsets = [1, 0], sizes = [17, 10], strides = [1, 1]} : vector<18x10xf32> to vector<17x10xf32>
    %717 = tpu.concatenate %716, %0 in 0 : vector<17x10xf32>, vector<1x10xf32> -> vector<18x10xf32>
    %718 = tpu.concatenate %715, %711, %717, %1 in 1 : vector<18x10xf32>, vector<18x10xf32>, vector<18x10xf32>, vector<18x1xf32> -> vector<18x31xf32>
    %cst_339 = arith.constant dense<0.000000e+00> : vector<18x10xf32>
    %719 = tpu.matmul %718, %713, %cst_339 {dimension_numbers = #tpu.dot_dimension_numbers<[1], [0], [0], [1], [0, 0, 1, 1], [], []>} : vector<18x31xf32>, vector<31x10xf32>, vector<18x10xf32> -> vector<18x10xf32>
    %c18_340 = arith.constant 18 : index
    %c0_341 = arith.constant 0 : index
    %c0_342 = arith.constant 0 : index
    %c0_343 = arith.constant 0 : index
    %720 = vector.load %arg2[%c18_340, %c0_341, %c0_342, %c0_343] : memref<36x2x18x1xf32, #tpu.memory_space<vmem>>, vector<1x1x18x1xf32>
    %721 = vector.shape_cast %720 : vector<1x1x18x1xf32> to vector<18x1xf32>
    %c18_344 = arith.constant 18 : index
    %c1_345 = arith.constant 1 : index
    %c0_346 = arith.constant 0 : index
    %c0_347 = arith.constant 0 : index
    %722 = vector.load %arg2[%c18_344, %c1_345, %c0_346, %c0_347] : memref<36x2x18x1xf32, #tpu.memory_space<vmem>>, vector<1x1x18x1xf32>
    %723 = vector.shape_cast %722 : vector<1x1x18x1xf32> to vector<18x1xf32>
    %cst_348 = arith.constant dense<0.000000e+00> : vector<18xf32>
    %724 = vector.multi_reduction <add>, %719, %cst_348 [1] : vector<18x10xf32> to vector<18xf32>
    %725 = vector.shape_cast %724 : vector<18xf32> to vector<18x1xf32>
    %726 = arith.mulf %719, %719 : vector<18x10xf32>
    %cst_349 = arith.constant dense<0.000000e+00> : vector<18xf32>
    %727 = vector.multi_reduction <add>, %726, %cst_349 [1] : vector<18x10xf32> to vector<18xf32>
    %728 = vector.shape_cast %727 : vector<18xf32> to vector<18x1xf32>
    %cst_350 = arith.constant 1.000000e-01 : f32
    %729 = vector.broadcast %cst_350 : f32 to vector<18x1xf32>
    %730 = arith.mulf %725, %729 : vector<18x1xf32>
    %cst_351 = arith.constant 1.000000e-01 : f32
    %731 = vector.broadcast %cst_351 : f32 to vector<18x1xf32>
    %732 = arith.mulf %728, %731 : vector<18x1xf32>
    %733 = arith.mulf %730, %730 : vector<18x1xf32>
    %734 = arith.subf %732, %733 : vector<18x1xf32>
    %cst_352 = arith.constant 0.000000e+00 : f32
    %735 = vector.broadcast %cst_352 : f32 to vector<18x1xf32>
    %736 = arith.maximumf %734, %735 : vector<18x1xf32>
    %cst_353 = arith.constant 9.99999974E-6 : f32
    %737 = vector.broadcast %cst_353 : f32 to vector<18x1xf32>
    %738 = arith.addf %736, %737 : vector<18x1xf32>
    %739 = math.rsqrt %738 : vector<18x1xf32>
    %740 = arith.mulf %721, %739 : vector<18x1xf32>
    %741 = arith.mulf %730, %740 : vector<18x1xf32>
    %742 = arith.subf %723, %741 : vector<18x1xf32>
    %743 = vector.broadcast %740 : vector<18x1xf32> to vector<18x10xf32>
    %744 = arith.mulf %719, %743 : vector<18x10xf32>
    %745 = vector.broadcast %742 : vector<18x1xf32> to vector<18x10xf32>
    %746 = arith.addf %744, %745 : vector<18x10xf32>
    %cst_354 = arith.constant 0.000000e+00 : f32
    %747 = vector.broadcast %cst_354 : f32 to vector<18x10xf32>
    %748 = arith.maximumf %746, %747 : vector<18x10xf32>
    %c19 = arith.constant 19 : index
    %c0_355 = arith.constant 0 : index
    %c0_356 = arith.constant 0 : index
    %749 = vector.load %arg1[%c19, %c0_355, %c0_356] : memref<36x31x10xf32, #tpu.memory_space<vmem>>, vector<1x31x10xf32>
    %750 = vector.shape_cast %749 : vector<1x31x10xf32> to vector<31x10xf32>
    %751 = vector.extract_strided_slice %748 {offsets = [0, 0], sizes = [17, 10], strides = [1, 1]} : vector<18x10xf32> to vector<17x10xf32>
    %752 = tpu.concatenate %0, %751 in 0 : vector<1x10xf32>, vector<17x10xf32> -> vector<18x10xf32>
    %753 = vector.extract_strided_slice %748 {offsets = [1, 0], sizes = [17, 10], strides = [1, 1]} : vector<18x10xf32> to vector<17x10xf32>
    %754 = tpu.concatenate %753, %0 in 0 : vector<17x10xf32>, vector<1x10xf32> -> vector<18x10xf32>
    %755 = tpu.concatenate %752, %748, %754, %1 in 1 : vector<18x10xf32>, vector<18x10xf32>, vector<18x10xf32>, vector<18x1xf32> -> vector<18x31xf32>
    %cst_357 = arith.constant dense<0.000000e+00> : vector<18x10xf32>
    %756 = tpu.matmul %755, %750, %cst_357 {dimension_numbers = #tpu.dot_dimension_numbers<[1], [0], [0], [1], [0, 0, 1, 1], [], []>} : vector<18x31xf32>, vector<31x10xf32>, vector<18x10xf32> -> vector<18x10xf32>
    %c19_358 = arith.constant 19 : index
    %c0_359 = arith.constant 0 : index
    %c0_360 = arith.constant 0 : index
    %c0_361 = arith.constant 0 : index
    %757 = vector.load %arg2[%c19_358, %c0_359, %c0_360, %c0_361] : memref<36x2x18x1xf32, #tpu.memory_space<vmem>>, vector<1x1x18x1xf32>
    %758 = vector.shape_cast %757 : vector<1x1x18x1xf32> to vector<18x1xf32>
    %c19_362 = arith.constant 19 : index
    %c1_363 = arith.constant 1 : index
    %c0_364 = arith.constant 0 : index
    %c0_365 = arith.constant 0 : index
    %759 = vector.load %arg2[%c19_362, %c1_363, %c0_364, %c0_365] : memref<36x2x18x1xf32, #tpu.memory_space<vmem>>, vector<1x1x18x1xf32>
    %760 = vector.shape_cast %759 : vector<1x1x18x1xf32> to vector<18x1xf32>
    %cst_366 = arith.constant dense<0.000000e+00> : vector<18xf32>
    %761 = vector.multi_reduction <add>, %756, %cst_366 [1] : vector<18x10xf32> to vector<18xf32>
    %762 = vector.shape_cast %761 : vector<18xf32> to vector<18x1xf32>
    %763 = arith.mulf %756, %756 : vector<18x10xf32>
    %cst_367 = arith.constant dense<0.000000e+00> : vector<18xf32>
    %764 = vector.multi_reduction <add>, %763, %cst_367 [1] : vector<18x10xf32> to vector<18xf32>
    %765 = vector.shape_cast %764 : vector<18xf32> to vector<18x1xf32>
    %cst_368 = arith.constant 1.000000e-01 : f32
    %766 = vector.broadcast %cst_368 : f32 to vector<18x1xf32>
    %767 = arith.mulf %762, %766 : vector<18x1xf32>
    %cst_369 = arith.constant 1.000000e-01 : f32
    %768 = vector.broadcast %cst_369 : f32 to vector<18x1xf32>
    %769 = arith.mulf %765, %768 : vector<18x1xf32>
    %770 = arith.mulf %767, %767 : vector<18x1xf32>
    %771 = arith.subf %769, %770 : vector<18x1xf32>
    %cst_370 = arith.constant 0.000000e+00 : f32
    %772 = vector.broadcast %cst_370 : f32 to vector<18x1xf32>
    %773 = arith.maximumf %771, %772 : vector<18x1xf32>
    %cst_371 = arith.constant 9.99999974E-6 : f32
    %774 = vector.broadcast %cst_371 : f32 to vector<18x1xf32>
    %775 = arith.addf %773, %774 : vector<18x1xf32>
    %776 = math.rsqrt %775 : vector<18x1xf32>
    %777 = arith.mulf %758, %776 : vector<18x1xf32>
    %778 = arith.mulf %767, %777 : vector<18x1xf32>
    %779 = arith.subf %760, %778 : vector<18x1xf32>
    %780 = vector.broadcast %777 : vector<18x1xf32> to vector<18x10xf32>
    %781 = arith.mulf %756, %780 : vector<18x10xf32>
    %782 = vector.broadcast %779 : vector<18x1xf32> to vector<18x10xf32>
    %783 = arith.addf %781, %782 : vector<18x10xf32>
    %784 = arith.addf %783, %711 : vector<18x10xf32>
    %cst_372 = arith.constant 0.000000e+00 : f32
    %785 = vector.broadcast %cst_372 : f32 to vector<18x10xf32>
    %786 = arith.maximumf %784, %785 : vector<18x10xf32>
    %c20 = arith.constant 20 : index
    %c0_373 = arith.constant 0 : index
    %c0_374 = arith.constant 0 : index
    %787 = vector.load %arg1[%c20, %c0_373, %c0_374] : memref<36x31x10xf32, #tpu.memory_space<vmem>>, vector<1x31x10xf32>
    %788 = vector.shape_cast %787 : vector<1x31x10xf32> to vector<31x10xf32>
    %789 = vector.extract_strided_slice %786 {offsets = [0, 0], sizes = [17, 10], strides = [1, 1]} : vector<18x10xf32> to vector<17x10xf32>
    %790 = tpu.concatenate %0, %789 in 0 : vector<1x10xf32>, vector<17x10xf32> -> vector<18x10xf32>
    %791 = vector.extract_strided_slice %786 {offsets = [1, 0], sizes = [17, 10], strides = [1, 1]} : vector<18x10xf32> to vector<17x10xf32>
    %792 = tpu.concatenate %791, %0 in 0 : vector<17x10xf32>, vector<1x10xf32> -> vector<18x10xf32>
    %793 = tpu.concatenate %790, %786, %792, %1 in 1 : vector<18x10xf32>, vector<18x10xf32>, vector<18x10xf32>, vector<18x1xf32> -> vector<18x31xf32>
    %cst_375 = arith.constant dense<0.000000e+00> : vector<18x10xf32>
    %794 = tpu.matmul %793, %788, %cst_375 {dimension_numbers = #tpu.dot_dimension_numbers<[1], [0], [0], [1], [0, 0, 1, 1], [], []>} : vector<18x31xf32>, vector<31x10xf32>, vector<18x10xf32> -> vector<18x10xf32>
    %c20_376 = arith.constant 20 : index
    %c0_377 = arith.constant 0 : index
    %c0_378 = arith.constant 0 : index
    %c0_379 = arith.constant 0 : index
    %795 = vector.load %arg2[%c20_376, %c0_377, %c0_378, %c0_379] : memref<36x2x18x1xf32, #tpu.memory_space<vmem>>, vector<1x1x18x1xf32>
    %796 = vector.shape_cast %795 : vector<1x1x18x1xf32> to vector<18x1xf32>
    %c20_380 = arith.constant 20 : index
    %c1_381 = arith.constant 1 : index
    %c0_382 = arith.constant 0 : index
    %c0_383 = arith.constant 0 : index
    %797 = vector.load %arg2[%c20_380, %c1_381, %c0_382, %c0_383] : memref<36x2x18x1xf32, #tpu.memory_space<vmem>>, vector<1x1x18x1xf32>
    %798 = vector.shape_cast %797 : vector<1x1x18x1xf32> to vector<18x1xf32>
    %cst_384 = arith.constant dense<0.000000e+00> : vector<18xf32>
    %799 = vector.multi_reduction <add>, %794, %cst_384 [1] : vector<18x10xf32> to vector<18xf32>
    %800 = vector.shape_cast %799 : vector<18xf32> to vector<18x1xf32>
    %801 = arith.mulf %794, %794 : vector<18x10xf32>
    %cst_385 = arith.constant dense<0.000000e+00> : vector<18xf32>
    %802 = vector.multi_reduction <add>, %801, %cst_385 [1] : vector<18x10xf32> to vector<18xf32>
    %803 = vector.shape_cast %802 : vector<18xf32> to vector<18x1xf32>
    %cst_386 = arith.constant 1.000000e-01 : f32
    %804 = vector.broadcast %cst_386 : f32 to vector<18x1xf32>
    %805 = arith.mulf %800, %804 : vector<18x1xf32>
    %cst_387 = arith.constant 1.000000e-01 : f32
    %806 = vector.broadcast %cst_387 : f32 to vector<18x1xf32>
    %807 = arith.mulf %803, %806 : vector<18x1xf32>
    %808 = arith.mulf %805, %805 : vector<18x1xf32>
    %809 = arith.subf %807, %808 : vector<18x1xf32>
    %cst_388 = arith.constant 0.000000e+00 : f32
    %810 = vector.broadcast %cst_388 : f32 to vector<18x1xf32>
    %811 = arith.maximumf %809, %810 : vector<18x1xf32>
    %cst_389 = arith.constant 9.99999974E-6 : f32
    %812 = vector.broadcast %cst_389 : f32 to vector<18x1xf32>
    %813 = arith.addf %811, %812 : vector<18x1xf32>
    %814 = math.rsqrt %813 : vector<18x1xf32>
    %815 = arith.mulf %796, %814 : vector<18x1xf32>
    %816 = arith.mulf %805, %815 : vector<18x1xf32>
    %817 = arith.subf %798, %816 : vector<18x1xf32>
    %818 = vector.broadcast %815 : vector<18x1xf32> to vector<18x10xf32>
    %819 = arith.mulf %794, %818 : vector<18x10xf32>
    %820 = vector.broadcast %817 : vector<18x1xf32> to vector<18x10xf32>
    %821 = arith.addf %819, %820 : vector<18x10xf32>
    %cst_390 = arith.constant 0.000000e+00 : f32
    %822 = vector.broadcast %cst_390 : f32 to vector<18x10xf32>
    %823 = arith.maximumf %821, %822 : vector<18x10xf32>
    %c21 = arith.constant 21 : index
    %c0_391 = arith.constant 0 : index
    %c0_392 = arith.constant 0 : index
    %824 = vector.load %arg1[%c21, %c0_391, %c0_392] : memref<36x31x10xf32, #tpu.memory_space<vmem>>, vector<1x31x10xf32>
    %825 = vector.shape_cast %824 : vector<1x31x10xf32> to vector<31x10xf32>
    %826 = vector.extract_strided_slice %823 {offsets = [0, 0], sizes = [17, 10], strides = [1, 1]} : vector<18x10xf32> to vector<17x10xf32>
    %827 = tpu.concatenate %0, %826 in 0 : vector<1x10xf32>, vector<17x10xf32> -> vector<18x10xf32>
    %828 = vector.extract_strided_slice %823 {offsets = [1, 0], sizes = [17, 10], strides = [1, 1]} : vector<18x10xf32> to vector<17x10xf32>
    %829 = tpu.concatenate %828, %0 in 0 : vector<17x10xf32>, vector<1x10xf32> -> vector<18x10xf32>
    %830 = tpu.concatenate %827, %823, %829, %1 in 1 : vector<18x10xf32>, vector<18x10xf32>, vector<18x10xf32>, vector<18x1xf32> -> vector<18x31xf32>
    %cst_393 = arith.constant dense<0.000000e+00> : vector<18x10xf32>
    %831 = tpu.matmul %830, %825, %cst_393 {dimension_numbers = #tpu.dot_dimension_numbers<[1], [0], [0], [1], [0, 0, 1, 1], [], []>} : vector<18x31xf32>, vector<31x10xf32>, vector<18x10xf32> -> vector<18x10xf32>
    %c21_394 = arith.constant 21 : index
    %c0_395 = arith.constant 0 : index
    %c0_396 = arith.constant 0 : index
    %c0_397 = arith.constant 0 : index
    %832 = vector.load %arg2[%c21_394, %c0_395, %c0_396, %c0_397] : memref<36x2x18x1xf32, #tpu.memory_space<vmem>>, vector<1x1x18x1xf32>
    %833 = vector.shape_cast %832 : vector<1x1x18x1xf32> to vector<18x1xf32>
    %c21_398 = arith.constant 21 : index
    %c1_399 = arith.constant 1 : index
    %c0_400 = arith.constant 0 : index
    %c0_401 = arith.constant 0 : index
    %834 = vector.load %arg2[%c21_398, %c1_399, %c0_400, %c0_401] : memref<36x2x18x1xf32, #tpu.memory_space<vmem>>, vector<1x1x18x1xf32>
    %835 = vector.shape_cast %834 : vector<1x1x18x1xf32> to vector<18x1xf32>
    %cst_402 = arith.constant dense<0.000000e+00> : vector<18xf32>
    %836 = vector.multi_reduction <add>, %831, %cst_402 [1] : vector<18x10xf32> to vector<18xf32>
    %837 = vector.shape_cast %836 : vector<18xf32> to vector<18x1xf32>
    %838 = arith.mulf %831, %831 : vector<18x10xf32>
    %cst_403 = arith.constant dense<0.000000e+00> : vector<18xf32>
    %839 = vector.multi_reduction <add>, %838, %cst_403 [1] : vector<18x10xf32> to vector<18xf32>
    %840 = vector.shape_cast %839 : vector<18xf32> to vector<18x1xf32>
    %cst_404 = arith.constant 1.000000e-01 : f32
    %841 = vector.broadcast %cst_404 : f32 to vector<18x1xf32>
    %842 = arith.mulf %837, %841 : vector<18x1xf32>
    %cst_405 = arith.constant 1.000000e-01 : f32
    %843 = vector.broadcast %cst_405 : f32 to vector<18x1xf32>
    %844 = arith.mulf %840, %843 : vector<18x1xf32>
    %845 = arith.mulf %842, %842 : vector<18x1xf32>
    %846 = arith.subf %844, %845 : vector<18x1xf32>
    %cst_406 = arith.constant 0.000000e+00 : f32
    %847 = vector.broadcast %cst_406 : f32 to vector<18x1xf32>
    %848 = arith.maximumf %846, %847 : vector<18x1xf32>
    %cst_407 = arith.constant 9.99999974E-6 : f32
    %849 = vector.broadcast %cst_407 : f32 to vector<18x1xf32>
    %850 = arith.addf %848, %849 : vector<18x1xf32>
    %851 = math.rsqrt %850 : vector<18x1xf32>
    %852 = arith.mulf %833, %851 : vector<18x1xf32>
    %853 = arith.mulf %842, %852 : vector<18x1xf32>
    %854 = arith.subf %835, %853 : vector<18x1xf32>
    %855 = vector.broadcast %852 : vector<18x1xf32> to vector<18x10xf32>
    %856 = arith.mulf %831, %855 : vector<18x10xf32>
    %857 = vector.broadcast %854 : vector<18x1xf32> to vector<18x10xf32>
    %858 = arith.addf %856, %857 : vector<18x10xf32>
    %859 = arith.addf %858, %786 : vector<18x10xf32>
    %cst_408 = arith.constant 0.000000e+00 : f32
    %860 = vector.broadcast %cst_408 : f32 to vector<18x10xf32>
    %861 = arith.maximumf %859, %860 : vector<18x10xf32>
    %c22 = arith.constant 22 : index
    %c0_409 = arith.constant 0 : index
    %c0_410 = arith.constant 0 : index
    %862 = vector.load %arg1[%c22, %c0_409, %c0_410] : memref<36x31x10xf32, #tpu.memory_space<vmem>>, vector<1x31x10xf32>
    %863 = vector.shape_cast %862 : vector<1x31x10xf32> to vector<31x10xf32>
    %864 = vector.extract_strided_slice %861 {offsets = [0, 0], sizes = [17, 10], strides = [1, 1]} : vector<18x10xf32> to vector<17x10xf32>
    %865 = tpu.concatenate %0, %864 in 0 : vector<1x10xf32>, vector<17x10xf32> -> vector<18x10xf32>
    %866 = vector.extract_strided_slice %861 {offsets = [1, 0], sizes = [17, 10], strides = [1, 1]} : vector<18x10xf32> to vector<17x10xf32>
    %867 = tpu.concatenate %866, %0 in 0 : vector<17x10xf32>, vector<1x10xf32> -> vector<18x10xf32>
    %868 = tpu.concatenate %865, %861, %867, %1 in 1 : vector<18x10xf32>, vector<18x10xf32>, vector<18x10xf32>, vector<18x1xf32> -> vector<18x31xf32>
    %cst_411 = arith.constant dense<0.000000e+00> : vector<18x10xf32>
    %869 = tpu.matmul %868, %863, %cst_411 {dimension_numbers = #tpu.dot_dimension_numbers<[1], [0], [0], [1], [0, 0, 1, 1], [], []>} : vector<18x31xf32>, vector<31x10xf32>, vector<18x10xf32> -> vector<18x10xf32>
    %c22_412 = arith.constant 22 : index
    %c0_413 = arith.constant 0 : index
    %c0_414 = arith.constant 0 : index
    %c0_415 = arith.constant 0 : index
    %870 = vector.load %arg2[%c22_412, %c0_413, %c0_414, %c0_415] : memref<36x2x18x1xf32, #tpu.memory_space<vmem>>, vector<1x1x18x1xf32>
    %871 = vector.shape_cast %870 : vector<1x1x18x1xf32> to vector<18x1xf32>
    %c22_416 = arith.constant 22 : index
    %c1_417 = arith.constant 1 : index
    %c0_418 = arith.constant 0 : index
    %c0_419 = arith.constant 0 : index
    %872 = vector.load %arg2[%c22_416, %c1_417, %c0_418, %c0_419] : memref<36x2x18x1xf32, #tpu.memory_space<vmem>>, vector<1x1x18x1xf32>
    %873 = vector.shape_cast %872 : vector<1x1x18x1xf32> to vector<18x1xf32>
    %cst_420 = arith.constant dense<0.000000e+00> : vector<18xf32>
    %874 = vector.multi_reduction <add>, %869, %cst_420 [1] : vector<18x10xf32> to vector<18xf32>
    %875 = vector.shape_cast %874 : vector<18xf32> to vector<18x1xf32>
    %876 = arith.mulf %869, %869 : vector<18x10xf32>
    %cst_421 = arith.constant dense<0.000000e+00> : vector<18xf32>
    %877 = vector.multi_reduction <add>, %876, %cst_421 [1] : vector<18x10xf32> to vector<18xf32>
    %878 = vector.shape_cast %877 : vector<18xf32> to vector<18x1xf32>
    %cst_422 = arith.constant 1.000000e-01 : f32
    %879 = vector.broadcast %cst_422 : f32 to vector<18x1xf32>
    %880 = arith.mulf %875, %879 : vector<18x1xf32>
    %cst_423 = arith.constant 1.000000e-01 : f32
    %881 = vector.broadcast %cst_423 : f32 to vector<18x1xf32>
    %882 = arith.mulf %878, %881 : vector<18x1xf32>
    %883 = arith.mulf %880, %880 : vector<18x1xf32>
    %884 = arith.subf %882, %883 : vector<18x1xf32>
    %cst_424 = arith.constant 0.000000e+00 : f32
    %885 = vector.broadcast %cst_424 : f32 to vector<18x1xf32>
    %886 = arith.maximumf %884, %885 : vector<18x1xf32>
    %cst_425 = arith.constant 9.99999974E-6 : f32
    %887 = vector.broadcast %cst_425 : f32 to vector<18x1xf32>
    %888 = arith.addf %886, %887 : vector<18x1xf32>
    %889 = math.rsqrt %888 : vector<18x1xf32>
    %890 = arith.mulf %871, %889 : vector<18x1xf32>
    %891 = arith.mulf %880, %890 : vector<18x1xf32>
    %892 = arith.subf %873, %891 : vector<18x1xf32>
    %893 = vector.broadcast %890 : vector<18x1xf32> to vector<18x10xf32>
    %894 = arith.mulf %869, %893 : vector<18x10xf32>
    %895 = vector.broadcast %892 : vector<18x1xf32> to vector<18x10xf32>
    %896 = arith.addf %894, %895 : vector<18x10xf32>
    %cst_426 = arith.constant 0.000000e+00 : f32
    %897 = vector.broadcast %cst_426 : f32 to vector<18x10xf32>
    %898 = arith.maximumf %896, %897 : vector<18x10xf32>
    %c23 = arith.constant 23 : index
    %c0_427 = arith.constant 0 : index
    %c0_428 = arith.constant 0 : index
    %899 = vector.load %arg1[%c23, %c0_427, %c0_428] : memref<36x31x10xf32, #tpu.memory_space<vmem>>, vector<1x31x10xf32>
    %900 = vector.shape_cast %899 : vector<1x31x10xf32> to vector<31x10xf32>
    %901 = vector.extract_strided_slice %898 {offsets = [0, 0], sizes = [17, 10], strides = [1, 1]} : vector<18x10xf32> to vector<17x10xf32>
    %902 = tpu.concatenate %0, %901 in 0 : vector<1x10xf32>, vector<17x10xf32> -> vector<18x10xf32>
    %903 = vector.extract_strided_slice %898 {offsets = [1, 0], sizes = [17, 10], strides = [1, 1]} : vector<18x10xf32> to vector<17x10xf32>
    %904 = tpu.concatenate %903, %0 in 0 : vector<17x10xf32>, vector<1x10xf32> -> vector<18x10xf32>
    %905 = tpu.concatenate %902, %898, %904, %1 in 1 : vector<18x10xf32>, vector<18x10xf32>, vector<18x10xf32>, vector<18x1xf32> -> vector<18x31xf32>
    %cst_429 = arith.constant dense<0.000000e+00> : vector<18x10xf32>
    %906 = tpu.matmul %905, %900, %cst_429 {dimension_numbers = #tpu.dot_dimension_numbers<[1], [0], [0], [1], [0, 0, 1, 1], [], []>} : vector<18x31xf32>, vector<31x10xf32>, vector<18x10xf32> -> vector<18x10xf32>
    %c23_430 = arith.constant 23 : index
    %c0_431 = arith.constant 0 : index
    %c0_432 = arith.constant 0 : index
    %c0_433 = arith.constant 0 : index
    %907 = vector.load %arg2[%c23_430, %c0_431, %c0_432, %c0_433] : memref<36x2x18x1xf32, #tpu.memory_space<vmem>>, vector<1x1x18x1xf32>
    %908 = vector.shape_cast %907 : vector<1x1x18x1xf32> to vector<18x1xf32>
    %c23_434 = arith.constant 23 : index
    %c1_435 = arith.constant 1 : index
    %c0_436 = arith.constant 0 : index
    %c0_437 = arith.constant 0 : index
    %909 = vector.load %arg2[%c23_434, %c1_435, %c0_436, %c0_437] : memref<36x2x18x1xf32, #tpu.memory_space<vmem>>, vector<1x1x18x1xf32>
    %910 = vector.shape_cast %909 : vector<1x1x18x1xf32> to vector<18x1xf32>
    %cst_438 = arith.constant dense<0.000000e+00> : vector<18xf32>
    %911 = vector.multi_reduction <add>, %906, %cst_438 [1] : vector<18x10xf32> to vector<18xf32>
    %912 = vector.shape_cast %911 : vector<18xf32> to vector<18x1xf32>
    %913 = arith.mulf %906, %906 : vector<18x10xf32>
    %cst_439 = arith.constant dense<0.000000e+00> : vector<18xf32>
    %914 = vector.multi_reduction <add>, %913, %cst_439 [1] : vector<18x10xf32> to vector<18xf32>
    %915 = vector.shape_cast %914 : vector<18xf32> to vector<18x1xf32>
    %cst_440 = arith.constant 1.000000e-01 : f32
    %916 = vector.broadcast %cst_440 : f32 to vector<18x1xf32>
    %917 = arith.mulf %912, %916 : vector<18x1xf32>
    %cst_441 = arith.constant 1.000000e-01 : f32
    %918 = vector.broadcast %cst_441 : f32 to vector<18x1xf32>
    %919 = arith.mulf %915, %918 : vector<18x1xf32>
    %920 = arith.mulf %917, %917 : vector<18x1xf32>
    %921 = arith.subf %919, %920 : vector<18x1xf32>
    %cst_442 = arith.constant 0.000000e+00 : f32
    %922 = vector.broadcast %cst_442 : f32 to vector<18x1xf32>
    %923 = arith.maximumf %921, %922 : vector<18x1xf32>
    %cst_443 = arith.constant 9.99999974E-6 : f32
    %924 = vector.broadcast %cst_443 : f32 to vector<18x1xf32>
    %925 = arith.addf %923, %924 : vector<18x1xf32>
    %926 = math.rsqrt %925 : vector<18x1xf32>
    %927 = arith.mulf %908, %926 : vector<18x1xf32>
    %928 = arith.mulf %917, %927 : vector<18x1xf32>
    %929 = arith.subf %910, %928 : vector<18x1xf32>
    %930 = vector.broadcast %927 : vector<18x1xf32> to vector<18x10xf32>
    %931 = arith.mulf %906, %930 : vector<18x10xf32>
    %932 = vector.broadcast %929 : vector<18x1xf32> to vector<18x10xf32>
    %933 = arith.addf %931, %932 : vector<18x10xf32>
    %934 = arith.addf %933, %861 : vector<18x10xf32>
    %cst_444 = arith.constant 0.000000e+00 : f32
    %935 = vector.broadcast %cst_444 : f32 to vector<18x10xf32>
    %936 = arith.maximumf %934, %935 : vector<18x10xf32>
    %c24 = arith.constant 24 : index
    %c0_445 = arith.constant 0 : index
    %c0_446 = arith.constant 0 : index
    %937 = vector.load %arg1[%c24, %c0_445, %c0_446] : memref<36x31x10xf32, #tpu.memory_space<vmem>>, vector<1x31x10xf32>
    %938 = vector.shape_cast %937 : vector<1x31x10xf32> to vector<31x10xf32>
    %939 = vector.extract_strided_slice %936 {offsets = [0, 0], sizes = [17, 10], strides = [1, 1]} : vector<18x10xf32> to vector<17x10xf32>
    %940 = tpu.concatenate %0, %939 in 0 : vector<1x10xf32>, vector<17x10xf32> -> vector<18x10xf32>
    %941 = vector.extract_strided_slice %936 {offsets = [1, 0], sizes = [17, 10], strides = [1, 1]} : vector<18x10xf32> to vector<17x10xf32>
    %942 = tpu.concatenate %941, %0 in 0 : vector<17x10xf32>, vector<1x10xf32> -> vector<18x10xf32>
    %943 = tpu.concatenate %940, %936, %942, %1 in 1 : vector<18x10xf32>, vector<18x10xf32>, vector<18x10xf32>, vector<18x1xf32> -> vector<18x31xf32>
    %cst_447 = arith.constant dense<0.000000e+00> : vector<18x10xf32>
    %944 = tpu.matmul %943, %938, %cst_447 {dimension_numbers = #tpu.dot_dimension_numbers<[1], [0], [0], [1], [0, 0, 1, 1], [], []>} : vector<18x31xf32>, vector<31x10xf32>, vector<18x10xf32> -> vector<18x10xf32>
    %c24_448 = arith.constant 24 : index
    %c0_449 = arith.constant 0 : index
    %c0_450 = arith.constant 0 : index
    %c0_451 = arith.constant 0 : index
    %945 = vector.load %arg2[%c24_448, %c0_449, %c0_450, %c0_451] : memref<36x2x18x1xf32, #tpu.memory_space<vmem>>, vector<1x1x18x1xf32>
    %946 = vector.shape_cast %945 : vector<1x1x18x1xf32> to vector<18x1xf32>
    %c24_452 = arith.constant 24 : index
    %c1_453 = arith.constant 1 : index
    %c0_454 = arith.constant 0 : index
    %c0_455 = arith.constant 0 : index
    %947 = vector.load %arg2[%c24_452, %c1_453, %c0_454, %c0_455] : memref<36x2x18x1xf32, #tpu.memory_space<vmem>>, vector<1x1x18x1xf32>
    %948 = vector.shape_cast %947 : vector<1x1x18x1xf32> to vector<18x1xf32>
    %cst_456 = arith.constant dense<0.000000e+00> : vector<18xf32>
    %949 = vector.multi_reduction <add>, %944, %cst_456 [1] : vector<18x10xf32> to vector<18xf32>
    %950 = vector.shape_cast %949 : vector<18xf32> to vector<18x1xf32>
    %951 = arith.mulf %944, %944 : vector<18x10xf32>
    %cst_457 = arith.constant dense<0.000000e+00> : vector<18xf32>
    %952 = vector.multi_reduction <add>, %951, %cst_457 [1] : vector<18x10xf32> to vector<18xf32>
    %953 = vector.shape_cast %952 : vector<18xf32> to vector<18x1xf32>
    %cst_458 = arith.constant 1.000000e-01 : f32
    %954 = vector.broadcast %cst_458 : f32 to vector<18x1xf32>
    %955 = arith.mulf %950, %954 : vector<18x1xf32>
    %cst_459 = arith.constant 1.000000e-01 : f32
    %956 = vector.broadcast %cst_459 : f32 to vector<18x1xf32>
    %957 = arith.mulf %953, %956 : vector<18x1xf32>
    %958 = arith.mulf %955, %955 : vector<18x1xf32>
    %959 = arith.subf %957, %958 : vector<18x1xf32>
    %cst_460 = arith.constant 0.000000e+00 : f32
    %960 = vector.broadcast %cst_460 : f32 to vector<18x1xf32>
    %961 = arith.maximumf %959, %960 : vector<18x1xf32>
    %cst_461 = arith.constant 9.99999974E-6 : f32
    %962 = vector.broadcast %cst_461 : f32 to vector<18x1xf32>
    %963 = arith.addf %961, %962 : vector<18x1xf32>
    %964 = math.rsqrt %963 : vector<18x1xf32>
    %965 = arith.mulf %946, %964 : vector<18x1xf32>
    %966 = arith.mulf %955, %965 : vector<18x1xf32>
    %967 = arith.subf %948, %966 : vector<18x1xf32>
    %968 = vector.broadcast %965 : vector<18x1xf32> to vector<18x10xf32>
    %969 = arith.mulf %944, %968 : vector<18x10xf32>
    %970 = vector.broadcast %967 : vector<18x1xf32> to vector<18x10xf32>
    %971 = arith.addf %969, %970 : vector<18x10xf32>
    %cst_462 = arith.constant 0.000000e+00 : f32
    %972 = vector.broadcast %cst_462 : f32 to vector<18x10xf32>
    %973 = arith.maximumf %971, %972 : vector<18x10xf32>
    %c25 = arith.constant 25 : index
    %c0_463 = arith.constant 0 : index
    %c0_464 = arith.constant 0 : index
    %974 = vector.load %arg1[%c25, %c0_463, %c0_464] : memref<36x31x10xf32, #tpu.memory_space<vmem>>, vector<1x31x10xf32>
    %975 = vector.shape_cast %974 : vector<1x31x10xf32> to vector<31x10xf32>
    %976 = vector.extract_strided_slice %973 {offsets = [0, 0], sizes = [17, 10], strides = [1, 1]} : vector<18x10xf32> to vector<17x10xf32>
    %977 = tpu.concatenate %0, %976 in 0 : vector<1x10xf32>, vector<17x10xf32> -> vector<18x10xf32>
    %978 = vector.extract_strided_slice %973 {offsets = [1, 0], sizes = [17, 10], strides = [1, 1]} : vector<18x10xf32> to vector<17x10xf32>
    %979 = tpu.concatenate %978, %0 in 0 : vector<17x10xf32>, vector<1x10xf32> -> vector<18x10xf32>
    %980 = tpu.concatenate %977, %973, %979, %1 in 1 : vector<18x10xf32>, vector<18x10xf32>, vector<18x10xf32>, vector<18x1xf32> -> vector<18x31xf32>
    %cst_465 = arith.constant dense<0.000000e+00> : vector<18x10xf32>
    %981 = tpu.matmul %980, %975, %cst_465 {dimension_numbers = #tpu.dot_dimension_numbers<[1], [0], [0], [1], [0, 0, 1, 1], [], []>} : vector<18x31xf32>, vector<31x10xf32>, vector<18x10xf32> -> vector<18x10xf32>
    %c25_466 = arith.constant 25 : index
    %c0_467 = arith.constant 0 : index
    %c0_468 = arith.constant 0 : index
    %c0_469 = arith.constant 0 : index
    %982 = vector.load %arg2[%c25_466, %c0_467, %c0_468, %c0_469] : memref<36x2x18x1xf32, #tpu.memory_space<vmem>>, vector<1x1x18x1xf32>
    %983 = vector.shape_cast %982 : vector<1x1x18x1xf32> to vector<18x1xf32>
    %c25_470 = arith.constant 25 : index
    %c1_471 = arith.constant 1 : index
    %c0_472 = arith.constant 0 : index
    %c0_473 = arith.constant 0 : index
    %984 = vector.load %arg2[%c25_470, %c1_471, %c0_472, %c0_473] : memref<36x2x18x1xf32, #tpu.memory_space<vmem>>, vector<1x1x18x1xf32>
    %985 = vector.shape_cast %984 : vector<1x1x18x1xf32> to vector<18x1xf32>
    %cst_474 = arith.constant dense<0.000000e+00> : vector<18xf32>
    %986 = vector.multi_reduction <add>, %981, %cst_474 [1] : vector<18x10xf32> to vector<18xf32>
    %987 = vector.shape_cast %986 : vector<18xf32> to vector<18x1xf32>
    %988 = arith.mulf %981, %981 : vector<18x10xf32>
    %cst_475 = arith.constant dense<0.000000e+00> : vector<18xf32>
    %989 = vector.multi_reduction <add>, %988, %cst_475 [1] : vector<18x10xf32> to vector<18xf32>
    %990 = vector.shape_cast %989 : vector<18xf32> to vector<18x1xf32>
    %cst_476 = arith.constant 1.000000e-01 : f32
    %991 = vector.broadcast %cst_476 : f32 to vector<18x1xf32>
    %992 = arith.mulf %987, %991 : vector<18x1xf32>
    %cst_477 = arith.constant 1.000000e-01 : f32
    %993 = vector.broadcast %cst_477 : f32 to vector<18x1xf32>
    %994 = arith.mulf %990, %993 : vector<18x1xf32>
    %995 = arith.mulf %992, %992 : vector<18x1xf32>
    %996 = arith.subf %994, %995 : vector<18x1xf32>
    %cst_478 = arith.constant 0.000000e+00 : f32
    %997 = vector.broadcast %cst_478 : f32 to vector<18x1xf32>
    %998 = arith.maximumf %996, %997 : vector<18x1xf32>
    %cst_479 = arith.constant 9.99999974E-6 : f32
    %999 = vector.broadcast %cst_479 : f32 to vector<18x1xf32>
    %1000 = arith.addf %998, %999 : vector<18x1xf32>
    %1001 = math.rsqrt %1000 : vector<18x1xf32>
    %1002 = arith.mulf %983, %1001 : vector<18x1xf32>
    %1003 = arith.mulf %992, %1002 : vector<18x1xf32>
    %1004 = arith.subf %985, %1003 : vector<18x1xf32>
    %1005 = vector.broadcast %1002 : vector<18x1xf32> to vector<18x10xf32>
    %1006 = arith.mulf %981, %1005 : vector<18x10xf32>
    %1007 = vector.broadcast %1004 : vector<18x1xf32> to vector<18x10xf32>
    %1008 = arith.addf %1006, %1007 : vector<18x10xf32>
    %1009 = arith.addf %1008, %936 : vector<18x10xf32>
    %cst_480 = arith.constant 0.000000e+00 : f32
    %1010 = vector.broadcast %cst_480 : f32 to vector<18x10xf32>
    %1011 = arith.maximumf %1009, %1010 : vector<18x10xf32>
    %c26 = arith.constant 26 : index
    %c0_481 = arith.constant 0 : index
    %c0_482 = arith.constant 0 : index
    %1012 = vector.load %arg1[%c26, %c0_481, %c0_482] : memref<36x31x10xf32, #tpu.memory_space<vmem>>, vector<1x31x10xf32>
    %1013 = vector.shape_cast %1012 : vector<1x31x10xf32> to vector<31x10xf32>
    %1014 = vector.extract_strided_slice %1011 {offsets = [0, 0], sizes = [17, 10], strides = [1, 1]} : vector<18x10xf32> to vector<17x10xf32>
    %1015 = tpu.concatenate %0, %1014 in 0 : vector<1x10xf32>, vector<17x10xf32> -> vector<18x10xf32>
    %1016 = vector.extract_strided_slice %1011 {offsets = [1, 0], sizes = [17, 10], strides = [1, 1]} : vector<18x10xf32> to vector<17x10xf32>
    %1017 = tpu.concatenate %1016, %0 in 0 : vector<17x10xf32>, vector<1x10xf32> -> vector<18x10xf32>
    %1018 = tpu.concatenate %1015, %1011, %1017, %1 in 1 : vector<18x10xf32>, vector<18x10xf32>, vector<18x10xf32>, vector<18x1xf32> -> vector<18x31xf32>
    %cst_483 = arith.constant dense<0.000000e+00> : vector<18x10xf32>
    %1019 = tpu.matmul %1018, %1013, %cst_483 {dimension_numbers = #tpu.dot_dimension_numbers<[1], [0], [0], [1], [0, 0, 1, 1], [], []>} : vector<18x31xf32>, vector<31x10xf32>, vector<18x10xf32> -> vector<18x10xf32>
    %c26_484 = arith.constant 26 : index
    %c0_485 = arith.constant 0 : index
    %c0_486 = arith.constant 0 : index
    %c0_487 = arith.constant 0 : index
    %1020 = vector.load %arg2[%c26_484, %c0_485, %c0_486, %c0_487] : memref<36x2x18x1xf32, #tpu.memory_space<vmem>>, vector<1x1x18x1xf32>
    %1021 = vector.shape_cast %1020 : vector<1x1x18x1xf32> to vector<18x1xf32>
    %c26_488 = arith.constant 26 : index
    %c1_489 = arith.constant 1 : index
    %c0_490 = arith.constant 0 : index
    %c0_491 = arith.constant 0 : index
    %1022 = vector.load %arg2[%c26_488, %c1_489, %c0_490, %c0_491] : memref<36x2x18x1xf32, #tpu.memory_space<vmem>>, vector<1x1x18x1xf32>
    %1023 = vector.shape_cast %1022 : vector<1x1x18x1xf32> to vector<18x1xf32>
    %cst_492 = arith.constant dense<0.000000e+00> : vector<18xf32>
    %1024 = vector.multi_reduction <add>, %1019, %cst_492 [1] : vector<18x10xf32> to vector<18xf32>
    %1025 = vector.shape_cast %1024 : vector<18xf32> to vector<18x1xf32>
    %1026 = arith.mulf %1019, %1019 : vector<18x10xf32>
    %cst_493 = arith.constant dense<0.000000e+00> : vector<18xf32>
    %1027 = vector.multi_reduction <add>, %1026, %cst_493 [1] : vector<18x10xf32> to vector<18xf32>
    %1028 = vector.shape_cast %1027 : vector<18xf32> to vector<18x1xf32>
    %cst_494 = arith.constant 1.000000e-01 : f32
    %1029 = vector.broadcast %cst_494 : f32 to vector<18x1xf32>
    %1030 = arith.mulf %1025, %1029 : vector<18x1xf32>
    %cst_495 = arith.constant 1.000000e-01 : f32
    %1031 = vector.broadcast %cst_495 : f32 to vector<18x1xf32>
    %1032 = arith.mulf %1028, %1031 : vector<18x1xf32>
    %1033 = arith.mulf %1030, %1030 : vector<18x1xf32>
    %1034 = arith.subf %1032, %1033 : vector<18x1xf32>
    %cst_496 = arith.constant 0.000000e+00 : f32
    %1035 = vector.broadcast %cst_496 : f32 to vector<18x1xf32>
    %1036 = arith.maximumf %1034, %1035 : vector<18x1xf32>
    %cst_497 = arith.constant 9.99999974E-6 : f32
    %1037 = vector.broadcast %cst_497 : f32 to vector<18x1xf32>
    %1038 = arith.addf %1036, %1037 : vector<18x1xf32>
    %1039 = math.rsqrt %1038 : vector<18x1xf32>
    %1040 = arith.mulf %1021, %1039 : vector<18x1xf32>
    %1041 = arith.mulf %1030, %1040 : vector<18x1xf32>
    %1042 = arith.subf %1023, %1041 : vector<18x1xf32>
    %1043 = vector.broadcast %1040 : vector<18x1xf32> to vector<18x10xf32>
    %1044 = arith.mulf %1019, %1043 : vector<18x10xf32>
    %1045 = vector.broadcast %1042 : vector<18x1xf32> to vector<18x10xf32>
    %1046 = arith.addf %1044, %1045 : vector<18x10xf32>
    %cst_498 = arith.constant 0.000000e+00 : f32
    %1047 = vector.broadcast %cst_498 : f32 to vector<18x10xf32>
    %1048 = arith.maximumf %1046, %1047 : vector<18x10xf32>
    %c27 = arith.constant 27 : index
    %c0_499 = arith.constant 0 : index
    %c0_500 = arith.constant 0 : index
    %1049 = vector.load %arg1[%c27, %c0_499, %c0_500] : memref<36x31x10xf32, #tpu.memory_space<vmem>>, vector<1x31x10xf32>
    %1050 = vector.shape_cast %1049 : vector<1x31x10xf32> to vector<31x10xf32>
    %1051 = vector.extract_strided_slice %1048 {offsets = [0, 0], sizes = [17, 10], strides = [1, 1]} : vector<18x10xf32> to vector<17x10xf32>
    %1052 = tpu.concatenate %0, %1051 in 0 : vector<1x10xf32>, vector<17x10xf32> -> vector<18x10xf32>
    %1053 = vector.extract_strided_slice %1048 {offsets = [1, 0], sizes = [17, 10], strides = [1, 1]} : vector<18x10xf32> to vector<17x10xf32>
    %1054 = tpu.concatenate %1053, %0 in 0 : vector<17x10xf32>, vector<1x10xf32> -> vector<18x10xf32>
    %1055 = tpu.concatenate %1052, %1048, %1054, %1 in 1 : vector<18x10xf32>, vector<18x10xf32>, vector<18x10xf32>, vector<18x1xf32> -> vector<18x31xf32>
    %cst_501 = arith.constant dense<0.000000e+00> : vector<18x10xf32>
    %1056 = tpu.matmul %1055, %1050, %cst_501 {dimension_numbers = #tpu.dot_dimension_numbers<[1], [0], [0], [1], [0, 0, 1, 1], [], []>} : vector<18x31xf32>, vector<31x10xf32>, vector<18x10xf32> -> vector<18x10xf32>
    %c27_502 = arith.constant 27 : index
    %c0_503 = arith.constant 0 : index
    %c0_504 = arith.constant 0 : index
    %c0_505 = arith.constant 0 : index
    %1057 = vector.load %arg2[%c27_502, %c0_503, %c0_504, %c0_505] : memref<36x2x18x1xf32, #tpu.memory_space<vmem>>, vector<1x1x18x1xf32>
    %1058 = vector.shape_cast %1057 : vector<1x1x18x1xf32> to vector<18x1xf32>
    %c27_506 = arith.constant 27 : index
    %c1_507 = arith.constant 1 : index
    %c0_508 = arith.constant 0 : index
    %c0_509 = arith.constant 0 : index
    %1059 = vector.load %arg2[%c27_506, %c1_507, %c0_508, %c0_509] : memref<36x2x18x1xf32, #tpu.memory_space<vmem>>, vector<1x1x18x1xf32>
    %1060 = vector.shape_cast %1059 : vector<1x1x18x1xf32> to vector<18x1xf32>
    %cst_510 = arith.constant dense<0.000000e+00> : vector<18xf32>
    %1061 = vector.multi_reduction <add>, %1056, %cst_510 [1] : vector<18x10xf32> to vector<18xf32>
    %1062 = vector.shape_cast %1061 : vector<18xf32> to vector<18x1xf32>
    %1063 = arith.mulf %1056, %1056 : vector<18x10xf32>
    %cst_511 = arith.constant dense<0.000000e+00> : vector<18xf32>
    %1064 = vector.multi_reduction <add>, %1063, %cst_511 [1] : vector<18x10xf32> to vector<18xf32>
    %1065 = vector.shape_cast %1064 : vector<18xf32> to vector<18x1xf32>
    %cst_512 = arith.constant 1.000000e-01 : f32
    %1066 = vector.broadcast %cst_512 : f32 to vector<18x1xf32>
    %1067 = arith.mulf %1062, %1066 : vector<18x1xf32>
    %cst_513 = arith.constant 1.000000e-01 : f32
    %1068 = vector.broadcast %cst_513 : f32 to vector<18x1xf32>
    %1069 = arith.mulf %1065, %1068 : vector<18x1xf32>
    %1070 = arith.mulf %1067, %1067 : vector<18x1xf32>
    %1071 = arith.subf %1069, %1070 : vector<18x1xf32>
    %cst_514 = arith.constant 0.000000e+00 : f32
    %1072 = vector.broadcast %cst_514 : f32 to vector<18x1xf32>
    %1073 = arith.maximumf %1071, %1072 : vector<18x1xf32>
    %cst_515 = arith.constant 9.99999974E-6 : f32
    %1074 = vector.broadcast %cst_515 : f32 to vector<18x1xf32>
    %1075 = arith.addf %1073, %1074 : vector<18x1xf32>
    %1076 = math.rsqrt %1075 : vector<18x1xf32>
    %1077 = arith.mulf %1058, %1076 : vector<18x1xf32>
    %1078 = arith.mulf %1067, %1077 : vector<18x1xf32>
    %1079 = arith.subf %1060, %1078 : vector<18x1xf32>
    %1080 = vector.broadcast %1077 : vector<18x1xf32> to vector<18x10xf32>
    %1081 = arith.mulf %1056, %1080 : vector<18x10xf32>
    %1082 = vector.broadcast %1079 : vector<18x1xf32> to vector<18x10xf32>
    %1083 = arith.addf %1081, %1082 : vector<18x10xf32>
    %1084 = arith.addf %1083, %1011 : vector<18x10xf32>
    %cst_516 = arith.constant 0.000000e+00 : f32
    %1085 = vector.broadcast %cst_516 : f32 to vector<18x10xf32>
    %1086 = arith.maximumf %1084, %1085 : vector<18x10xf32>
    %c28 = arith.constant 28 : index
    %c0_517 = arith.constant 0 : index
    %c0_518 = arith.constant 0 : index
    %1087 = vector.load %arg1[%c28, %c0_517, %c0_518] : memref<36x31x10xf32, #tpu.memory_space<vmem>>, vector<1x31x10xf32>
    %1088 = vector.shape_cast %1087 : vector<1x31x10xf32> to vector<31x10xf32>
    %1089 = vector.extract_strided_slice %1086 {offsets = [0, 0], sizes = [17, 10], strides = [1, 1]} : vector<18x10xf32> to vector<17x10xf32>
    %1090 = tpu.concatenate %0, %1089 in 0 : vector<1x10xf32>, vector<17x10xf32> -> vector<18x10xf32>
    %1091 = vector.extract_strided_slice %1086 {offsets = [1, 0], sizes = [17, 10], strides = [1, 1]} : vector<18x10xf32> to vector<17x10xf32>
    %1092 = tpu.concatenate %1091, %0 in 0 : vector<17x10xf32>, vector<1x10xf32> -> vector<18x10xf32>
    %1093 = tpu.concatenate %1090, %1086, %1092, %1 in 1 : vector<18x10xf32>, vector<18x10xf32>, vector<18x10xf32>, vector<18x1xf32> -> vector<18x31xf32>
    %cst_519 = arith.constant dense<0.000000e+00> : vector<18x10xf32>
    %1094 = tpu.matmul %1093, %1088, %cst_519 {dimension_numbers = #tpu.dot_dimension_numbers<[1], [0], [0], [1], [0, 0, 1, 1], [], []>} : vector<18x31xf32>, vector<31x10xf32>, vector<18x10xf32> -> vector<18x10xf32>
    %c28_520 = arith.constant 28 : index
    %c0_521 = arith.constant 0 : index
    %c0_522 = arith.constant 0 : index
    %c0_523 = arith.constant 0 : index
    %1095 = vector.load %arg2[%c28_520, %c0_521, %c0_522, %c0_523] : memref<36x2x18x1xf32, #tpu.memory_space<vmem>>, vector<1x1x18x1xf32>
    %1096 = vector.shape_cast %1095 : vector<1x1x18x1xf32> to vector<18x1xf32>
    %c28_524 = arith.constant 28 : index
    %c1_525 = arith.constant 1 : index
    %c0_526 = arith.constant 0 : index
    %c0_527 = arith.constant 0 : index
    %1097 = vector.load %arg2[%c28_524, %c1_525, %c0_526, %c0_527] : memref<36x2x18x1xf32, #tpu.memory_space<vmem>>, vector<1x1x18x1xf32>
    %1098 = vector.shape_cast %1097 : vector<1x1x18x1xf32> to vector<18x1xf32>
    %cst_528 = arith.constant dense<0.000000e+00> : vector<18xf32>
    %1099 = vector.multi_reduction <add>, %1094, %cst_528 [1] : vector<18x10xf32> to vector<18xf32>
    %1100 = vector.shape_cast %1099 : vector<18xf32> to vector<18x1xf32>
    %1101 = arith.mulf %1094, %1094 : vector<18x10xf32>
    %cst_529 = arith.constant dense<0.000000e+00> : vector<18xf32>
    %1102 = vector.multi_reduction <add>, %1101, %cst_529 [1] : vector<18x10xf32> to vector<18xf32>
    %1103 = vector.shape_cast %1102 : vector<18xf32> to vector<18x1xf32>
    %cst_530 = arith.constant 1.000000e-01 : f32
    %1104 = vector.broadcast %cst_530 : f32 to vector<18x1xf32>
    %1105 = arith.mulf %1100, %1104 : vector<18x1xf32>
    %cst_531 = arith.constant 1.000000e-01 : f32
    %1106 = vector.broadcast %cst_531 : f32 to vector<18x1xf32>
    %1107 = arith.mulf %1103, %1106 : vector<18x1xf32>
    %1108 = arith.mulf %1105, %1105 : vector<18x1xf32>
    %1109 = arith.subf %1107, %1108 : vector<18x1xf32>
    %cst_532 = arith.constant 0.000000e+00 : f32
    %1110 = vector.broadcast %cst_532 : f32 to vector<18x1xf32>
    %1111 = arith.maximumf %1109, %1110 : vector<18x1xf32>
    %cst_533 = arith.constant 9.99999974E-6 : f32
    %1112 = vector.broadcast %cst_533 : f32 to vector<18x1xf32>
    %1113 = arith.addf %1111, %1112 : vector<18x1xf32>
    %1114 = math.rsqrt %1113 : vector<18x1xf32>
    %1115 = arith.mulf %1096, %1114 : vector<18x1xf32>
    %1116 = arith.mulf %1105, %1115 : vector<18x1xf32>
    %1117 = arith.subf %1098, %1116 : vector<18x1xf32>
    %1118 = vector.broadcast %1115 : vector<18x1xf32> to vector<18x10xf32>
    %1119 = arith.mulf %1094, %1118 : vector<18x10xf32>
    %1120 = vector.broadcast %1117 : vector<18x1xf32> to vector<18x10xf32>
    %1121 = arith.addf %1119, %1120 : vector<18x10xf32>
    %cst_534 = arith.constant 0.000000e+00 : f32
    %1122 = vector.broadcast %cst_534 : f32 to vector<18x10xf32>
    %1123 = arith.maximumf %1121, %1122 : vector<18x10xf32>
    %c29 = arith.constant 29 : index
    %c0_535 = arith.constant 0 : index
    %c0_536 = arith.constant 0 : index
    %1124 = vector.load %arg1[%c29, %c0_535, %c0_536] : memref<36x31x10xf32, #tpu.memory_space<vmem>>, vector<1x31x10xf32>
    %1125 = vector.shape_cast %1124 : vector<1x31x10xf32> to vector<31x10xf32>
    %1126 = vector.extract_strided_slice %1123 {offsets = [0, 0], sizes = [17, 10], strides = [1, 1]} : vector<18x10xf32> to vector<17x10xf32>
    %1127 = tpu.concatenate %0, %1126 in 0 : vector<1x10xf32>, vector<17x10xf32> -> vector<18x10xf32>
    %1128 = vector.extract_strided_slice %1123 {offsets = [1, 0], sizes = [17, 10], strides = [1, 1]} : vector<18x10xf32> to vector<17x10xf32>
    %1129 = tpu.concatenate %1128, %0 in 0 : vector<17x10xf32>, vector<1x10xf32> -> vector<18x10xf32>
    %1130 = tpu.concatenate %1127, %1123, %1129, %1 in 1 : vector<18x10xf32>, vector<18x10xf32>, vector<18x10xf32>, vector<18x1xf32> -> vector<18x31xf32>
    %cst_537 = arith.constant dense<0.000000e+00> : vector<18x10xf32>
    %1131 = tpu.matmul %1130, %1125, %cst_537 {dimension_numbers = #tpu.dot_dimension_numbers<[1], [0], [0], [1], [0, 0, 1, 1], [], []>} : vector<18x31xf32>, vector<31x10xf32>, vector<18x10xf32> -> vector<18x10xf32>
    %c29_538 = arith.constant 29 : index
    %c0_539 = arith.constant 0 : index
    %c0_540 = arith.constant 0 : index
    %c0_541 = arith.constant 0 : index
    %1132 = vector.load %arg2[%c29_538, %c0_539, %c0_540, %c0_541] : memref<36x2x18x1xf32, #tpu.memory_space<vmem>>, vector<1x1x18x1xf32>
    %1133 = vector.shape_cast %1132 : vector<1x1x18x1xf32> to vector<18x1xf32>
    %c29_542 = arith.constant 29 : index
    %c1_543 = arith.constant 1 : index
    %c0_544 = arith.constant 0 : index
    %c0_545 = arith.constant 0 : index
    %1134 = vector.load %arg2[%c29_542, %c1_543, %c0_544, %c0_545] : memref<36x2x18x1xf32, #tpu.memory_space<vmem>>, vector<1x1x18x1xf32>
    %1135 = vector.shape_cast %1134 : vector<1x1x18x1xf32> to vector<18x1xf32>
    %cst_546 = arith.constant dense<0.000000e+00> : vector<18xf32>
    %1136 = vector.multi_reduction <add>, %1131, %cst_546 [1] : vector<18x10xf32> to vector<18xf32>
    %1137 = vector.shape_cast %1136 : vector<18xf32> to vector<18x1xf32>
    %1138 = arith.mulf %1131, %1131 : vector<18x10xf32>
    %cst_547 = arith.constant dense<0.000000e+00> : vector<18xf32>
    %1139 = vector.multi_reduction <add>, %1138, %cst_547 [1] : vector<18x10xf32> to vector<18xf32>
    %1140 = vector.shape_cast %1139 : vector<18xf32> to vector<18x1xf32>
    %cst_548 = arith.constant 1.000000e-01 : f32
    %1141 = vector.broadcast %cst_548 : f32 to vector<18x1xf32>
    %1142 = arith.mulf %1137, %1141 : vector<18x1xf32>
    %cst_549 = arith.constant 1.000000e-01 : f32
    %1143 = vector.broadcast %cst_549 : f32 to vector<18x1xf32>
    %1144 = arith.mulf %1140, %1143 : vector<18x1xf32>
    %1145 = arith.mulf %1142, %1142 : vector<18x1xf32>
    %1146 = arith.subf %1144, %1145 : vector<18x1xf32>
    %cst_550 = arith.constant 0.000000e+00 : f32
    %1147 = vector.broadcast %cst_550 : f32 to vector<18x1xf32>
    %1148 = arith.maximumf %1146, %1147 : vector<18x1xf32>
    %cst_551 = arith.constant 9.99999974E-6 : f32
    %1149 = vector.broadcast %cst_551 : f32 to vector<18x1xf32>
    %1150 = arith.addf %1148, %1149 : vector<18x1xf32>
    %1151 = math.rsqrt %1150 : vector<18x1xf32>
    %1152 = arith.mulf %1133, %1151 : vector<18x1xf32>
    %1153 = arith.mulf %1142, %1152 : vector<18x1xf32>
    %1154 = arith.subf %1135, %1153 : vector<18x1xf32>
    %1155 = vector.broadcast %1152 : vector<18x1xf32> to vector<18x10xf32>
    %1156 = arith.mulf %1131, %1155 : vector<18x10xf32>
    %1157 = vector.broadcast %1154 : vector<18x1xf32> to vector<18x10xf32>
    %1158 = arith.addf %1156, %1157 : vector<18x10xf32>
    %1159 = arith.addf %1158, %1086 : vector<18x10xf32>
    %cst_552 = arith.constant 0.000000e+00 : f32
    %1160 = vector.broadcast %cst_552 : f32 to vector<18x10xf32>
    %1161 = arith.maximumf %1159, %1160 : vector<18x10xf32>
    %c30 = arith.constant 30 : index
    %c0_553 = arith.constant 0 : index
    %c0_554 = arith.constant 0 : index
    %1162 = vector.load %arg1[%c30, %c0_553, %c0_554] : memref<36x31x10xf32, #tpu.memory_space<vmem>>, vector<1x31x10xf32>
    %1163 = vector.shape_cast %1162 : vector<1x31x10xf32> to vector<31x10xf32>
    %1164 = vector.extract_strided_slice %1161 {offsets = [0, 0], sizes = [17, 10], strides = [1, 1]} : vector<18x10xf32> to vector<17x10xf32>
    %1165 = tpu.concatenate %0, %1164 in 0 : vector<1x10xf32>, vector<17x10xf32> -> vector<18x10xf32>
    %1166 = vector.extract_strided_slice %1161 {offsets = [1, 0], sizes = [17, 10], strides = [1, 1]} : vector<18x10xf32> to vector<17x10xf32>
    %1167 = tpu.concatenate %1166, %0 in 0 : vector<17x10xf32>, vector<1x10xf32> -> vector<18x10xf32>
    %1168 = tpu.concatenate %1165, %1161, %1167, %1 in 1 : vector<18x10xf32>, vector<18x10xf32>, vector<18x10xf32>, vector<18x1xf32> -> vector<18x31xf32>
    %cst_555 = arith.constant dense<0.000000e+00> : vector<18x10xf32>
    %1169 = tpu.matmul %1168, %1163, %cst_555 {dimension_numbers = #tpu.dot_dimension_numbers<[1], [0], [0], [1], [0, 0, 1, 1], [], []>} : vector<18x31xf32>, vector<31x10xf32>, vector<18x10xf32> -> vector<18x10xf32>
    %c30_556 = arith.constant 30 : index
    %c0_557 = arith.constant 0 : index
    %c0_558 = arith.constant 0 : index
    %c0_559 = arith.constant 0 : index
    %1170 = vector.load %arg2[%c30_556, %c0_557, %c0_558, %c0_559] : memref<36x2x18x1xf32, #tpu.memory_space<vmem>>, vector<1x1x18x1xf32>
    %1171 = vector.shape_cast %1170 : vector<1x1x18x1xf32> to vector<18x1xf32>
    %c30_560 = arith.constant 30 : index
    %c1_561 = arith.constant 1 : index
    %c0_562 = arith.constant 0 : index
    %c0_563 = arith.constant 0 : index
    %1172 = vector.load %arg2[%c30_560, %c1_561, %c0_562, %c0_563] : memref<36x2x18x1xf32, #tpu.memory_space<vmem>>, vector<1x1x18x1xf32>
    %1173 = vector.shape_cast %1172 : vector<1x1x18x1xf32> to vector<18x1xf32>
    %cst_564 = arith.constant dense<0.000000e+00> : vector<18xf32>
    %1174 = vector.multi_reduction <add>, %1169, %cst_564 [1] : vector<18x10xf32> to vector<18xf32>
    %1175 = vector.shape_cast %1174 : vector<18xf32> to vector<18x1xf32>
    %1176 = arith.mulf %1169, %1169 : vector<18x10xf32>
    %cst_565 = arith.constant dense<0.000000e+00> : vector<18xf32>
    %1177 = vector.multi_reduction <add>, %1176, %cst_565 [1] : vector<18x10xf32> to vector<18xf32>
    %1178 = vector.shape_cast %1177 : vector<18xf32> to vector<18x1xf32>
    %cst_566 = arith.constant 1.000000e-01 : f32
    %1179 = vector.broadcast %cst_566 : f32 to vector<18x1xf32>
    %1180 = arith.mulf %1175, %1179 : vector<18x1xf32>
    %cst_567 = arith.constant 1.000000e-01 : f32
    %1181 = vector.broadcast %cst_567 : f32 to vector<18x1xf32>
    %1182 = arith.mulf %1178, %1181 : vector<18x1xf32>
    %1183 = arith.mulf %1180, %1180 : vector<18x1xf32>
    %1184 = arith.subf %1182, %1183 : vector<18x1xf32>
    %cst_568 = arith.constant 0.000000e+00 : f32
    %1185 = vector.broadcast %cst_568 : f32 to vector<18x1xf32>
    %1186 = arith.maximumf %1184, %1185 : vector<18x1xf32>
    %cst_569 = arith.constant 9.99999974E-6 : f32
    %1187 = vector.broadcast %cst_569 : f32 to vector<18x1xf32>
    %1188 = arith.addf %1186, %1187 : vector<18x1xf32>
    %1189 = math.rsqrt %1188 : vector<18x1xf32>
    %1190 = arith.mulf %1171, %1189 : vector<18x1xf32>
    %1191 = arith.mulf %1180, %1190 : vector<18x1xf32>
    %1192 = arith.subf %1173, %1191 : vector<18x1xf32>
    %1193 = vector.broadcast %1190 : vector<18x1xf32> to vector<18x10xf32>
    %1194 = arith.mulf %1169, %1193 : vector<18x10xf32>
    %1195 = vector.broadcast %1192 : vector<18x1xf32> to vector<18x10xf32>
    %1196 = arith.addf %1194, %1195 : vector<18x10xf32>
    %cst_570 = arith.constant 0.000000e+00 : f32
    %1197 = vector.broadcast %cst_570 : f32 to vector<18x10xf32>
    %1198 = arith.maximumf %1196, %1197 : vector<18x10xf32>
    %c31 = arith.constant 31 : index
    %c0_571 = arith.constant 0 : index
    %c0_572 = arith.constant 0 : index
    %1199 = vector.load %arg1[%c31, %c0_571, %c0_572] : memref<36x31x10xf32, #tpu.memory_space<vmem>>, vector<1x31x10xf32>
    %1200 = vector.shape_cast %1199 : vector<1x31x10xf32> to vector<31x10xf32>
    %1201 = vector.extract_strided_slice %1198 {offsets = [0, 0], sizes = [17, 10], strides = [1, 1]} : vector<18x10xf32> to vector<17x10xf32>
    %1202 = tpu.concatenate %0, %1201 in 0 : vector<1x10xf32>, vector<17x10xf32> -> vector<18x10xf32>
    %1203 = vector.extract_strided_slice %1198 {offsets = [1, 0], sizes = [17, 10], strides = [1, 1]} : vector<18x10xf32> to vector<17x10xf32>
    %1204 = tpu.concatenate %1203, %0 in 0 : vector<17x10xf32>, vector<1x10xf32> -> vector<18x10xf32>
    %1205 = tpu.concatenate %1202, %1198, %1204, %1 in 1 : vector<18x10xf32>, vector<18x10xf32>, vector<18x10xf32>, vector<18x1xf32> -> vector<18x31xf32>
    %cst_573 = arith.constant dense<0.000000e+00> : vector<18x10xf32>
    %1206 = tpu.matmul %1205, %1200, %cst_573 {dimension_numbers = #tpu.dot_dimension_numbers<[1], [0], [0], [1], [0, 0, 1, 1], [], []>} : vector<18x31xf32>, vector<31x10xf32>, vector<18x10xf32> -> vector<18x10xf32>
    %c31_574 = arith.constant 31 : index
    %c0_575 = arith.constant 0 : index
    %c0_576 = arith.constant 0 : index
    %c0_577 = arith.constant 0 : index
    %1207 = vector.load %arg2[%c31_574, %c0_575, %c0_576, %c0_577] : memref<36x2x18x1xf32, #tpu.memory_space<vmem>>, vector<1x1x18x1xf32>
    %1208 = vector.shape_cast %1207 : vector<1x1x18x1xf32> to vector<18x1xf32>
    %c31_578 = arith.constant 31 : index
    %c1_579 = arith.constant 1 : index
    %c0_580 = arith.constant 0 : index
    %c0_581 = arith.constant 0 : index
    %1209 = vector.load %arg2[%c31_578, %c1_579, %c0_580, %c0_581] : memref<36x2x18x1xf32, #tpu.memory_space<vmem>>, vector<1x1x18x1xf32>
    %1210 = vector.shape_cast %1209 : vector<1x1x18x1xf32> to vector<18x1xf32>
    %cst_582 = arith.constant dense<0.000000e+00> : vector<18xf32>
    %1211 = vector.multi_reduction <add>, %1206, %cst_582 [1] : vector<18x10xf32> to vector<18xf32>
    %1212 = vector.shape_cast %1211 : vector<18xf32> to vector<18x1xf32>
    %1213 = arith.mulf %1206, %1206 : vector<18x10xf32>
    %cst_583 = arith.constant dense<0.000000e+00> : vector<18xf32>
    %1214 = vector.multi_reduction <add>, %1213, %cst_583 [1] : vector<18x10xf32> to vector<18xf32>
    %1215 = vector.shape_cast %1214 : vector<18xf32> to vector<18x1xf32>
    %cst_584 = arith.constant 1.000000e-01 : f32
    %1216 = vector.broadcast %cst_584 : f32 to vector<18x1xf32>
    %1217 = arith.mulf %1212, %1216 : vector<18x1xf32>
    %cst_585 = arith.constant 1.000000e-01 : f32
    %1218 = vector.broadcast %cst_585 : f32 to vector<18x1xf32>
    %1219 = arith.mulf %1215, %1218 : vector<18x1xf32>
    %1220 = arith.mulf %1217, %1217 : vector<18x1xf32>
    %1221 = arith.subf %1219, %1220 : vector<18x1xf32>
    %cst_586 = arith.constant 0.000000e+00 : f32
    %1222 = vector.broadcast %cst_586 : f32 to vector<18x1xf32>
    %1223 = arith.maximumf %1221, %1222 : vector<18x1xf32>
    %cst_587 = arith.constant 9.99999974E-6 : f32
    %1224 = vector.broadcast %cst_587 : f32 to vector<18x1xf32>
    %1225 = arith.addf %1223, %1224 : vector<18x1xf32>
    %1226 = math.rsqrt %1225 : vector<18x1xf32>
    %1227 = arith.mulf %1208, %1226 : vector<18x1xf32>
    %1228 = arith.mulf %1217, %1227 : vector<18x1xf32>
    %1229 = arith.subf %1210, %1228 : vector<18x1xf32>
    %1230 = vector.broadcast %1227 : vector<18x1xf32> to vector<18x10xf32>
    %1231 = arith.mulf %1206, %1230 : vector<18x10xf32>
    %1232 = vector.broadcast %1229 : vector<18x1xf32> to vector<18x10xf32>
    %1233 = arith.addf %1231, %1232 : vector<18x10xf32>
    %1234 = arith.addf %1233, %1161 : vector<18x10xf32>
    %cst_588 = arith.constant 0.000000e+00 : f32
    %1235 = vector.broadcast %cst_588 : f32 to vector<18x10xf32>
    %1236 = arith.maximumf %1234, %1235 : vector<18x10xf32>
    %c32 = arith.constant 32 : index
    %c0_589 = arith.constant 0 : index
    %c0_590 = arith.constant 0 : index
    %1237 = vector.load %arg1[%c32, %c0_589, %c0_590] : memref<36x31x10xf32, #tpu.memory_space<vmem>>, vector<1x31x10xf32>
    %1238 = vector.shape_cast %1237 : vector<1x31x10xf32> to vector<31x10xf32>
    %1239 = vector.extract_strided_slice %1236 {offsets = [0, 0], sizes = [17, 10], strides = [1, 1]} : vector<18x10xf32> to vector<17x10xf32>
    %1240 = tpu.concatenate %0, %1239 in 0 : vector<1x10xf32>, vector<17x10xf32> -> vector<18x10xf32>
    %1241 = vector.extract_strided_slice %1236 {offsets = [1, 0], sizes = [17, 10], strides = [1, 1]} : vector<18x10xf32> to vector<17x10xf32>
    %1242 = tpu.concatenate %1241, %0 in 0 : vector<17x10xf32>, vector<1x10xf32> -> vector<18x10xf32>
    %1243 = tpu.concatenate %1240, %1236, %1242, %1 in 1 : vector<18x10xf32>, vector<18x10xf32>, vector<18x10xf32>, vector<18x1xf32> -> vector<18x31xf32>
    %cst_591 = arith.constant dense<0.000000e+00> : vector<18x10xf32>
    %1244 = tpu.matmul %1243, %1238, %cst_591 {dimension_numbers = #tpu.dot_dimension_numbers<[1], [0], [0], [1], [0, 0, 1, 1], [], []>} : vector<18x31xf32>, vector<31x10xf32>, vector<18x10xf32> -> vector<18x10xf32>
    %c32_592 = arith.constant 32 : index
    %c0_593 = arith.constant 0 : index
    %c0_594 = arith.constant 0 : index
    %c0_595 = arith.constant 0 : index
    %1245 = vector.load %arg2[%c32_592, %c0_593, %c0_594, %c0_595] : memref<36x2x18x1xf32, #tpu.memory_space<vmem>>, vector<1x1x18x1xf32>
    %1246 = vector.shape_cast %1245 : vector<1x1x18x1xf32> to vector<18x1xf32>
    %c32_596 = arith.constant 32 : index
    %c1_597 = arith.constant 1 : index
    %c0_598 = arith.constant 0 : index
    %c0_599 = arith.constant 0 : index
    %1247 = vector.load %arg2[%c32_596, %c1_597, %c0_598, %c0_599] : memref<36x2x18x1xf32, #tpu.memory_space<vmem>>, vector<1x1x18x1xf32>
    %1248 = vector.shape_cast %1247 : vector<1x1x18x1xf32> to vector<18x1xf32>
    %cst_600 = arith.constant dense<0.000000e+00> : vector<18xf32>
    %1249 = vector.multi_reduction <add>, %1244, %cst_600 [1] : vector<18x10xf32> to vector<18xf32>
    %1250 = vector.shape_cast %1249 : vector<18xf32> to vector<18x1xf32>
    %1251 = arith.mulf %1244, %1244 : vector<18x10xf32>
    %cst_601 = arith.constant dense<0.000000e+00> : vector<18xf32>
    %1252 = vector.multi_reduction <add>, %1251, %cst_601 [1] : vector<18x10xf32> to vector<18xf32>
    %1253 = vector.shape_cast %1252 : vector<18xf32> to vector<18x1xf32>
    %cst_602 = arith.constant 1.000000e-01 : f32
    %1254 = vector.broadcast %cst_602 : f32 to vector<18x1xf32>
    %1255 = arith.mulf %1250, %1254 : vector<18x1xf32>
    %cst_603 = arith.constant 1.000000e-01 : f32
    %1256 = vector.broadcast %cst_603 : f32 to vector<18x1xf32>
    %1257 = arith.mulf %1253, %1256 : vector<18x1xf32>
    %1258 = arith.mulf %1255, %1255 : vector<18x1xf32>
    %1259 = arith.subf %1257, %1258 : vector<18x1xf32>
    %cst_604 = arith.constant 0.000000e+00 : f32
    %1260 = vector.broadcast %cst_604 : f32 to vector<18x1xf32>
    %1261 = arith.maximumf %1259, %1260 : vector<18x1xf32>
    %cst_605 = arith.constant 9.99999974E-6 : f32
    %1262 = vector.broadcast %cst_605 : f32 to vector<18x1xf32>
    %1263 = arith.addf %1261, %1262 : vector<18x1xf32>
    %1264 = math.rsqrt %1263 : vector<18x1xf32>
    %1265 = arith.mulf %1246, %1264 : vector<18x1xf32>
    %1266 = arith.mulf %1255, %1265 : vector<18x1xf32>
    %1267 = arith.subf %1248, %1266 : vector<18x1xf32>
    %1268 = vector.broadcast %1265 : vector<18x1xf32> to vector<18x10xf32>
    %1269 = arith.mulf %1244, %1268 : vector<18x10xf32>
    %1270 = vector.broadcast %1267 : vector<18x1xf32> to vector<18x10xf32>
    %1271 = arith.addf %1269, %1270 : vector<18x10xf32>
    %cst_606 = arith.constant 0.000000e+00 : f32
    %1272 = vector.broadcast %cst_606 : f32 to vector<18x10xf32>
    %1273 = arith.maximumf %1271, %1272 : vector<18x10xf32>
    %c33 = arith.constant 33 : index
    %c0_607 = arith.constant 0 : index
    %c0_608 = arith.constant 0 : index
    %1274 = vector.load %arg1[%c33, %c0_607, %c0_608] : memref<36x31x10xf32, #tpu.memory_space<vmem>>, vector<1x31x10xf32>
    %1275 = vector.shape_cast %1274 : vector<1x31x10xf32> to vector<31x10xf32>
    %1276 = vector.extract_strided_slice %1273 {offsets = [0, 0], sizes = [17, 10], strides = [1, 1]} : vector<18x10xf32> to vector<17x10xf32>
    %1277 = tpu.concatenate %0, %1276 in 0 : vector<1x10xf32>, vector<17x10xf32> -> vector<18x10xf32>
    %1278 = vector.extract_strided_slice %1273 {offsets = [1, 0], sizes = [17, 10], strides = [1, 1]} : vector<18x10xf32> to vector<17x10xf32>
    %1279 = tpu.concatenate %1278, %0 in 0 : vector<17x10xf32>, vector<1x10xf32> -> vector<18x10xf32>
    %1280 = tpu.concatenate %1277, %1273, %1279, %1 in 1 : vector<18x10xf32>, vector<18x10xf32>, vector<18x10xf32>, vector<18x1xf32> -> vector<18x31xf32>
    %cst_609 = arith.constant dense<0.000000e+00> : vector<18x10xf32>
    %1281 = tpu.matmul %1280, %1275, %cst_609 {dimension_numbers = #tpu.dot_dimension_numbers<[1], [0], [0], [1], [0, 0, 1, 1], [], []>} : vector<18x31xf32>, vector<31x10xf32>, vector<18x10xf32> -> vector<18x10xf32>
    %c33_610 = arith.constant 33 : index
    %c0_611 = arith.constant 0 : index
    %c0_612 = arith.constant 0 : index
    %c0_613 = arith.constant 0 : index
    %1282 = vector.load %arg2[%c33_610, %c0_611, %c0_612, %c0_613] : memref<36x2x18x1xf32, #tpu.memory_space<vmem>>, vector<1x1x18x1xf32>
    %1283 = vector.shape_cast %1282 : vector<1x1x18x1xf32> to vector<18x1xf32>
    %c33_614 = arith.constant 33 : index
    %c1_615 = arith.constant 1 : index
    %c0_616 = arith.constant 0 : index
    %c0_617 = arith.constant 0 : index
    %1284 = vector.load %arg2[%c33_614, %c1_615, %c0_616, %c0_617] : memref<36x2x18x1xf32, #tpu.memory_space<vmem>>, vector<1x1x18x1xf32>
    %1285 = vector.shape_cast %1284 : vector<1x1x18x1xf32> to vector<18x1xf32>
    %cst_618 = arith.constant dense<0.000000e+00> : vector<18xf32>
    %1286 = vector.multi_reduction <add>, %1281, %cst_618 [1] : vector<18x10xf32> to vector<18xf32>
    %1287 = vector.shape_cast %1286 : vector<18xf32> to vector<18x1xf32>
    %1288 = arith.mulf %1281, %1281 : vector<18x10xf32>
    %cst_619 = arith.constant dense<0.000000e+00> : vector<18xf32>
    %1289 = vector.multi_reduction <add>, %1288, %cst_619 [1] : vector<18x10xf32> to vector<18xf32>
    %1290 = vector.shape_cast %1289 : vector<18xf32> to vector<18x1xf32>
    %cst_620 = arith.constant 1.000000e-01 : f32
    %1291 = vector.broadcast %cst_620 : f32 to vector<18x1xf32>
    %1292 = arith.mulf %1287, %1291 : vector<18x1xf32>
    %cst_621 = arith.constant 1.000000e-01 : f32
    %1293 = vector.broadcast %cst_621 : f32 to vector<18x1xf32>
    %1294 = arith.mulf %1290, %1293 : vector<18x1xf32>
    %1295 = arith.mulf %1292, %1292 : vector<18x1xf32>
    %1296 = arith.subf %1294, %1295 : vector<18x1xf32>
    %cst_622 = arith.constant 0.000000e+00 : f32
    %1297 = vector.broadcast %cst_622 : f32 to vector<18x1xf32>
    %1298 = arith.maximumf %1296, %1297 : vector<18x1xf32>
    %cst_623 = arith.constant 9.99999974E-6 : f32
    %1299 = vector.broadcast %cst_623 : f32 to vector<18x1xf32>
    %1300 = arith.addf %1298, %1299 : vector<18x1xf32>
    %1301 = math.rsqrt %1300 : vector<18x1xf32>
    %1302 = arith.mulf %1283, %1301 : vector<18x1xf32>
    %1303 = arith.mulf %1292, %1302 : vector<18x1xf32>
    %1304 = arith.subf %1285, %1303 : vector<18x1xf32>
    %1305 = vector.broadcast %1302 : vector<18x1xf32> to vector<18x10xf32>
    %1306 = arith.mulf %1281, %1305 : vector<18x10xf32>
    %1307 = vector.broadcast %1304 : vector<18x1xf32> to vector<18x10xf32>
    %1308 = arith.addf %1306, %1307 : vector<18x10xf32>
    %1309 = arith.addf %1308, %1236 : vector<18x10xf32>
    %cst_624 = arith.constant 0.000000e+00 : f32
    %1310 = vector.broadcast %cst_624 : f32 to vector<18x10xf32>
    %1311 = arith.maximumf %1309, %1310 : vector<18x10xf32>
    %c34 = arith.constant 34 : index
    %c0_625 = arith.constant 0 : index
    %c0_626 = arith.constant 0 : index
    %1312 = vector.load %arg1[%c34, %c0_625, %c0_626] : memref<36x31x10xf32, #tpu.memory_space<vmem>>, vector<1x31x10xf32>
    %1313 = vector.shape_cast %1312 : vector<1x31x10xf32> to vector<31x10xf32>
    %1314 = vector.extract_strided_slice %1311 {offsets = [0, 0], sizes = [17, 10], strides = [1, 1]} : vector<18x10xf32> to vector<17x10xf32>
    %1315 = tpu.concatenate %0, %1314 in 0 : vector<1x10xf32>, vector<17x10xf32> -> vector<18x10xf32>
    %1316 = vector.extract_strided_slice %1311 {offsets = [1, 0], sizes = [17, 10], strides = [1, 1]} : vector<18x10xf32> to vector<17x10xf32>
    %1317 = tpu.concatenate %1316, %0 in 0 : vector<17x10xf32>, vector<1x10xf32> -> vector<18x10xf32>
    %1318 = tpu.concatenate %1315, %1311, %1317, %1 in 1 : vector<18x10xf32>, vector<18x10xf32>, vector<18x10xf32>, vector<18x1xf32> -> vector<18x31xf32>
    %cst_627 = arith.constant dense<0.000000e+00> : vector<18x10xf32>
    %1319 = tpu.matmul %1318, %1313, %cst_627 {dimension_numbers = #tpu.dot_dimension_numbers<[1], [0], [0], [1], [0, 0, 1, 1], [], []>} : vector<18x31xf32>, vector<31x10xf32>, vector<18x10xf32> -> vector<18x10xf32>
    %c34_628 = arith.constant 34 : index
    %c0_629 = arith.constant 0 : index
    %c0_630 = arith.constant 0 : index
    %c0_631 = arith.constant 0 : index
    %1320 = vector.load %arg2[%c34_628, %c0_629, %c0_630, %c0_631] : memref<36x2x18x1xf32, #tpu.memory_space<vmem>>, vector<1x1x18x1xf32>
    %1321 = vector.shape_cast %1320 : vector<1x1x18x1xf32> to vector<18x1xf32>
    %c34_632 = arith.constant 34 : index
    %c1_633 = arith.constant 1 : index
    %c0_634 = arith.constant 0 : index
    %c0_635 = arith.constant 0 : index
    %1322 = vector.load %arg2[%c34_632, %c1_633, %c0_634, %c0_635] : memref<36x2x18x1xf32, #tpu.memory_space<vmem>>, vector<1x1x18x1xf32>
    %1323 = vector.shape_cast %1322 : vector<1x1x18x1xf32> to vector<18x1xf32>
    %cst_636 = arith.constant dense<0.000000e+00> : vector<18xf32>
    %1324 = vector.multi_reduction <add>, %1319, %cst_636 [1] : vector<18x10xf32> to vector<18xf32>
    %1325 = vector.shape_cast %1324 : vector<18xf32> to vector<18x1xf32>
    %1326 = arith.mulf %1319, %1319 : vector<18x10xf32>
    %cst_637 = arith.constant dense<0.000000e+00> : vector<18xf32>
    %1327 = vector.multi_reduction <add>, %1326, %cst_637 [1] : vector<18x10xf32> to vector<18xf32>
    %1328 = vector.shape_cast %1327 : vector<18xf32> to vector<18x1xf32>
    %cst_638 = arith.constant 1.000000e-01 : f32
    %1329 = vector.broadcast %cst_638 : f32 to vector<18x1xf32>
    %1330 = arith.mulf %1325, %1329 : vector<18x1xf32>
    %cst_639 = arith.constant 1.000000e-01 : f32
    %1331 = vector.broadcast %cst_639 : f32 to vector<18x1xf32>
    %1332 = arith.mulf %1328, %1331 : vector<18x1xf32>
    %1333 = arith.mulf %1330, %1330 : vector<18x1xf32>
    %1334 = arith.subf %1332, %1333 : vector<18x1xf32>
    %cst_640 = arith.constant 0.000000e+00 : f32
    %1335 = vector.broadcast %cst_640 : f32 to vector<18x1xf32>
    %1336 = arith.maximumf %1334, %1335 : vector<18x1xf32>
    %cst_641 = arith.constant 9.99999974E-6 : f32
    %1337 = vector.broadcast %cst_641 : f32 to vector<18x1xf32>
    %1338 = arith.addf %1336, %1337 : vector<18x1xf32>
    %1339 = math.rsqrt %1338 : vector<18x1xf32>
    %1340 = arith.mulf %1321, %1339 : vector<18x1xf32>
    %1341 = arith.mulf %1330, %1340 : vector<18x1xf32>
    %1342 = arith.subf %1323, %1341 : vector<18x1xf32>
    %1343 = vector.broadcast %1340 : vector<18x1xf32> to vector<18x10xf32>
    %1344 = arith.mulf %1319, %1343 : vector<18x10xf32>
    %1345 = vector.broadcast %1342 : vector<18x1xf32> to vector<18x10xf32>
    %1346 = arith.addf %1344, %1345 : vector<18x10xf32>
    %cst_642 = arith.constant 0.000000e+00 : f32
    %1347 = vector.broadcast %cst_642 : f32 to vector<18x10xf32>
    %1348 = arith.maximumf %1346, %1347 : vector<18x10xf32>
    %c35 = arith.constant 35 : index
    %c0_643 = arith.constant 0 : index
    %c0_644 = arith.constant 0 : index
    %1349 = vector.load %arg1[%c35, %c0_643, %c0_644] : memref<36x31x10xf32, #tpu.memory_space<vmem>>, vector<1x31x10xf32>
    %1350 = vector.shape_cast %1349 : vector<1x31x10xf32> to vector<31x10xf32>
    %1351 = vector.extract_strided_slice %1348 {offsets = [0, 0], sizes = [17, 10], strides = [1, 1]} : vector<18x10xf32> to vector<17x10xf32>
    %1352 = tpu.concatenate %0, %1351 in 0 : vector<1x10xf32>, vector<17x10xf32> -> vector<18x10xf32>
    %1353 = vector.extract_strided_slice %1348 {offsets = [1, 0], sizes = [17, 10], strides = [1, 1]} : vector<18x10xf32> to vector<17x10xf32>
    %1354 = tpu.concatenate %1353, %0 in 0 : vector<17x10xf32>, vector<1x10xf32> -> vector<18x10xf32>
    %1355 = tpu.concatenate %1352, %1348, %1354, %1 in 1 : vector<18x10xf32>, vector<18x10xf32>, vector<18x10xf32>, vector<18x1xf32> -> vector<18x31xf32>
    %cst_645 = arith.constant dense<0.000000e+00> : vector<18x10xf32>
    %1356 = tpu.matmul %1355, %1350, %cst_645 {dimension_numbers = #tpu.dot_dimension_numbers<[1], [0], [0], [1], [0, 0, 1, 1], [], []>} : vector<18x31xf32>, vector<31x10xf32>, vector<18x10xf32> -> vector<18x10xf32>
    %c35_646 = arith.constant 35 : index
    %c0_647 = arith.constant 0 : index
    %c0_648 = arith.constant 0 : index
    %c0_649 = arith.constant 0 : index
    %1357 = vector.load %arg2[%c35_646, %c0_647, %c0_648, %c0_649] : memref<36x2x18x1xf32, #tpu.memory_space<vmem>>, vector<1x1x18x1xf32>
    %1358 = vector.shape_cast %1357 : vector<1x1x18x1xf32> to vector<18x1xf32>
    %c35_650 = arith.constant 35 : index
    %c1_651 = arith.constant 1 : index
    %c0_652 = arith.constant 0 : index
    %c0_653 = arith.constant 0 : index
    %1359 = vector.load %arg2[%c35_650, %c1_651, %c0_652, %c0_653] : memref<36x2x18x1xf32, #tpu.memory_space<vmem>>, vector<1x1x18x1xf32>
    %1360 = vector.shape_cast %1359 : vector<1x1x18x1xf32> to vector<18x1xf32>
    %cst_654 = arith.constant dense<0.000000e+00> : vector<18xf32>
    %1361 = vector.multi_reduction <add>, %1356, %cst_654 [1] : vector<18x10xf32> to vector<18xf32>
    %1362 = vector.shape_cast %1361 : vector<18xf32> to vector<18x1xf32>
    %1363 = arith.mulf %1356, %1356 : vector<18x10xf32>
    %cst_655 = arith.constant dense<0.000000e+00> : vector<18xf32>
    %1364 = vector.multi_reduction <add>, %1363, %cst_655 [1] : vector<18x10xf32> to vector<18xf32>
    %1365 = vector.shape_cast %1364 : vector<18xf32> to vector<18x1xf32>
    %cst_656 = arith.constant 1.000000e-01 : f32
    %1366 = vector.broadcast %cst_656 : f32 to vector<18x1xf32>
    %1367 = arith.mulf %1362, %1366 : vector<18x1xf32>
    %cst_657 = arith.constant 1.000000e-01 : f32
    %1368 = vector.broadcast %cst_657 : f32 to vector<18x1xf32>
    %1369 = arith.mulf %1365, %1368 : vector<18x1xf32>
    %1370 = arith.mulf %1367, %1367 : vector<18x1xf32>
    %1371 = arith.subf %1369, %1370 : vector<18x1xf32>
    %cst_658 = arith.constant 0.000000e+00 : f32
    %1372 = vector.broadcast %cst_658 : f32 to vector<18x1xf32>
    %1373 = arith.maximumf %1371, %1372 : vector<18x1xf32>
    %cst_659 = arith.constant 9.99999974E-6 : f32
    %1374 = vector.broadcast %cst_659 : f32 to vector<18x1xf32>
    %1375 = arith.addf %1373, %1374 : vector<18x1xf32>
    %1376 = math.rsqrt %1375 : vector<18x1xf32>
    %1377 = arith.mulf %1358, %1376 : vector<18x1xf32>
    %1378 = arith.mulf %1367, %1377 : vector<18x1xf32>
    %1379 = arith.subf %1360, %1378 : vector<18x1xf32>
    %1380 = vector.broadcast %1377 : vector<18x1xf32> to vector<18x10xf32>
    %1381 = arith.mulf %1356, %1380 : vector<18x10xf32>
    %1382 = vector.broadcast %1379 : vector<18x1xf32> to vector<18x10xf32>
    %1383 = arith.addf %1381, %1382 : vector<18x10xf32>
    %1384 = arith.addf %1383, %1311 : vector<18x10xf32>
    %cst_660 = arith.constant 0.000000e+00 : f32
    %1385 = vector.broadcast %cst_660 : f32 to vector<18x10xf32>
    %1386 = arith.maximumf %1384, %1385 : vector<18x10xf32>
    %cst_661 = arith.constant dense<0.000000e+00> : vector<18x1xf32>
    %1387 = tpu.matmul %1386, %6, %cst_661 {dimension_numbers = #tpu.dot_dimension_numbers<[1], [0], [0], [1], [0, 0, 1, 1], [], []>} : vector<18x10xf32>, vector<10x1xf32>, vector<18x1xf32> -> vector<18x1xf32>
    %cst_662 = arith.constant dense<0.000000e+00> : vector<10x1xf32>
    %1388 = tpu.matmul %7, %1387, %cst_662 {dimension_numbers = #tpu.dot_dimension_numbers<[1], [0], [0], [1], [0, 0, 1, 1], [], []>} : vector<10x18xf32>, vector<18x1xf32>, vector<10x1xf32> -> vector<10x1xf32>
    %1389 = arith.addf %1388, %8 : vector<10x1xf32>
    %c0_663 = arith.constant 0 : index
    %c0_664 = arith.constant 0 : index
    %1390 = vector.load %arg4[%c0_663, %c0_664] : memref<10x1xf32, #tpu.memory_space<vmem>>, vector<10x1xf32>
    tpu.vector_store %arg4[%c0_663, %c0_664], %1389 {strides = array<i32>} : memref<10x1xf32, #tpu.memory_space<vmem>>, vector<10x1xf32>,
    return
  }
}

</mosaic_0001>

<llo_original>
// kernel: resnet_forward.1
$region0: #{resnet_forward.1}
  #allocation0 [shape = 'u32[]', space=smem, size = 0x4, offset = 0x4, fixed_abs, tag = 'smem constant byte address 0x4 - core index']
  #allocation1 [shape = 'u32[144,128]{1,0:T(1,128)}', space=vmem, size = 0x12000, scoped, tag = 'internal scratch']
  %s0 = inlined_call_operand.vmem [shape: f32[18,10], index: 0, kind: input, shape index: {}]
  %s1 = inlined_call_operand.vmem [shape: f32[36,31,10], index: 1, kind: input, shape index: {}]
  %s2 = inlined_call_operand.vmem [shape: f32[36,2,18,1], index: 2, kind: input, shape index: {}]
  %s3 = inlined_call_operand.vmem [shape: f32[18,32], index: 3, kind: input, shape index: {}]
  %s4 = inlined_call_operand.vmem [shape: f32[10,1], index: 4, kind: output, shape index: {}]
  %s5 = sld [smem:[#allocation0]]
  $region26: #{resnet_forward.1} parent=0
    _
  %s7 = ssub.s32 1, %s5
  %s8 = scalar_select 0, %s7, %s5
  // Predicated region
  $region2: #{resnet_forward.1} parent=0 // pred_check
    _
  $region3: #{resnet_forward.1} parent=0 // pred_check_branch
    %10 = sbr.rel (0) target = $region5
  $region4: #{resnet_forward.1} parent=0 // pred_region
    _
  $region5: #{resnet_forward.1} parent=0 // pred_fallthru
    _
  // Predicated region
  $region6: #{resnet_forward.1} parent=0 // pred_check
    _
  $region7: #{resnet_forward.1} parent=0 // pred_check_branch
    %12 = sbr.rel (0) target = $region9
  $region8: #{resnet_forward.1} parent=0 // pred_region
    _
  $region9: #{resnet_forward.1} parent=0 // pred_fallthru
    _
  // Predicated region
  $region10: #{resnet_forward.1} parent=0 // pred_check
    _
  $region11: #{resnet_forward.1} parent=0 // pred_check_branch
    %14 = sbr.rel (0) target = $region13
  $region12: #{resnet_forward.1} parent=0 // pred_region
    _
  $region13: #{resnet_forward.1} parent=0 // pred_fallthru
    _
  // Predicated region
  $region14: #{resnet_forward.1} parent=0 // pred_check
    _
  $region15: #{resnet_forward.1} parent=0 // pred_check_branch
    %16 = sbr.rel (0) target = $region17
  $region16: #{resnet_forward.1} parent=0 // pred_region
    _
  $region17: #{resnet_forward.1} parent=0 // pred_fallthru
    _
  %v17 = vld [vmem:[%s3] sm:$0xff]
  %v18 = vld [vmem:[%s3 + $0x8] sm:$0xff]
  %v19 = vld [vmem:[%s3 + $0x10] sm:$0x3]
  %v20 = vld [vmem:[%s0] sm:$0xff]
  %v21 = vld [vmem:[%s0 + $0x8] sm:$0xff]
  %v22 = vld [vmem:[%s0 + $0x10] sm:$0x3]
  %vm23 = vcmask 80896
  %v24 = vsel %vm23, %v20, 1.0
  %v25 = vsel %vm23, %v21, 1.0
  %v26 = vsel %vm23, %v22, 1.0
  %vm27 = vcmask 89088
  %v29 = vsel %vm27, %v24, 0
  %v32 = vsel %vm27, %v25, 0
  %v35 = vsel %vm27, %v26, 0
  %vm37 = vcmask 1042432
  %v39 = vsel %vm37, %v18, 0
  %41 = vmatprep.subr.mxu0 0.0
  %42 = vmatpush1.msra.mxu0 0.0
  %43 = vmatprep.subr.mxu0 0.0
  %44 = vmatpush1.msra.mxu0 0.0
  %45 = vmatprep.subr.mxu0 0.0
  %46 = vmatpush1.msra.mxu0 0.0
  %47 = vmatprep.subr.mxu0 0.0
  %48 = vmatpush1.msra.mxu0 0.0
  %49 = vmatprep.subr.mxu0 0.0
  %50 = vmatpush1.msra.mxu0 0.0
  %51 = vmatprep.subr.mxu0 0.0
  %52 = vmatpush1.msra.mxu0 0.0
  %53 = vmatprep.subr.mxu0 0.0
  %54 = vmatpush1.msra.mxu0 0.0
  %55 = vmatprep.subr.mxu0 0.0
  %56 = vmatpush1.msra.mxu0 0.0
  %57 = vmatprep.subr.mxu0 0.0
  %58 = vmatpush1.msra.mxu0 0.0
  %59 = vmatprep.subr.mxu0 0.0
  %60 = vmatpush1.msra.mxu0 0.0
  %61 = vmatprep.subr.mxu0 0.0
  %62 = vmatpush1.msra.mxu0 0.0
  %63 = vmatprep.subr.mxu0 0.0
  %64 = vmatpush1.msra.mxu0 0.0
  %65 = vmatprep.subr.mxu0 0.0
  %66 = vmatpush1.msra.mxu0 0.0
  %67 = vmatprep.subr.mxu0 0.0
  %68 = vmatpush1.msra.mxu0 0.0
  %69 = vmatprep.subr.mxu0 0.0
  %70 = vmatpush1.msra.mxu0 %v39
  %71 = vmatprep.subr.mxu0 0.0
  %72 = vmatpush1.msra.mxu0 %v17
  %73 = vmatprep.subr.mxu0 0.0
  %74 = vmatpush2.msra.mxu0 0.0
  %75 = vmatprep.subr.mxu0 0.0
  %76 = vmatpush2.msra.mxu0 0.0
  %77 = vmatprep.subr.mxu0 0.0
  %78 = vmatpush2.msra.mxu0 0.0
  %79 = vmatprep.subr.mxu0 0.0
  %80 = vmatpush2.msra.mxu0 0.0
  %81 = vmatprep.subr.mxu0 0.0
  %82 = vmatpush2.msra.mxu0 0.0
  %83 = vmatprep.subr.mxu0 0.0
  %84 = vmatpush2.msra.mxu0 0.0
  %85 = vmatprep.subr.mxu0 0.0
  %86 = vmatpush2.msra.mxu0 0.0
  %87 = vmatprep.subr.mxu0 0.0
  %88 = vmatpush2.msra.mxu0 0.0
  %89 = vmatprep.subr.mxu0 0.0
  %90 = vmatpush2.msra.mxu0 0.0
  %91 = vmatprep.subr.mxu0 0.0
  %92 = vmatpush2.msra.mxu0 0.0
  %93 = vmatprep.subr.mxu0 0.0
  %94 = vmatpush2.msra.mxu0 0.0
  %95 = vmatprep.subr.mxu0 0.0
  %96 = vmatpush2.msra.mxu0 0.0
  %97 = vmatprep.subr.mxu0 0.0
  %98 = vmatpush2.msra.mxu0 0.0
  %99 = vmatprep.subr.mxu0 0.0
  %100 = vmatpush2.msra.mxu0 0.0
  %101 = vmatprep.subr.mxu0 0.0
  %102 = vmatpush2.msra.mxu0 0.0
  %103 = vmatprep.subr.mxu0 0.0
  %104 = vmatpush2.msra.mxu0 0.0
  %105 = vmatprep.mubr.f32.mxu0 0.0
  %106 = vmatmul.mubr.f32.gmra.mxu0 %v29
  %v107 = vpop.f32.mrf.mxu0
  %v108 = vadd.f32 0.0, %v107
  %v109 = vpop.f32.mrf.mxu0
  %110 = vmatprep.mubr.f32.mxu0 0.0
  %111 = vmatmul.mubr.f32.gmra.mxu0 %v32
  %v112 = vpop.f32.mrf.mxu0
  %v113 = vadd.f32 0.0, %v112
  %v114 = vpop.f32.mrf.mxu0
  %115 = vmatprep.mubr.f32.mxu0 0.0
  %116 = vmatmul.mubr.f32.gmra.mxu0 %v35
  %v117 = vpop.f32.mrf.mxu0
  %v118 = vadd.f32 0.0, %v117
  %v119 = vpop.f32.mrf.mxu0
  %120 = vdwg.mxu0
  %v121 = vsel %vm23, %v108, 0.0
  %122 = vadd.xlane.f32.xlu0 %v121
  %v123 = vpop.xlane.xlu0 %122
  %v124 = vsel %vm23, %v113, 0.0
  %125 = vadd.xlane.f32.xlu0 %v124
  %v126 = vpop.xlane.xlu0 %125
  %vm127 = vcmask 74752
  %v128 = vsel %vm127, %v118, 0.0
  %129 = vadd.xlane.f32.xlu0 %v128
  %v130 = vpop.xlane.xlu0 %129
  %v131 = vmul.f32 %v108, %v108
  %v132 = vmul.f32 %v113, %v113
  %v133 = vmul.f32 %v118, %v118
  %v134 = vsel %vm23, %v131, 0.0
  %135 = vadd.xlane.f32.xlu0 %v134
  %v136 = vpop.xlane.xlu0 %135
  %v137 = vsel %vm23, %v132, 0.0
  %138 = vadd.xlane.f32.xlu0 %v137
  %v139 = vpop.xlane.xlu0 %138
  %v140 = vsel %vm127, %v133, 0.0
  %141 = vadd.xlane.f32.xlu0 %v140
  %v142 = vpop.xlane.xlu0 %141
  %v143 = vmul.f32 %v123, 0.1
  %v144 = vmul.f32 %v126, 0.1
  %v145 = vmul.f32 %v130, 0.1
  %v146 = vmul.f32 %v136, 0.1
  %v147 = vmul.f32 %v139, 0.1
  %v148 = vmul.f32 %v142, 0.1
  %v149 = vmul.f32 %v143, %v143
  %v150 = vmul.f32 %v144, %v144
  %v151 = vmul.f32 %v145, %v145
  %v152 = vsub.f32 %v146, %v149
  %v153 = vsub.f32 %v147, %v150
  %v154 = vsub.f32 %v148, %v151
  %v155 = vmax.f32 %v152, 0.0
  %v156 = vmax.f32 %v153, 0.0
  %v157 = vmax.f32 %v154, 0.0
  %v158 = vadd.f32 %v155, 1e-05
  %v159 = vadd.f32 %v156, 1e-05
  %v160 = vadd.f32 %v157, 1e-05
  %v161 = vrsqrt.pop %v158
  %v162 = vrsqrt.pop %v159
  %v163 = vrsqrt.pop %v160
  %v164 = vmul.f32 %v17, %v161
  %v165 = vmul.f32 %v18, %v162
  %v166 = vmul.f32 %v19, %v163
  %v167 = vmul.f32 %v143, %v164
  %v168 = vmul.f32 %v144, %v165
  %v169 = vmul.f32 %v145, %v166
  %173 = vrot.lane.b32.xlu0 %v167, 1
  %v174 = vpop.permute.xlu0 %173
  %175 = vrot.lane.b32.xlu0 %v168, 1
  %v176 = vpop.permute.xlu0 %175
  %177 = vrot.lane.b32.xlu0 %v169, 1
  %v178 = vpop.permute.xlu0 %177
  %v182 = vsub.f32 %v17, %v174
  %v183 = vsub.f32 %v18, %v176
  %v184 = vsub.f32 %v19, %v178
  %186 = vset.pattern.permute.xlu0 10
  %187 = vperm.xlu0 %186, %v164
  %v188 = vpop.permute.xlu0 %187
  %191 = vset.pattern.permute.xlu0 10
  %192 = vperm.xlu0 %191, %v165
  %v193 = vpop.permute.xlu0 %192
  %196 = vset.pattern.permute.xlu0 10
  %197 = vperm.xlu0 %196, %v166
  %v198 = vpop.permute.xlu0 %197
  %v200 = vmul.f32 %v108, %v188
  %v201 = vmul.f32 %v113, %v193
  %v202 = vmul.f32 %v118, %v198
  %204 = vset.pattern.permute.xlu0 11
  %205 = vperm.xlu0 %204, %v182
  %v206 = vpop.permute.xlu0 %205
  %209 = vset.pattern.permute.xlu0 11
  %210 = vperm.xlu0 %209, %v183
  %v211 = vpop.permute.xlu0 %210
  %214 = vset.pattern.permute.xlu0 11
  %215 = vperm.xlu0 %214, %v184
  %v216 = vpop.permute.xlu0 %215
  %v218 = vadd.f32 %v200, %v206
  %v219 = vadd.f32 %v201, %v211
  %v220 = vadd.f32 %v202, %v216
  %v221 = vmax.f32 %v218, 0.0
  %v222 = vmax.f32 %v219, 0.0
  %v223 = vmax.f32 %v220, 0.0
  %v224 = vld [vmem:[%s1] sm:$0xff]
  %v225 = vld [vmem:[%s1 + $0x8] sm:$0xff]
  %v226 = vld [vmem:[%s1 + $0x10] sm:$0xff]
  %v227 = vld [vmem:[%s1 + $0x18] sm:$0x7f]
  %vm231 = vcmask 1040384
  %v232 = vrot.slane %v221, 7
  %v233 = vrot.slane %v222, 7
  %v234 = vsel %vm231, %v232, %v233
  %v235 = vrot.slane %v223, 7
  %v236 = vsel %vm231, %v233, %v235
  %v240 = vsel %vm231, 0.0, %v232
  %vm241 = vcmask 1046528
  %v242 = vrot.slane %v221, 1
  %v243 = vrot.slane %v222, 1
  %v244 = vsel %vm241, %v242, %v243
  %v245 = vrot.slane %v223, 1
  %v246 = vsel %vm241, %v243, %v245
  %v248 = vsel %vm231, %v245, 0.0
  %249 = vrot.lane.b32.xlu0 %v221, 10
  %v250 = vpop.permute.xlu0 %249
  %251 = vrot.lane.b32.xlu0 %v222, 10
  %v252 = vpop.permute.xlu0 %251
  %253 = vrot.lane.b32.xlu0 %v223, 10
  %v254 = vpop.permute.xlu0 %253
  %259 = vrot.lane.b32.xlu0 %v244, 20
  %v260 = vpop.permute.xlu0 %259
  %261 = vrot.lane.b32.xlu0 %v246, 20
  %v262 = vpop.permute.xlu0 %261
  %263 = vrot.lane.b32.xlu0 %v248, 20
  %v264 = vpop.permute.xlu0 %263
  %v268 = vsel %vm23, %v240, %v250
  %v269 = vsel %vm23, %v234, %v252
  %v270 = vsel %vm23, %v236, %v254
  %vm271 = vcmask 162816
  %v272 = vsel %vm271, %v268, %v260
  %v273 = vsel %vm271, %v269, %v262
  %v274 = vsel %vm271, %v270, %v264
  %vm275 = vcmask 244736
  %v276 = vsel %vm275, %v272, 1.0
  %v277 = vsel %vm275, %v273, 1.0
  %v278 = vsel %vm275, %v274, 1.0
  %vm279 = vcmask 252928
  %v281 = vsel %vm279, %v276, 0
  %v284 = vsel %vm279, %v277, 0
  %v287 = vsel %vm279, %v278, 0
  %v290 = vsel %vm241, %v227, 0
  %292 = vmatprep.subr.mxu0 0.0
  %293 = vmatpush1.msra.mxu0 0.0
  %294 = vmatprep.subr.mxu0 0.0
  %295 = vmatpush1.msra.mxu0 0.0
  %296 = vmatprep.subr.mxu0 0.0
  %297 = vmatpush1.msra.mxu0 0.0
  %298 = vmatprep.subr.mxu0 0.0
  %299 = vmatpush1.msra.mxu0 0.0
  %300 = vmatprep.subr.mxu0 0.0
  %301 = vmatpush1.msra.mxu0 0.0
  %302 = vmatprep.subr.mxu0 0.0
  %303 = vmatpush1.msra.mxu0 0.0
  %304 = vmatprep.subr.mxu0 0.0
  %305 = vmatpush1.msra.mxu0 0.0
  %306 = vmatprep.subr.mxu0 0.0
  %307 = vmatpush1.msra.mxu0 0.0
  %308 = vmatprep.subr.mxu0 0.0
  %309 = vmatpush1.msra.mxu0 0.0
  %310 = vmatprep.subr.mxu0 0.0
  %311 = vmatpush1.msra.mxu0 0.0
  %312 = vmatprep.subr.mxu0 0.0
  %313 = vmatpush1.msra.mxu0 0.0
  %314 = vmatprep.subr.mxu0 0.0
  %315 = vmatpush1.msra.mxu0 0.0
  %316 = vmatprep.subr.mxu0 0.0
  %317 = vmatpush1.msra.mxu0 %v290
  %318 = vmatprep.subr.mxu0 0.0
  %319 = vmatpush1.msra.mxu0 %v226
  %320 = vmatprep.subr.mxu0 0.0
  %321 = vmatpush1.msra.mxu0 %v225
  %322 = vmatprep.subr.mxu0 0.0
  %323 = vmatpush1.msra.mxu0 %v224
  %324 = vmatprep.subr.mxu0 0.0
  %325 = vmatpush2.msra.mxu0 0.0
  %326 = vmatprep.subr.mxu0 0.0
  %327 = vmatpush2.msra.mxu0 0.0
  %328 = vmatprep.subr.mxu0 0.0
  %329 = vmatpush2.msra.mxu0 0.0
  %330 = vmatprep.subr.mxu0 0.0
  %331 = vmatpush2.msra.mxu0 0.0
  %332 = vmatprep.subr.mxu0 0.0
  %333 = vmatpush2.msra.mxu0 0.0
  %334 = vmatprep.subr.mxu0 0.0
  %335 = vmatpush2.msra.mxu0 0.0
  %336 = vmatprep.subr.mxu0 0.0
  %337 = vmatpush2.msra.mxu0 0.0
  %338 = vmatprep.subr.mxu0 0.0
  %339 = vmatpush2.msra.mxu0 0.0
  %340 = vmatprep.subr.mxu0 0.0
  %341 = vmatpush2.msra.mxu0 0.0
  %342 = vmatprep.subr.mxu0 0.0
  %343 = vmatpush2.msra.mxu0 0.0
  %344 = vmatprep.subr.mxu0 0.0
  %345 = vmatpush2.msra.mxu0 0.0
  %346 = vmatprep.subr.mxu0 0.0
  %347 = vmatpush2.msra.mxu0 0.0
  %348 = vmatprep.subr.mxu0 0.0
  %349 = vmatpush2.msra.mxu0 0.0
  %350 = vmatprep.subr.mxu0 0.0
  %351 = vmatpush2.msra.mxu0 0.0
  %352 = vmatprep.subr.mxu0 0.0
  %353 = vmatpush2.msra.mxu0 0.0
  %354 = vmatprep.subr.mxu0 0.0
  %355 = vmatpush2.msra.mxu0 0.0
  %356 = vmatprep.mubr.f32.mxu0 0.0
  %357 = vmatmul.mubr.f32.gmra.mxu0 %v281
  %v358 = vpop.f32.mrf.mxu0
  %v359 = vadd.f32 0.0, %v358
  %v360 = vpop.f32.mrf.mxu0
  %361 = vmatprep.mubr.f32.mxu0 0.0
  %362 = vmatmul.mubr.f32.gmra.mxu0 %v284
  %v363 = vpop.f32.mrf.mxu0
  %v364 = vadd.f32 0.0, %v363
  %v365 = vpop.f32.mrf.mxu0
  %366 = vmatprep.mubr.f32.mxu0 0.0
  %367 = vmatmul.mubr.f32.gmra.mxu0 %v287
  %v368 = vpop.f32.mrf.mxu0
  %v369 = vadd.f32 0.0, %v368
  %v370 = vpop.f32.mrf.mxu0
  %371 = vdwg.mxu0
  %v372 = vld [vmem:[%s2] sm:$0xff]
  %v373 = vld [vmem:[%s2 + $0x8] sm:$0xff]
  %v374 = vld [vmem:[%s2 + $0x10] sm:$0x3]
  %s375 = scalar_lea.vmem %s2, 24
  %v376 = vld [vmem:[%s375] sm:$0xff]
  %v377 = vld [vmem:[%s375 + $0x8] sm:$0xff]
  %v378 = vld [vmem:[%s375 + $0x10] sm:$0x3]
  %v379 = vsel %vm23, %v359, 0.0
  %380 = vadd.xlane.f32.xlu0 %v379
  %v381 = vpop.xlane.xlu0 %380
  %v382 = vsel %vm23, %v364, 0.0
  %383 = vadd.xlane.f32.xlu0 %v382
  %v384 = vpop.xlane.xlu0 %383
  %v385 = vsel %vm127, %v369, 0.0
  %386 = vadd.xlane.f32.xlu0 %v385
  %v387 = vpop.xlane.xlu0 %386
  %v388 = vmul.f32 %v359, %v359
  %v389 = vmul.f32 %v364, %v364
  %v390 = vmul.f32 %v369, %v369
  %v391 = vsel %vm23, %v388, 0.0
  %392 = vadd.xlane.f32.xlu0 %v391
  %v393 = vpop.xlane.xlu0 %392
  %v394 = vsel %vm23, %v389, 0.0
  %395 = vadd.xlane.f32.xlu0 %v394
  %v396 = vpop.xlane.xlu0 %395
  %v397 = vsel %vm127, %v390, 0.0
  %398 = vadd.xlane.f32.xlu0 %v397
  %v399 = vpop.xlane.xlu0 %398
  %v400 = vmul.f32 %v381, 0.1
  %v401 = vmul.f32 %v384, 0.1
  %v402 = vmul.f32 %v387, 0.1
  %v403 = vmul.f32 %v393, 0.1
  %v404 = vmul.f32 %v396, 0.1
  %v405 = vmul.f32 %v399, 0.1
  %v406 = vmul.f32 %v400, %v400
  %v407 = vmul.f32 %v401, %v401
  %v408 = vmul.f32 %v402, %v402
  %v409 = vsub.f32 %v403, %v406
  %v410 = vsub.f32 %v404, %v407
  %v411 = vsub.f32 %v405, %v408
  %v412 = vmax.f32 %v409, 0.0
  %v413 = vmax.f32 %v410, 0.0
  %v414 = vmax.f32 %v411, 0.0
  %v415 = vadd.f32 %v412, 1e-05
  %v416 = vadd.f32 %v413, 1e-05
  %v417 = vadd.f32 %v414, 1e-05
  %v418 = vrsqrt.pop %v415
  %v419 = vrsqrt.pop %v416
  %v420 = vrsqrt.pop %v417
  %v421 = vmul.f32 %v372, %v418
  %v422 = vmul.f32 %v373, %v419
  %v423 = vmul.f32 %v374, %v420
  %v424 = vmul.f32 %v400, %v421
  %v425 = vmul.f32 %v401, %v422
  %v426 = vmul.f32 %v402, %v423
  %v427 = vsub.f32 %v376, %v424
  %v428 = vsub.f32 %v377, %v425
  %v429 = vsub.f32 %v378, %v426
  %431 = vset.pattern.permute.xlu0 0
  %432 = vperm.xlu0 %431, %v421
  %v433 = vpop.permute.xlu0 %432
  %436 = vset.pattern.permute.xlu0 0
  %437 = vperm.xlu0 %436, %v422
  %v438 = vpop.permute.xlu0 %437
  %441 = vset.pattern.permute.xlu0 0
  %442 = vperm.xlu0 %441, %v423
  %v443 = vpop.permute.xlu0 %442
  %v445 = vmul.f32 %v359, %v433
  %v446 = vmul.f32 %v364, %v438
  %v447 = vmul.f32 %v369, %v443
  %449 = vset.pattern.permute.xlu0 0
  %450 = vperm.xlu0 %449, %v427
  %v451 = vpop.permute.xlu0 %450
  %454 = vset.pattern.permute.xlu0 0
  %455 = vperm.xlu0 %454, %v428
  %v456 = vpop.permute.xlu0 %455
  %459 = vset.pattern.permute.xlu0 0
  %460 = vperm.xlu0 %459, %v429
  %v461 = vpop.permute.xlu0 %460
  %v463 = vadd.f32 %v445, %v451
  %v464 = vadd.f32 %v446, %v456
  %v465 = vadd.f32 %v447, %v461
  %v466 = vmax.f32 %v463, 0.0
  %v467 = vmax.f32 %v464, 0.0
  %v468 = vmax.f32 %v465, 0.0
  %s469 = scalar_lea.vmem %s1, 32
  %v470 = vld [vmem:[%s469] sm:$0xff]
  %v471 = vld [vmem:[%s469 + $0x8] sm:$0xff]
  %v472 = vld [vmem:[%s469 + $0x10] sm:$0xff]
  %v473 = vld [vmem:[%s469 + $0x18] sm:$0x7f]
  %v477 = vrot.slane %v466, 7
  %v478 = vrot.slane %v467, 7
  %v479 = vsel %vm231, %v477, %v478
  %v480 = vrot.slane %v468, 7
  %v481 = vsel %vm231, %v478, %v480
  %v485 = vsel %vm231, 0.0, %v477
  %v486 = vrot.slane %v466, 1
  %v487 = vrot.slane %v467, 1
  %v488 = vsel %vm241, %v486, %v487
  %v489 = vrot.slane %v468, 1
  %v490 = vsel %vm241, %v487, %v489
  %v492 = vsel %vm231, %v489, 0.0
  %493 = vrot.lane.b32.xlu0 %v466, 10
  %v494 = vpop.permute.xlu0 %493
  %495 = vrot.lane.b32.xlu0 %v467, 10
  %v496 = vpop.permute.xlu0 %495
  %497 = vrot.lane.b32.xlu0 %v468, 10
  %v498 = vpop.permute.xlu0 %497
  %503 = vrot.lane.b32.xlu0 %v488, 20
  %v504 = vpop.permute.xlu0 %503
  %505 = vrot.lane.b32.xlu0 %v490, 20
  %v506 = vpop.permute.xlu0 %505
  %507 = vrot.lane.b32.xlu0 %v492, 20
  %v508 = vpop.permute.xlu0 %507
  %v512 = vsel %vm23, %v485, %v494
  %v513 = vsel %vm23, %v479, %v496
  %v514 = vsel %vm23, %v481, %v498
  %v515 = vsel %vm271, %v512, %v504
  %v516 = vsel %vm271, %v513, %v506
  %v517 = vsel %vm271, %v514, %v508
  %v518 = vsel %vm275, %v515, 1.0
  %v519 = vsel %vm275, %v516, 1.0
  %v520 = vsel %vm275, %v517, 1.0
  %v522 = vsel %vm279, %v518, 0
  %v525 = vsel %vm279, %v519, 0
  %v528 = vsel %vm279, %v520, 0
  %v531 = vsel %vm241, %v473, 0
  %533 = vmatprep.subr.mxu0 0.0
  %534 = vmatpush1.msra.mxu0 0.0
  %535 = vmatprep.subr.mxu0 0.0
  %536 = vmatpush1.msra.mxu0 0.0
  %537 = vmatprep.subr.mxu0 0.0
  %538 = vmatpush1.msra.mxu0 0.0
  %539 = vmatprep.subr.mxu0 0.0
  %540 = vmatpush1.msra.mxu0 0.0
  %541 = vmatprep.subr.mxu0 0.0
  %542 = vmatpush1.msra.mxu0 0.0
  %543 = vmatprep.subr.mxu0 0.0
  %544 = vmatpush1.msra.mxu0 0.0
  %545 = vmatprep.subr.mxu0 0.0
  %546 = vmatpush1.msra.mxu0 0.0
  %547 = vmatprep.subr.mxu0 0.0
  %548 = vmatpush1.msra.mxu0 0.0
  %549 = vmatprep.subr.mxu0 0.0
  %550 = vmatpush1.msra.mxu0 0.0
  %551 = vmatprep.subr.mxu0 0.0
  %552 = vmatpush1.msra.mxu0 0.0
  %553 = vmatprep.subr.mxu0 0.0
  %554 = vmatpush1.msra.mxu0 0.0
  %555 = vmatprep.subr.mxu0 0.0
  %556 = vmatpush1.msra.mxu0 0.0
  %557 = vmatprep.subr.mxu0 0.0
  %558 = vmatpush1.msra.mxu0 %v531
  %559 = vmatprep.subr.mxu0 0.0
  %560 = vmatpush1.msra.mxu0 %v472
  %561 = vmatprep.subr.mxu0 0.0
  %562 = vmatpush1.msra.mxu0 %v471
  %563 = vmatprep.subr.mxu0 0.0
  %564 = vmatpush1.msra.mxu0 %v470
  %565 = vmatprep.subr.mxu0 0.0
  %566 = vmatpush2.msra.mxu0 0.0
  %567 = vmatprep.subr.mxu0 0.0
  %568 = vmatpush2.msra.mxu0 0.0
  %569 = vmatprep.subr.mxu0 0.0
  %570 = vmatpush2.msra.mxu0 0.0
  %571 = vmatprep.subr.mxu0 0.0
  %572 = vmatpush2.msra.mxu0 0.0
  %573 = vmatprep.subr.mxu0 0.0
  %574 = vmatpush2.msra.mxu0 0.0
  %575 = vmatprep.subr.mxu0 0.0
  %576 = vmatpush2.msra.mxu0 0.0
  %577 = vmatprep.subr.mxu0 0.0
  %578 = vmatpush2.msra.mxu0 0.0
  %579 = vmatprep.subr.mxu0 0.0
  %580 = vmatpush2.msra.mxu0 0.0
  %581 = vmatprep.subr.mxu0 0.0
  %582 = vmatpush2.msra.mxu0 0.0
  %583 = vmatprep.subr.mxu0 0.0
  %584 = vmatpush2.msra.mxu0 0.0
  %585 = vmatprep.subr.mxu0 0.0
  %586 = vmatpush2.msra.mxu0 0.0
  %587 = vmatprep.subr.mxu0 0.0
  %588 = vmatpush2.msra.mxu0 0.0
  %589 = vmatprep.subr.mxu0 0.0
  %590 = vmatpush2.msra.mxu0 0.0
  %591 = vmatprep.subr.mxu0 0.0
  %592 = vmatpush2.msra.mxu0 0.0
  %593 = vmatprep.subr.mxu0 0.0
  %594 = vmatpush2.msra.mxu0 0.0
  %595 = vmatprep.subr.mxu0 0.0
  %596 = vmatpush2.msra.mxu0 0.0
  %597 = vmatprep.mubr.f32.mxu0 0.0
  %598 = vmatmul.mubr.f32.gmra.mxu0 %v522
  %v599 = vpop.f32.mrf.mxu0
  %v600 = vadd.f32 0.0, %v599
  %v601 = vpop.f32.mrf.mxu0
  %602 = vmatprep.mubr.f32.mxu0 0.0
  %603 = vmatmul.mubr.f32.gmra.mxu0 %v525
  %v604 = vpop.f32.mrf.mxu0
  %v605 = vadd.f32 0.0, %v604
  %v606 = vpop.f32.mrf.mxu0
  %607 = vmatprep.mubr.f32.mxu0 0.0
  %608 = vmatmul.mubr.f32.gmra.mxu0 %v528
  %v609 = vpop.f32.mrf.mxu0
  %v610 = vadd.f32 0.0, %v609
  %v611 = vpop.f32.mrf.mxu0
  %612 = vdwg.mxu0
  %s613 = scalar_lea.vmem %s2, 48
  %v614 = vld [vmem:[%s613] sm:$0xff]
  %v615 = vld [vmem:[%s613 + $0x8] sm:$0xff]
  %v616 = vld [vmem:[%s613 + $0x10] sm:$0x3]
  %s617 = scalar_lea.vmem %s2, 72
  %v618 = vld [vmem:[%s617] sm:$0xff]
  %v619 = vld [vmem:[%s617 + $0x8] sm:$0xff]
  %v620 = vld [vmem:[%s617 + $0x10] sm:$0x3]
  %v621 = vsel %vm23, %v600, 0.0
  %622 = vadd.xlane.f32.xlu0 %v621
  %v623 = vpop.xlane.xlu0 %622
  %v624 = vsel %vm23, %v605, 0.0
  %625 = vadd.xlane.f32.xlu0 %v624
  %v626 = vpop.xlane.xlu0 %625
  %v627 = vsel %vm127, %v610, 0.0
  %628 = vadd.xlane.f32.xlu0 %v627
  %v629 = vpop.xlane.xlu0 %628
  %v630 = vmul.f32 %v600, %v600
  %v631 = vmul.f32 %v605, %v605
  %v632 = vmul.f32 %v610, %v610
  %v633 = vsel %vm23, %v630, 0.0
  %634 = vadd.xlane.f32.xlu0 %v633
  %v635 = vpop.xlane.xlu0 %634
  %v636 = vsel %vm23, %v631, 0.0
  %637 = vadd.xlane.f32.xlu0 %v636
  %v638 = vpop.xlane.xlu0 %637
  %v639 = vsel %vm127, %v632, 0.0
  %640 = vadd.xlane.f32.xlu0 %v639
  %v641 = vpop.xlane.xlu0 %640
  %v642 = vmul.f32 %v623, 0.1
  %v643 = vmul.f32 %v626, 0.1
  %v644 = vmul.f32 %v629, 0.1
  %v645 = vmul.f32 %v635, 0.1
  %v646 = vmul.f32 %v638, 0.1
  %v647 = vmul.f32 %v641, 0.1
  %v648 = vmul.f32 %v642, %v642
  %v649 = vmul.f32 %v643, %v643
  %v650 = vmul.f32 %v644, %v644
  %v651 = vsub.f32 %v645, %v648
  %v652 = vsub.f32 %v646, %v649
  %v653 = vsub.f32 %v647, %v650
  %v654 = vmax.f32 %v651, 0.0
  %v655 = vmax.f32 %v652, 0.0
  %v656 = vmax.f32 %v653, 0.0
  %v657 = vadd.f32 %v654, 1e-05
  %v658 = vadd.f32 %v655, 1e-05
  %v659 = vadd.f32 %v656, 1e-05
  %v660 = vrsqrt.pop %v657
  %v661 = vrsqrt.pop %v658
  %v662 = vrsqrt.pop %v659
  %v663 = vmul.f32 %v614, %v660
  %v664 = vmul.f32 %v615, %v661
  %v665 = vmul.f32 %v616, %v662
  %v666 = vmul.f32 %v642, %v663
  %v667 = vmul.f32 %v643, %v664
  %v668 = vmul.f32 %v644, %v665
  %v669 = vsub.f32 %v618, %v666
  %v670 = vsub.f32 %v619, %v667
  %v671 = vsub.f32 %v620, %v668
  %673 = vset.pattern.permute.xlu0 0
  %674 = vperm.xlu0 %673, %v663
  %v675 = vpop.permute.xlu0 %674
  %678 = vset.pattern.permute.xlu0 0
  %679 = vperm.xlu0 %678, %v664
  %v680 = vpop.permute.xlu0 %679
  %683 = vset.pattern.permute.xlu0 0
  %684 = vperm.xlu0 %683, %v665
  %v685 = vpop.permute.xlu0 %684
  %v687 = vmul.f32 %v600, %v675
  %v688 = vmul.f32 %v605, %v680
  %v689 = vmul.f32 %v610, %v685
  %691 = vset.pattern.permute.xlu0 0
  %692 = vperm.xlu0 %691, %v669
  %v693 = vpop.permute.xlu0 %692
  %696 = vset.pattern.permute.xlu0 0
  %697 = vperm.xlu0 %696, %v670
  %v698 = vpop.permute.xlu0 %697
  %701 = vset.pattern.permute.xlu0 0
  %702 = vperm.xlu0 %701, %v671
  %v703 = vpop.permute.xlu0 %702
  %v705 = vadd.f32 %v687, %v693
  %v706 = vadd.f32 %v688, %v698
  %v707 = vadd.f32 %v689, %v703
  %v708 = vadd.f32 %v705, %v221
  %v709 = vadd.f32 %v706, %v222
  %v710 = vadd.f32 %v707, %v223
  %v711 = vmax.f32 %v708, 0.0
  %v712 = vmax.f32 %v709, 0.0
  %v713 = vmax.f32 %v710, 0.0
  %s714 = scalar_lea.vmem %s1, 64
  %v715 = vld [vmem:[%s714] sm:$0xff]
  %v716 = vld [vmem:[%s714 + $0x8] sm:$0xff]
  %v717 = vld [vmem:[%s714 + $0x10] sm:$0xff]
  %v718 = vld [vmem:[%s714 + $0x18] sm:$0x7f]
  %v722 = vrot.slane %v711, 7
  %v723 = vrot.slane %v712, 7
  %v724 = vsel %vm231, %v722, %v723
  %v725 = vrot.slane %v713, 7
  %v726 = vsel %vm231, %v723, %v725
  %v730 = vsel %vm231, 0.0, %v722
  %v731 = vrot.slane %v711, 1
  %v732 = vrot.slane %v712, 1
  %v733 = vsel %vm241, %v731, %v732
  %v734 = vrot.slane %v713, 1
  %v735 = vsel %vm241, %v732, %v734
  %v737 = vsel %vm231, %v734, 0.0
  %738 = vrot.lane.b32.xlu0 %v711, 10
  %v739 = vpop.permute.xlu0 %738
  %740 = vrot.lane.b32.xlu0 %v712, 10
  %v741 = vpop.permute.xlu0 %740
  %742 = vrot.lane.b32.xlu0 %v713, 10
  %v743 = vpop.permute.xlu0 %742
  %748 = vrot.lane.b32.xlu0 %v733, 20
  %v749 = vpop.permute.xlu0 %748
  %750 = vrot.lane.b32.xlu0 %v735, 20
  %v751 = vpop.permute.xlu0 %750
  %752 = vrot.lane.b32.xlu0 %v737, 20
  %v753 = vpop.permute.xlu0 %752
  %v757 = vsel %vm23, %v730, %v739
  %v758 = vsel %vm23, %v724, %v741
  %v759 = vsel %vm23, %v726, %v743
  %v760 = vsel %vm271, %v757, %v749
  %v761 = vsel %vm271, %v758, %v751
  %v762 = vsel %vm271, %v759, %v753
  %v763 = vsel %vm275, %v760, 1.0
  %v764 = vsel %vm275, %v761, 1.0
  %v765 = vsel %vm275, %v762, 1.0
  %v767 = vsel %vm279, %v763, 0
  %v770 = vsel %vm279, %v764, 0
  %v773 = vsel %vm279, %v765, 0
  %v776 = vsel %vm241, %v718, 0
  %778 = vmatprep.subr.mxu0 0.0
  %779 = vmatpush1.msra.mxu0 0.0
  %780 = vmatprep.subr.mxu0 0.0
  %781 = vmatpush1.msra.mxu0 0.0
  %782 = vmatprep.subr.mxu0 0.0
  %783 = vmatpush1.msra.mxu0 0.0
  %784 = vmatprep.subr.mxu0 0.0
  %785 = vmatpush1.msra.mxu0 0.0
  %786 = vmatprep.subr.mxu0 0.0
  %787 = vmatpush1.msra.mxu0 0.0
  %788 = vmatprep.subr.mxu0 0.0
  %789 = vmatpush1.msra.mxu0 0.0
  %790 = vmatprep.subr.mxu0 0.0
  %791 = vmatpush1.msra.mxu0 0.0
  %792 = vmatprep.subr.mxu0 0.0
  %793 = vmatpush1.msra.mxu0 0.0
  %794 = vmatprep.subr.mxu0 0.0
  %795 = vmatpush1.msra.mxu0 0.0
  %796 = vmatprep.subr.mxu0 0.0
  %797 = vmatpush1.msra.mxu0 0.0
  %798 = vmatprep.subr.mxu0 0.0
  %799 = vmatpush1.msra.mxu0 0.0
  %800 = vmatprep.subr.mxu0 0.0
  %801 = vmatpush1.msra.mxu0 0.0
  %802 = vmatprep.subr.mxu0 0.0
  %803 = vmatpush1.msra.mxu0 %v776
  %804 = vmatprep.subr.mxu0 0.0
  %805 = vmatpush1.msra.mxu0 %v717
  %806 = vmatprep.subr.mxu0 0.0
  %807 = vmatpush1.msra.mxu0 %v716
  %808 = vmatprep.subr.mxu0 0.0
  %809 = vmatpush1.msra.mxu0 %v715
  %810 = vmatprep.subr.mxu0 0.0
  %811 = vmatpush2.msra.mxu0 0.0
  %812 = vmatprep.subr.mxu0 0.0
  %813 = vmatpush2.msra.mxu0 0.0
  %814 = vmatprep.subr.mxu0 0.0
  %815 = vmatpush2.msra.mxu0 0.0
  %816 = vmatprep.subr.mxu0 0.0
  %817 = vmatpush2.msra.mxu0 0.0
  %818 = vmatprep.subr.mxu0 0.0
  %819 = vmatpush2.msra.mxu0 0.0
  %820 = vmatprep.subr.mxu0 0.0
  %821 = vmatpush2.msra.mxu0 0.0
  %822 = vmatprep.subr.mxu0 0.0
  %823 = vmatpush2.msra.mxu0 0.0
  %824 = vmatprep.subr.mxu0 0.0
  %825 = vmatpush2.msra.mxu0 0.0
  %826 = vmatprep.subr.mxu0 0.0
  %827 = vmatpush2.msra.mxu0 0.0
  %828 = vmatprep.subr.mxu0 0.0
  %829 = vmatpush2.msra.mxu0 0.0
  %830 = vmatprep.subr.mxu0 0.0
  %831 = vmatpush2.msra.mxu0 0.0
  %832 = vmatprep.subr.mxu0 0.0
  %833 = vmatpush2.msra.mxu0 0.0
  %834 = vmatprep.subr.mxu0 0.0
  %835 = vmatpush2.msra.mxu0 0.0
  %836 = vmatprep.subr.mxu0 0.0
  %837 = vmatpush2.msra.mxu0 0.0
  %838 = vmatprep.subr.mxu0 0.0
  %839 = vmatpush2.msra.mxu0 0.0
  %840 = vmatprep.subr.mxu0 0.0
  %841 = vmatpush2.msra.mxu0 0.0
  %842 = vmatprep.mubr.f32.mxu0 0.0
  %843 = vmatmul.mubr.f32.gmra.mxu0 %v767
  %v844 = vpop.f32.mrf.mxu0
  %v845 = vadd.f32 0.0, %v844
  %v846 = vpop.f32.mrf.mxu0
  %847 = vmatprep.mubr.f32.mxu0 0.0
  %848 = vmatmul.mubr.f32.gmra.mxu0 %v770
  %v849 = vpop.f32.mrf.mxu0
  %v850 = vadd.f32 0.0, %v849
  %v851 = vpop.f32.mrf.mxu0
  %852 = vmatprep.mubr.f32.mxu0 0.0
  %853 = vmatmul.mubr.f32.gmra.mxu0 %v773
  %v854 = vpop.f32.mrf.mxu0
  %v855 = vadd.f32 0.0, %v854
  %v856 = vpop.f32.mrf.mxu0
  %857 = vdwg.mxu0
  %s858 = scalar_lea.vmem %s2, 96
  %v859 = vld [vmem:[%s858] sm:$0xff]
  %v860 = vld [vmem:[%s858 + $0x8] sm:$0xff]
  %v861 = vld [vmem:[%s858 + $0x10] sm:$0x3]
  %s862 = scalar_lea.vmem %s2, 120
  %v863 = vld [vmem:[%s862] sm:$0xff]
  %v864 = vld [vmem:[%s862 + $0x8] sm:$0xff]
  %v865 = vld [vmem:[%s862 + $0x10] sm:$0x3]
  %v866 = vsel %vm23, %v845, 0.0
  %867 = vadd.xlane.f32.xlu0 %v866
  %v868 = vpop.xlane.xlu0 %867
  %v869 = vsel %vm23, %v850, 0.0
  %870 = vadd.xlane.f32.xlu0 %v869
  %v871 = vpop.xlane.xlu0 %870
  %v872 = vsel %vm127, %v855, 0.0
  %873 = vadd.xlane.f32.xlu0 %v872
  %v874 = vpop.xlane.xlu0 %873
  %v875 = vmul.f32 %v845, %v845
  %v876 = vmul.f32 %v850, %v850
  %v877 = vmul.f32 %v855, %v855
  %v878 = vsel %vm23, %v875, 0.0
  %879 = vadd.xlane.f32.xlu0 %v878
  %v880 = vpop.xlane.xlu0 %879
  %v881 = vsel %vm23, %v876, 0.0
  %882 = vadd.xlane.f32.xlu0 %v881
  %v883 = vpop.xlane.xlu0 %882
  %v884 = vsel %vm127, %v877, 0.0
  %885 = vadd.xlane.f32.xlu0 %v884
  %v886 = vpop.xlane.xlu0 %885
  %v887 = vmul.f32 %v868, 0.1
  %v888 = vmul.f32 %v871, 0.1
  %v889 = vmul.f32 %v874, 0.1
  %v890 = vmul.f32 %v880, 0.1
  %v891 = vmul.f32 %v883, 0.1
  %v892 = vmul.f32 %v886, 0.1
  %v893 = vmul.f32 %v887, %v887
  %v894 = vmul.f32 %v888, %v888
  %v895 = vmul.f32 %v889, %v889
  %v896 = vsub.f32 %v890, %v893
  %v897 = vsub.f32 %v891, %v894
  %v898 = vsub.f32 %v892, %v895
  %v899 = vmax.f32 %v896, 0.0
  %v900 = vmax.f32 %v897, 0.0
  %v901 = vmax.f32 %v898, 0.0
  %v902 = vadd.f32 %v899, 1e-05
  %v903 = vadd.f32 %v900, 1e-05
  %v904 = vadd.f32 %v901, 1e-05
  %v905 = vrsqrt.pop %v902
  %v906 = vrsqrt.pop %v903
  %v907 = vrsqrt.pop %v904
  %v908 = vmul.f32 %v859, %v905
  %v909 = vmul.f32 %v860, %v906
  %v910 = vmul.f32 %v861, %v907
  %v911 = vmul.f32 %v887, %v908
  %v912 = vmul.f32 %v888, %v909
  %v913 = vmul.f32 %v889, %v910
  %v914 = vsub.f32 %v863, %v911
  %v915 = vsub.f32 %v864, %v912
  %v916 = vsub.f32 %v865, %v913
  %918 = vset.pattern.permute.xlu0 0
  %919 = vperm.xlu0 %918, %v908
  %v920 = vpop.permute.xlu0 %919
  %923 = vset.pattern.permute.xlu0 0
  %924 = vperm.xlu0 %923, %v909
  %v925 = vpop.permute.xlu0 %924
  %928 = vset.pattern.permute.xlu0 0
  %929 = vperm.xlu0 %928, %v910
  %v930 = vpop.permute.xlu0 %929
  %v932 = vmul.f32 %v845, %v920
  %v933 = vmul.f32 %v850, %v925
  %v934 = vmul.f32 %v855, %v930
  %936 = vset.pattern.permute.xlu0 0
  %937 = vperm.xlu0 %936, %v914
  %v938 = vpop.permute.xlu0 %937
  %941 = vset.pattern.permute.xlu0 0
  %942 = vperm.xlu0 %941, %v915
  %v943 = vpop.permute.xlu0 %942
  %946 = vset.pattern.permute.xlu0 0
  %947 = vperm.xlu0 %946, %v916
  %v948 = vpop.permute.xlu0 %947
  %v950 = vadd.f32 %v932, %v938
  %v951 = vadd.f32 %v933, %v943
  %v952 = vadd.f32 %v934, %v948
  %v953 = vmax.f32 %v950, 0.0
  %v954 = vmax.f32 %v951, 0.0
  %v955 = vmax.f32 %v952, 0.0
  %s956 = scalar_lea.vmem %s1, 96
  %v957 = vld [vmem:[%s956] sm:$0xff]
  %v958 = vld [vmem:[%s956 + $0x8] sm:$0xff]
  %v959 = vld [vmem:[%s956 + $0x10] sm:$0xff]
  %v960 = vld [vmem:[%s956 + $0x18] sm:$0x7f]
  %v964 = vrot.slane %v953, 7
  %v965 = vrot.slane %v954, 7
  %v966 = vsel %vm231, %v964, %v965
  %v967 = vrot.slane %v955, 7
  %v968 = vsel %vm231, %v965, %v967
  %v972 = vsel %vm231, 0.0, %v964
  %v973 = vrot.slane %v953, 1
  %v974 = vrot.slane %v954, 1
  %v975 = vsel %vm241, %v973, %v974
  %v976 = vrot.slane %v955, 1
  %v977 = vsel %vm241, %v974, %v976
  %v979 = vsel %vm231, %v976, 0.0
  %980 = vrot.lane.b32.xlu0 %v953, 10
  %v981 = vpop.permute.xlu0 %980
  %982 = vrot.lane.b32.xlu0 %v954, 10
  %v983 = vpop.permute.xlu0 %982
  %984 = vrot.lane.b32.xlu0 %v955, 10
  %v985 = vpop.permute.xlu0 %984
  %990 = vrot.lane.b32.xlu0 %v975, 20
  %v991 = vpop.permute.xlu0 %990
  %992 = vrot.lane.b32.xlu0 %v977, 20
  %v993 = vpop.permute.xlu0 %992
  %994 = vrot.lane.b32.xlu0 %v979, 20
  %v995 = vpop.permute.xlu0 %994
  %v999 = vsel %vm23, %v972, %v981
  %v1000 = vsel %vm23, %v966, %v983
  %v1001 = vsel %vm23, %v968, %v985
  %v1002 = vsel %vm271, %v999, %v991
  %v1003 = vsel %vm271, %v1000, %v993
  %v1004 = vsel %vm271, %v1001, %v995
  %v1005 = vsel %vm275, %v1002, 1.0
  %v1006 = vsel %vm275, %v1003, 1.0
  %v1007 = vsel %vm275, %v1004, 1.0
  %v1009 = vsel %vm279, %v1005, 0
  %v1012 = vsel %vm279, %v1006, 0
  %v1015 = vsel %vm279, %v1007, 0
  %v1018 = vsel %vm241, %v960, 0
  %1020 = vmatprep.subr.mxu0 0.0
  %1021 = vmatpush1.msra.mxu0 0.0
  %1022 = vmatprep.subr.mxu0 0.0
  %1023 = vmatpush1.msra.mxu0 0.0
  %1024 = vmatprep.subr.mxu0 0.0
  %1025 = vmatpush1.msra.mxu0 0.0
  %1026 = vmatprep.subr.mxu0 0.0
  %1027 = vmatpush1.msra.mxu0 0.0
  %1028 = vmatprep.subr.mxu0 0.0
  %1029 = vmatpush1.msra.mxu0 0.0
  %1030 = vmatprep.subr.mxu0 0.0
  %1031 = vmatpush1.msra.mxu0 0.0
  %1032 = vmatprep.subr.mxu0 0.0
  %1033 = vmatpush1.msra.mxu0 0.0
  %1034 = vmatprep.subr.mxu0 0.0
  %1035 = vmatpush1.msra.mxu0 0.0
  %1036 = vmatprep.subr.mxu0 0.0
  %1037 = vmatpush1.msra.mxu0 0.0
  %1038 = vmatprep.subr.mxu0 0.0
  %1039 = vmatpush1.msra.mxu0 0.0
  %1040 = vmatprep.subr.mxu0 0.0
  %1041 = vmatpush1.msra.mxu0 0.0
  %1042 = vmatprep.subr.mxu0 0.0
  %1043 = vmatpush1.msra.mxu0 0.0
  %1044 = vmatprep.subr.mxu0 0.0
  %1045 = vmatpush1.msra.mxu0 %v1018
  %1046 = vmatprep.subr.mxu0 0.0
  %1047 = vmatpush1.msra.mxu0 %v959
  %1048 = vmatprep.subr.mxu0 0.0
  %1049 = vmatpush1.msra.mxu0 %v958
  %1050 = vmatprep.subr.mxu0 0.0
  %1051 = vmatpush1.msra.mxu0 %v957
  %1052 = vmatprep.subr.mxu0 0.0
  %1053 = vmatpush2.msra.mxu0 0.0
  %1054 = vmatprep.subr.mxu0 0.0
  %1055 = vmatpush2.msra.mxu0 0.0
  %1056 = vmatprep.subr.mxu0 0.0
  %1057 = vmatpush2.msra.mxu0 0.0
  %1058 = vmatprep.subr.mxu0 0.0
  %1059 = vmatpush2.msra.mxu0 0.0
  %1060 = vmatprep.subr.mxu0 0.0
  %1061 = vmatpush2.msra.mxu0 0.0
  %1062 = vmatprep.subr.mxu0 0.0
  %1063 = vmatpush2.msra.mxu0 0.0
  %1064 = vmatprep.subr.mxu0 0.0
  %1065 = vmatpush2.msra.mxu0 0.0
  %1066 = vmatprep.subr.mxu0 0.0
  %1067 = vmatpush2.msra.mxu0 0.0
  %1068 = vmatprep.subr.mxu0 0.0
  %1069 = vmatpush2.msra.mxu0 0.0
  %1070 = vmatprep.subr.mxu0 0.0
  %1071 = vmatpush2.msra.mxu0 0.0
  %1072 = vmatprep.subr.mxu0 0.0
  %1073 = vmatpush2.msra.mxu0 0.0
  %1074 = vmatprep.subr.mxu0 0.0
  %1075 = vmatpush2.msra.mxu0 0.0
  %1076 = vmatprep.subr.mxu0 0.0
  %1077 = vmatpush2.msra.mxu0 0.0
  %1078 = vmatprep.subr.mxu0 0.0
  %1079 = vmatpush2.msra.mxu0 0.0
  %1080 = vmatprep.subr.mxu0 0.0
  %1081 = vmatpush2.msra.mxu0 0.0
  %1082 = vmatprep.subr.mxu0 0.0
  %1083 = vmatpush2.msra.mxu0 0.0
  %1084 = vmatprep.mubr.f32.mxu0 0.0
  %1085 = vmatmul.mubr.f32.gmra.mxu0 %v1009
  %v1086 = vpop.f32.mrf.mxu0
  %v1087 = vadd.f32 0.0, %v1086
  %v1088 = vpop.f32.mrf.mxu0
  %1089 = vmatprep.mubr.f32.mxu0 0.0
  %1090 = vmatmul.mubr.f32.gmra.mxu0 %v1012
  %v1091 = vpop.f32.mrf.mxu0
  %v1092 = vadd.f32 0.0, %v1091
  %v1093 = vpop.f32.mrf.mxu0
  %1094 = vmatprep.mubr.f32.mxu0 0.0
  %1095 = vmatmul.mubr.f32.gmra.mxu0 %v1015
  %v1096 = vpop.f32.mrf.mxu0
  %v1097 = vadd.f32 0.0, %v1096
  %v1098 = vpop.f32.mrf.mxu0
  %1099 = vdwg.mxu0
  %s1100 = scalar_lea.vmem %s2, 144
  %v1101 = vld [vmem:[%s1100] sm:$0xff]
  %v1102 = vld [vmem:[%s1100 + $0x8] sm:$0xff]
  %v1103 = vld [vmem:[%s1100 + $0x10] sm:$0x3]
  %s1104 = scalar_lea.vmem %s2, 168
  %v1105 = vld [vmem:[%s1104] sm:$0xff]
  %v1106 = vld [vmem:[%s1104 + $0x8] sm:$0xff]
  %v1107 = vld [vmem:[%s1104 + $0x10] sm:$0x3]
  %v1108 = vsel %vm23, %v1087, 0.0
  %1109 = vadd.xlane.f32.xlu0 %v1108
  %v1110 = vpop.xlane.xlu0 %1109
  %v1111 = vsel %vm23, %v1092, 0.0
  %1112 = vadd.xlane.f32.xlu0 %v1111
  %v1113 = vpop.xlane.xlu0 %1112
  %v1114 = vsel %vm127, %v1097, 0.0
  %1115 = vadd.xlane.f32.xlu0 %v1114
  %v1116 = vpop.xlane.xlu0 %1115
  %v1117 = vmul.f32 %v1087, %v1087
  %v1118 = vmul.f32 %v1092, %v1092
  %v1119 = vmul.f32 %v1097, %v1097
  %v1120 = vsel %vm23, %v1117, 0.0
  %1121 = vadd.xlane.f32.xlu0 %v1120
  %v1122 = vpop.xlane.xlu0 %1121
  %v1123 = vsel %vm23, %v1118, 0.0
  %1124 = vadd.xlane.f32.xlu0 %v1123
  %v1125 = vpop.xlane.xlu0 %1124
  %v1126 = vsel %vm127, %v1119, 0.0
  %1127 = vadd.xlane.f32.xlu0 %v1126
  %v1128 = vpop.xlane.xlu0 %1127
  %v1129 = vmul.f32 %v1110, 0.1
  %v1130 = vmul.f32 %v1113, 0.1
  %v1131 = vmul.f32 %v1116, 0.1
  %v1132 = vmul.f32 %v1122, 0.1
  %v1133 = vmul.f32 %v1125, 0.1
  %v1134 = vmul.f32 %v1128, 0.1
  %v1135 = vmul.f32 %v1129, %v1129
  %v1136 = vmul.f32 %v1130, %v1130
  %v1137 = vmul.f32 %v1131, %v1131
  %v1138 = vsub.f32 %v1132, %v1135
  %v1139 = vsub.f32 %v1133, %v1136
  %v1140 = vsub.f32 %v1134, %v1137
  %v1141 = vmax.f32 %v1138, 0.0
  %v1142 = vmax.f32 %v1139, 0.0
  %v1143 = vmax.f32 %v1140, 0.0
  %v1144 = vadd.f32 %v1141, 1e-05
  %v1145 = vadd.f32 %v1142, 1e-05
  %v1146 = vadd.f32 %v1143, 1e-05
  %v1147 = vrsqrt.pop %v1144
  %v1148 = vrsqrt.pop %v1145
  %v1149 = vrsqrt.pop %v1146
  %v1150 = vmul.f32 %v1101, %v1147
  %v1151 = vmul.f32 %v1102, %v1148
  %v1152 = vmul.f32 %v1103, %v1149
  %v1153 = vmul.f32 %v1129, %v1150
  %v1154 = vmul.f32 %v1130, %v1151
  %v1155 = vmul.f32 %v1131, %v1152
  %v1156 = vsub.f32 %v1105, %v1153
  %v1157 = vsub.f32 %v1106, %v1154
  %v1158 = vsub.f32 %v1107, %v1155
  %1160 = vset.pattern.permute.xlu0 0
  %1161 = vperm.xlu0 %1160, %v1150
  %v1162 = vpop.permute.xlu0 %1161
  %1165 = vset.pattern.permute.xlu0 0
  %1166 = vperm.xlu0 %1165, %v1151
  %v1167 = vpop.permute.xlu0 %1166
  %1170 = vset.pattern.permute.xlu0 0
  %1171 = vperm.xlu0 %1170, %v1152
  %v1172 = vpop.permute.xlu0 %1171
  %v1174 = vmul.f32 %v1087, %v1162
  %v1175 = vmul.f32 %v1092, %v1167
  %v1176 = vmul.f32 %v1097, %v1172
  %1178 = vset.pattern.permute.xlu0 0
  %1179 = vperm.xlu0 %1178, %v1156
  %v1180 = vpop.permute.xlu0 %1179
  %1183 = vset.pattern.permute.xlu0 0
  %1184 = vperm.xlu0 %1183, %v1157
  %v1185 = vpop.permute.xlu0 %1184
  %1188 = vset.pattern.permute.xlu0 0
  %1189 = vperm.xlu0 %1188, %v1158
  %v1190 = vpop.permute.xlu0 %1189
  %v1192 = vadd.f32 %v1174, %v1180
  %v1193 = vadd.f32 %v1175, %v1185
  %v1194 = vadd.f32 %v1176, %v1190
  %v1195 = vadd.f32 %v1192, %v711
  %v1196 = vadd.f32 %v1193, %v712
  %v1197 = vadd.f32 %v1194, %v713
  %v1198 = vmax.f32 %v1195, 0.0
  %v1199 = vmax.f32 %v1196, 0.0
  %v1200 = vmax.f32 %v1197, 0.0
  %s1201 = scalar_lea.vmem %s1, 128
  %v1202 = vld [vmem:[%s1201] sm:$0xff]
  %v1203 = vld [vmem:[%s1201 + $0x8] sm:$0xff]
  %v1204 = vld [vmem:[%s1201 + $0x10] sm:$0xff]
  %v1205 = vld [vmem:[%s1201 + $0x18] sm:$0x7f]
  %v1209 = vrot.slane %v1198, 7
  %v1210 = vrot.slane %v1199, 7
  %v1211 = vsel %vm231, %v1209, %v1210
  %v1212 = vrot.slane %v1200, 7
  %v1213 = vsel %vm231, %v1210, %v1212
  %v1217 = vsel %vm231, 0.0, %v1209
  %v1218 = vrot.slane %v1198, 1
  %v1219 = vrot.slane %v1199, 1
  %v1220 = vsel %vm241, %v1218, %v1219
  %v1221 = vrot.slane %v1200, 1
  %v1222 = vsel %vm241, %v1219, %v1221
  %v1224 = vsel %vm231, %v1221, 0.0
  %1225 = vrot.lane.b32.xlu0 %v1198, 10
  %v1226 = vpop.permute.xlu0 %1225
  %1227 = vrot.lane.b32.xlu0 %v1199, 10
  %v1228 = vpop.permute.xlu0 %1227
  %1229 = vrot.lane.b32.xlu0 %v1200, 10
  %v1230 = vpop.permute.xlu0 %1229
  %1235 = vrot.lane.b32.xlu0 %v1220, 20
  %v1236 = vpop.permute.xlu0 %1235
  %1237 = vrot.lane.b32.xlu0 %v1222, 20
  %v1238 = vpop.permute.xlu0 %1237
  %1239 = vrot.lane.b32.xlu0 %v1224, 20
  %v1240 = vpop.permute.xlu0 %1239
  %v1244 = vsel %vm23, %v1217, %v1226
  %v1245 = vsel %vm23, %v1211, %v1228
  %v1246 = vsel %vm23, %v1213, %v1230
  %v1247 = vsel %vm271, %v1244, %v1236
  %v1248 = vsel %vm271, %v1245, %v1238
  %v1249 = vsel %vm271, %v1246, %v1240
  %v1250 = vsel %vm275, %v1247, 1.0
  %v1251 = vsel %vm275, %v1248, 1.0
  %v1252 = vsel %vm275, %v1249, 1.0
  %v1254 = vsel %vm279, %v1250, 0
  %v1257 = vsel %vm279, %v1251, 0
  %v1260 = vsel %vm279, %v1252, 0
  %v1263 = vsel %vm241, %v1205, 0
  %1265 = vmatprep.subr.mxu0 0.0
  %1266 = vmatpush1.msra.mxu0 0.0
  %1267 = vmatprep.subr.mxu0 0.0
  %1268 = vmatpush1.msra.mxu0 0.0
  %1269 = vmatprep.subr.mxu0 0.0
  %1270 = vmatpush1.msra.mxu0 0.0
  %1271 = vmatprep.subr.mxu0 0.0
  %1272 = vmatpush1.msra.mxu0 0.0
  %1273 = vmatprep.subr.mxu0 0.0
  %1274 = vmatpush1.msra.mxu0 0.0
  %1275 = vmatprep.subr.mxu0 0.0
  %1276 = vmatpush1.msra.mxu0 0.0
  %1277 = vmatprep.subr.mxu0 0.0
  %1278 = vmatpush1.msra.mxu0 0.0
  %1279 = vmatprep.subr.mxu0 0.0
  %1280 = vmatpush1.msra.mxu0 0.0
  %1281 = vmatprep.subr.mxu0 0.0
  %1282 = vmatpush1.msra.mxu0 0.0
  %1283 = vmatprep.subr.mxu0 0.0
  %1284 = vmatpush1.msra.mxu0 0.0
  %1285 = vmatprep.subr.mxu0 0.0
  %1286 = vmatpush1.msra.mxu0 0.0
  %1287 = vmatprep.subr.mxu0 0.0
  %1288 = vmatpush1.msra.mxu0 0.0
  %1289 = vmatprep.subr.mxu0 0.0
  %1290 = vmatpush1.msra.mxu0 %v1263
  %1291 = vmatprep.subr.mxu0 0.0
  %1292 = vmatpush1.msra.mxu0 %v1204
  %1293 = vmatprep.subr.mxu0 0.0
  %1294 = vmatpush1.msra.mxu0 %v1203
  %1295 = vmatprep.subr.mxu0 0.0
  %1296 = vmatpush1.msra.mxu0 %v1202
  %1297 = vmatprep.subr.mxu0 0.0
  %1298 = vmatpush2.msra.mxu0 0.0
  %1299 = vmatprep.subr.mxu0 0.0
  %1300 = vmatpush2.msra.mxu0 0.0
  %1301 = vmatprep.subr.mxu0 0.0
  %1302 = vmatpush2.msra.mxu0 0.0
  %1303 = vmatprep.subr.mxu0 0.0
  %1304 = vmatpush2.msra.mxu0 0.0
  %1305 = vmatprep.subr.mxu0 0.0
  %1306 = vmatpush2.msra.mxu0 0.0
  %1307 = vmatprep.subr.mxu0 0.0
  %1308 = vmatpush2.msra.mxu0 0.0
  %1309 = vmatprep.subr.mxu0 0.0
  %1310 = vmatpush2.msra.mxu0 0.0
  %1311 = vmatprep.subr.mxu0 0.0
  %1312 = vmatpush2.msra.mxu0 0.0
  %1313 = vmatprep.subr.mxu0 0.0
  %1314 = vmatpush2.msra.mxu0 0.0
  %1315 = vmatprep.subr.mxu0 0.0
  %1316 = vmatpush2.msra.mxu0 0.0
  %1317 = vmatprep.subr.mxu0 0.0
  %1318 = vmatpush2.msra.mxu0 0.0
  %1319 = vmatprep.subr.mxu0 0.0
  %1320 = vmatpush2.msra.mxu0 0.0
  %1321 = vmatprep.subr.mxu0 0.0
  %1322 = vmatpush2.msra.mxu0 0.0
  %1323 = vmatprep.subr.mxu0 0.0
  %1324 = vmatpush2.msra.mxu0 0.0
  %1325 = vmatprep.subr.mxu0 0.0
  %1326 = vmatpush2.msra.mxu0 0.0
  %1327 = vmatprep.subr.mxu0 0.0
  %1328 = vmatpush2.msra.mxu0 0.0
  %1329 = vmatprep.mubr.f32.mxu0 0.0
  %1330 = vmatmul.mubr.f32.gmra.mxu0 %v1254
  %v1331 = vpop.f32.mrf.mxu0
  %v1332 = vadd.f32 0.0, %v1331
  %v1333 = vpop.f32.mrf.mxu0
  %1334 = vmatprep.mubr.f32.mxu0 0.0
  %1335 = vmatmul.mubr.f32.gmra.mxu0 %v1257
  %v1336 = vpop.f32.mrf.mxu0
  %v1337 = vadd.f32 0.0, %v1336
  %v1338 = vpop.f32.mrf.mxu0
  %1339 = vmatprep.mubr.f32.mxu0 0.0
  %1340 = vmatmul.mubr.f32.gmra.mxu0 %v1260
  %v1341 = vpop.f32.mrf.mxu0
  %v1342 = vadd.f32 0.0, %v1341
  %v1343 = vpop.f32.mrf.mxu0
  %1344 = vdwg.mxu0
  %s1345 = scalar_lea.vmem %s2, 192
  %v1346 = vld [vmem:[%s1345] sm:$0xff]
  %v1347 = vld [vmem:[%s1345 + $0x8] sm:$0xff]
  %v1348 = vld [vmem:[%s1345 + $0x10] sm:$0x3]
  %s1349 = scalar_lea.vmem %s2, 216
  %v1350 = vld [vmem:[%s1349] sm:$0xff]
  %v1351 = vld [vmem:[%s1349 + $0x8] sm:$0xff]
  %v1352 = vld [vmem:[%s1349 + $0x10] sm:$0x3]
  %v1353 = vsel %vm23, %v1332, 0.0
  %1354 = vadd.xlane.f32.xlu0 %v1353
  %v1355 = vpop.xlane.xlu0 %1354
  %v1356 = vsel %vm23, %v1337, 0.0
  %1357 = vadd.xlane.f32.xlu0 %v1356
  %v1358 = vpop.xlane.xlu0 %1357
  %v1359 = vsel %vm127, %v1342, 0.0
  %1360 = vadd.xlane.f32.xlu0 %v1359
  %v1361 = vpop.xlane.xlu0 %1360
  %v1362 = vmul.f32 %v1332, %v1332
  %v1363 = vmul.f32 %v1337, %v1337
  %v1364 = vmul.f32 %v1342, %v1342
  %v1365 = vsel %vm23, %v1362, 0.0
  %1366 = vadd.xlane.f32.xlu0 %v1365
  %v1367 = vpop.xlane.xlu0 %1366
  %v1368 = vsel %vm23, %v1363, 0.0
  %1369 = vadd.xlane.f32.xlu0 %v1368
  %v1370 = vpop.xlane.xlu0 %1369
  %v1371 = vsel %vm127, %v1364, 0.0
  %1372 = vadd.xlane.f32.xlu0 %v1371
  %v1373 = vpop.xlane.xlu0 %1372
  %v1374 = vmul.f32 %v1355, 0.1
  %v1375 = vmul.f32 %v1358, 0.1
  %v1376 = vmul.f32 %v1361, 0.1
  %v1377 = vmul.f32 %v1367, 0.1
  %v1378 = vmul.f32 %v1370, 0.1
  %v1379 = vmul.f32 %v1373, 0.1
  %v1380 = vmul.f32 %v1374, %v1374
  %v1381 = vmul.f32 %v1375, %v1375
  %v1382 = vmul.f32 %v1376, %v1376
  %v1383 = vsub.f32 %v1377, %v1380
  %v1384 = vsub.f32 %v1378, %v1381
  %v1385 = vsub.f32 %v1379, %v1382
  %v1386 = vmax.f32 %v1383, 0.0
  %v1387 = vmax.f32 %v1384, 0.0
  %v1388 = vmax.f32 %v1385, 0.0
  %v1389 = vadd.f32 %v1386, 1e-05
  %v1390 = vadd.f32 %v1387, 1e-05
  %v1391 = vadd.f32 %v1388, 1e-05
  %v1392 = vrsqrt.pop %v1389
  %v1393 = vrsqrt.pop %v1390
  %v1394 = vrsqrt.pop %v1391
  %v1395 = vmul.f32 %v1346, %v1392
  %v1396 = vmul.f32 %v1347, %v1393
  %v1397 = vmul.f32 %v1348, %v1394
  %v1398 = vmul.f32 %v1374, %v1395
  %v1399 = vmul.f32 %v1375, %v1396
  %v1400 = vmul.f32 %v1376, %v1397
  %v1401 = vsub.f32 %v1350, %v1398
  %v1402 = vsub.f32 %v1351, %v1399
  %v1403 = vsub.f32 %v1352, %v1400
  %1405 = vset.pattern.permute.xlu0 0
  %1406 = vperm.xlu0 %1405, %v1395
  %v1407 = vpop.permute.xlu0 %1406
  %1410 = vset.pattern.permute.xlu0 0
  %1411 = vperm.xlu0 %1410, %v1396
  %v1412 = vpop.permute.xlu0 %1411
  %1415 = vset.pattern.permute.xlu0 0
  %1416 = vperm.xlu0 %1415, %v1397
  %v1417 = vpop.permute.xlu0 %1416
  %v1419 = vmul.f32 %v1332, %v1407
  %v1420 = vmul.f32 %v1337, %v1412
  %v1421 = vmul.f32 %v1342, %v1417
  %1423 = vset.pattern.permute.xlu0 0
  %1424 = vperm.xlu0 %1423, %v1401
  %v1425 = vpop.permute.xlu0 %1424
  %1428 = vset.pattern.permute.xlu0 0
  %1429 = vperm.xlu0 %1428, %v1402
  %v1430 = vpop.permute.xlu0 %1429
  %1433 = vset.pattern.permute.xlu0 0
  %1434 = vperm.xlu0 %1433, %v1403
  %v1435 = vpop.permute.xlu0 %1434
  %v1437 = vadd.f32 %v1419, %v1425
  %v1438 = vadd.f32 %v1420, %v1430
  %v1439 = vadd.f32 %v1421, %v1435
  %v1440 = vmax.f32 %v1437, 0.0
  %v1441 = vmax.f32 %v1438, 0.0
  %v1442 = vmax.f32 %v1439, 0.0
  %s1443 = scalar_lea.vmem %s1, 160
  %v1444 = vld [vmem:[%s1443] sm:$0xff]
  %v1445 = vld [vmem:[%s1443 + $0x8] sm:$0xff]
  %v1446 = vld [vmem:[%s1443 + $0x10] sm:$0xff]
  %v1447 = vld [vmem:[%s1443 + $0x18] sm:$0x7f]
  %v1451 = vrot.slane %v1440, 7
  %v1452 = vrot.slane %v1441, 7
  %v1453 = vsel %vm231, %v1451, %v1452
  %v1454 = vrot.slane %v1442, 7
  %v1455 = vsel %vm231, %v1452, %v1454
  %v1459 = vsel %vm231, 0.0, %v1451
  %v1460 = vrot.slane %v1440, 1
  %v1461 = vrot.slane %v1441, 1
  %v1462 = vsel %vm241, %v1460, %v1461
  %v1463 = vrot.slane %v1442, 1
  %v1464 = vsel %vm241, %v1461, %v1463
  %v1466 = vsel %vm231, %v1463, 0.0
  %1467 = vrot.lane.b32.xlu0 %v1440, 10
  %v1468 = vpop.permute.xlu0 %1467
  %1469 = vrot.lane.b32.xlu0 %v1441, 10
  %v1470 = vpop.permute.xlu0 %1469
  %1471 = vrot.lane.b32.xlu0 %v1442, 10
  %v1472 = vpop.permute.xlu0 %1471
  %1477 = vrot.lane.b32.xlu0 %v1462, 20
  %v1478 = vpop.permute.xlu0 %1477
  %1479 = vrot.lane.b32.xlu0 %v1464, 20
  %v1480 = vpop.permute.xlu0 %1479
  %1481 = vrot.lane.b32.xlu0 %v1466, 20
  %v1482 = vpop.permute.xlu0 %1481
  %v1486 = vsel %vm23, %v1459, %v1468
  %v1487 = vsel %vm23, %v1453, %v1470
  %v1488 = vsel %vm23, %v1455, %v1472
  %v1489 = vsel %vm271, %v1486, %v1478
  %v1490 = vsel %vm271, %v1487, %v1480
  %v1491 = vsel %vm271, %v1488, %v1482
  %v1492 = vsel %vm275, %v1489, 1.0
  %v1493 = vsel %vm275, %v1490, 1.0
  %v1494 = vsel %vm275, %v1491, 1.0
  %v1496 = vsel %vm279, %v1492, 0
  %v1499 = vsel %vm279, %v1493, 0
  %v1502 = vsel %vm279, %v1494, 0
  %v1505 = vsel %vm241, %v1447, 0
  %1507 = vmatprep.subr.mxu0 0.0
  %1508 = vmatpush1.msra.mxu0 0.0
  %1509 = vmatprep.subr.mxu0 0.0
  %1510 = vmatpush1.msra.mxu0 0.0
  %1511 = vmatprep.subr.mxu0 0.0
  %1512 = vmatpush1.msra.mxu0 0.0
  %1513 = vmatprep.subr.mxu0 0.0
  %1514 = vmatpush1.msra.mxu0 0.0
  %1515 = vmatprep.subr.mxu0 0.0
  %1516 = vmatpush1.msra.mxu0 0.0
  %1517 = vmatprep.subr.mxu0 0.0
  %1518 = vmatpush1.msra.mxu0 0.0
  %1519 = vmatprep.subr.mxu0 0.0
  %1520 = vmatpush1.msra.mxu0 0.0
  %1521 = vmatprep.subr.mxu0 0.0
  %1522 = vmatpush1.msra.mxu0 0.0
  %1523 = vmatprep.subr.mxu0 0.0
  %1524 = vmatpush1.msra.mxu0 0.0
  %1525 = vmatprep.subr.mxu0 0.0
  %1526 = vmatpush1.msra.mxu0 0.0
  %1527 = vmatprep.subr.mxu0 0.0
  %1528 = vmatpush1.msra.mxu0 0.0
  %1529 = vmatprep.subr.mxu0 0.0
  %1530 = vmatpush1.msra.mxu0 0.0
  %1531 = vmatprep.subr.mxu0 0.0
  %1532 = vmatpush1.msra.mxu0 %v1505
  %1533 = vmatprep.subr.mxu0 0.0
  %1534 = vmatpush1.msra.mxu0 %v1446
  %1535 = vmatprep.subr.mxu0 0.0
  %1536 = vmatpush1.msra.mxu0 %v1445
  %1537 = vmatprep.subr.mxu0 0.0
  %1538 = vmatpush1.msra.mxu0 %v1444
  %1539 = vmatprep.subr.mxu0 0.0
  %1540 = vmatpush2.msra.mxu0 0.0
  %1541 = vmatprep.subr.mxu0 0.0
  %1542 = vmatpush2.msra.mxu0 0.0
  %1543 = vmatprep.subr.mxu0 0.0
  %1544 = vmatpush2.msra.mxu0 0.0
  %1545 = vmatprep.subr.mxu0 0.0
  %1546 = vmatpush2.msra.mxu0 0.0
  %1547 = vmatprep.subr.mxu0 0.0
  %1548 = vmatpush2.msra.mxu0 0.0
  %1549 = vmatprep.subr.mxu0 0.0
  %1550 = vmatpush2.msra.mxu0 0.0
  %1551 = vmatprep.subr.mxu0 0.0
  %1552 = vmatpush2.msra.mxu0 0.0
  %1553 = vmatprep.subr.mxu0 0.0
  %1554 = vmatpush2.msra.mxu0 0.0
  %1555 = vmatprep.subr.mxu0 0.0
  %1556 = vmatpush2.msra.mxu0 0.0
  %1557 = vmatprep.subr.mxu0 0.0
  %1558 = vmatpush2.msra.mxu0 0.0
  %1559 = vmatprep.subr.mxu0 0.0
  %1560 = vmatpush2.msra.mxu0 0.0
  %1561 = vmatprep.subr.mxu0 0.0
  %1562 = vmatpush2.msra.mxu0 0.0
  %1563 = vmatprep.subr.mxu0 0.0
  %1564 = vmatpush2.msra.mxu0 0.0
  %1565 = vmatprep.subr.mxu0 0.0
  %1566 = vmatpush2.msra.mxu0 0.0
  %1567 = vmatprep.subr.mxu0 0.0
  %1568 = vmatpush2.msra.mxu0 0.0
  %1569 = vmatprep.subr.mxu0 0.0
  %1570 = vmatpush2.msra.mxu0 0.0
  %1571 = vmatprep.mubr.f32.mxu0 0.0
  %1572 = vmatmul.mubr.f32.gmra.mxu0 %v1496
  %v1573 = vpop.f32.mrf.mxu0
  %v1574 = vadd.f32 0.0, %v1573
  %v1575 = vpop.f32.mrf.mxu0
  %1576 = vmatprep.mubr.f32.mxu0 0.0
  %1577 = vmatmul.mubr.f32.gmra.mxu0 %v1499
  %v1578 = vpop.f32.mrf.mxu0
  %v1579 = vadd.f32 0.0, %v1578
  %v1580 = vpop.f32.mrf.mxu0
  %1581 = vmatprep.mubr.f32.mxu0 0.0
  %1582 = vmatmul.mubr.f32.gmra.mxu0 %v1502
  %v1583 = vpop.f32.mrf.mxu0
  %v1584 = vadd.f32 0.0, %v1583
  %v1585 = vpop.f32.mrf.mxu0
  %1586 = vdwg.mxu0
  %s1587 = scalar_lea.vmem %s2, 240
  %v1588 = vld [vmem:[%s1587] sm:$0xff]
  %v1589 = vld [vmem:[%s1587 + $0x8] sm:$0xff]
  %v1590 = vld [vmem:[%s1587 + $0x10] sm:$0x3]
  %s1591 = scalar_lea.vmem %s2, 264
  %v1592 = vld [vmem:[%s1591] sm:$0xff]
  %v1593 = vld [vmem:[%s1591 + $0x8] sm:$0xff]
  %v1594 = vld [vmem:[%s1591 + $0x10] sm:$0x3]
  %v1595 = vsel %vm23, %v1574, 0.0
  %1596 = vadd.xlane.f32.xlu0 %v1595
  %v1597 = vpop.xlane.xlu0 %1596
  %v1598 = vsel %vm23, %v1579, 0.0
  %1599 = vadd.xlane.f32.xlu0 %v1598
  %v1600 = vpop.xlane.xlu0 %1599
  %v1601 = vsel %vm127, %v1584, 0.0
  %1602 = vadd.xlane.f32.xlu0 %v1601
  %v1603 = vpop.xlane.xlu0 %1602
  %v1604 = vmul.f32 %v1574, %v1574
  %v1605 = vmul.f32 %v1579, %v1579
  %v1606 = vmul.f32 %v1584, %v1584
  %v1607 = vsel %vm23, %v1604, 0.0
  %1608 = vadd.xlane.f32.xlu0 %v1607
  %v1609 = vpop.xlane.xlu0 %1608
  %v1610 = vsel %vm23, %v1605, 0.0
  %1611 = vadd.xlane.f32.xlu0 %v1610
  %v1612 = vpop.xlane.xlu0 %1611
  %v1613 = vsel %vm127, %v1606, 0.0
  %1614 = vadd.xlane.f32.xlu0 %v1613
  %v1615 = vpop.xlane.xlu0 %1614
  %v1616 = vmul.f32 %v1597, 0.1
  %v1617 = vmul.f32 %v1600, 0.1
  %v1618 = vmul.f32 %v1603, 0.1
  %v1619 = vmul.f32 %v1609, 0.1
  %v1620 = vmul.f32 %v1612, 0.1
  %v1621 = vmul.f32 %v1615, 0.1
  %v1622 = vmul.f32 %v1616, %v1616
  %v1623 = vmul.f32 %v1617, %v1617
  %v1624 = vmul.f32 %v1618, %v1618
  %v1625 = vsub.f32 %v1619, %v1622
  %v1626 = vsub.f32 %v1620, %v1623
  %v1627 = vsub.f32 %v1621, %v1624
  %v1628 = vmax.f32 %v1625, 0.0
  %v1629 = vmax.f32 %v1626, 0.0
  %v1630 = vmax.f32 %v1627, 0.0
  %v1631 = vadd.f32 %v1628, 1e-05
  %v1632 = vadd.f32 %v1629, 1e-05
  %v1633 = vadd.f32 %v1630, 1e-05
  %v1634 = vrsqrt.pop %v1631
  %v1635 = vrsqrt.pop %v1632
  %v1636 = vrsqrt.pop %v1633
  %v1637 = vmul.f32 %v1588, %v1634
  %v1638 = vmul.f32 %v1589, %v1635
  %v1639 = vmul.f32 %v1590, %v1636
  %v1640 = vmul.f32 %v1616, %v1637
  %v1641 = vmul.f32 %v1617, %v1638
  %v1642 = vmul.f32 %v1618, %v1639
  %v1643 = vsub.f32 %v1592, %v1640
  %v1644 = vsub.f32 %v1593, %v1641
  %v1645 = vsub.f32 %v1594, %v1642
  %1647 = vset.pattern.permute.xlu0 0
  %1648 = vperm.xlu0 %1647, %v1637
  %v1649 = vpop.permute.xlu0 %1648
  %1652 = vset.pattern.permute.xlu0 0
  %1653 = vperm.xlu0 %1652, %v1638
  %v1654 = vpop.permute.xlu0 %1653
  %1657 = vset.pattern.permute.xlu0 0
  %1658 = vperm.xlu0 %1657, %v1639
  %v1659 = vpop.permute.xlu0 %1658
  %v1661 = vmul.f32 %v1574, %v1649
  %v1662 = vmul.f32 %v1579, %v1654
  %v1663 = vmul.f32 %v1584, %v1659
  %1665 = vset.pattern.permute.xlu0 0
  %1666 = vperm.xlu0 %1665, %v1643
  %v1667 = vpop.permute.xlu0 %1666
  %1670 = vset.pattern.permute.xlu0 0
  %1671 = vperm.xlu0 %1670, %v1644
  %v1672 = vpop.permute.xlu0 %1671
  %1675 = vset.pattern.permute.xlu0 0
  %1676 = vperm.xlu0 %1675, %v1645
  %v1677 = vpop.permute.xlu0 %1676
  %v1679 = vadd.f32 %v1661, %v1667
  %v1680 = vadd.f32 %v1662, %v1672
  %v1681 = vadd.f32 %v1663, %v1677
  %v1682 = vadd.f32 %v1679, %v1198
  %v1683 = vadd.f32 %v1680, %v1199
  %v1684 = vadd.f32 %v1681, %v1200
  %v1685 = vmax.f32 %v1682, 0.0
  %v1686 = vmax.f32 %v1683, 0.0
  %v1687 = vmax.f32 %v1684, 0.0
  %s1688 = scalar_lea.vmem %s1, 192
  %v1689 = vld [vmem:[%s1688] sm:$0xff]
  %v1690 = vld [vmem:[%s1688 + $0x8] sm:$0xff]
  %v1691 = vld [vmem:[%s1688 + $0x10] sm:$0xff]
  %v1692 = vld [vmem:[%s1688 + $0x18] sm:$0x7f]
  %v1696 = vrot.slane %v1685, 7
  %v1697 = vrot.slane %v1686, 7
  %v1698 = vsel %vm231, %v1696, %v1697
  %v1699 = vrot.slane %v1687, 7
  %v1700 = vsel %vm231, %v1697, %v1699
  %v1704 = vsel %vm231, 0.0, %v1696
  %v1705 = vrot.slane %v1685, 1
  %v1706 = vrot.slane %v1686, 1
  %v1707 = vsel %vm241, %v1705, %v1706
  %v1708 = vrot.slane %v1687, 1
  %v1709 = vsel %vm241, %v1706, %v1708
  %v1711 = vsel %vm231, %v1708, 0.0
  %1712 = vrot.lane.b32.xlu0 %v1685, 10
  %v1713 = vpop.permute.xlu0 %1712
  %1714 = vrot.lane.b32.xlu0 %v1686, 10
  %v1715 = vpop.permute.xlu0 %1714
  %1716 = vrot.lane.b32.xlu0 %v1687, 10
  %v1717 = vpop.permute.xlu0 %1716
  %1722 = vrot.lane.b32.xlu0 %v1707, 20
  %v1723 = vpop.permute.xlu0 %1722
  %1724 = vrot.lane.b32.xlu0 %v1709, 20
  %v1725 = vpop.permute.xlu0 %1724
  %1726 = vrot.lane.b32.xlu0 %v1711, 20
  %v1727 = vpop.permute.xlu0 %1726
  %v1731 = vsel %vm23, %v1704, %v1713
  %v1732 = vsel %vm23, %v1698, %v1715
  %v1733 = vsel %vm23, %v1700, %v1717
  %v1734 = vsel %vm271, %v1731, %v1723
  %v1735 = vsel %vm271, %v1732, %v1725
  %v1736 = vsel %vm271, %v1733, %v1727
  %v1737 = vsel %vm275, %v1734, 1.0
  %v1738 = vsel %vm275, %v1735, 1.0
  %v1739 = vsel %vm275, %v1736, 1.0
  %v1741 = vsel %vm279, %v1737, 0
  %v1744 = vsel %vm279, %v1738, 0
  %v1747 = vsel %vm279, %v1739, 0
  %v1750 = vsel %vm241, %v1692, 0
  %1752 = vmatprep.subr.mxu0 0.0
  %1753 = vmatpush1.msra.mxu0 0.0
  %1754 = vmatprep.subr.mxu0 0.0
  %1755 = vmatpush1.msra.mxu0 0.0
  %1756 = vmatprep.subr.mxu0 0.0
  %1757 = vmatpush1.msra.mxu0 0.0
  %1758 = vmatprep.subr.mxu0 0.0
  %1759 = vmatpush1.msra.mxu0 0.0
  %1760 = vmatprep.subr.mxu0 0.0
  %1761 = vmatpush1.msra.mxu0 0.0
  %1762 = vmatprep.subr.mxu0 0.0
  %1763 = vmatpush1.msra.mxu0 0.0
  %1764 = vmatprep.subr.mxu0 0.0
  %1765 = vmatpush1.msra.mxu0 0.0
  %1766 = vmatprep.subr.mxu0 0.0
  %1767 = vmatpush1.msra.mxu0 0.0
  %1768 = vmatprep.subr.mxu0 0.0
  %1769 = vmatpush1.msra.mxu0 0.0
  %1770 = vmatprep.subr.mxu0 0.0
  %1771 = vmatpush1.msra.mxu0 0.0
  %1772 = vmatprep.subr.mxu0 0.0
  %1773 = vmatpush1.msra.mxu0 0.0
  %1774 = vmatprep.subr.mxu0 0.0
  %1775 = vmatpush1.msra.mxu0 0.0
  %1776 = vmatprep.subr.mxu0 0.0
  %1777 = vmatpush1.msra.mxu0 %v1750
  %1778 = vmatprep.subr.mxu0 0.0
  %1779 = vmatpush1.msra.mxu0 %v1691
  %1780 = vmatprep.subr.mxu0 0.0
  %1781 = vmatpush1.msra.mxu0 %v1690
  %1782 = vmatprep.subr.mxu0 0.0
  %1783 = vmatpush1.msra.mxu0 %v1689
  %1784 = vmatprep.subr.mxu0 0.0
  %1785 = vmatpush2.msra.mxu0 0.0
  %1786 = vmatprep.subr.mxu0 0.0
  %1787 = vmatpush2.msra.mxu0 0.0
  %1788 = vmatprep.subr.mxu0 0.0
  %1789 = vmatpush2.msra.mxu0 0.0
  %1790 = vmatprep.subr.mxu0 0.0
  %1791 = vmatpush2.msra.mxu0 0.0
  %1792 = vmatprep.subr.mxu0 0.0
  %1793 = vmatpush2.msra.mxu0 0.0
  %1794 = vmatprep.subr.mxu0 0.0
  %1795 = vmatpush2.msra.mxu0 0.0
  %1796 = vmatprep.subr.mxu0 0.0
  %1797 = vmatpush2.msra.mxu0 0.0
  %1798 = vmatprep.subr.mxu0 0.0
  %1799 = vmatpush2.msra.mxu0 0.0
  %1800 = vmatprep.subr.mxu0 0.0
  %1801 = vmatpush2.msra.mxu0 0.0
  %1802 = vmatprep.subr.mxu0 0.0
  %1803 = vmatpush2.msra.mxu0 0.0
  %1804 = vmatprep.subr.mxu0 0.0
  %1805 = vmatpush2.msra.mxu0 0.0
  %1806 = vmatprep.subr.mxu0 0.0
  %1807 = vmatpush2.msra.mxu0 0.0
  %1808 = vmatprep.subr.mxu0 0.0
  %1809 = vmatpush2.msra.mxu0 0.0
  %1810 = vmatprep.subr.mxu0 0.0
  %1811 = vmatpush2.msra.mxu0 0.0
  %1812 = vmatprep.subr.mxu0 0.0
  %1813 = vmatpush2.msra.mxu0 0.0
  %1814 = vmatprep.subr.mxu0 0.0
  %1815 = vmatpush2.msra.mxu0 0.0
  %1816 = vmatprep.mubr.f32.mxu0 0.0
  %1817 = vmatmul.mubr.f32.gmra.mxu0 %v1741
  %v1818 = vpop.f32.mrf.mxu0
  %v1819 = vadd.f32 0.0, %v1818
  %v1820 = vpop.f32.mrf.mxu0
  %1821 = vmatprep.mubr.f32.mxu0 0.0
  %1822 = vmatmul.mubr.f32.gmra.mxu0 %v1744
  %v1823 = vpop.f32.mrf.mxu0
  %v1824 = vadd.f32 0.0, %v1823
  %v1825 = vpop.f32.mrf.mxu0
  %1826 = vmatprep.mubr.f32.mxu0 0.0
  %1827 = vmatmul.mubr.f32.gmra.mxu0 %v1747
  %v1828 = vpop.f32.mrf.mxu0
  %v1829 = vadd.f32 0.0, %v1828
  %v1830 = vpop.f32.mrf.mxu0
  %1831 = vdwg.mxu0
  %s1832 = scalar_lea.vmem %s2, 288
  %v1833 = vld [vmem:[%s1832] sm:$0xff]
  %v1834 = vld [vmem:[%s1832 + $0x8] sm:$0xff]
  %v1835 = vld [vmem:[%s1832 + $0x10] sm:$0x3]
  %s1836 = scalar_lea.vmem %s2, 312
  %v1837 = vld [vmem:[%s1836] sm:$0xff]
  %v1838 = vld [vmem:[%s1836 + $0x8] sm:$0xff]
  %v1839 = vld [vmem:[%s1836 + $0x10] sm:$0x3]
  %v1840 = vsel %vm23, %v1819, 0.0
  %1841 = vadd.xlane.f32.xlu0 %v1840
  %v1842 = vpop.xlane.xlu0 %1841
  %v1843 = vsel %vm23, %v1824, 0.0
  %1844 = vadd.xlane.f32.xlu0 %v1843
  %v1845 = vpop.xlane.xlu0 %1844
  %v1846 = vsel %vm127, %v1829, 0.0
  %1847 = vadd.xlane.f32.xlu0 %v1846
  %v1848 = vpop.xlane.xlu0 %1847
  %v1849 = vmul.f32 %v1819, %v1819
  %v1850 = vmul.f32 %v1824, %v1824
  %v1851 = vmul.f32 %v1829, %v1829
  %v1852 = vsel %vm23, %v1849, 0.0
  %1853 = vadd.xlane.f32.xlu0 %v1852
  %v1854 = vpop.xlane.xlu0 %1853
  %v1855 = vsel %vm23, %v1850, 0.0
  %1856 = vadd.xlane.f32.xlu0 %v1855
  %v1857 = vpop.xlane.xlu0 %1856
  %v1858 = vsel %vm127, %v1851, 0.0
  %1859 = vadd.xlane.f32.xlu0 %v1858
  %v1860 = vpop.xlane.xlu0 %1859
  %v1861 = vmul.f32 %v1842, 0.1
  %v1862 = vmul.f32 %v1845, 0.1
  %v1863 = vmul.f32 %v1848, 0.1
  %v1864 = vmul.f32 %v1854, 0.1
  %v1865 = vmul.f32 %v1857, 0.1
  %v1866 = vmul.f32 %v1860, 0.1
  %v1867 = vmul.f32 %v1861, %v1861
  %v1868 = vmul.f32 %v1862, %v1862
  %v1869 = vmul.f32 %v1863, %v1863
  %v1870 = vsub.f32 %v1864, %v1867
  %v1871 = vsub.f32 %v1865, %v1868
  %v1872 = vsub.f32 %v1866, %v1869
  %v1873 = vmax.f32 %v1870, 0.0
  %v1874 = vmax.f32 %v1871, 0.0
  %v1875 = vmax.f32 %v1872, 0.0
  %v1876 = vadd.f32 %v1873, 1e-05
  %v1877 = vadd.f32 %v1874, 1e-05
  %v1878 = vadd.f32 %v1875, 1e-05
  %v1879 = vrsqrt.pop %v1876
  %v1880 = vrsqrt.pop %v1877
  %v1881 = vrsqrt.pop %v1878
  %v1882 = vmul.f32 %v1833, %v1879
  %v1883 = vmul.f32 %v1834, %v1880
  %v1884 = vmul.f32 %v1835, %v1881
  %v1885 = vmul.f32 %v1861, %v1882
  %v1886 = vmul.f32 %v1862, %v1883
  %v1887 = vmul.f32 %v1863, %v1884
  %v1888 = vsub.f32 %v1837, %v1885
  %v1889 = vsub.f32 %v1838, %v1886
  %v1890 = vsub.f32 %v1839, %v1887
  %1892 = vset.pattern.permute.xlu0 0
  %1893 = vperm.xlu0 %1892, %v1882
  %v1894 = vpop.permute.xlu0 %1893
  %1897 = vset.pattern.permute.xlu0 0
  %1898 = vperm.xlu0 %1897, %v1883
  %v1899 = vpop.permute.xlu0 %1898
  %1902 = vset.pattern.permute.xlu0 0
  %1903 = vperm.xlu0 %1902, %v1884
  %v1904 = vpop.permute.xlu0 %1903
  %v1906 = vmul.f32 %v1819, %v1894
  %v1907 = vmul.f32 %v1824, %v1899
  %v1908 = vmul.f32 %v1829, %v1904
  %1910 = vset.pattern.permute.xlu0 0
  %1911 = vperm.xlu0 %1910, %v1888
  %v1912 = vpop.permute.xlu0 %1911
  %1915 = vset.pattern.permute.xlu0 0
  %1916 = vperm.xlu0 %1915, %v1889
  %v1917 = vpop.permute.xlu0 %1916
  %1920 = vset.pattern.permute.xlu0 0
  %1921 = vperm.xlu0 %1920, %v1890
  %v1922 = vpop.permute.xlu0 %1921
  %v1924 = vadd.f32 %v1906, %v1912
  %v1925 = vadd.f32 %v1907, %v1917
  %v1926 = vadd.f32 %v1908, %v1922
  %v1927 = vmax.f32 %v1924, 0.0
  %v1928 = vmax.f32 %v1925, 0.0
  %v1929 = vmax.f32 %v1926, 0.0
  %s1930 = scalar_lea.vmem %s1, 224
  %v1931 = vld [vmem:[%s1930] sm:$0xff]
  %v1932 = vld [vmem:[%s1930 + $0x8] sm:$0xff]
  %v1933 = vld [vmem:[%s1930 + $0x10] sm:$0xff]
  %v1934 = vld [vmem:[%s1930 + $0x18] sm:$0x7f]
  %v1938 = vrot.slane %v1927, 7
  %v1939 = vrot.slane %v1928, 7
  %v1940 = vsel %vm231, %v1938, %v1939
  %v1941 = vrot.slane %v1929, 7
  %v1942 = vsel %vm231, %v1939, %v1941
  %v1946 = vsel %vm231, 0.0, %v1938
  %v1947 = vrot.slane %v1927, 1
  %v1948 = vrot.slane %v1928, 1
  %v1949 = vsel %vm241, %v1947, %v1948
  %v1950 = vrot.slane %v1929, 1
  %v1951 = vsel %vm241, %v1948, %v1950
  %v1953 = vsel %vm231, %v1950, 0.0
  %1954 = vrot.lane.b32.xlu0 %v1927, 10
  %v1955 = vpop.permute.xlu0 %1954
  %1956 = vrot.lane.b32.xlu0 %v1928, 10
  %v1957 = vpop.permute.xlu0 %1956
  %1958 = vrot.lane.b32.xlu0 %v1929, 10
  %v1959 = vpop.permute.xlu0 %1958
  %1964 = vrot.lane.b32.xlu0 %v1949, 20
  %v1965 = vpop.permute.xlu0 %1964
  %1966 = vrot.lane.b32.xlu0 %v1951, 20
  %v1967 = vpop.permute.xlu0 %1966
  %1968 = vrot.lane.b32.xlu0 %v1953, 20
  %v1969 = vpop.permute.xlu0 %1968
  %v1973 = vsel %vm23, %v1946, %v1955
  %v1974 = vsel %vm23, %v1940, %v1957
  %v1975 = vsel %vm23, %v1942, %v1959
  %v1976 = vsel %vm271, %v1973, %v1965
  %v1977 = vsel %vm271, %v1974, %v1967
  %v1978 = vsel %vm271, %v1975, %v1969
  %v1979 = vsel %vm275, %v1976, 1.0
  %v1980 = vsel %vm275, %v1977, 1.0
  %v1981 = vsel %vm275, %v1978, 1.0
  %v1983 = vsel %vm279, %v1979, 0
  %v1986 = vsel %vm279, %v1980, 0
  %v1989 = vsel %vm279, %v1981, 0
  %v1992 = vsel %vm241, %v1934, 0
  %1994 = vmatprep.subr.mxu0 0.0
  %1995 = vmatpush1.msra.mxu0 0.0
  %1996 = vmatprep.subr.mxu0 0.0
  %1997 = vmatpush1.msra.mxu0 0.0
  %1998 = vmatprep.subr.mxu0 0.0
  %1999 = vmatpush1.msra.mxu0 0.0
  %2000 = vmatprep.subr.mxu0 0.0
  %2001 = vmatpush1.msra.mxu0 0.0
  %2002 = vmatprep.subr.mxu0 0.0
  %2003 = vmatpush1.msra.mxu0 0.0
  %2004 = vmatprep.subr.mxu0 0.0
  %2005 = vmatpush1.msra.mxu0 0.0
  %2006 = vmatprep.subr.mxu0 0.0
  %2007 = vmatpush1.msra.mxu0 0.0
  %2008 = vmatprep.subr.mxu0 0.0
  %2009 = vmatpush1.msra.mxu0 0.0
  %2010 = vmatprep.subr.mxu0 0.0
  %2011 = vmatpush1.msra.mxu0 0.0
  %2012 = vmatprep.subr.mxu0 0.0
  %2013 = vmatpush1.msra.mxu0 0.0
  %2014 = vmatprep.subr.mxu0 0.0
  %2015 = vmatpush1.msra.mxu0 0.0
  %2016 = vmatprep.subr.mxu0 0.0
  %2017 = vmatpush1.msra.mxu0 0.0
  %2018 = vmatprep.subr.mxu0 0.0
  %2019 = vmatpush1.msra.mxu0 %v1992
  %2020 = vmatprep.subr.mxu0 0.0
  %2021 = vmatpush1.msra.mxu0 %v1933
  %2022 = vmatprep.subr.mxu0 0.0
  %2023 = vmatpush1.msra.mxu0 %v1932
  %2024 = vmatprep.subr.mxu0 0.0
  %2025 = vmatpush1.msra.mxu0 %v1931
  %2026 = vmatprep.subr.mxu0 0.0
  %2027 = vmatpush2.msra.mxu0 0.0
  %2028 = vmatprep.subr.mxu0 0.0
  %2029 = vmatpush2.msra.mxu0 0.0
  %2030 = vmatprep.subr.mxu0 0.0
  %2031 = vmatpush2.msra.mxu0 0.0
  %2032 = vmatprep.subr.mxu0 0.0
  %2033 = vmatpush2.msra.mxu0 0.0
  %2034 = vmatprep.subr.mxu0 0.0
  %2035 = vmatpush2.msra.mxu0 0.0
  %2036 = vmatprep.subr.mxu0 0.0
  %2037 = vmatpush2.msra.mxu0 0.0
  %2038 = vmatprep.subr.mxu0 0.0
  %2039 = vmatpush2.msra.mxu0 0.0
  %2040 = vmatprep.subr.mxu0 0.0
  %2041 = vmatpush2.msra.mxu0 0.0
  %2042 = vmatprep.subr.mxu0 0.0
  %2043 = vmatpush2.msra.mxu0 0.0
  %2044 = vmatprep.subr.mxu0 0.0
  %2045 = vmatpush2.msra.mxu0 0.0
  %2046 = vmatprep.subr.mxu0 0.0
  %2047 = vmatpush2.msra.mxu0 0.0
  %2048 = vmatprep.subr.mxu0 0.0
  %2049 = vmatpush2.msra.mxu0 0.0
  %2050 = vmatprep.subr.mxu0 0.0
  %2051 = vmatpush2.msra.mxu0 0.0
  %2052 = vmatprep.subr.mxu0 0.0
  %2053 = vmatpush2.msra.mxu0 0.0
  %2054 = vmatprep.subr.mxu0 0.0
  %2055 = vmatpush2.msra.mxu0 0.0
  %2056 = vmatprep.subr.mxu0 0.0
  %2057 = vmatpush2.msra.mxu0 0.0
  %2058 = vmatprep.mubr.f32.mxu0 0.0
  %2059 = vmatmul.mubr.f32.gmra.mxu0 %v1983
  %v2060 = vpop.f32.mrf.mxu0
  %v2061 = vadd.f32 0.0, %v2060
  %v2062 = vpop.f32.mrf.mxu0
  %2063 = vmatprep.mubr.f32.mxu0 0.0
  %2064 = vmatmul.mubr.f32.gmra.mxu0 %v1986
  %v2065 = vpop.f32.mrf.mxu0
  %v2066 = vadd.f32 0.0, %v2065
  %v2067 = vpop.f32.mrf.mxu0
  %2068 = vmatprep.mubr.f32.mxu0 0.0
  %2069 = vmatmul.mubr.f32.gmra.mxu0 %v1989
  %v2070 = vpop.f32.mrf.mxu0
  %v2071 = vadd.f32 0.0, %v2070
  %v2072 = vpop.f32.mrf.mxu0
  %2073 = vdwg.mxu0
  %s2074 = scalar_lea.vmem %s2, 336
  %v2075 = vld [vmem:[%s2074] sm:$0xff]
  %v2076 = vld [vmem:[%s2074 + $0x8] sm:$0xff]
  %v2077 = vld [vmem:[%s2074 + $0x10] sm:$0x3]
  %s2078 = scalar_lea.vmem %s2, 360
  %v2079 = vld [vmem:[%s2078] sm:$0xff]
  %v2080 = vld [vmem:[%s2078 + $0x8] sm:$0xff]
  %v2081 = vld [vmem:[%s2078 + $0x10] sm:$0x3]
  %v2082 = vsel %vm23, %v2061, 0.0
  %2083 = vadd.xlane.f32.xlu0 %v2082
  %v2084 = vpop.xlane.xlu0 %2083
  %v2085 = vsel %vm23, %v2066, 0.0
  %2086 = vadd.xlane.f32.xlu0 %v2085
  %v2087 = vpop.xlane.xlu0 %2086
  %v2088 = vsel %vm127, %v2071, 0.0
  %2089 = vadd.xlane.f32.xlu0 %v2088
  %v2090 = vpop.xlane.xlu0 %2089
  %v2091 = vmul.f32 %v2061, %v2061
  %v2092 = vmul.f32 %v2066, %v2066
  %v2093 = vmul.f32 %v2071, %v2071
  %v2094 = vsel %vm23, %v2091, 0.0
  %2095 = vadd.xlane.f32.xlu0 %v2094
  %v2096 = vpop.xlane.xlu0 %2095
  %v2097 = vsel %vm23, %v2092, 0.0
  %2098 = vadd.xlane.f32.xlu0 %v2097
  %v2099 = vpop.xlane.xlu0 %2098
  %v2100 = vsel %vm127, %v2093, 0.0
  %2101 = vadd.xlane.f32.xlu0 %v2100
  %v2102 = vpop.xlane.xlu0 %2101
  %v2103 = vmul.f32 %v2084, 0.1
  %v2104 = vmul.f32 %v2087, 0.1
  %v2105 = vmul.f32 %v2090, 0.1
  %v2106 = vmul.f32 %v2096, 0.1
  %v2107 = vmul.f32 %v2099, 0.1
  %v2108 = vmul.f32 %v2102, 0.1
  %v2109 = vmul.f32 %v2103, %v2103
  %v2110 = vmul.f32 %v2104, %v2104
  %v2111 = vmul.f32 %v2105, %v2105
  %v2112 = vsub.f32 %v2106, %v2109
  %v2113 = vsub.f32 %v2107, %v2110
  %v2114 = vsub.f32 %v2108, %v2111
  %v2115 = vmax.f32 %v2112, 0.0
  %v2116 = vmax.f32 %v2113, 0.0
  %v2117 = vmax.f32 %v2114, 0.0
  %v2118 = vadd.f32 %v2115, 1e-05
  %v2119 = vadd.f32 %v2116, 1e-05
  %v2120 = vadd.f32 %v2117, 1e-05
  %v2121 = vrsqrt.pop %v2118
  %v2122 = vrsqrt.pop %v2119
  %v2123 = vrsqrt.pop %v2120
  %v2124 = vmul.f32 %v2075, %v2121
  %v2125 = vmul.f32 %v2076, %v2122
  %v2126 = vmul.f32 %v2077, %v2123
  %v2127 = vmul.f32 %v2103, %v2124
  %v2128 = vmul.f32 %v2104, %v2125
  %v2129 = vmul.f32 %v2105, %v2126
  %v2130 = vsub.f32 %v2079, %v2127
  %v2131 = vsub.f32 %v2080, %v2128
  %v2132 = vsub.f32 %v2081, %v2129
  %2134 = vset.pattern.permute.xlu0 0
  %2135 = vperm.xlu0 %2134, %v2124
  %v2136 = vpop.permute.xlu0 %2135
  %2139 = vset.pattern.permute.xlu0 0
  %2140 = vperm.xlu0 %2139, %v2125
  %v2141 = vpop.permute.xlu0 %2140
  %2144 = vset.pattern.permute.xlu0 0
  %2145 = vperm.xlu0 %2144, %v2126
  %v2146 = vpop.permute.xlu0 %2145
  %v2148 = vmul.f32 %v2061, %v2136
  %v2149 = vmul.f32 %v2066, %v2141
  %v2150 = vmul.f32 %v2071, %v2146
  %2152 = vset.pattern.permute.xlu0 0
  %2153 = vperm.xlu0 %2152, %v2130
  %v2154 = vpop.permute.xlu0 %2153
  %2157 = vset.pattern.permute.xlu0 0
  %2158 = vperm.xlu0 %2157, %v2131
  %v2159 = vpop.permute.xlu0 %2158
  %2162 = vset.pattern.permute.xlu0 0
  %2163 = vperm.xlu0 %2162, %v2132
  %v2164 = vpop.permute.xlu0 %2163
  %v2166 = vadd.f32 %v2148, %v2154
  %v2167 = vadd.f32 %v2149, %v2159
  %v2168 = vadd.f32 %v2150, %v2164
  %v2169 = vadd.f32 %v2166, %v1685
  %v2170 = vadd.f32 %v2167, %v1686
  %v2171 = vadd.f32 %v2168, %v1687
  %v2172 = vmax.f32 %v2169, 0.0
  %v2173 = vmax.f32 %v2170, 0.0
  %v2174 = vmax.f32 %v2171, 0.0
  %s2175 = scalar_lea.vmem %s1, 256
  %v2176 = vld [vmem:[%s2175] sm:$0xff]
  %v2177 = vld [vmem:[%s2175 + $0x8] sm:$0xff]
  %v2178 = vld [vmem:[%s2175 + $0x10] sm:$0xff]
  %v2179 = vld [vmem:[%s2175 + $0x18] sm:$0x7f]
  %v2183 = vrot.slane %v2172, 7
  %v2184 = vrot.slane %v2173, 7
  %v2185 = vsel %vm231, %v2183, %v2184
  %v2186 = vrot.slane %v2174, 7
  %v2187 = vsel %vm231, %v2184, %v2186
  %v2191 = vsel %vm231, 0.0, %v2183
  %v2192 = vrot.slane %v2172, 1
  %v2193 = vrot.slane %v2173, 1
  %v2194 = vsel %vm241, %v2192, %v2193
  %v2195 = vrot.slane %v2174, 1
  %v2196 = vsel %vm241, %v2193, %v2195
  %v2198 = vsel %vm231, %v2195, 0.0
  %2199 = vrot.lane.b32.xlu0 %v2172, 10
  %v2200 = vpop.permute.xlu0 %2199
  %2201 = vrot.lane.b32.xlu0 %v2173, 10
  %v2202 = vpop.permute.xlu0 %2201
  %2203 = vrot.lane.b32.xlu0 %v2174, 10
  %v2204 = vpop.permute.xlu0 %2203
  %2209 = vrot.lane.b32.xlu0 %v2194, 20
  %v2210 = vpop.permute.xlu0 %2209
  %2211 = vrot.lane.b32.xlu0 %v2196, 20
  %v2212 = vpop.permute.xlu0 %2211
  %2213 = vrot.lane.b32.xlu0 %v2198, 20
  %v2214 = vpop.permute.xlu0 %2213
  %v2218 = vsel %vm23, %v2191, %v2200
  %v2219 = vsel %vm23, %v2185, %v2202
  %v2220 = vsel %vm23, %v2187, %v2204
  %v2221 = vsel %vm271, %v2218, %v2210
  %v2222 = vsel %vm271, %v2219, %v2212
  %v2223 = vsel %vm271, %v2220, %v2214
  %v2224 = vsel %vm275, %v2221, 1.0
  %v2225 = vsel %vm275, %v2222, 1.0
  %v2226 = vsel %vm275, %v2223, 1.0
  %v2228 = vsel %vm279, %v2224, 0
  %v2231 = vsel %vm279, %v2225, 0
  %v2234 = vsel %vm279, %v2226, 0
  %v2237 = vsel %vm241, %v2179, 0
  %2239 = vmatprep.subr.mxu0 0.0
  %2240 = vmatpush1.msra.mxu0 0.0
  %2241 = vmatprep.subr.mxu0 0.0
  %2242 = vmatpush1.msra.mxu0 0.0
  %2243 = vmatprep.subr.mxu0 0.0
  %2244 = vmatpush1.msra.mxu0 0.0
  %2245 = vmatprep.subr.mxu0 0.0
  %2246 = vmatpush1.msra.mxu0 0.0
  %2247 = vmatprep.subr.mxu0 0.0
  %2248 = vmatpush1.msra.mxu0 0.0
  %2249 = vmatprep.subr.mxu0 0.0
  %2250 = vmatpush1.msra.mxu0 0.0
  %2251 = vmatprep.subr.mxu0 0.0
  %2252 = vmatpush1.msra.mxu0 0.0
  %2253 = vmatprep.subr.mxu0 0.0
  %2254 = vmatpush1.msra.mxu0 0.0
  %2255 = vmatprep.subr.mxu0 0.0
  %2256 = vmatpush1.msra.mxu0 0.0
  %2257 = vmatprep.subr.mxu0 0.0
  %2258 = vmatpush1.msra.mxu0 0.0
  %2259 = vmatprep.subr.mxu0 0.0
  %2260 = vmatpush1.msra.mxu0 0.0
  %2261 = vmatprep.subr.mxu0 0.0
  %2262 = vmatpush1.msra.mxu0 0.0
  %2263 = vmatprep.subr.mxu0 0.0
  %2264 = vmatpush1.msra.mxu0 %v2237
  %2265 = vmatprep.subr.mxu0 0.0
  %2266 = vmatpush1.msra.mxu0 %v2178
  %2267 = vmatprep.subr.mxu0 0.0
  %2268 = vmatpush1.msra.mxu0 %v2177
  %2269 = vmatprep.subr.mxu0 0.0
  %2270 = vmatpush1.msra.mxu0 %v2176
  %2271 = vmatprep.subr.mxu0 0.0
  %2272 = vmatpush2.msra.mxu0 0.0
  %2273 = vmatprep.subr.mxu0 0.0
  %2274 = vmatpush2.msra.mxu0 0.0
  %2275 = vmatprep.subr.mxu0 0.0
  %2276 = vmatpush2.msra.mxu0 0.0
  %2277 = vmatprep.subr.mxu0 0.0
  %2278 = vmatpush2.msra.mxu0 0.0
  %2279 = vmatprep.subr.mxu0 0.0
  %2280 = vmatpush2.msra.mxu0 0.0
  %2281 = vmatprep.subr.mxu0 0.0
  %2282 = vmatpush2.msra.mxu0 0.0
  %2283 = vmatprep.subr.mxu0 0.0
  %2284 = vmatpush2.msra.mxu0 0.0
  %2285 = vmatprep.subr.mxu0 0.0
  %2286 = vmatpush2.msra.mxu0 0.0
  %2287 = vmatprep.subr.mxu0 0.0
  %2288 = vmatpush2.msra.mxu0 0.0
  %2289 = vmatprep.subr.mxu0 0.0
  %2290 = vmatpush2.msra.mxu0 0.0
  %2291 = vmatprep.subr.mxu0 0.0
  %2292 = vmatpush2.msra.mxu0 0.0
  %2293 = vmatprep.subr.mxu0 0.0
  %2294 = vmatpush2.msra.mxu0 0.0
  %2295 = vmatprep.subr.mxu0 0.0
  %2296 = vmatpush2.msra.mxu0 0.0
  %2297 = vmatprep.subr.mxu0 0.0
  %2298 = vmatpush2.msra.mxu0 0.0
  %2299 = vmatprep.subr.mxu0 0.0
  %2300 = vmatpush2.msra.mxu0 0.0
  %2301 = vmatprep.subr.mxu0 0.0
  %2302 = vmatpush2.msra.mxu0 0.0
  %2303 = vmatprep.mubr.f32.mxu0 0.0
  %2304 = vmatmul.mubr.f32.gmra.mxu0 %v2228
  %v2305 = vpop.f32.mrf.mxu0
  %v2306 = vadd.f32 0.0, %v2305
  %v2307 = vpop.f32.mrf.mxu0
  %2308 = vmatprep.mubr.f32.mxu0 0.0
  %2309 = vmatmul.mubr.f32.gmra.mxu0 %v2231
  %v2310 = vpop.f32.mrf.mxu0
  %v2311 = vadd.f32 0.0, %v2310
  %v2312 = vpop.f32.mrf.mxu0
  %2313 = vmatprep.mubr.f32.mxu0 0.0
  %2314 = vmatmul.mubr.f32.gmra.mxu0 %v2234
  %v2315 = vpop.f32.mrf.mxu0
  %v2316 = vadd.f32 0.0, %v2315
  %v2317 = vpop.f32.mrf.mxu0
  %2318 = vdwg.mxu0
  %s2319 = scalar_lea.vmem %s2, 384
  %v2320 = vld [vmem:[%s2319] sm:$0xff]
  %v2321 = vld [vmem:[%s2319 + $0x8] sm:$0xff]
  %v2322 = vld [vmem:[%s2319 + $0x10] sm:$0x3]
  %s2323 = scalar_lea.vmem %s2, 408
  %v2324 = vld [vmem:[%s2323] sm:$0xff]
  %v2325 = vld [vmem:[%s2323 + $0x8] sm:$0xff]
  %v2326 = vld [vmem:[%s2323 + $0x10] sm:$0x3]
  %v2327 = vsel %vm23, %v2306, 0.0
  %2328 = vadd.xlane.f32.xlu0 %v2327
  %v2329 = vpop.xlane.xlu0 %2328
  %v2330 = vsel %vm23, %v2311, 0.0
  %2331 = vadd.xlane.f32.xlu0 %v2330
  %v2332 = vpop.xlane.xlu0 %2331
  %v2333 = vsel %vm127, %v2316, 0.0
  %2334 = vadd.xlane.f32.xlu0 %v2333
  %v2335 = vpop.xlane.xlu0 %2334
  %v2336 = vmul.f32 %v2306, %v2306
  %v2337 = vmul.f32 %v2311, %v2311
  %v2338 = vmul.f32 %v2316, %v2316
  %v2339 = vsel %vm23, %v2336, 0.0
  %2340 = vadd.xlane.f32.xlu0 %v2339
  %v2341 = vpop.xlane.xlu0 %2340
  %v2342 = vsel %vm23, %v2337, 0.0
  %2343 = vadd.xlane.f32.xlu0 %v2342
  %v2344 = vpop.xlane.xlu0 %2343
  %v2345 = vsel %vm127, %v2338, 0.0
  %2346 = vadd.xlane.f32.xlu0 %v2345
  %v2347 = vpop.xlane.xlu0 %2346
  %v2348 = vmul.f32 %v2329, 0.1
  %v2349 = vmul.f32 %v2332, 0.1
  %v2350 = vmul.f32 %v2335, 0.1
  %v2351 = vmul.f32 %v2341, 0.1
  %v2352 = vmul.f32 %v2344, 0.1
  %v2353 = vmul.f32 %v2347, 0.1
  %v2354 = vmul.f32 %v2348, %v2348
  %v2355 = vmul.f32 %v2349, %v2349
  %v2356 = vmul.f32 %v2350, %v2350
  %v2357 = vsub.f32 %v2351, %v2354
  %v2358 = vsub.f32 %v2352, %v2355
  %v2359 = vsub.f32 %v2353, %v2356
  %v2360 = vmax.f32 %v2357, 0.0
  %v2361 = vmax.f32 %v2358, 0.0
  %v2362 = vmax.f32 %v2359, 0.0
  %v2363 = vadd.f32 %v2360, 1e-05
  %v2364 = vadd.f32 %v2361, 1e-05
  %v2365 = vadd.f32 %v2362, 1e-05
  %v2366 = vrsqrt.pop %v2363
  %v2367 = vrsqrt.pop %v2364
  %v2368 = vrsqrt.pop %v2365
  %v2369 = vmul.f32 %v2320, %v2366
  %v2370 = vmul.f32 %v2321, %v2367
  %v2371 = vmul.f32 %v2322, %v2368
  %v2372 = vmul.f32 %v2348, %v2369
  %v2373 = vmul.f32 %v2349, %v2370
  %v2374 = vmul.f32 %v2350, %v2371
  %v2375 = vsub.f32 %v2324, %v2372
  %v2376 = vsub.f32 %v2325, %v2373
  %v2377 = vsub.f32 %v2326, %v2374
  %2379 = vset.pattern.permute.xlu0 0
  %2380 = vperm.xlu0 %2379, %v2369
  %v2381 = vpop.permute.xlu0 %2380
  %2384 = vset.pattern.permute.xlu0 0
  %2385 = vperm.xlu0 %2384, %v2370
  %v2386 = vpop.permute.xlu0 %2385
  %2389 = vset.pattern.permute.xlu0 0
  %2390 = vperm.xlu0 %2389, %v2371
  %v2391 = vpop.permute.xlu0 %2390
  %v2393 = vmul.f32 %v2306, %v2381
  %v2394 = vmul.f32 %v2311, %v2386
  %v2395 = vmul.f32 %v2316, %v2391
  %2397 = vset.pattern.permute.xlu0 0
  %2398 = vperm.xlu0 %2397, %v2375
  %v2399 = vpop.permute.xlu0 %2398
  %2402 = vset.pattern.permute.xlu0 0
  %2403 = vperm.xlu0 %2402, %v2376
  %v2404 = vpop.permute.xlu0 %2403
  %2407 = vset.pattern.permute.xlu0 0
  %2408 = vperm.xlu0 %2407, %v2377
  %v2409 = vpop.permute.xlu0 %2408
  %v2411 = vadd.f32 %v2393, %v2399
  %v2412 = vadd.f32 %v2394, %v2404
  %v2413 = vadd.f32 %v2395, %v2409
  %v2414 = vmax.f32 %v2411, 0.0
  %v2415 = vmax.f32 %v2412, 0.0
  %v2416 = vmax.f32 %v2413, 0.0
  %s2417 = scalar_lea.vmem %s1, 288
  %v2418 = vld [vmem:[%s2417] sm:$0xff]
  %v2419 = vld [vmem:[%s2417 + $0x8] sm:$0xff]
  %v2420 = vld [vmem:[%s2417 + $0x10] sm:$0xff]
  %v2421 = vld [vmem:[%s2417 + $0x18] sm:$0x7f]
  %v2425 = vrot.slane %v2414, 7
  %v2426 = vrot.slane %v2415, 7
  %v2427 = vsel %vm231, %v2425, %v2426
  %v2428 = vrot.slane %v2416, 7
  %v2429 = vsel %vm231, %v2426, %v2428
  %v2433 = vsel %vm231, 0.0, %v2425
  %v2434 = vrot.slane %v2414, 1
  %v2435 = vrot.slane %v2415, 1
  %v2436 = vsel %vm241, %v2434, %v2435
  %v2437 = vrot.slane %v2416, 1
  %v2438 = vsel %vm241, %v2435, %v2437
  %v2440 = vsel %vm231, %v2437, 0.0
  %2441 = vrot.lane.b32.xlu0 %v2414, 10
  %v2442 = vpop.permute.xlu0 %2441
  %2443 = vrot.lane.b32.xlu0 %v2415, 10
  %v2444 = vpop.permute.xlu0 %2443
  %2445 = vrot.lane.b32.xlu0 %v2416, 10
  %v2446 = vpop.permute.xlu0 %2445
  %2451 = vrot.lane.b32.xlu0 %v2436, 20
  %v2452 = vpop.permute.xlu0 %2451
  %2453 = vrot.lane.b32.xlu0 %v2438, 20
  %v2454 = vpop.permute.xlu0 %2453
  %2455 = vrot.lane.b32.xlu0 %v2440, 20
  %v2456 = vpop.permute.xlu0 %2455
  %v2460 = vsel %vm23, %v2433, %v2442
  %v2461 = vsel %vm23, %v2427, %v2444
  %v2462 = vsel %vm23, %v2429, %v2446
  %v2463 = vsel %vm271, %v2460, %v2452
  %v2464 = vsel %vm271, %v2461, %v2454
  %v2465 = vsel %vm271, %v2462, %v2456
  %v2466 = vsel %vm275, %v2463, 1.0
  %v2467 = vsel %vm275, %v2464, 1.0
  %v2468 = vsel %vm275, %v2465, 1.0
  %v2470 = vsel %vm279, %v2466, 0
  %v2473 = vsel %vm279, %v2467, 0
  %v2476 = vsel %vm279, %v2468, 0
  %v2479 = vsel %vm241, %v2421, 0
  %2481 = vmatprep.subr.mxu0 0.0
  %2482 = vmatpush1.msra.mxu0 0.0
  %2483 = vmatprep.subr.mxu0 0.0
  %2484 = vmatpush1.msra.mxu0 0.0
  %2485 = vmatprep.subr.mxu0 0.0
  %2486 = vmatpush1.msra.mxu0 0.0
  %2487 = vmatprep.subr.mxu0 0.0
  %2488 = vmatpush1.msra.mxu0 0.0
  %2489 = vmatprep.subr.mxu0 0.0
  %2490 = vmatpush1.msra.mxu0 0.0
  %2491 = vmatprep.subr.mxu0 0.0
  %2492 = vmatpush1.msra.mxu0 0.0
  %2493 = vmatprep.subr.mxu0 0.0
  %2494 = vmatpush1.msra.mxu0 0.0
  %2495 = vmatprep.subr.mxu0 0.0
  %2496 = vmatpush1.msra.mxu0 0.0
  %2497 = vmatprep.subr.mxu0 0.0
  %2498 = vmatpush1.msra.mxu0 0.0
  %2499 = vmatprep.subr.mxu0 0.0
  %2500 = vmatpush1.msra.mxu0 0.0
  %2501 = vmatprep.subr.mxu0 0.0
  %2502 = vmatpush1.msra.mxu0 0.0
  %2503 = vmatprep.subr.mxu0 0.0
  %2504 = vmatpush1.msra.mxu0 0.0
  %2505 = vmatprep.subr.mxu0 0.0
  %2506 = vmatpush1.msra.mxu0 %v2479
  %2507 = vmatprep.subr.mxu0 0.0
  %2508 = vmatpush1.msra.mxu0 %v2420
  %2509 = vmatprep.subr.mxu0 0.0
  %2510 = vmatpush1.msra.mxu0 %v2419
  %2511 = vmatprep.subr.mxu0 0.0
  %2512 = vmatpush1.msra.mxu0 %v2418
  %2513 = vmatprep.subr.mxu0 0.0
  %2514 = vmatpush2.msra.mxu0 0.0
  %2515 = vmatprep.subr.mxu0 0.0
  %2516 = vmatpush2.msra.mxu0 0.0
  %2517 = vmatprep.subr.mxu0 0.0
  %2518 = vmatpush2.msra.mxu0 0.0
  %2519 = vmatprep.subr.mxu0 0.0
  %2520 = vmatpush2.msra.mxu0 0.0
  %2521 = vmatprep.subr.mxu0 0.0
  %2522 = vmatpush2.msra.mxu0 0.0
  %2523 = vmatprep.subr.mxu0 0.0
  %2524 = vmatpush2.msra.mxu0 0.0
  %2525 = vmatprep.subr.mxu0 0.0
  %2526 = vmatpush2.msra.mxu0 0.0
  %2527 = vmatprep.subr.mxu0 0.0
  %2528 = vmatpush2.msra.mxu0 0.0
  %2529 = vmatprep.subr.mxu0 0.0
  %2530 = vmatpush2.msra.mxu0 0.0
  %2531 = vmatprep.subr.mxu0 0.0
  %2532 = vmatpush2.msra.mxu0 0.0
  %2533 = vmatprep.subr.mxu0 0.0
  %2534 = vmatpush2.msra.mxu0 0.0
  %2535 = vmatprep.subr.mxu0 0.0
  %2536 = vmatpush2.msra.mxu0 0.0
  %2537 = vmatprep.subr.mxu0 0.0
  %2538 = vmatpush2.msra.mxu0 0.0
  %2539 = vmatprep.subr.mxu0 0.0
  %2540 = vmatpush2.msra.mxu0 0.0
  %2541 = vmatprep.subr.mxu0 0.0
  %2542 = vmatpush2.msra.mxu0 0.0
  %2543 = vmatprep.subr.mxu0 0.0
  %2544 = vmatpush2.msra.mxu0 0.0
  %2545 = vmatprep.mubr.f32.mxu0 0.0
  %2546 = vmatmul.mubr.f32.gmra.mxu0 %v2470
  %v2547 = vpop.f32.mrf.mxu0
  %v2548 = vadd.f32 0.0, %v2547
  %v2549 = vpop.f32.mrf.mxu0
  %2550 = vmatprep.mubr.f32.mxu0 0.0
  %2551 = vmatmul.mubr.f32.gmra.mxu0 %v2473
  %v2552 = vpop.f32.mrf.mxu0
  %v2553 = vadd.f32 0.0, %v2552
  %v2554 = vpop.f32.mrf.mxu0
  %2555 = vmatprep.mubr.f32.mxu0 0.0
  %2556 = vmatmul.mubr.f32.gmra.mxu0 %v2476
  %v2557 = vpop.f32.mrf.mxu0
  %v2558 = vadd.f32 0.0, %v2557
  %v2559 = vpop.f32.mrf.mxu0
  %2560 = vdwg.mxu0
  %s2561 = scalar_lea.vmem %s2, 432
  %v2562 = vld [vmem:[%s2561] sm:$0xff]
  %v2563 = vld [vmem:[%s2561 + $0x8] sm:$0xff]
  %v2564 = vld [vmem:[%s2561 + $0x10] sm:$0x3]
  %s2565 = scalar_lea.vmem %s2, 456
  %v2566 = vld [vmem:[%s2565] sm:$0xff]
  %v2567 = vld [vmem:[%s2565 + $0x8] sm:$0xff]
  %v2568 = vld [vmem:[%s2565 + $0x10] sm:$0x3]
  %v2569 = vsel %vm23, %v2548, 0.0
  %2570 = vadd.xlane.f32.xlu0 %v2569
  %v2571 = vpop.xlane.xlu0 %2570
  %v2572 = vsel %vm23, %v2553, 0.0
  %2573 = vadd.xlane.f32.xlu0 %v2572
  %v2574 = vpop.xlane.xlu0 %2573
  %v2575 = vsel %vm127, %v2558, 0.0
  %2576 = vadd.xlane.f32.xlu0 %v2575
  %v2577 = vpop.xlane.xlu0 %2576
  %v2578 = vmul.f32 %v2548, %v2548
  %v2579 = vmul.f32 %v2553, %v2553
  %v2580 = vmul.f32 %v2558, %v2558
  %v2581 = vsel %vm23, %v2578, 0.0
  %2582 = vadd.xlane.f32.xlu0 %v2581
  %v2583 = vpop.xlane.xlu0 %2582
  %v2584 = vsel %vm23, %v2579, 0.0
  %2585 = vadd.xlane.f32.xlu0 %v2584
  %v2586 = vpop.xlane.xlu0 %2585
  %v2587 = vsel %vm127, %v2580, 0.0
  %2588 = vadd.xlane.f32.xlu0 %v2587
  %v2589 = vpop.xlane.xlu0 %2588
  %v2590 = vmul.f32 %v2571, 0.1
  %v2591 = vmul.f32 %v2574, 0.1
  %v2592 = vmul.f32 %v2577, 0.1
  %v2593 = vmul.f32 %v2583, 0.1
  %v2594 = vmul.f32 %v2586, 0.1
  %v2595 = vmul.f32 %v2589, 0.1
  %v2596 = vmul.f32 %v2590, %v2590
  %v2597 = vmul.f32 %v2591, %v2591
  %v2598 = vmul.f32 %v2592, %v2592
  %v2599 = vsub.f32 %v2593, %v2596
  %v2600 = vsub.f32 %v2594, %v2597
  %v2601 = vsub.f32 %v2595, %v2598
  %v2602 = vmax.f32 %v2599, 0.0
  %v2603 = vmax.f32 %v2600, 0.0
  %v2604 = vmax.f32 %v2601, 0.0
  %v2605 = vadd.f32 %v2602, 1e-05
  %v2606 = vadd.f32 %v2603, 1e-05
  %v2607 = vadd.f32 %v2604, 1e-05
  %v2608 = vrsqrt.pop %v2605
  %v2609 = vrsqrt.pop %v2606
  %v2610 = vrsqrt.pop %v2607
  %v2611 = vmul.f32 %v2562, %v2608
  %v2612 = vmul.f32 %v2563, %v2609
  %v2613 = vmul.f32 %v2564, %v2610
  %v2614 = vmul.f32 %v2590, %v2611
  %v2615 = vmul.f32 %v2591, %v2612
  %v2616 = vmul.f32 %v2592, %v2613
  %v2617 = vsub.f32 %v2566, %v2614
  %v2618 = vsub.f32 %v2567, %v2615
  %v2619 = vsub.f32 %v2568, %v2616
  %2621 = vset.pattern.permute.xlu0 0
  %2622 = vperm.xlu0 %2621, %v2611
  %v2623 = vpop.permute.xlu0 %2622
  %2626 = vset.pattern.permute.xlu0 0
  %2627 = vperm.xlu0 %2626, %v2612
  %v2628 = vpop.permute.xlu0 %2627
  %2631 = vset.pattern.permute.xlu0 0
  %2632 = vperm.xlu0 %2631, %v2613
  %v2633 = vpop.permute.xlu0 %2632
  %v2635 = vmul.f32 %v2548, %v2623
  %v2636 = vmul.f32 %v2553, %v2628
  %v2637 = vmul.f32 %v2558, %v2633
  %2639 = vset.pattern.permute.xlu0 0
  %2640 = vperm.xlu0 %2639, %v2617
  %v2641 = vpop.permute.xlu0 %2640
  %2644 = vset.pattern.permute.xlu0 0
  %2645 = vperm.xlu0 %2644, %v2618
  %v2646 = vpop.permute.xlu0 %2645
  %2649 = vset.pattern.permute.xlu0 0
  %2650 = vperm.xlu0 %2649, %v2619
  %v2651 = vpop.permute.xlu0 %2650
  %v2653 = vadd.f32 %v2635, %v2641
  %v2654 = vadd.f32 %v2636, %v2646
  %v2655 = vadd.f32 %v2637, %v2651
  %v2656 = vadd.f32 %v2653, %v2172
  %v2657 = vadd.f32 %v2654, %v2173
  %v2658 = vadd.f32 %v2655, %v2174
  %v2659 = vmax.f32 %v2656, 0.0
  %v2660 = vmax.f32 %v2657, 0.0
  %v2661 = vmax.f32 %v2658, 0.0
  %s2662 = scalar_lea.vmem %s1, 320
  %v2663 = vld [vmem:[%s2662] sm:$0xff]
  %v2664 = vld [vmem:[%s2662 + $0x8] sm:$0xff]
  %v2665 = vld [vmem:[%s2662 + $0x10] sm:$0xff]
  %v2666 = vld [vmem:[%s2662 + $0x18] sm:$0x7f]
  %v2670 = vrot.slane %v2659, 7
  %v2671 = vrot.slane %v2660, 7
  %v2672 = vsel %vm231, %v2670, %v2671
  %v2673 = vrot.slane %v2661, 7
  %v2674 = vsel %vm231, %v2671, %v2673
  %v2678 = vsel %vm231, 0.0, %v2670
  %v2679 = vrot.slane %v2659, 1
  %v2680 = vrot.slane %v2660, 1
  %v2681 = vsel %vm241, %v2679, %v2680
  %v2682 = vrot.slane %v2661, 1
  %v2683 = vsel %vm241, %v2680, %v2682
  %v2685 = vsel %vm231, %v2682, 0.0
  %2686 = vrot.lane.b32.xlu0 %v2659, 10
  %v2687 = vpop.permute.xlu0 %2686
  %2688 = vrot.lane.b32.xlu0 %v2660, 10
  %v2689 = vpop.permute.xlu0 %2688
  %2690 = vrot.lane.b32.xlu0 %v2661, 10
  %v2691 = vpop.permute.xlu0 %2690
  %2696 = vrot.lane.b32.xlu0 %v2681, 20
  %v2697 = vpop.permute.xlu0 %2696
  %2698 = vrot.lane.b32.xlu0 %v2683, 20
  %v2699 = vpop.permute.xlu0 %2698
  %2700 = vrot.lane.b32.xlu0 %v2685, 20
  %v2701 = vpop.permute.xlu0 %2700
  %v2705 = vsel %vm23, %v2678, %v2687
  %v2706 = vsel %vm23, %v2672, %v2689
  %v2707 = vsel %vm23, %v2674, %v2691
  %v2708 = vsel %vm271, %v2705, %v2697
  %v2709 = vsel %vm271, %v2706, %v2699
  %v2710 = vsel %vm271, %v2707, %v2701
  %v2711 = vsel %vm275, %v2708, 1.0
  %v2712 = vsel %vm275, %v2709, 1.0
  %v2713 = vsel %vm275, %v2710, 1.0
  %v2715 = vsel %vm279, %v2711, 0
  %v2718 = vsel %vm279, %v2712, 0
  %v2721 = vsel %vm279, %v2713, 0
  %v2724 = vsel %vm241, %v2666, 0
  %2726 = vmatprep.subr.mxu0 0.0
  %2727 = vmatpush1.msra.mxu0 0.0
  %2728 = vmatprep.subr.mxu0 0.0
  %2729 = vmatpush1.msra.mxu0 0.0
  %2730 = vmatprep.subr.mxu0 0.0
  %2731 = vmatpush1.msra.mxu0 0.0
  %2732 = vmatprep.subr.mxu0 0.0
  %2733 = vmatpush1.msra.mxu0 0.0
  %2734 = vmatprep.subr.mxu0 0.0
  %2735 = vmatpush1.msra.mxu0 0.0
  %2736 = vmatprep.subr.mxu0 0.0
  %2737 = vmatpush1.msra.mxu0 0.0
  %2738 = vmatprep.subr.mxu0 0.0
  %2739 = vmatpush1.msra.mxu0 0.0
  %2740 = vmatprep.subr.mxu0 0.0
  %2741 = vmatpush1.msra.mxu0 0.0
  %2742 = vmatprep.subr.mxu0 0.0
  %2743 = vmatpush1.msra.mxu0 0.0
  %2744 = vmatprep.subr.mxu0 0.0
  %2745 = vmatpush1.msra.mxu0 0.0
  %2746 = vmatprep.subr.mxu0 0.0
  %2747 = vmatpush1.msra.mxu0 0.0
  %2748 = vmatprep.subr.mxu0 0.0
  %2749 = vmatpush1.msra.mxu0 0.0
  %2750 = vmatprep.subr.mxu0 0.0
  %2751 = vmatpush1.msra.mxu0 %v2724
  %2752 = vmatprep.subr.mxu0 0.0
  %2753 = vmatpush1.msra.mxu0 %v2665
  %2754 = vmatprep.subr.mxu0 0.0
  %2755 = vmatpush1.msra.mxu0 %v2664
  %2756 = vmatprep.subr.mxu0 0.0
  %2757 = vmatpush1.msra.mxu0 %v2663
  %2758 = vmatprep.subr.mxu0 0.0
  %2759 = vmatpush2.msra.mxu0 0.0
  %2760 = vmatprep.subr.mxu0 0.0
  %2761 = vmatpush2.msra.mxu0 0.0
  %2762 = vmatprep.subr.mxu0 0.0
  %2763 = vmatpush2.msra.mxu0 0.0
  %2764 = vmatprep.subr.mxu0 0.0
  %2765 = vmatpush2.msra.mxu0 0.0
  %2766 = vmatprep.subr.mxu0 0.0
  %2767 = vmatpush2.msra.mxu0 0.0
  %2768 = vmatprep.subr.mxu0 0.0
  %2769 = vmatpush2.msra.mxu0 0.0
  %2770 = vmatprep.subr.mxu0 0.0
  %2771 = vmatpush2.msra.mxu0 0.0
  %2772 = vmatprep.subr.mxu0 0.0
  %2773 = vmatpush2.msra.mxu0 0.0
  %2774 = vmatprep.subr.mxu0 0.0
  %2775 = vmatpush2.msra.mxu0 0.0
  %2776 = vmatprep.subr.mxu0 0.0
  %2777 = vmatpush2.msra.mxu0 0.0
  %2778 = vmatprep.subr.mxu0 0.0
  %2779 = vmatpush2.msra.mxu0 0.0
  %2780 = vmatprep.subr.mxu0 0.0
  %2781 = vmatpush2.msra.mxu0 0.0
  %2782 = vmatprep.subr.mxu0 0.0
  %2783 = vmatpush2.msra.mxu0 0.0
  %2784 = vmatprep.subr.mxu0 0.0
  %2785 = vmatpush2.msra.mxu0 0.0
  %2786 = vmatprep.subr.mxu0 0.0
  %2787 = vmatpush2.msra.mxu0 0.0
  %2788 = vmatprep.subr.mxu0 0.0
  %2789 = vmatpush2.msra.mxu0 0.0
  %2790 = vmatprep.mubr.f32.mxu0 0.0
  %2791 = vmatmul.mubr.f32.gmra.mxu0 %v2715
  %v2792 = vpop.f32.mrf.mxu0
  %v2793 = vadd.f32 0.0, %v2792
  %v2794 = vpop.f32.mrf.mxu0
  %2795 = vmatprep.mubr.f32.mxu0 0.0
  %2796 = vmatmul.mubr.f32.gmra.mxu0 %v2718
  %v2797 = vpop.f32.mrf.mxu0
  %v2798 = vadd.f32 0.0, %v2797
  %v2799 = vpop.f32.mrf.mxu0
  %2800 = vmatprep.mubr.f32.mxu0 0.0
  %2801 = vmatmul.mubr.f32.gmra.mxu0 %v2721
  %v2802 = vpop.f32.mrf.mxu0
  %v2803 = vadd.f32 0.0, %v2802
  %v2804 = vpop.f32.mrf.mxu0
  %2805 = vdwg.mxu0
  %s2806 = scalar_lea.vmem %s2, 480
  %v2807 = vld [vmem:[%s2806] sm:$0xff]
  %v2808 = vld [vmem:[%s2806 + $0x8] sm:$0xff]
  %v2809 = vld [vmem:[%s2806 + $0x10] sm:$0x3]
  %s2810 = scalar_lea.vmem %s2, 504
  %v2811 = vld [vmem:[%s2810] sm:$0xff]
  %v2812 = vld [vmem:[%s2810 + $0x8] sm:$0xff]
  %v2813 = vld [vmem:[%s2810 + $0x10] sm:$0x3]
  %v2814 = vsel %vm23, %v2793, 0.0
  %2815 = vadd.xlane.f32.xlu0 %v2814
  %v2816 = vpop.xlane.xlu0 %2815
  %v2817 = vsel %vm23, %v2798, 0.0
  %2818 = vadd.xlane.f32.xlu0 %v2817
  %v2819 = vpop.xlane.xlu0 %2818
  %v2820 = vsel %vm127, %v2803, 0.0
  %2821 = vadd.xlane.f32.xlu0 %v2820
  %v2822 = vpop.xlane.xlu0 %2821
  %v2823 = vmul.f32 %v2793, %v2793
  %v2824 = vmul.f32 %v2798, %v2798
  %v2825 = vmul.f32 %v2803, %v2803
  %v2826 = vsel %vm23, %v2823, 0.0
  %2827 = vadd.xlane.f32.xlu0 %v2826
  %v2828 = vpop.xlane.xlu0 %2827
  %v2829 = vsel %vm23, %v2824, 0.0
  %2830 = vadd.xlane.f32.xlu0 %v2829
  %v2831 = vpop.xlane.xlu0 %2830
  %v2832 = vsel %vm127, %v2825, 0.0
  %2833 = vadd.xlane.f32.xlu0 %v2832
  %v2834 = vpop.xlane.xlu0 %2833
  %v2835 = vmul.f32 %v2816, 0.1
  %v2836 = vmul.f32 %v2819, 0.1
  %v2837 = vmul.f32 %v2822, 0.1
  %v2838 = vmul.f32 %v2828, 0.1
  %v2839 = vmul.f32 %v2831, 0.1
  %v2840 = vmul.f32 %v2834, 0.1
  %v2841 = vmul.f32 %v2835, %v2835
  %v2842 = vmul.f32 %v2836, %v2836
  %v2843 = vmul.f32 %v2837, %v2837
  %v2844 = vsub.f32 %v2838, %v2841
  %v2845 = vsub.f32 %v2839, %v2842
  %v2846 = vsub.f32 %v2840, %v2843
  %v2847 = vmax.f32 %v2844, 0.0
  %v2848 = vmax.f32 %v2845, 0.0
  %v2849 = vmax.f32 %v2846, 0.0
  %v2850 = vadd.f32 %v2847, 1e-05
  %v2851 = vadd.f32 %v2848, 1e-05
  %v2852 = vadd.f32 %v2849, 1e-05
  %v2853 = vrsqrt.pop %v2850
  %v2854 = vrsqrt.pop %v2851
  %v2855 = vrsqrt.pop %v2852
  %v2856 = vmul.f32 %v2807, %v2853
  %v2857 = vmul.f32 %v2808, %v2854
  %v2858 = vmul.f32 %v2809, %v2855
  %v2859 = vmul.f32 %v2835, %v2856
  %v2860 = vmul.f32 %v2836, %v2857
  %v2861 = vmul.f32 %v2837, %v2858
  %v2862 = vsub.f32 %v2811, %v2859
  %v2863 = vsub.f32 %v2812, %v2860
  %v2864 = vsub.f32 %v2813, %v2861
  %2866 = vset.pattern.permute.xlu0 0
  %2867 = vperm.xlu0 %2866, %v2856
  %v2868 = vpop.permute.xlu0 %2867
  %2871 = vset.pattern.permute.xlu0 0
  %2872 = vperm.xlu0 %2871, %v2857
  %v2873 = vpop.permute.xlu0 %2872
  %2876 = vset.pattern.permute.xlu0 0
  %2877 = vperm.xlu0 %2876, %v2858
  %v2878 = vpop.permute.xlu0 %2877
  %v2880 = vmul.f32 %v2793, %v2868
  %v2881 = vmul.f32 %v2798, %v2873
  %v2882 = vmul.f32 %v2803, %v2878
  %2884 = vset.pattern.permute.xlu0 0
  %2885 = vperm.xlu0 %2884, %v2862
  %v2886 = vpop.permute.xlu0 %2885
  %2889 = vset.pattern.permute.xlu0 0
  %2890 = vperm.xlu0 %2889, %v2863
  %v2891 = vpop.permute.xlu0 %2890
  %2894 = vset.pattern.permute.xlu0 0
  %2895 = vperm.xlu0 %2894, %v2864
  %v2896 = vpop.permute.xlu0 %2895
  %v2898 = vadd.f32 %v2880, %v2886
  %v2899 = vadd.f32 %v2881, %v2891
  %v2900 = vadd.f32 %v2882, %v2896
  %v2901 = vmax.f32 %v2898, 0.0
  %v2902 = vmax.f32 %v2899, 0.0
  %v2903 = vmax.f32 %v2900, 0.0
  %s2904 = scalar_lea.vmem %s1, 352
  %v2905 = vld [vmem:[%s2904] sm:$0xff]
  %v2906 = vld [vmem:[%s2904 + $0x8] sm:$0xff]
  %v2907 = vld [vmem:[%s2904 + $0x10] sm:$0xff]
  %v2908 = vld [vmem:[%s2904 + $0x18] sm:$0x7f]
  %v2912 = vrot.slane %v2901, 7
  %v2913 = vrot.slane %v2902, 7
  %v2914 = vsel %vm231, %v2912, %v2913
  %v2915 = vrot.slane %v2903, 7
  %v2916 = vsel %vm231, %v2913, %v2915
  %v2920 = vsel %vm231, 0.0, %v2912
  %v2921 = vrot.slane %v2901, 1
  %v2922 = vrot.slane %v2902, 1
  %v2923 = vsel %vm241, %v2921, %v2922
  %v2924 = vrot.slane %v2903, 1
  %v2925 = vsel %vm241, %v2922, %v2924
  %v2927 = vsel %vm231, %v2924, 0.0
  %2928 = vrot.lane.b32.xlu0 %v2901, 10
  %v2929 = vpop.permute.xlu0 %2928
  %2930 = vrot.lane.b32.xlu0 %v2902, 10
  %v2931 = vpop.permute.xlu0 %2930
  %2932 = vrot.lane.b32.xlu0 %v2903, 10
  %v2933 = vpop.permute.xlu0 %2932
  %2938 = vrot.lane.b32.xlu0 %v2923, 20
  %v2939 = vpop.permute.xlu0 %2938
  %2940 = vrot.lane.b32.xlu0 %v2925, 20
  %v2941 = vpop.permute.xlu0 %2940
  %2942 = vrot.lane.b32.xlu0 %v2927, 20
  %v2943 = vpop.permute.xlu0 %2942
  %v2947 = vsel %vm23, %v2920, %v2929
  %v2948 = vsel %vm23, %v2914, %v2931
  %v2949 = vsel %vm23, %v2916, %v2933
  %v2950 = vsel %vm271, %v2947, %v2939
  %v2951 = vsel %vm271, %v2948, %v2941
  %v2952 = vsel %vm271, %v2949, %v2943
  %v2953 = vsel %vm275, %v2950, 1.0
  %v2954 = vsel %vm275, %v2951, 1.0
  %v2955 = vsel %vm275, %v2952, 1.0
  %v2957 = vsel %vm279, %v2953, 0
  %v2960 = vsel %vm279, %v2954, 0
  %v2963 = vsel %vm279, %v2955, 0
  %v2966 = vsel %vm241, %v2908, 0
  %2968 = vmatprep.subr.mxu0 0.0
  %2969 = vmatpush1.msra.mxu0 0.0
  %2970 = vmatprep.subr.mxu0 0.0
  %2971 = vmatpush1.msra.mxu0 0.0
  %2972 = vmatprep.subr.mxu0 0.0
  %2973 = vmatpush1.msra.mxu0 0.0
  %2974 = vmatprep.subr.mxu0 0.0
  %2975 = vmatpush1.msra.mxu0 0.0
  %2976 = vmatprep.subr.mxu0 0.0
  %2977 = vmatpush1.msra.mxu0 0.0
  %2978 = vmatprep.subr.mxu0 0.0
  %2979 = vmatpush1.msra.mxu0 0.0
  %2980 = vmatprep.subr.mxu0 0.0
  %2981 = vmatpush1.msra.mxu0 0.0
  %2982 = vmatprep.subr.mxu0 0.0
  %2983 = vmatpush1.msra.mxu0 0.0
  %2984 = vmatprep.subr.mxu0 0.0
  %2985 = vmatpush1.msra.mxu0 0.0
  %2986 = vmatprep.subr.mxu0 0.0
  %2987 = vmatpush1.msra.mxu0 0.0
  %2988 = vmatprep.subr.mxu0 0.0
  %2989 = vmatpush1.msra.mxu0 0.0
  %2990 = vmatprep.subr.mxu0 0.0
  %2991 = vmatpush1.msra.mxu0 0.0
  %2992 = vmatprep.subr.mxu0 0.0
  %2993 = vmatpush1.msra.mxu0 %v2966
  %2994 = vmatprep.subr.mxu0 0.0
  %2995 = vmatpush1.msra.mxu0 %v2907
  %2996 = vmatprep.subr.mxu0 0.0
  %2997 = vmatpush1.msra.mxu0 %v2906
  %2998 = vmatprep.subr.mxu0 0.0
  %2999 = vmatpush1.msra.mxu0 %v2905
  %3000 = vmatprep.subr.mxu0 0.0
  %3001 = vmatpush2.msra.mxu0 0.0
  %3002 = vmatprep.subr.mxu0 0.0
  %3003 = vmatpush2.msra.mxu0 0.0
  %3004 = vmatprep.subr.mxu0 0.0
  %3005 = vmatpush2.msra.mxu0 0.0
  %3006 = vmatprep.subr.mxu0 0.0
  %3007 = vmatpush2.msra.mxu0 0.0
  %3008 = vmatprep.subr.mxu0 0.0
  %3009 = vmatpush2.msra.mxu0 0.0
  %3010 = vmatprep.subr.mxu0 0.0
  %3011 = vmatpush2.msra.mxu0 0.0
  %3012 = vmatprep.subr.mxu0 0.0
  %3013 = vmatpush2.msra.mxu0 0.0
  %3014 = vmatprep.subr.mxu0 0.0
  %3015 = vmatpush2.msra.mxu0 0.0
  %3016 = vmatprep.subr.mxu0 0.0
  %3017 = vmatpush2.msra.mxu0 0.0
  %3018 = vmatprep.subr.mxu0 0.0
  %3019 = vmatpush2.msra.mxu0 0.0
  %3020 = vmatprep.subr.mxu0 0.0
  %3021 = vmatpush2.msra.mxu0 0.0
  %3022 = vmatprep.subr.mxu0 0.0
  %3023 = vmatpush2.msra.mxu0 0.0
  %3024 = vmatprep.subr.mxu0 0.0
  %3025 = vmatpush2.msra.mxu0 0.0
  %3026 = vmatprep.subr.mxu0 0.0
  %3027 = vmatpush2.msra.mxu0 0.0
  %3028 = vmatprep.subr.mxu0 0.0
  %3029 = vmatpush2.msra.mxu0 0.0
  %3030 = vmatprep.subr.mxu0 0.0
  %3031 = vmatpush2.msra.mxu0 0.0
  %3032 = vmatprep.mubr.f32.mxu0 0.0
  %3033 = vmatmul.mubr.f32.gmra.mxu0 %v2957
  %v3034 = vpop.f32.mrf.mxu0
  %v3035 = vadd.f32 0.0, %v3034
  %v3036 = vpop.f32.mrf.mxu0
  %3037 = vmatprep.mubr.f32.mxu0 0.0
  %3038 = vmatmul.mubr.f32.gmra.mxu0 %v2960
  %v3039 = vpop.f32.mrf.mxu0
  %v3040 = vadd.f32 0.0, %v3039
  %v3041 = vpop.f32.mrf.mxu0
  %3042 = vmatprep.mubr.f32.mxu0 0.0
  %3043 = vmatmul.mubr.f32.gmra.mxu0 %v2963
  %v3044 = vpop.f32.mrf.mxu0
  %v3045 = vadd.f32 0.0, %v3044
  %v3046 = vpop.f32.mrf.mxu0
  %3047 = vdwg.mxu0
  %s3048 = scalar_lea.vmem %s2, 528
  %v3049 = vld [vmem:[%s3048] sm:$0xff]
  %v3050 = vld [vmem:[%s3048 + $0x8] sm:$0xff]
  %v3051 = vld [vmem:[%s3048 + $0x10] sm:$0x3]
  %s3052 = scalar_lea.vmem %s2, 552
  %v3053 = vld [vmem:[%s3052] sm:$0xff]
  %v3054 = vld [vmem:[%s3052 + $0x8] sm:$0xff]
  %v3055 = vld [vmem:[%s3052 + $0x10] sm:$0x3]
  %v3056 = vsel %vm23, %v3035, 0.0
  %3057 = vadd.xlane.f32.xlu0 %v3056
  %v3058 = vpop.xlane.xlu0 %3057
  %v3059 = vsel %vm23, %v3040, 0.0
  %3060 = vadd.xlane.f32.xlu0 %v3059
  %v3061 = vpop.xlane.xlu0 %3060
  %v3062 = vsel %vm127, %v3045, 0.0
  %3063 = vadd.xlane.f32.xlu0 %v3062
  %v3064 = vpop.xlane.xlu0 %3063
  %v3065 = vmul.f32 %v3035, %v3035
  %v3066 = vmul.f32 %v3040, %v3040
  %v3067 = vmul.f32 %v3045, %v3045
  %v3068 = vsel %vm23, %v3065, 0.0
  %3069 = vadd.xlane.f32.xlu0 %v3068
  %v3070 = vpop.xlane.xlu0 %3069
  %v3071 = vsel %vm23, %v3066, 0.0
  %3072 = vadd.xlane.f32.xlu0 %v3071
  %v3073 = vpop.xlane.xlu0 %3072
  %v3074 = vsel %vm127, %v3067, 0.0
  %3075 = vadd.xlane.f32.xlu0 %v3074
  %v3076 = vpop.xlane.xlu0 %3075
  %v3077 = vmul.f32 %v3058, 0.1
  %v3078 = vmul.f32 %v3061, 0.1
  %v3079 = vmul.f32 %v3064, 0.1
  %v3080 = vmul.f32 %v3070, 0.1
  %v3081 = vmul.f32 %v3073, 0.1
  %v3082 = vmul.f32 %v3076, 0.1
  %v3083 = vmul.f32 %v3077, %v3077
  %v3084 = vmul.f32 %v3078, %v3078
  %v3085 = vmul.f32 %v3079, %v3079
  %v3086 = vsub.f32 %v3080, %v3083
  %v3087 = vsub.f32 %v3081, %v3084
  %v3088 = vsub.f32 %v3082, %v3085
  %v3089 = vmax.f32 %v3086, 0.0
  %v3090 = vmax.f32 %v3087, 0.0
  %v3091 = vmax.f32 %v3088, 0.0
  %v3092 = vadd.f32 %v3089, 1e-05
  %v3093 = vadd.f32 %v3090, 1e-05
  %v3094 = vadd.f32 %v3091, 1e-05
  %v3095 = vrsqrt.pop %v3092
  %v3096 = vrsqrt.pop %v3093
  %v3097 = vrsqrt.pop %v3094
  %v3098 = vmul.f32 %v3049, %v3095
  %v3099 = vmul.f32 %v3050, %v3096
  %v3100 = vmul.f32 %v3051, %v3097
  %v3101 = vmul.f32 %v3077, %v3098
  %v3102 = vmul.f32 %v3078, %v3099
  %v3103 = vmul.f32 %v3079, %v3100
  %v3104 = vsub.f32 %v3053, %v3101
  %v3105 = vsub.f32 %v3054, %v3102
  %v3106 = vsub.f32 %v3055, %v3103
  %3108 = vset.pattern.permute.xlu0 0
  %3109 = vperm.xlu0 %3108, %v3098
  %v3110 = vpop.permute.xlu0 %3109
  %3113 = vset.pattern.permute.xlu0 0
  %3114 = vperm.xlu0 %3113, %v3099
  %v3115 = vpop.permute.xlu0 %3114
  %3118 = vset.pattern.permute.xlu0 0
  %3119 = vperm.xlu0 %3118, %v3100
  %v3120 = vpop.permute.xlu0 %3119
  %v3122 = vmul.f32 %v3035, %v3110
  %v3123 = vmul.f32 %v3040, %v3115
  %v3124 = vmul.f32 %v3045, %v3120
  %3126 = vset.pattern.permute.xlu0 0
  %3127 = vperm.xlu0 %3126, %v3104
  %v3128 = vpop.permute.xlu0 %3127
  %3131 = vset.pattern.permute.xlu0 0
  %3132 = vperm.xlu0 %3131, %v3105
  %v3133 = vpop.permute.xlu0 %3132
  %3136 = vset.pattern.permute.xlu0 0
  %3137 = vperm.xlu0 %3136, %v3106
  %v3138 = vpop.permute.xlu0 %3137
  %v3140 = vadd.f32 %v3122, %v3128
  %v3141 = vadd.f32 %v3123, %v3133
  %v3142 = vadd.f32 %v3124, %v3138
  %v3143 = vadd.f32 %v3140, %v2659
  %v3144 = vadd.f32 %v3141, %v2660
  %v3145 = vadd.f32 %v3142, %v2661
  %v3146 = vmax.f32 %v3143, 0.0
  %v3147 = vmax.f32 %v3144, 0.0
  %v3148 = vmax.f32 %v3145, 0.0
  %s3149 = scalar_lea.vmem %s1, 384
  %v3150 = vld [vmem:[%s3149] sm:$0xff]
  %v3151 = vld [vmem:[%s3149 + $0x8] sm:$0xff]
  %v3152 = vld [vmem:[%s3149 + $0x10] sm:$0xff]
  %v3153 = vld [vmem:[%s3149 + $0x18] sm:$0x7f]
  %v3157 = vrot.slane %v3146, 7
  %v3158 = vrot.slane %v3147, 7
  %v3159 = vsel %vm231, %v3157, %v3158
  %v3160 = vrot.slane %v3148, 7
  %v3161 = vsel %vm231, %v3158, %v3160
  %v3165 = vsel %vm231, 0.0, %v3157
  %v3166 = vrot.slane %v3146, 1
  %v3167 = vrot.slane %v3147, 1
  %v3168 = vsel %vm241, %v3166, %v3167
  %v3169 = vrot.slane %v3148, 1
  %v3170 = vsel %vm241, %v3167, %v3169
  %v3172 = vsel %vm231, %v3169, 0.0
  %3173 = vrot.lane.b32.xlu0 %v3146, 10
  %v3174 = vpop.permute.xlu0 %3173
  %3175 = vrot.lane.b32.xlu0 %v3147, 10
  %v3176 = vpop.permute.xlu0 %3175
  %3177 = vrot.lane.b32.xlu0 %v3148, 10
  %v3178 = vpop.permute.xlu0 %3177
  %3183 = vrot.lane.b32.xlu0 %v3168, 20
  %v3184 = vpop.permute.xlu0 %3183
  %3185 = vrot.lane.b32.xlu0 %v3170, 20
  %v3186 = vpop.permute.xlu0 %3185
  %3187 = vrot.lane.b32.xlu0 %v3172, 20
  %v3188 = vpop.permute.xlu0 %3187
  %v3192 = vsel %vm23, %v3165, %v3174
  %v3193 = vsel %vm23, %v3159, %v3176
  %v3194 = vsel %vm23, %v3161, %v3178
  %v3195 = vsel %vm271, %v3192, %v3184
  %v3196 = vsel %vm271, %v3193, %v3186
  %v3197 = vsel %vm271, %v3194, %v3188
  %v3198 = vsel %vm275, %v3195, 1.0
  %v3199 = vsel %vm275, %v3196, 1.0
  %v3200 = vsel %vm275, %v3197, 1.0
  %v3202 = vsel %vm279, %v3198, 0
  %v3205 = vsel %vm279, %v3199, 0
  %v3208 = vsel %vm279, %v3200, 0
  %v3211 = vsel %vm241, %v3153, 0
  %3213 = vmatprep.subr.mxu0 0.0
  %3214 = vmatpush1.msra.mxu0 0.0
  %3215 = vmatprep.subr.mxu0 0.0
  %3216 = vmatpush1.msra.mxu0 0.0
  %3217 = vmatprep.subr.mxu0 0.0
  %3218 = vmatpush1.msra.mxu0 0.0
  %3219 = vmatprep.subr.mxu0 0.0
  %3220 = vmatpush1.msra.mxu0 0.0
  %3221 = vmatprep.subr.mxu0 0.0
  %3222 = vmatpush1.msra.mxu0 0.0
  %3223 = vmatprep.subr.mxu0 0.0
  %3224 = vmatpush1.msra.mxu0 0.0
  %3225 = vmatprep.subr.mxu0 0.0
  %3226 = vmatpush1.msra.mxu0 0.0
  %3227 = vmatprep.subr.mxu0 0.0
  %3228 = vmatpush1.msra.mxu0 0.0
  %3229 = vmatprep.subr.mxu0 0.0
  %3230 = vmatpush1.msra.mxu0 0.0
  %3231 = vmatprep.subr.mxu0 0.0
  %3232 = vmatpush1.msra.mxu0 0.0
  %3233 = vmatprep.subr.mxu0 0.0
  %3234 = vmatpush1.msra.mxu0 0.0
  %3235 = vmatprep.subr.mxu0 0.0
  %3236 = vmatpush1.msra.mxu0 0.0
  %3237 = vmatprep.subr.mxu0 0.0
  %3238 = vmatpush1.msra.mxu0 %v3211
  %3239 = vmatprep.subr.mxu0 0.0
  %3240 = vmatpush1.msra.mxu0 %v3152
  %3241 = vmatprep.subr.mxu0 0.0
  %3242 = vmatpush1.msra.mxu0 %v3151
  %3243 = vmatprep.subr.mxu0 0.0
  %3244 = vmatpush1.msra.mxu0 %v3150
  %3245 = vmatprep.subr.mxu0 0.0
  %3246 = vmatpush2.msra.mxu0 0.0
  %3247 = vmatprep.subr.mxu0 0.0
  %3248 = vmatpush2.msra.mxu0 0.0
  %3249 = vmatprep.subr.mxu0 0.0
  %3250 = vmatpush2.msra.mxu0 0.0
  %3251 = vmatprep.subr.mxu0 0.0
  %3252 = vmatpush2.msra.mxu0 0.0
  %3253 = vmatprep.subr.mxu0 0.0
  %3254 = vmatpush2.msra.mxu0 0.0
  %3255 = vmatprep.subr.mxu0 0.0
  %3256 = vmatpush2.msra.mxu0 0.0
  %3257 = vmatprep.subr.mxu0 0.0
  %3258 = vmatpush2.msra.mxu0 0.0
  %3259 = vmatprep.subr.mxu0 0.0
  %3260 = vmatpush2.msra.mxu0 0.0
  %3261 = vmatprep.subr.mxu0 0.0
  %3262 = vmatpush2.msra.mxu0 0.0
  %3263 = vmatprep.subr.mxu0 0.0
  %3264 = vmatpush2.msra.mxu0 0.0
  %3265 = vmatprep.subr.mxu0 0.0
  %3266 = vmatpush2.msra.mxu0 0.0
  %3267 = vmatprep.subr.mxu0 0.0
  %3268 = vmatpush2.msra.mxu0 0.0
  %3269 = vmatprep.subr.mxu0 0.0
  %3270 = vmatpush2.msra.mxu0 0.0
  %3271 = vmatprep.subr.mxu0 0.0
  %3272 = vmatpush2.msra.mxu0 0.0
  %3273 = vmatprep.subr.mxu0 0.0
  %3274 = vmatpush2.msra.mxu0 0.0
  %3275 = vmatprep.subr.mxu0 0.0
  %3276 = vmatpush2.msra.mxu0 0.0
  %3277 = vmatprep.mubr.f32.mxu0 0.0
  %3278 = vmatmul.mubr.f32.gmra.mxu0 %v3202
  %v3279 = vpop.f32.mrf.mxu0
  %v3280 = vadd.f32 0.0, %v3279
  %v3281 = vpop.f32.mrf.mxu0
  %3282 = vmatprep.mubr.f32.mxu0 0.0
  %3283 = vmatmul.mubr.f32.gmra.mxu0 %v3205
  %v3284 = vpop.f32.mrf.mxu0
  %v3285 = vadd.f32 0.0, %v3284
  %v3286 = vpop.f32.mrf.mxu0
  %3287 = vmatprep.mubr.f32.mxu0 0.0
  %3288 = vmatmul.mubr.f32.gmra.mxu0 %v3208
  %v3289 = vpop.f32.mrf.mxu0
  %v3290 = vadd.f32 0.0, %v3289
  %v3291 = vpop.f32.mrf.mxu0
  %3292 = vdwg.mxu0
  %s3293 = scalar_lea.vmem %s2, 576
  %v3294 = vld [vmem:[%s3293] sm:$0xff]
  %v3295 = vld [vmem:[%s3293 + $0x8] sm:$0xff]
  %v3296 = vld [vmem:[%s3293 + $0x10] sm:$0x3]
  %s3297 = scalar_lea.vmem %s2, 600
  %v3298 = vld [vmem:[%s3297] sm:$0xff]
  %v3299 = vld [vmem:[%s3297 + $0x8] sm:$0xff]
  %v3300 = vld [vmem:[%s3297 + $0x10] sm:$0x3]
  %v3301 = vsel %vm23, %v3280, 0.0
  %3302 = vadd.xlane.f32.xlu0 %v3301
  %v3303 = vpop.xlane.xlu0 %3302
  %v3304 = vsel %vm23, %v3285, 0.0
  %3305 = vadd.xlane.f32.xlu0 %v3304
  %v3306 = vpop.xlane.xlu0 %3305
  %v3307 = vsel %vm127, %v3290, 0.0
  %3308 = vadd.xlane.f32.xlu0 %v3307
  %v3309 = vpop.xlane.xlu0 %3308
  %v3310 = vmul.f32 %v3280, %v3280
  %v3311 = vmul.f32 %v3285, %v3285
  %v3312 = vmul.f32 %v3290, %v3290
  %v3313 = vsel %vm23, %v3310, 0.0
  %3314 = vadd.xlane.f32.xlu0 %v3313
  %v3315 = vpop.xlane.xlu0 %3314
  %v3316 = vsel %vm23, %v3311, 0.0
  %3317 = vadd.xlane.f32.xlu0 %v3316
  %v3318 = vpop.xlane.xlu0 %3317
  %v3319 = vsel %vm127, %v3312, 0.0
  %3320 = vadd.xlane.f32.xlu0 %v3319
  %v3321 = vpop.xlane.xlu0 %3320
  %v3322 = vmul.f32 %v3303, 0.1
  %v3323 = vmul.f32 %v3306, 0.1
  %v3324 = vmul.f32 %v3309, 0.1
  %v3325 = vmul.f32 %v3315, 0.1
  %v3326 = vmul.f32 %v3318, 0.1
  %v3327 = vmul.f32 %v3321, 0.1
  %v3328 = vmul.f32 %v3322, %v3322
  %v3329 = vmul.f32 %v3323, %v3323
  %v3330 = vmul.f32 %v3324, %v3324
  %v3331 = vsub.f32 %v3325, %v3328
  %v3332 = vsub.f32 %v3326, %v3329
  %v3333 = vsub.f32 %v3327, %v3330
  %v3334 = vmax.f32 %v3331, 0.0
  %v3335 = vmax.f32 %v3332, 0.0
  %v3336 = vmax.f32 %v3333, 0.0
  %v3337 = vadd.f32 %v3334, 1e-05
  %v3338 = vadd.f32 %v3335, 1e-05
  %v3339 = vadd.f32 %v3336, 1e-05
  %v3340 = vrsqrt.pop %v3337
  %v3341 = vrsqrt.pop %v3338
  %v3342 = vrsqrt.pop %v3339
  %v3343 = vmul.f32 %v3294, %v3340
  %v3344 = vmul.f32 %v3295, %v3341
  %v3345 = vmul.f32 %v3296, %v3342
  %v3346 = vmul.f32 %v3322, %v3343
  %v3347 = vmul.f32 %v3323, %v3344
  %v3348 = vmul.f32 %v3324, %v3345
  %v3349 = vsub.f32 %v3298, %v3346
  %v3350 = vsub.f32 %v3299, %v3347
  %v3351 = vsub.f32 %v3300, %v3348
  %3353 = vset.pattern.permute.xlu0 0
  %3354 = vperm.xlu0 %3353, %v3343
  %v3355 = vpop.permute.xlu0 %3354
  %3358 = vset.pattern.permute.xlu0 0
  %3359 = vperm.xlu0 %3358, %v3344
  %v3360 = vpop.permute.xlu0 %3359
  %3363 = vset.pattern.permute.xlu0 0
  %3364 = vperm.xlu0 %3363, %v3345
  %v3365 = vpop.permute.xlu0 %3364
  %v3367 = vmul.f32 %v3280, %v3355
  %v3368 = vmul.f32 %v3285, %v3360
  %v3369 = vmul.f32 %v3290, %v3365
  %3371 = vset.pattern.permute.xlu0 0
  %3372 = vperm.xlu0 %3371, %v3349
  %v3373 = vpop.permute.xlu0 %3372
  %3376 = vset.pattern.permute.xlu0 0
  %3377 = vperm.xlu0 %3376, %v3350
  %v3378 = vpop.permute.xlu0 %3377
  %3381 = vset.pattern.permute.xlu0 0
  %3382 = vperm.xlu0 %3381, %v3351
  %v3383 = vpop.permute.xlu0 %3382
  %v3385 = vadd.f32 %v3367, %v3373
  %v3386 = vadd.f32 %v3368, %v3378
  %v3387 = vadd.f32 %v3369, %v3383
  %v3388 = vmax.f32 %v3385, 0.0
  %v3389 = vmax.f32 %v3386, 0.0
  %v3390 = vmax.f32 %v3387, 0.0
  %s3391 = scalar_lea.vmem %s1, 416
  %v3392 = vld [vmem:[%s3391] sm:$0xff]
  %v3393 = vld [vmem:[%s3391 + $0x8] sm:$0xff]
  %v3394 = vld [vmem:[%s3391 + $0x10] sm:$0xff]
  %v3395 = vld [vmem:[%s3391 + $0x18] sm:$0x7f]
  %v3399 = vrot.slane %v3388, 7
  %v3400 = vrot.slane %v3389, 7
  %v3401 = vsel %vm231, %v3399, %v3400
  %v3402 = vrot.slane %v3390, 7
  %v3403 = vsel %vm231, %v3400, %v3402
  %v3407 = vsel %vm231, 0.0, %v3399
  %v3408 = vrot.slane %v3388, 1
  %v3409 = vrot.slane %v3389, 1
  %v3410 = vsel %vm241, %v3408, %v3409
  %v3411 = vrot.slane %v3390, 1
  %v3412 = vsel %vm241, %v3409, %v3411
  %v3414 = vsel %vm231, %v3411, 0.0
  %3415 = vrot.lane.b32.xlu0 %v3388, 10
  %v3416 = vpop.permute.xlu0 %3415
  %3417 = vrot.lane.b32.xlu0 %v3389, 10
  %v3418 = vpop.permute.xlu0 %3417
  %3419 = vrot.lane.b32.xlu0 %v3390, 10
  %v3420 = vpop.permute.xlu0 %3419
  %3425 = vrot.lane.b32.xlu0 %v3410, 20
  %v3426 = vpop.permute.xlu0 %3425
  %3427 = vrot.lane.b32.xlu0 %v3412, 20
  %v3428 = vpop.permute.xlu0 %3427
  %3429 = vrot.lane.b32.xlu0 %v3414, 20
  %v3430 = vpop.permute.xlu0 %3429
  %v3434 = vsel %vm23, %v3407, %v3416
  %v3435 = vsel %vm23, %v3401, %v3418
  %v3436 = vsel %vm23, %v3403, %v3420
  %v3437 = vsel %vm271, %v3434, %v3426
  %v3438 = vsel %vm271, %v3435, %v3428
  %v3439 = vsel %vm271, %v3436, %v3430
  %v3440 = vsel %vm275, %v3437, 1.0
  %v3441 = vsel %vm275, %v3438, 1.0
  %v3442 = vsel %vm275, %v3439, 1.0
  %v3444 = vsel %vm279, %v3440, 0
  %v3447 = vsel %vm279, %v3441, 0
  %v3450 = vsel %vm279, %v3442, 0
  %v3453 = vsel %vm241, %v3395, 0
  %3455 = vmatprep.subr.mxu0 0.0
  %3456 = vmatpush1.msra.mxu0 0.0
  %3457 = vmatprep.subr.mxu0 0.0
  %3458 = vmatpush1.msra.mxu0 0.0
  %3459 = vmatprep.subr.mxu0 0.0
  %3460 = vmatpush1.msra.mxu0 0.0
  %3461 = vmatprep.subr.mxu0 0.0
  %3462 = vmatpush1.msra.mxu0 0.0
  %3463 = vmatprep.subr.mxu0 0.0
  %3464 = vmatpush1.msra.mxu0 0.0
  %3465 = vmatprep.subr.mxu0 0.0
  %3466 = vmatpush1.msra.mxu0 0.0
  %3467 = vmatprep.subr.mxu0 0.0
  %3468 = vmatpush1.msra.mxu0 0.0
  %3469 = vmatprep.subr.mxu0 0.0
  %3470 = vmatpush1.msra.mxu0 0.0
  %3471 = vmatprep.subr.mxu0 0.0
  %3472 = vmatpush1.msra.mxu0 0.0
  %3473 = vmatprep.subr.mxu0 0.0
  %3474 = vmatpush1.msra.mxu0 0.0
  %3475 = vmatprep.subr.mxu0 0.0
  %3476 = vmatpush1.msra.mxu0 0.0
  %3477 = vmatprep.subr.mxu0 0.0
  %3478 = vmatpush1.msra.mxu0 0.0
  %3479 = vmatprep.subr.mxu0 0.0
  %3480 = vmatpush1.msra.mxu0 %v3453
  %3481 = vmatprep.subr.mxu0 0.0
  %3482 = vmatpush1.msra.mxu0 %v3394
  %3483 = vmatprep.subr.mxu0 0.0
  %3484 = vmatpush1.msra.mxu0 %v3393
  %3485 = vmatprep.subr.mxu0 0.0
  %3486 = vmatpush1.msra.mxu0 %v3392
  %3487 = vmatprep.subr.mxu0 0.0
  %3488 = vmatpush2.msra.mxu0 0.0
  %3489 = vmatprep.subr.mxu0 0.0
  %3490 = vmatpush2.msra.mxu0 0.0
  %3491 = vmatprep.subr.mxu0 0.0
  %3492 = vmatpush2.msra.mxu0 0.0
  %3493 = vmatprep.subr.mxu0 0.0
  %3494 = vmatpush2.msra.mxu0 0.0
  %3495 = vmatprep.subr.mxu0 0.0
  %3496 = vmatpush2.msra.mxu0 0.0
  %3497 = vmatprep.subr.mxu0 0.0
  %3498 = vmatpush2.msra.mxu0 0.0
  %3499 = vmatprep.subr.mxu0 0.0
  %3500 = vmatpush2.msra.mxu0 0.0
  %3501 = vmatprep.subr.mxu0 0.0
  %3502 = vmatpush2.msra.mxu0 0.0
  %3503 = vmatprep.subr.mxu0 0.0
  %3504 = vmatpush2.msra.mxu0 0.0
  %3505 = vmatprep.subr.mxu0 0.0
  %3506 = vmatpush2.msra.mxu0 0.0
  %3507 = vmatprep.subr.mxu0 0.0
  %3508 = vmatpush2.msra.mxu0 0.0
  %3509 = vmatprep.subr.mxu0 0.0
  %3510 = vmatpush2.msra.mxu0 0.0
  %3511 = vmatprep.subr.mxu0 0.0
  %3512 = vmatpush2.msra.mxu0 0.0
  %3513 = vmatprep.subr.mxu0 0.0
  %3514 = vmatpush2.msra.mxu0 0.0
  %3515 = vmatprep.subr.mxu0 0.0
  %3516 = vmatpush2.msra.mxu0 0.0
  %3517 = vmatprep.subr.mxu0 0.0
  %3518 = vmatpush2.msra.mxu0 0.0
  %3519 = vmatprep.mubr.f32.mxu0 0.0
  %3520 = vmatmul.mubr.f32.gmra.mxu0 %v3444
  %v3521 = vpop.f32.mrf.mxu0
  %v3522 = vadd.f32 0.0, %v3521
  %v3523 = vpop.f32.mrf.mxu0
  %3524 = vmatprep.mubr.f32.mxu0 0.0
  %3525 = vmatmul.mubr.f32.gmra.mxu0 %v3447
  %v3526 = vpop.f32.mrf.mxu0
  %v3527 = vadd.f32 0.0, %v3526
  %v3528 = vpop.f32.mrf.mxu0
  %3529 = vmatprep.mubr.f32.mxu0 0.0
  %3530 = vmatmul.mubr.f32.gmra.mxu0 %v3450
  %v3531 = vpop.f32.mrf.mxu0
  %v3532 = vadd.f32 0.0, %v3531
  %v3533 = vpop.f32.mrf.mxu0
  %3534 = vdwg.mxu0
  %s3535 = scalar_lea.vmem %s2, 624
  %v3536 = vld [vmem:[%s3535] sm:$0xff]
  %v3537 = vld [vmem:[%s3535 + $0x8] sm:$0xff]
  %v3538 = vld [vmem:[%s3535 + $0x10] sm:$0x3]
  %s3539 = scalar_lea.vmem %s2, 648
  %v3540 = vld [vmem:[%s3539] sm:$0xff]
  %v3541 = vld [vmem:[%s3539 + $0x8] sm:$0xff]
  %v3542 = vld [vmem:[%s3539 + $0x10] sm:$0x3]
  %v3543 = vsel %vm23, %v3522, 0.0
  %3544 = vadd.xlane.f32.xlu0 %v3543
  %v3545 = vpop.xlane.xlu0 %3544
  %v3546 = vsel %vm23, %v3527, 0.0
  %3547 = vadd.xlane.f32.xlu0 %v3546
  %v3548 = vpop.xlane.xlu0 %3547
  %v3549 = vsel %vm127, %v3532, 0.0
  %3550 = vadd.xlane.f32.xlu0 %v3549
  %v3551 = vpop.xlane.xlu0 %3550
  %v3552 = vmul.f32 %v3522, %v3522
  %v3553 = vmul.f32 %v3527, %v3527
  %v3554 = vmul.f32 %v3532, %v3532
  %v3555 = vsel %vm23, %v3552, 0.0
  %3556 = vadd.xlane.f32.xlu0 %v3555
  %v3557 = vpop.xlane.xlu0 %3556
  %v3558 = vsel %vm23, %v3553, 0.0
  %3559 = vadd.xlane.f32.xlu0 %v3558
  %v3560 = vpop.xlane.xlu0 %3559
  %v3561 = vsel %vm127, %v3554, 0.0
  %3562 = vadd.xlane.f32.xlu0 %v3561
  %v3563 = vpop.xlane.xlu0 %3562
  %v3564 = vmul.f32 %v3545, 0.1
  %v3565 = vmul.f32 %v3548, 0.1
  %v3566 = vmul.f32 %v3551, 0.1
  %v3567 = vmul.f32 %v3557, 0.1
  %v3568 = vmul.f32 %v3560, 0.1
  %v3569 = vmul.f32 %v3563, 0.1
  %v3570 = vmul.f32 %v3564, %v3564
  %v3571 = vmul.f32 %v3565, %v3565
  %v3572 = vmul.f32 %v3566, %v3566
  %v3573 = vsub.f32 %v3567, %v3570
  %v3574 = vsub.f32 %v3568, %v3571
  %v3575 = vsub.f32 %v3569, %v3572
  %v3576 = vmax.f32 %v3573, 0.0
  %v3577 = vmax.f32 %v3574, 0.0
  %v3578 = vmax.f32 %v3575, 0.0
  %v3579 = vadd.f32 %v3576, 1e-05
  %v3580 = vadd.f32 %v3577, 1e-05
  %v3581 = vadd.f32 %v3578, 1e-05
  %v3582 = vrsqrt.pop %v3579
  %v3583 = vrsqrt.pop %v3580
  %v3584 = vrsqrt.pop %v3581
  %v3585 = vmul.f32 %v3536, %v3582
  %v3586 = vmul.f32 %v3537, %v3583
  %v3587 = vmul.f32 %v3538, %v3584
  %v3588 = vmul.f32 %v3564, %v3585
  %v3589 = vmul.f32 %v3565, %v3586
  %v3590 = vmul.f32 %v3566, %v3587
  %v3591 = vsub.f32 %v3540, %v3588
  %v3592 = vsub.f32 %v3541, %v3589
  %v3593 = vsub.f32 %v3542, %v3590
  %3595 = vset.pattern.permute.xlu0 0
  %3596 = vperm.xlu0 %3595, %v3585
  %v3597 = vpop.permute.xlu0 %3596
  %3600 = vset.pattern.permute.xlu0 0
  %3601 = vperm.xlu0 %3600, %v3586
  %v3602 = vpop.permute.xlu0 %3601
  %3605 = vset.pattern.permute.xlu0 0
  %3606 = vperm.xlu0 %3605, %v3587
  %v3607 = vpop.permute.xlu0 %3606
  %v3609 = vmul.f32 %v3522, %v3597
  %v3610 = vmul.f32 %v3527, %v3602
  %v3611 = vmul.f32 %v3532, %v3607
  %3613 = vset.pattern.permute.xlu0 0
  %3614 = vperm.xlu0 %3613, %v3591
  %v3615 = vpop.permute.xlu0 %3614
  %3618 = vset.pattern.permute.xlu0 0
  %3619 = vperm.xlu0 %3618, %v3592
  %v3620 = vpop.permute.xlu0 %3619
  %3623 = vset.pattern.permute.xlu0 0
  %3624 = vperm.xlu0 %3623, %v3593
  %v3625 = vpop.permute.xlu0 %3624
  %v3627 = vadd.f32 %v3609, %v3615
  %v3628 = vadd.f32 %v3610, %v3620
  %v3629 = vadd.f32 %v3611, %v3625
  %v3630 = vadd.f32 %v3627, %v3146
  %v3631 = vadd.f32 %v3628, %v3147
  %v3632 = vadd.f32 %v3629, %v3148
  %v3633 = vmax.f32 %v3630, 0.0
  %v3634 = vmax.f32 %v3631, 0.0
  %v3635 = vmax.f32 %v3632, 0.0
  %s3636 = scalar_lea.vmem %s1, 448
  %v3637 = vld [vmem:[%s3636] sm:$0xff]
  %v3638 = vld [vmem:[%s3636 + $0x8] sm:$0xff]
  %v3639 = vld [vmem:[%s3636 + $0x10] sm:$0xff]
  %v3640 = vld [vmem:[%s3636 + $0x18] sm:$0x7f]
  %v3644 = vrot.slane %v3633, 7
  %v3645 = vrot.slane %v3634, 7
  %v3646 = vsel %vm231, %v3644, %v3645
  %v3647 = vrot.slane %v3635, 7
  %v3648 = vsel %vm231, %v3645, %v3647
  %v3652 = vsel %vm231, 0.0, %v3644
  %v3653 = vrot.slane %v3633, 1
  %v3654 = vrot.slane %v3634, 1
  %v3655 = vsel %vm241, %v3653, %v3654
  %v3656 = vrot.slane %v3635, 1
  %v3657 = vsel %vm241, %v3654, %v3656
  %v3659 = vsel %vm231, %v3656, 0.0
  %3660 = vrot.lane.b32.xlu0 %v3633, 10
  %v3661 = vpop.permute.xlu0 %3660
  %3662 = vrot.lane.b32.xlu0 %v3634, 10
  %v3663 = vpop.permute.xlu0 %3662
  %3664 = vrot.lane.b32.xlu0 %v3635, 10
  %v3665 = vpop.permute.xlu0 %3664
  %3670 = vrot.lane.b32.xlu0 %v3655, 20
  %v3671 = vpop.permute.xlu0 %3670
  %3672 = vrot.lane.b32.xlu0 %v3657, 20
  %v3673 = vpop.permute.xlu0 %3672
  %3674 = vrot.lane.b32.xlu0 %v3659, 20
  %v3675 = vpop.permute.xlu0 %3674
  %v3679 = vsel %vm23, %v3652, %v3661
  %v3680 = vsel %vm23, %v3646, %v3663
  %v3681 = vsel %vm23, %v3648, %v3665
  %v3682 = vsel %vm271, %v3679, %v3671
  %v3683 = vsel %vm271, %v3680, %v3673
  %v3684 = vsel %vm271, %v3681, %v3675
  %v3685 = vsel %vm275, %v3682, 1.0
  %v3686 = vsel %vm275, %v3683, 1.0
  %v3687 = vsel %vm275, %v3684, 1.0
  %v3689 = vsel %vm279, %v3685, 0
  %v3692 = vsel %vm279, %v3686, 0
  %v3695 = vsel %vm279, %v3687, 0
  %v3698 = vsel %vm241, %v3640, 0
  %3700 = vmatprep.subr.mxu0 0.0
  %3701 = vmatpush1.msra.mxu0 0.0
  %3702 = vmatprep.subr.mxu0 0.0
  %3703 = vmatpush1.msra.mxu0 0.0
  %3704 = vmatprep.subr.mxu0 0.0
  %3705 = vmatpush1.msra.mxu0 0.0
  %3706 = vmatprep.subr.mxu0 0.0
  %3707 = vmatpush1.msra.mxu0 0.0
  %3708 = vmatprep.subr.mxu0 0.0
  %3709 = vmatpush1.msra.mxu0 0.0
  %3710 = vmatprep.subr.mxu0 0.0
  %3711 = vmatpush1.msra.mxu0 0.0
  %3712 = vmatprep.subr.mxu0 0.0
  %3713 = vmatpush1.msra.mxu0 0.0
  %3714 = vmatprep.subr.mxu0 0.0
  %3715 = vmatpush1.msra.mxu0 0.0
  %3716 = vmatprep.subr.mxu0 0.0
  %3717 = vmatpush1.msra.mxu0 0.0
  %3718 = vmatprep.subr.mxu0 0.0
  %3719 = vmatpush1.msra.mxu0 0.0
  %3720 = vmatprep.subr.mxu0 0.0
  %3721 = vmatpush1.msra.mxu0 0.0
  %3722 = vmatprep.subr.mxu0 0.0
  %3723 = vmatpush1.msra.mxu0 0.0
  %3724 = vmatprep.subr.mxu0 0.0
  %3725 = vmatpush1.msra.mxu0 %v3698
  %3726 = vmatprep.subr.mxu0 0.0
  %3727 = vmatpush1.msra.mxu0 %v3639
  %3728 = vmatprep.subr.mxu0 0.0
  %3729 = vmatpush1.msra.mxu0 %v3638
  %3730 = vmatprep.subr.mxu0 0.0
  %3731 = vmatpush1.msra.mxu0 %v3637
  %3732 = vmatprep.subr.mxu0 0.0
  %3733 = vmatpush2.msra.mxu0 0.0
  %3734 = vmatprep.subr.mxu0 0.0
  %3735 = vmatpush2.msra.mxu0 0.0
  %3736 = vmatprep.subr.mxu0 0.0
  %3737 = vmatpush2.msra.mxu0 0.0
  %3738 = vmatprep.subr.mxu0 0.0
  %3739 = vmatpush2.msra.mxu0 0.0
  %3740 = vmatprep.subr.mxu0 0.0
  %3741 = vmatpush2.msra.mxu0 0.0
  %3742 = vmatprep.subr.mxu0 0.0
  %3743 = vmatpush2.msra.mxu0 0.0
  %3744 = vmatprep.subr.mxu0 0.0
  %3745 = vmatpush2.msra.mxu0 0.0
  %3746 = vmatprep.subr.mxu0 0.0
  %3747 = vmatpush2.msra.mxu0 0.0
  %3748 = vmatprep.subr.mxu0 0.0
  %3749 = vmatpush2.msra.mxu0 0.0
  %3750 = vmatprep.subr.mxu0 0.0
  %3751 = vmatpush2.msra.mxu0 0.0
  %3752 = vmatprep.subr.mxu0 0.0
  %3753 = vmatpush2.msra.mxu0 0.0
  %3754 = vmatprep.subr.mxu0 0.0
  %3755 = vmatpush2.msra.mxu0 0.0
  %3756 = vmatprep.subr.mxu0 0.0
  %3757 = vmatpush2.msra.mxu0 0.0
  %3758 = vmatprep.subr.mxu0 0.0
  %3759 = vmatpush2.msra.mxu0 0.0
  %3760 = vmatprep.subr.mxu0 0.0
  %3761 = vmatpush2.msra.mxu0 0.0
  %3762 = vmatprep.subr.mxu0 0.0
  %3763 = vmatpush2.msra.mxu0 0.0
  %3764 = vmatprep.mubr.f32.mxu0 0.0
  %3765 = vmatmul.mubr.f32.gmra.mxu0 %v3689
  %v3766 = vpop.f32.mrf.mxu0
  %v3767 = vadd.f32 0.0, %v3766
  %v3768 = vpop.f32.mrf.mxu0
  %3769 = vmatprep.mubr.f32.mxu0 0.0
  %3770 = vmatmul.mubr.f32.gmra.mxu0 %v3692
  %v3771 = vpop.f32.mrf.mxu0
  %v3772 = vadd.f32 0.0, %v3771
  %v3773 = vpop.f32.mrf.mxu0
  %3774 = vmatprep.mubr.f32.mxu0 0.0
  %3775 = vmatmul.mubr.f32.gmra.mxu0 %v3695
  %v3776 = vpop.f32.mrf.mxu0
  %v3777 = vadd.f32 0.0, %v3776
  %v3778 = vpop.f32.mrf.mxu0
  %3779 = vdwg.mxu0
  %s3780 = scalar_lea.vmem %s2, 672
  %v3781 = vld [vmem:[%s3780] sm:$0xff]
  %v3782 = vld [vmem:[%s3780 + $0x8] sm:$0xff]
  %v3783 = vld [vmem:[%s3780 + $0x10] sm:$0x3]
  %s3784 = scalar_lea.vmem %s2, 696
  %v3785 = vld [vmem:[%s3784] sm:$0xff]
  %v3786 = vld [vmem:[%s3784 + $0x8] sm:$0xff]
  %v3787 = vld [vmem:[%s3784 + $0x10] sm:$0x3]
  %v3788 = vsel %vm23, %v3767, 0.0
  %3789 = vadd.xlane.f32.xlu0 %v3788
  %v3790 = vpop.xlane.xlu0 %3789
  %v3791 = vsel %vm23, %v3772, 0.0
  %3792 = vadd.xlane.f32.xlu0 %v3791
  %v3793 = vpop.xlane.xlu0 %3792
  %v3794 = vsel %vm127, %v3777, 0.0
  %3795 = vadd.xlane.f32.xlu0 %v3794
  %v3796 = vpop.xlane.xlu0 %3795
  %v3797 = vmul.f32 %v3767, %v3767
  %v3798 = vmul.f32 %v3772, %v3772
  %v3799 = vmul.f32 %v3777, %v3777
  %v3800 = vsel %vm23, %v3797, 0.0
  %3801 = vadd.xlane.f32.xlu0 %v3800
  %v3802 = vpop.xlane.xlu0 %3801
  %v3803 = vsel %vm23, %v3798, 0.0
  %3804 = vadd.xlane.f32.xlu0 %v3803
  %v3805 = vpop.xlane.xlu0 %3804
  %v3806 = vsel %vm127, %v3799, 0.0
  %3807 = vadd.xlane.f32.xlu0 %v3806
  %v3808 = vpop.xlane.xlu0 %3807
  %v3809 = vmul.f32 %v3790, 0.1
  %v3810 = vmul.f32 %v3793, 0.1
  %v3811 = vmul.f32 %v3796, 0.1
  %v3812 = vmul.f32 %v3802, 0.1
  %v3813 = vmul.f32 %v3805, 0.1
  %v3814 = vmul.f32 %v3808, 0.1
  %v3815 = vmul.f32 %v3809, %v3809
  %v3816 = vmul.f32 %v3810, %v3810
  %v3817 = vmul.f32 %v3811, %v3811
  %v3818 = vsub.f32 %v3812, %v3815
  %v3819 = vsub.f32 %v3813, %v3816
  %v3820 = vsub.f32 %v3814, %v3817
  %v3821 = vmax.f32 %v3818, 0.0
  %v3822 = vmax.f32 %v3819, 0.0
  %v3823 = vmax.f32 %v3820, 0.0
  %v3824 = vadd.f32 %v3821, 1e-05
  %v3825 = vadd.f32 %v3822, 1e-05
  %v3826 = vadd.f32 %v3823, 1e-05
  %v3827 = vrsqrt.pop %v3824
  %v3828 = vrsqrt.pop %v3825
  %v3829 = vrsqrt.pop %v3826
  %v3830 = vmul.f32 %v3781, %v3827
  %v3831 = vmul.f32 %v3782, %v3828
  %v3832 = vmul.f32 %v3783, %v3829
  %v3833 = vmul.f32 %v3809, %v3830
  %v3834 = vmul.f32 %v3810, %v3831
  %v3835 = vmul.f32 %v3811, %v3832
  %v3836 = vsub.f32 %v3785, %v3833
  %v3837 = vsub.f32 %v3786, %v3834
  %v3838 = vsub.f32 %v3787, %v3835
  %3840 = vset.pattern.permute.xlu0 0
  %3841 = vperm.xlu0 %3840, %v3830
  %v3842 = vpop.permute.xlu0 %3841
  %3845 = vset.pattern.permute.xlu0 0
  %3846 = vperm.xlu0 %3845, %v3831
  %v3847 = vpop.permute.xlu0 %3846
  %3850 = vset.pattern.permute.xlu0 0
  %3851 = vperm.xlu0 %3850, %v3832
  %v3852 = vpop.permute.xlu0 %3851
  %v3854 = vmul.f32 %v3767, %v3842
  %v3855 = vmul.f32 %v3772, %v3847
  %v3856 = vmul.f32 %v3777, %v3852
  %3858 = vset.pattern.permute.xlu0 0
  %3859 = vperm.xlu0 %3858, %v3836
  %v3860 = vpop.permute.xlu0 %3859
  %3863 = vset.pattern.permute.xlu0 0
  %3864 = vperm.xlu0 %3863, %v3837
  %v3865 = vpop.permute.xlu0 %3864
  %3868 = vset.pattern.permute.xlu0 0
  %3869 = vperm.xlu0 %3868, %v3838
  %v3870 = vpop.permute.xlu0 %3869
  %v3872 = vadd.f32 %v3854, %v3860
  %v3873 = vadd.f32 %v3855, %v3865
  %v3874 = vadd.f32 %v3856, %v3870
  %v3875 = vmax.f32 %v3872, 0.0
  %v3876 = vmax.f32 %v3873, 0.0
  %v3877 = vmax.f32 %v3874, 0.0
  %s3878 = scalar_lea.vmem %s1, 480
  %v3879 = vld [vmem:[%s3878] sm:$0xff]
  %v3880 = vld [vmem:[%s3878 + $0x8] sm:$0xff]
  %v3881 = vld [vmem:[%s3878 + $0x10] sm:$0xff]
  %v3882 = vld [vmem:[%s3878 + $0x18] sm:$0x7f]
  %v3886 = vrot.slane %v3875, 7
  %v3887 = vrot.slane %v3876, 7
  %v3888 = vsel %vm231, %v3886, %v3887
  %v3889 = vrot.slane %v3877, 7
  %v3890 = vsel %vm231, %v3887, %v3889
  %v3894 = vsel %vm231, 0.0, %v3886
  %v3895 = vrot.slane %v3875, 1
  %v3896 = vrot.slane %v3876, 1
  %v3897 = vsel %vm241, %v3895, %v3896
  %v3898 = vrot.slane %v3877, 1
  %v3899 = vsel %vm241, %v3896, %v3898
  %v3901 = vsel %vm231, %v3898, 0.0
  %3902 = vrot.lane.b32.xlu0 %v3875, 10
  %v3903 = vpop.permute.xlu0 %3902
  %3904 = vrot.lane.b32.xlu0 %v3876, 10
  %v3905 = vpop.permute.xlu0 %3904
  %3906 = vrot.lane.b32.xlu0 %v3877, 10
  %v3907 = vpop.permute.xlu0 %3906
  %3912 = vrot.lane.b32.xlu0 %v3897, 20
  %v3913 = vpop.permute.xlu0 %3912
  %3914 = vrot.lane.b32.xlu0 %v3899, 20
  %v3915 = vpop.permute.xlu0 %3914
  %3916 = vrot.lane.b32.xlu0 %v3901, 20
  %v3917 = vpop.permute.xlu0 %3916
  %v3921 = vsel %vm23, %v3894, %v3903
  %v3922 = vsel %vm23, %v3888, %v3905
  %v3923 = vsel %vm23, %v3890, %v3907
  %v3924 = vsel %vm271, %v3921, %v3913
  %v3925 = vsel %vm271, %v3922, %v3915
  %v3926 = vsel %vm271, %v3923, %v3917
  %v3927 = vsel %vm275, %v3924, 1.0
  %v3928 = vsel %vm275, %v3925, 1.0
  %v3929 = vsel %vm275, %v3926, 1.0
  %v3931 = vsel %vm279, %v3927, 0
  %v3934 = vsel %vm279, %v3928, 0
  %v3937 = vsel %vm279, %v3929, 0
  %v3940 = vsel %vm241, %v3882, 0
  %3942 = vmatprep.subr.mxu0 0.0
  %3943 = vmatpush1.msra.mxu0 0.0
  %3944 = vmatprep.subr.mxu0 0.0
  %3945 = vmatpush1.msra.mxu0 0.0
  %3946 = vmatprep.subr.mxu0 0.0
  %3947 = vmatpush1.msra.mxu0 0.0
  %3948 = vmatprep.subr.mxu0 0.0
  %3949 = vmatpush1.msra.mxu0 0.0
  %3950 = vmatprep.subr.mxu0 0.0
  %3951 = vmatpush1.msra.mxu0 0.0
  %3952 = vmatprep.subr.mxu0 0.0
  %3953 = vmatpush1.msra.mxu0 0.0
  %3954 = vmatprep.subr.mxu0 0.0
  %3955 = vmatpush1.msra.mxu0 0.0
  %3956 = vmatprep.subr.mxu0 0.0
  %3957 = vmatpush1.msra.mxu0 0.0
  %3958 = vmatprep.subr.mxu0 0.0
  %3959 = vmatpush1.msra.mxu0 0.0
  %3960 = vmatprep.subr.mxu0 0.0
  %3961 = vmatpush1.msra.mxu0 0.0
  %3962 = vmatprep.subr.mxu0 0.0
  %3963 = vmatpush1.msra.mxu0 0.0
  %3964 = vmatprep.subr.mxu0 0.0
  %3965 = vmatpush1.msra.mxu0 0.0
  %3966 = vmatprep.subr.mxu0 0.0
  %3967 = vmatpush1.msra.mxu0 %v3940
  %3968 = vmatprep.subr.mxu0 0.0
  %3969 = vmatpush1.msra.mxu0 %v3881
  %3970 = vmatprep.subr.mxu0 0.0
  %3971 = vmatpush1.msra.mxu0 %v3880
  %3972 = vmatprep.subr.mxu0 0.0
  %3973 = vmatpush1.msra.mxu0 %v3879
  %3974 = vmatprep.subr.mxu0 0.0
  %3975 = vmatpush2.msra.mxu0 0.0
  %3976 = vmatprep.subr.mxu0 0.0
  %3977 = vmatpush2.msra.mxu0 0.0
  %3978 = vmatprep.subr.mxu0 0.0
  %3979 = vmatpush2.msra.mxu0 0.0
  %3980 = vmatprep.subr.mxu0 0.0
  %3981 = vmatpush2.msra.mxu0 0.0
  %3982 = vmatprep.subr.mxu0 0.0
  %3983 = vmatpush2.msra.mxu0 0.0
  %3984 = vmatprep.subr.mxu0 0.0
  %3985 = vmatpush2.msra.mxu0 0.0
  %3986 = vmatprep.subr.mxu0 0.0
  %3987 = vmatpush2.msra.mxu0 0.0
  %3988 = vmatprep.subr.mxu0 0.0
  %3989 = vmatpush2.msra.mxu0 0.0
  %3990 = vmatprep.subr.mxu0 0.0
  %3991 = vmatpush2.msra.mxu0 0.0
  %3992 = vmatprep.subr.mxu0 0.0
  %3993 = vmatpush2.msra.mxu0 0.0
  %3994 = vmatprep.subr.mxu0 0.0
  %3995 = vmatpush2.msra.mxu0 0.0
  %3996 = vmatprep.subr.mxu0 0.0
  %3997 = vmatpush2.msra.mxu0 0.0
  %3998 = vmatprep.subr.mxu0 0.0
  %3999 = vmatpush2.msra.mxu0 0.0
  %4000 = vmatprep.subr.mxu0 0.0
  %4001 = vmatpush2.msra.mxu0 0.0
  %4002 = vmatprep.subr.mxu0 0.0
  %4003 = vmatpush2.msra.mxu0 0.0
  %4004 = vmatprep.subr.mxu0 0.0
  %4005 = vmatpush2.msra.mxu0 0.0
  %4006 = vmatprep.mubr.f32.mxu0 0.0
  %4007 = vmatmul.mubr.f32.gmra.mxu0 %v3931
  %v4008 = vpop.f32.mrf.mxu0
  %v4009 = vadd.f32 0.0, %v4008
  %v4010 = vpop.f32.mrf.mxu0
  %4011 = vmatprep.mubr.f32.mxu0 0.0
  %4012 = vmatmul.mubr.f32.gmra.mxu0 %v3934
  %v4013 = vpop.f32.mrf.mxu0
  %v4014 = vadd.f32 0.0, %v4013
  %v4015 = vpop.f32.mrf.mxu0
  %4016 = vmatprep.mubr.f32.mxu0 0.0
  %4017 = vmatmul.mubr.f32.gmra.mxu0 %v3937
  %v4018 = vpop.f32.mrf.mxu0
  %v4019 = vadd.f32 0.0, %v4018
  %v4020 = vpop.f32.mrf.mxu0
  %4021 = vdwg.mxu0
  %s4022 = scalar_lea.vmem %s2, 720
  %v4023 = vld [vmem:[%s4022] sm:$0xff]
  %v4024 = vld [vmem:[%s4022 + $0x8] sm:$0xff]
  %v4025 = vld [vmem:[%s4022 + $0x10] sm:$0x3]
  %s4026 = scalar_lea.vmem %s2, 744
  %v4027 = vld [vmem:[%s4026] sm:$0xff]
  %v4028 = vld [vmem:[%s4026 + $0x8] sm:$0xff]
  %v4029 = vld [vmem:[%s4026 + $0x10] sm:$0x3]
  %v4030 = vsel %vm23, %v4009, 0.0
  %4031 = vadd.xlane.f32.xlu0 %v4030
  %v4032 = vpop.xlane.xlu0 %4031
  %v4033 = vsel %vm23, %v4014, 0.0
  %4034 = vadd.xlane.f32.xlu0 %v4033
  %v4035 = vpop.xlane.xlu0 %4034
  %v4036 = vsel %vm127, %v4019, 0.0
  %4037 = vadd.xlane.f32.xlu0 %v4036
  %v4038 = vpop.xlane.xlu0 %4037
  %v4039 = vmul.f32 %v4009, %v4009
  %v4040 = vmul.f32 %v4014, %v4014
  %v4041 = vmul.f32 %v4019, %v4019
  %v4042 = vsel %vm23, %v4039, 0.0
  %4043 = vadd.xlane.f32.xlu0 %v4042
  %v4044 = vpop.xlane.xlu0 %4043
  %v4045 = vsel %vm23, %v4040, 0.0
  %4046 = vadd.xlane.f32.xlu0 %v4045
  %v4047 = vpop.xlane.xlu0 %4046
  %v4048 = vsel %vm127, %v4041, 0.0
  %4049 = vadd.xlane.f32.xlu0 %v4048
  %v4050 = vpop.xlane.xlu0 %4049
  %v4051 = vmul.f32 %v4032, 0.1
  %v4052 = vmul.f32 %v4035, 0.1
  %v4053 = vmul.f32 %v4038, 0.1
  %v4054 = vmul.f32 %v4044, 0.1
  %v4055 = vmul.f32 %v4047, 0.1
  %v4056 = vmul.f32 %v4050, 0.1
  %v4057 = vmul.f32 %v4051, %v4051
  %v4058 = vmul.f32 %v4052, %v4052
  %v4059 = vmul.f32 %v4053, %v4053
  %v4060 = vsub.f32 %v4054, %v4057
  %v4061 = vsub.f32 %v4055, %v4058
  %v4062 = vsub.f32 %v4056, %v4059
  %v4063 = vmax.f32 %v4060, 0.0
  %v4064 = vmax.f32 %v4061, 0.0
  %v4065 = vmax.f32 %v4062, 0.0
  %v4066 = vadd.f32 %v4063, 1e-05
  %v4067 = vadd.f32 %v4064, 1e-05
  %v4068 = vadd.f32 %v4065, 1e-05
  %v4069 = vrsqrt.pop %v4066
  %v4070 = vrsqrt.pop %v4067
  %v4071 = vrsqrt.pop %v4068
  %v4072 = vmul.f32 %v4023, %v4069
  %v4073 = vmul.f32 %v4024, %v4070
  %v4074 = vmul.f32 %v4025, %v4071
  %v4075 = vmul.f32 %v4051, %v4072
  %v4076 = vmul.f32 %v4052, %v4073
  %v4077 = vmul.f32 %v4053, %v4074
  %v4078 = vsub.f32 %v4027, %v4075
  %v4079 = vsub.f32 %v4028, %v4076
  %v4080 = vsub.f32 %v4029, %v4077
  %4082 = vset.pattern.permute.xlu0 0
  %4083 = vperm.xlu0 %4082, %v4072
  %v4084 = vpop.permute.xlu0 %4083
  %4087 = vset.pattern.permute.xlu0 0
  %4088 = vperm.xlu0 %4087, %v4073
  %v4089 = vpop.permute.xlu0 %4088
  %4092 = vset.pattern.permute.xlu0 0
  %4093 = vperm.xlu0 %4092, %v4074
  %v4094 = vpop.permute.xlu0 %4093
  %v4096 = vmul.f32 %v4009, %v4084
  %v4097 = vmul.f32 %v4014, %v4089
  %v4098 = vmul.f32 %v4019, %v4094
  %4100 = vset.pattern.permute.xlu0 0
  %4101 = vperm.xlu0 %4100, %v4078
  %v4102 = vpop.permute.xlu0 %4101
  %4105 = vset.pattern.permute.xlu0 0
  %4106 = vperm.xlu0 %4105, %v4079
  %v4107 = vpop.permute.xlu0 %4106
  %4110 = vset.pattern.permute.xlu0 0
  %4111 = vperm.xlu0 %4110, %v4080
  %v4112 = vpop.permute.xlu0 %4111
  %v4114 = vadd.f32 %v4096, %v4102
  %v4115 = vadd.f32 %v4097, %v4107
  %v4116 = vadd.f32 %v4098, %v4112
  %v4117 = vadd.f32 %v4114, %v3633
  %v4118 = vadd.f32 %v4115, %v3634
  %v4119 = vadd.f32 %v4116, %v3635
  %v4120 = vmax.f32 %v4117, 0.0
  %v4121 = vmax.f32 %v4118, 0.0
  %v4122 = vmax.f32 %v4119, 0.0
  %s4123 = scalar_lea.vmem %s1, 512
  %v4124 = vld [vmem:[%s4123] sm:$0xff]
  %v4125 = vld [vmem:[%s4123 + $0x8] sm:$0xff]
  %v4126 = vld [vmem:[%s4123 + $0x10] sm:$0xff]
  %v4127 = vld [vmem:[%s4123 + $0x18] sm:$0x7f]
  %v4131 = vrot.slane %v4120, 7
  %v4132 = vrot.slane %v4121, 7
  %v4133 = vsel %vm231, %v4131, %v4132
  %v4134 = vrot.slane %v4122, 7
  %v4135 = vsel %vm231, %v4132, %v4134
  %v4139 = vsel %vm231, 0.0, %v4131
  %v4140 = vrot.slane %v4120, 1
  %v4141 = vrot.slane %v4121, 1
  %v4142 = vsel %vm241, %v4140, %v4141
  %v4143 = vrot.slane %v4122, 1
  %v4144 = vsel %vm241, %v4141, %v4143
  %v4146 = vsel %vm231, %v4143, 0.0
  %4147 = vrot.lane.b32.xlu0 %v4120, 10
  %v4148 = vpop.permute.xlu0 %4147
  %4149 = vrot.lane.b32.xlu0 %v4121, 10
  %v4150 = vpop.permute.xlu0 %4149
  %4151 = vrot.lane.b32.xlu0 %v4122, 10
  %v4152 = vpop.permute.xlu0 %4151
  %4157 = vrot.lane.b32.xlu0 %v4142, 20
  %v4158 = vpop.permute.xlu0 %4157
  %4159 = vrot.lane.b32.xlu0 %v4144, 20
  %v4160 = vpop.permute.xlu0 %4159
  %4161 = vrot.lane.b32.xlu0 %v4146, 20
  %v4162 = vpop.permute.xlu0 %4161
  %v4166 = vsel %vm23, %v4139, %v4148
  %v4167 = vsel %vm23, %v4133, %v4150
  %v4168 = vsel %vm23, %v4135, %v4152
  %v4169 = vsel %vm271, %v4166, %v4158
  %v4170 = vsel %vm271, %v4167, %v4160
  %v4171 = vsel %vm271, %v4168, %v4162
  %v4172 = vsel %vm275, %v4169, 1.0
  %v4173 = vsel %vm275, %v4170, 1.0
  %v4174 = vsel %vm275, %v4171, 1.0
  %v4176 = vsel %vm279, %v4172, 0
  %v4179 = vsel %vm279, %v4173, 0
  %v4182 = vsel %vm279, %v4174, 0
  %v4185 = vsel %vm241, %v4127, 0
  %4187 = vmatprep.subr.mxu0 0.0
  %4188 = vmatpush1.msra.mxu0 0.0
  %4189 = vmatprep.subr.mxu0 0.0
  %4190 = vmatpush1.msra.mxu0 0.0
  %4191 = vmatprep.subr.mxu0 0.0
  %4192 = vmatpush1.msra.mxu0 0.0
  %4193 = vmatprep.subr.mxu0 0.0
  %4194 = vmatpush1.msra.mxu0 0.0
  %4195 = vmatprep.subr.mxu0 0.0
  %4196 = vmatpush1.msra.mxu0 0.0
  %4197 = vmatprep.subr.mxu0 0.0
  %4198 = vmatpush1.msra.mxu0 0.0
  %4199 = vmatprep.subr.mxu0 0.0
  %4200 = vmatpush1.msra.mxu0 0.0
  %4201 = vmatprep.subr.mxu0 0.0
  %4202 = vmatpush1.msra.mxu0 0.0
  %4203 = vmatprep.subr.mxu0 0.0
  %4204 = vmatpush1.msra.mxu0 0.0
  %4205 = vmatprep.subr.mxu0 0.0
  %4206 = vmatpush1.msra.mxu0 0.0
  %4207 = vmatprep.subr.mxu0 0.0
  %4208 = vmatpush1.msra.mxu0 0.0
  %4209 = vmatprep.subr.mxu0 0.0
  %4210 = vmatpush1.msra.mxu0 0.0
  %4211 = vmatprep.subr.mxu0 0.0
  %4212 = vmatpush1.msra.mxu0 %v4185
  %4213 = vmatprep.subr.mxu0 0.0
  %4214 = vmatpush1.msra.mxu0 %v4126
  %4215 = vmatprep.subr.mxu0 0.0
  %4216 = vmatpush1.msra.mxu0 %v4125
  %4217 = vmatprep.subr.mxu0 0.0
  %4218 = vmatpush1.msra.mxu0 %v4124
  %4219 = vmatprep.subr.mxu0 0.0
  %4220 = vmatpush2.msra.mxu0 0.0
  %4221 = vmatprep.subr.mxu0 0.0
  %4222 = vmatpush2.msra.mxu0 0.0
  %4223 = vmatprep.subr.mxu0 0.0
  %4224 = vmatpush2.msra.mxu0 0.0
  %4225 = vmatprep.subr.mxu0 0.0
  %4226 = vmatpush2.msra.mxu0 0.0
  %4227 = vmatprep.subr.mxu0 0.0
  %4228 = vmatpush2.msra.mxu0 0.0
  %4229 = vmatprep.subr.mxu0 0.0
  %4230 = vmatpush2.msra.mxu0 0.0
  %4231 = vmatprep.subr.mxu0 0.0
  %4232 = vmatpush2.msra.mxu0 0.0
  %4233 = vmatprep.subr.mxu0 0.0
  %4234 = vmatpush2.msra.mxu0 0.0
  %4235 = vmatprep.subr.mxu0 0.0
  %4236 = vmatpush2.msra.mxu0 0.0
  %4237 = vmatprep.subr.mxu0 0.0
  %4238 = vmatpush2.msra.mxu0 0.0
  %4239 = vmatprep.subr.mxu0 0.0
  %4240 = vmatpush2.msra.mxu0 0.0
  %4241 = vmatprep.subr.mxu0 0.0
  %4242 = vmatpush2.msra.mxu0 0.0
  %4243 = vmatprep.subr.mxu0 0.0
  %4244 = vmatpush2.msra.mxu0 0.0
  %4245 = vmatprep.subr.mxu0 0.0
  %4246 = vmatpush2.msra.mxu0 0.0
  %4247 = vmatprep.subr.mxu0 0.0
  %4248 = vmatpush2.msra.mxu0 0.0
  %4249 = vmatprep.subr.mxu0 0.0
  %4250 = vmatpush2.msra.mxu0 0.0
  %4251 = vmatprep.mubr.f32.mxu0 0.0
  %4252 = vmatmul.mubr.f32.gmra.mxu0 %v4176
  %v4253 = vpop.f32.mrf.mxu0
  %v4254 = vadd.f32 0.0, %v4253
  %v4255 = vpop.f32.mrf.mxu0
  %4256 = vmatprep.mubr.f32.mxu0 0.0
  %4257 = vmatmul.mubr.f32.gmra.mxu0 %v4179
  %v4258 = vpop.f32.mrf.mxu0
  %v4259 = vadd.f32 0.0, %v4258
  %v4260 = vpop.f32.mrf.mxu0
  %4261 = vmatprep.mubr.f32.mxu0 0.0
  %4262 = vmatmul.mubr.f32.gmra.mxu0 %v4182
  %v4263 = vpop.f32.mrf.mxu0
  %v4264 = vadd.f32 0.0, %v4263
  %v4265 = vpop.f32.mrf.mxu0
  %4266 = vdwg.mxu0
  %s4267 = scalar_lea.vmem %s2, 768
  %v4268 = vld [vmem:[%s4267] sm:$0xff]
  %v4269 = vld [vmem:[%s4267 + $0x8] sm:$0xff]
  %v4270 = vld [vmem:[%s4267 + $0x10] sm:$0x3]
  %s4271 = scalar_lea.vmem %s2, 792
  %v4272 = vld [vmem:[%s4271] sm:$0xff]
  %v4273 = vld [vmem:[%s4271 + $0x8] sm:$0xff]
  %v4274 = vld [vmem:[%s4271 + $0x10] sm:$0x3]
  %v4275 = vsel %vm23, %v4254, 0.0
  %4276 = vadd.xlane.f32.xlu0 %v4275
  %v4277 = vpop.xlane.xlu0 %4276
  %v4278 = vsel %vm23, %v4259, 0.0
  %4279 = vadd.xlane.f32.xlu0 %v4278
  %v4280 = vpop.xlane.xlu0 %4279
  %v4281 = vsel %vm127, %v4264, 0.0
  %4282 = vadd.xlane.f32.xlu0 %v4281
  %v4283 = vpop.xlane.xlu0 %4282
  %v4284 = vmul.f32 %v4254, %v4254
  %v4285 = vmul.f32 %v4259, %v4259
  %v4286 = vmul.f32 %v4264, %v4264
  %v4287 = vsel %vm23, %v4284, 0.0
  %4288 = vadd.xlane.f32.xlu0 %v4287
  %v4289 = vpop.xlane.xlu0 %4288
  %v4290 = vsel %vm23, %v4285, 0.0
  %4291 = vadd.xlane.f32.xlu0 %v4290
  %v4292 = vpop.xlane.xlu0 %4291
  %v4293 = vsel %vm127, %v4286, 0.0
  %4294 = vadd.xlane.f32.xlu0 %v4293
  %v4295 = vpop.xlane.xlu0 %4294
  %v4296 = vmul.f32 %v4277, 0.1
  %v4297 = vmul.f32 %v4280, 0.1
  %v4298 = vmul.f32 %v4283, 0.1
  %v4299 = vmul.f32 %v4289, 0.1
  %v4300 = vmul.f32 %v4292, 0.1
  %v4301 = vmul.f32 %v4295, 0.1
  %v4302 = vmul.f32 %v4296, %v4296
  %v4303 = vmul.f32 %v4297, %v4297
  %v4304 = vmul.f32 %v4298, %v4298
  %v4305 = vsub.f32 %v4299, %v4302
  %v4306 = vsub.f32 %v4300, %v4303
  %v4307 = vsub.f32 %v4301, %v4304
  %v4308 = vmax.f32 %v4305, 0.0
  %v4309 = vmax.f32 %v4306, 0.0
  %v4310 = vmax.f32 %v4307, 0.0
  %v4311 = vadd.f32 %v4308, 1e-05
  %v4312 = vadd.f32 %v4309, 1e-05
  %v4313 = vadd.f32 %v4310, 1e-05
  %v4314 = vrsqrt.pop %v4311
  %v4315 = vrsqrt.pop %v4312
  %v4316 = vrsqrt.pop %v4313
  %v4317 = vmul.f32 %v4268, %v4314
  %v4318 = vmul.f32 %v4269, %v4315
  %v4319 = vmul.f32 %v4270, %v4316
  %v4320 = vmul.f32 %v4296, %v4317
  %v4321 = vmul.f32 %v4297, %v4318
  %v4322 = vmul.f32 %v4298, %v4319
  %v4323 = vsub.f32 %v4272, %v4320
  %v4324 = vsub.f32 %v4273, %v4321
  %v4325 = vsub.f32 %v4274, %v4322
  %4327 = vset.pattern.permute.xlu0 0
  %4328 = vperm.xlu0 %4327, %v4317
  %v4329 = vpop.permute.xlu0 %4328
  %4332 = vset.pattern.permute.xlu0 0
  %4333 = vperm.xlu0 %4332, %v4318
  %v4334 = vpop.permute.xlu0 %4333
  %4337 = vset.pattern.permute.xlu0 0
  %4338 = vperm.xlu0 %4337, %v4319
  %v4339 = vpop.permute.xlu0 %4338
  %v4341 = vmul.f32 %v4254, %v4329
  %v4342 = vmul.f32 %v4259, %v4334
  %v4343 = vmul.f32 %v4264, %v4339
  %4345 = vset.pattern.permute.xlu0 0
  %4346 = vperm.xlu0 %4345, %v4323
  %v4347 = vpop.permute.xlu0 %4346
  %4350 = vset.pattern.permute.xlu0 0
  %4351 = vperm.xlu0 %4350, %v4324
  %v4352 = vpop.permute.xlu0 %4351
  %4355 = vset.pattern.permute.xlu0 0
  %4356 = vperm.xlu0 %4355, %v4325
  %v4357 = vpop.permute.xlu0 %4356
  %v4359 = vadd.f32 %v4341, %v4347
  %v4360 = vadd.f32 %v4342, %v4352
  %v4361 = vadd.f32 %v4343, %v4357
  %v4362 = vmax.f32 %v4359, 0.0
  %v4363 = vmax.f32 %v4360, 0.0
  %v4364 = vmax.f32 %v4361, 0.0
  %s4365 = scalar_lea.vmem %s1, 544
  %v4366 = vld [vmem:[%s4365] sm:$0xff]
  %v4367 = vld [vmem:[%s4365 + $0x8] sm:$0xff]
  %v4368 = vld [vmem:[%s4365 + $0x10] sm:$0xff]
  %v4369 = vld [vmem:[%s4365 + $0x18] sm:$0x7f]
  %v4373 = vrot.slane %v4362, 7
  %v4374 = vrot.slane %v4363, 7
  %v4375 = vsel %vm231, %v4373, %v4374
  %v4376 = vrot.slane %v4364, 7
  %v4377 = vsel %vm231, %v4374, %v4376
  %v4381 = vsel %vm231, 0.0, %v4373
  %v4382 = vrot.slane %v4362, 1
  %v4383 = vrot.slane %v4363, 1
  %v4384 = vsel %vm241, %v4382, %v4383
  %v4385 = vrot.slane %v4364, 1
  %v4386 = vsel %vm241, %v4383, %v4385
  %v4388 = vsel %vm231, %v4385, 0.0
  %4389 = vrot.lane.b32.xlu0 %v4362, 10
  %v4390 = vpop.permute.xlu0 %4389
  %4391 = vrot.lane.b32.xlu0 %v4363, 10
  %v4392 = vpop.permute.xlu0 %4391
  %4393 = vrot.lane.b32.xlu0 %v4364, 10
  %v4394 = vpop.permute.xlu0 %4393
  %4399 = vrot.lane.b32.xlu0 %v4384, 20
  %v4400 = vpop.permute.xlu0 %4399
  %4401 = vrot.lane.b32.xlu0 %v4386, 20
  %v4402 = vpop.permute.xlu0 %4401
  %4403 = vrot.lane.b32.xlu0 %v4388, 20
  %v4404 = vpop.permute.xlu0 %4403
  %v4408 = vsel %vm23, %v4381, %v4390
  %v4409 = vsel %vm23, %v4375, %v4392
  %v4410 = vsel %vm23, %v4377, %v4394
  %v4411 = vsel %vm271, %v4408, %v4400
  %v4412 = vsel %vm271, %v4409, %v4402
  %v4413 = vsel %vm271, %v4410, %v4404
  %v4414 = vsel %vm275, %v4411, 1.0
  %v4415 = vsel %vm275, %v4412, 1.0
  %v4416 = vsel %vm275, %v4413, 1.0
  %v4418 = vsel %vm279, %v4414, 0
  %v4421 = vsel %vm279, %v4415, 0
  %v4424 = vsel %vm279, %v4416, 0
  %v4427 = vsel %vm241, %v4369, 0
  %4429 = vmatprep.subr.mxu0 0.0
  %4430 = vmatpush1.msra.mxu0 0.0
  %4431 = vmatprep.subr.mxu0 0.0
  %4432 = vmatpush1.msra.mxu0 0.0
  %4433 = vmatprep.subr.mxu0 0.0
  %4434 = vmatpush1.msra.mxu0 0.0
  %4435 = vmatprep.subr.mxu0 0.0
  %4436 = vmatpush1.msra.mxu0 0.0
  %4437 = vmatprep.subr.mxu0 0.0
  %4438 = vmatpush1.msra.mxu0 0.0
  %4439 = vmatprep.subr.mxu0 0.0
  %4440 = vmatpush1.msra.mxu0 0.0
  %4441 = vmatprep.subr.mxu0 0.0
  %4442 = vmatpush1.msra.mxu0 0.0
  %4443 = vmatprep.subr.mxu0 0.0
  %4444 = vmatpush1.msra.mxu0 0.0
  %4445 = vmatprep.subr.mxu0 0.0
  %4446 = vmatpush1.msra.mxu0 0.0
  %4447 = vmatprep.subr.mxu0 0.0
  %4448 = vmatpush1.msra.mxu0 0.0
  %4449 = vmatprep.subr.mxu0 0.0
  %4450 = vmatpush1.msra.mxu0 0.0
  %4451 = vmatprep.subr.mxu0 0.0
  %4452 = vmatpush1.msra.mxu0 0.0
  %4453 = vmatprep.subr.mxu0 0.0
  %4454 = vmatpush1.msra.mxu0 %v4427
  %4455 = vmatprep.subr.mxu0 0.0
  %4456 = vmatpush1.msra.mxu0 %v4368
  %4457 = vmatprep.subr.mxu0 0.0
  %4458 = vmatpush1.msra.mxu0 %v4367
  %4459 = vmatprep.subr.mxu0 0.0
  %4460 = vmatpush1.msra.mxu0 %v4366
  %4461 = vmatprep.subr.mxu0 0.0
  %4462 = vmatpush2.msra.mxu0 0.0
  %4463 = vmatprep.subr.mxu0 0.0
  %4464 = vmatpush2.msra.mxu0 0.0
  %4465 = vmatprep.subr.mxu0 0.0
  %4466 = vmatpush2.msra.mxu0 0.0
  %4467 = vmatprep.subr.mxu0 0.0
  %4468 = vmatpush2.msra.mxu0 0.0
  %4469 = vmatprep.subr.mxu0 0.0
  %4470 = vmatpush2.msra.mxu0 0.0
  %4471 = vmatprep.subr.mxu0 0.0
  %4472 = vmatpush2.msra.mxu0 0.0
  %4473 = vmatprep.subr.mxu0 0.0
  %4474 = vmatpush2.msra.mxu0 0.0
  %4475 = vmatprep.subr.mxu0 0.0
  %4476 = vmatpush2.msra.mxu0 0.0
  %4477 = vmatprep.subr.mxu0 0.0
  %4478 = vmatpush2.msra.mxu0 0.0
  %4479 = vmatprep.subr.mxu0 0.0
  %4480 = vmatpush2.msra.mxu0 0.0
  %4481 = vmatprep.subr.mxu0 0.0
  %4482 = vmatpush2.msra.mxu0 0.0
  %4483 = vmatprep.subr.mxu0 0.0
  %4484 = vmatpush2.msra.mxu0 0.0
  %4485 = vmatprep.subr.mxu0 0.0
  %4486 = vmatpush2.msra.mxu0 0.0
  %4487 = vmatprep.subr.mxu0 0.0
  %4488 = vmatpush2.msra.mxu0 0.0
  %4489 = vmatprep.subr.mxu0 0.0
  %4490 = vmatpush2.msra.mxu0 0.0
  %4491 = vmatprep.subr.mxu0 0.0
  %4492 = vmatpush2.msra.mxu0 0.0
  %4493 = vmatprep.mubr.f32.mxu0 0.0
  %4494 = vmatmul.mubr.f32.gmra.mxu0 %v4418
  %v4495 = vpop.f32.mrf.mxu0
  %v4496 = vadd.f32 0.0, %v4495
  %v4497 = vpop.f32.mrf.mxu0
  %4498 = vmatprep.mubr.f32.mxu0 0.0
  %4499 = vmatmul.mubr.f32.gmra.mxu0 %v4421
  %v4500 = vpop.f32.mrf.mxu0
  %v4501 = vadd.f32 0.0, %v4500
  %v4502 = vpop.f32.mrf.mxu0
  %4503 = vmatprep.mubr.f32.mxu0 0.0
  %4504 = vmatmul.mubr.f32.gmra.mxu0 %v4424
  %v4505 = vpop.f32.mrf.mxu0
  %v4506 = vadd.f32 0.0, %v4505
  %v4507 = vpop.f32.mrf.mxu0
  %4508 = vdwg.mxu0
  %s4509 = scalar_lea.vmem %s2, 816
  %v4510 = vld [vmem:[%s4509] sm:$0xff]
  %v4511 = vld [vmem:[%s4509 + $0x8] sm:$0xff]
  %v4512 = vld [vmem:[%s4509 + $0x10] sm:$0x3]
  %s4513 = scalar_lea.vmem %s2, 840
  %v4514 = vld [vmem:[%s4513] sm:$0xff]
  %v4515 = vld [vmem:[%s4513 + $0x8] sm:$0xff]
  %v4516 = vld [vmem:[%s4513 + $0x10] sm:$0x3]
  %v4517 = vsel %vm23, %v4496, 0.0
  %4518 = vadd.xlane.f32.xlu0 %v4517
  %v4519 = vpop.xlane.xlu0 %4518
  %v4520 = vsel %vm23, %v4501, 0.0
  %4521 = vadd.xlane.f32.xlu0 %v4520
  %v4522 = vpop.xlane.xlu0 %4521
  %v4523 = vsel %vm127, %v4506, 0.0
  %4524 = vadd.xlane.f32.xlu0 %v4523
  %v4525 = vpop.xlane.xlu0 %4524
  %v4526 = vmul.f32 %v4496, %v4496
  %v4527 = vmul.f32 %v4501, %v4501
  %v4528 = vmul.f32 %v4506, %v4506
  %v4529 = vsel %vm23, %v4526, 0.0
  %4530 = vadd.xlane.f32.xlu0 %v4529
  %v4531 = vpop.xlane.xlu0 %4530
  %v4532 = vsel %vm23, %v4527, 0.0
  %4533 = vadd.xlane.f32.xlu0 %v4532
  %v4534 = vpop.xlane.xlu0 %4533
  %v4535 = vsel %vm127, %v4528, 0.0
  %4536 = vadd.xlane.f32.xlu0 %v4535
  %v4537 = vpop.xlane.xlu0 %4536
  %v4538 = vmul.f32 %v4519, 0.1
  %v4539 = vmul.f32 %v4522, 0.1
  %v4540 = vmul.f32 %v4525, 0.1
  %v4541 = vmul.f32 %v4531, 0.1
  %v4542 = vmul.f32 %v4534, 0.1
  %v4543 = vmul.f32 %v4537, 0.1
  %v4544 = vmul.f32 %v4538, %v4538
  %v4545 = vmul.f32 %v4539, %v4539
  %v4546 = vmul.f32 %v4540, %v4540
  %v4547 = vsub.f32 %v4541, %v4544
  %v4548 = vsub.f32 %v4542, %v4545
  %v4549 = vsub.f32 %v4543, %v4546
  %v4550 = vmax.f32 %v4547, 0.0
  %v4551 = vmax.f32 %v4548, 0.0
  %v4552 = vmax.f32 %v4549, 0.0
  %v4553 = vadd.f32 %v4550, 1e-05
  %v4554 = vadd.f32 %v4551, 1e-05
  %v4555 = vadd.f32 %v4552, 1e-05
  %v4556 = vrsqrt.pop %v4553
  %v4557 = vrsqrt.pop %v4554
  %v4558 = vrsqrt.pop %v4555
  %v4559 = vmul.f32 %v4510, %v4556
  %v4560 = vmul.f32 %v4511, %v4557
  %v4561 = vmul.f32 %v4512, %v4558
  %v4562 = vmul.f32 %v4538, %v4559
  %v4563 = vmul.f32 %v4539, %v4560
  %v4564 = vmul.f32 %v4540, %v4561
  %v4565 = vsub.f32 %v4514, %v4562
  %v4566 = vsub.f32 %v4515, %v4563
  %v4567 = vsub.f32 %v4516, %v4564
  %4569 = vset.pattern.permute.xlu0 0
  %4570 = vperm.xlu0 %4569, %v4559
  %v4571 = vpop.permute.xlu0 %4570
  %4574 = vset.pattern.permute.xlu0 0
  %4575 = vperm.xlu0 %4574, %v4560
  %v4576 = vpop.permute.xlu0 %4575
  %4579 = vset.pattern.permute.xlu0 0
  %4580 = vperm.xlu0 %4579, %v4561
  %v4581 = vpop.permute.xlu0 %4580
  %v4583 = vmul.f32 %v4496, %v4571
  %v4584 = vmul.f32 %v4501, %v4576
  %v4585 = vmul.f32 %v4506, %v4581
  %4587 = vset.pattern.permute.xlu0 0
  %4588 = vperm.xlu0 %4587, %v4565
  %v4589 = vpop.permute.xlu0 %4588
  %4592 = vset.pattern.permute.xlu0 0
  %4593 = vperm.xlu0 %4592, %v4566
  %v4594 = vpop.permute.xlu0 %4593
  %4597 = vset.pattern.permute.xlu0 0
  %4598 = vperm.xlu0 %4597, %v4567
  %v4599 = vpop.permute.xlu0 %4598
  %v4601 = vadd.f32 %v4583, %v4589
  %v4602 = vadd.f32 %v4584, %v4594
  %v4603 = vadd.f32 %v4585, %v4599
  %v4604 = vadd.f32 %v4601, %v4120
  %v4605 = vadd.f32 %v4602, %v4121
  %v4606 = vadd.f32 %v4603, %v4122
  %v4607 = vmax.f32 %v4604, 0.0
  %v4608 = vmax.f32 %v4605, 0.0
  %v4609 = vmax.f32 %v4606, 0.0
  %s4610 = scalar_lea.vmem %s1, 576
  %v4611 = vld [vmem:[%s4610] sm:$0xff]
  %v4612 = vld [vmem:[%s4610 + $0x8] sm:$0xff]
  %v4613 = vld [vmem:[%s4610 + $0x10] sm:$0xff]
  %v4614 = vld [vmem:[%s4610 + $0x18] sm:$0x7f]
  %v4618 = vrot.slane %v4607, 7
  %v4619 = vrot.slane %v4608, 7
  %v4620 = vsel %vm231, %v4618, %v4619
  %v4621 = vrot.slane %v4609, 7
  %v4622 = vsel %vm231, %v4619, %v4621
  %v4626 = vsel %vm231, 0.0, %v4618
  %v4627 = vrot.slane %v4607, 1
  %v4628 = vrot.slane %v4608, 1
  %v4629 = vsel %vm241, %v4627, %v4628
  %v4630 = vrot.slane %v4609, 1
  %v4631 = vsel %vm241, %v4628, %v4630
  %v4633 = vsel %vm231, %v4630, 0.0
  %4634 = vrot.lane.b32.xlu0 %v4607, 10
  %v4635 = vpop.permute.xlu0 %4634
  %4636 = vrot.lane.b32.xlu0 %v4608, 10
  %v4637 = vpop.permute.xlu0 %4636
  %4638 = vrot.lane.b32.xlu0 %v4609, 10
  %v4639 = vpop.permute.xlu0 %4638
  %4644 = vrot.lane.b32.xlu0 %v4629, 20
  %v4645 = vpop.permute.xlu0 %4644
  %4646 = vrot.lane.b32.xlu0 %v4631, 20
  %v4647 = vpop.permute.xlu0 %4646
  %4648 = vrot.lane.b32.xlu0 %v4633, 20
  %v4649 = vpop.permute.xlu0 %4648
  %v4653 = vsel %vm23, %v4626, %v4635
  %v4654 = vsel %vm23, %v4620, %v4637
  %v4655 = vsel %vm23, %v4622, %v4639
  %v4656 = vsel %vm271, %v4653, %v4645
  %v4657 = vsel %vm271, %v4654, %v4647
  %v4658 = vsel %vm271, %v4655, %v4649
  %v4659 = vsel %vm275, %v4656, 1.0
  %v4660 = vsel %vm275, %v4657, 1.0
  %v4661 = vsel %vm275, %v4658, 1.0
  %v4663 = vsel %vm279, %v4659, 0
  %v4666 = vsel %vm279, %v4660, 0
  %v4669 = vsel %vm279, %v4661, 0
  %v4672 = vsel %vm241, %v4614, 0
  %4674 = vmatprep.subr.mxu0 0.0
  %4675 = vmatpush1.msra.mxu0 0.0
  %4676 = vmatprep.subr.mxu0 0.0
  %4677 = vmatpush1.msra.mxu0 0.0
  %4678 = vmatprep.subr.mxu0 0.0
  %4679 = vmatpush1.msra.mxu0 0.0
  %4680 = vmatprep.subr.mxu0 0.0
  %4681 = vmatpush1.msra.mxu0 0.0
  %4682 = vmatprep.subr.mxu0 0.0
  %4683 = vmatpush1.msra.mxu0 0.0
  %4684 = vmatprep.subr.mxu0 0.0
  %4685 = vmatpush1.msra.mxu0 0.0
  %4686 = vmatprep.subr.mxu0 0.0
  %4687 = vmatpush1.msra.mxu0 0.0
  %4688 = vmatprep.subr.mxu0 0.0
  %4689 = vmatpush1.msra.mxu0 0.0
  %4690 = vmatprep.subr.mxu0 0.0
  %4691 = vmatpush1.msra.mxu0 0.0
  %4692 = vmatprep.subr.mxu0 0.0
  %4693 = vmatpush1.msra.mxu0 0.0
  %4694 = vmatprep.subr.mxu0 0.0
  %4695 = vmatpush1.msra.mxu0 0.0
  %4696 = vmatprep.subr.mxu0 0.0
  %4697 = vmatpush1.msra.mxu0 0.0
  %4698 = vmatprep.subr.mxu0 0.0
  %4699 = vmatpush1.msra.mxu0 %v4672
  %4700 = vmatprep.subr.mxu0 0.0
  %4701 = vmatpush1.msra.mxu0 %v4613
  %4702 = vmatprep.subr.mxu0 0.0
  %4703 = vmatpush1.msra.mxu0 %v4612
  %4704 = vmatprep.subr.mxu0 0.0
  %4705 = vmatpush1.msra.mxu0 %v4611
  %4706 = vmatprep.subr.mxu0 0.0
  %4707 = vmatpush2.msra.mxu0 0.0
  %4708 = vmatprep.subr.mxu0 0.0
  %4709 = vmatpush2.msra.mxu0 0.0
  %4710 = vmatprep.subr.mxu0 0.0
  %4711 = vmatpush2.msra.mxu0 0.0
  %4712 = vmatprep.subr.mxu0 0.0
  %4713 = vmatpush2.msra.mxu0 0.0
  %4714 = vmatprep.subr.mxu0 0.0
  %4715 = vmatpush2.msra.mxu0 0.0
  %4716 = vmatprep.subr.mxu0 0.0
  %4717 = vmatpush2.msra.mxu0 0.0
  %4718 = vmatprep.subr.mxu0 0.0
  %4719 = vmatpush2.msra.mxu0 0.0
  %4720 = vmatprep.subr.mxu0 0.0
  %4721 = vmatpush2.msra.mxu0 0.0
  %4722 = vmatprep.subr.mxu0 0.0
  %4723 = vmatpush2.msra.mxu0 0.0
  %4724 = vmatprep.subr.mxu0 0.0
  %4725 = vmatpush2.msra.mxu0 0.0
  %4726 = vmatprep.subr.mxu0 0.0
  %4727 = vmatpush2.msra.mxu0 0.0
  %4728 = vmatprep.subr.mxu0 0.0
  %4729 = vmatpush2.msra.mxu0 0.0
  %4730 = vmatprep.subr.mxu0 0.0
  %4731 = vmatpush2.msra.mxu0 0.0
  %4732 = vmatprep.subr.mxu0 0.0
  %4733 = vmatpush2.msra.mxu0 0.0
  %4734 = vmatprep.subr.mxu0 0.0
  %4735 = vmatpush2.msra.mxu0 0.0
  %4736 = vmatprep.subr.mxu0 0.0
  %4737 = vmatpush2.msra.mxu0 0.0
  %4738 = vmatprep.mubr.f32.mxu0 0.0
  %4739 = vmatmul.mubr.f32.gmra.mxu0 %v4663
  %v4740 = vpop.f32.mrf.mxu0
  %v4741 = vadd.f32 0.0, %v4740
  %v4742 = vpop.f32.mrf.mxu0
  %4743 = vmatprep.mubr.f32.mxu0 0.0
  %4744 = vmatmul.mubr.f32.gmra.mxu0 %v4666
  %v4745 = vpop.f32.mrf.mxu0
  %v4746 = vadd.f32 0.0, %v4745
  %v4747 = vpop.f32.mrf.mxu0
  %4748 = vmatprep.mubr.f32.mxu0 0.0
  %4749 = vmatmul.mubr.f32.gmra.mxu0 %v4669
  %v4750 = vpop.f32.mrf.mxu0
  %v4751 = vadd.f32 0.0, %v4750
  %v4752 = vpop.f32.mrf.mxu0
  %4753 = vdwg.mxu0
  %s4754 = scalar_lea.vmem %s2, 864
  %v4755 = vld [vmem:[%s4754] sm:$0xff]
  %v4756 = vld [vmem:[%s4754 + $0x8] sm:$0xff]
  %v4757 = vld [vmem:[%s4754 + $0x10] sm:$0x3]
  %s4758 = scalar_lea.vmem %s2, 888
  %v4759 = vld [vmem:[%s4758] sm:$0xff]
  %v4760 = vld [vmem:[%s4758 + $0x8] sm:$0xff]
  %v4761 = vld [vmem:[%s4758 + $0x10] sm:$0x3]
  %v4762 = vsel %vm23, %v4741, 0.0
  %4763 = vadd.xlane.f32.xlu0 %v4762
  %v4764 = vpop.xlane.xlu0 %4763
  %v4765 = vsel %vm23, %v4746, 0.0
  %4766 = vadd.xlane.f32.xlu0 %v4765
  %v4767 = vpop.xlane.xlu0 %4766
  %v4768 = vsel %vm127, %v4751, 0.0
  %4769 = vadd.xlane.f32.xlu0 %v4768
  %v4770 = vpop.xlane.xlu0 %4769
  %v4771 = vmul.f32 %v4741, %v4741
  %v4772 = vmul.f32 %v4746, %v4746
  %v4773 = vmul.f32 %v4751, %v4751
  %v4774 = vsel %vm23, %v4771, 0.0
  %4775 = vadd.xlane.f32.xlu0 %v4774
  %v4776 = vpop.xlane.xlu0 %4775
  %v4777 = vsel %vm23, %v4772, 0.0
  %4778 = vadd.xlane.f32.xlu0 %v4777
  %v4779 = vpop.xlane.xlu0 %4778
  %v4780 = vsel %vm127, %v4773, 0.0
  %4781 = vadd.xlane.f32.xlu0 %v4780
  %v4782 = vpop.xlane.xlu0 %4781
  %v4783 = vmul.f32 %v4764, 0.1
  %v4784 = vmul.f32 %v4767, 0.1
  %v4785 = vmul.f32 %v4770, 0.1
  %v4786 = vmul.f32 %v4776, 0.1
  %v4787 = vmul.f32 %v4779, 0.1
  %v4788 = vmul.f32 %v4782, 0.1
  %v4789 = vmul.f32 %v4783, %v4783
  %v4790 = vmul.f32 %v4784, %v4784
  %v4791 = vmul.f32 %v4785, %v4785
  %v4792 = vsub.f32 %v4786, %v4789
  %v4793 = vsub.f32 %v4787, %v4790
  %v4794 = vsub.f32 %v4788, %v4791
  %v4795 = vmax.f32 %v4792, 0.0
  %v4796 = vmax.f32 %v4793, 0.0
  %v4797 = vmax.f32 %v4794, 0.0
  %v4798 = vadd.f32 %v4795, 1e-05
  %v4799 = vadd.f32 %v4796, 1e-05
  %v4800 = vadd.f32 %v4797, 1e-05
  %v4801 = vrsqrt.pop %v4798
  %v4802 = vrsqrt.pop %v4799
  %v4803 = vrsqrt.pop %v4800
  %v4804 = vmul.f32 %v4755, %v4801
  %v4805 = vmul.f32 %v4756, %v4802
  %v4806 = vmul.f32 %v4757, %v4803
  %v4807 = vmul.f32 %v4783, %v4804
  %v4808 = vmul.f32 %v4784, %v4805
  %v4809 = vmul.f32 %v4785, %v4806
  %v4810 = vsub.f32 %v4759, %v4807
  %v4811 = vsub.f32 %v4760, %v4808
  %v4812 = vsub.f32 %v4761, %v4809
  %4814 = vset.pattern.permute.xlu0 0
  %4815 = vperm.xlu0 %4814, %v4804
  %v4816 = vpop.permute.xlu0 %4815
  %4819 = vset.pattern.permute.xlu0 0
  %4820 = vperm.xlu0 %4819, %v4805
  %v4821 = vpop.permute.xlu0 %4820
  %4824 = vset.pattern.permute.xlu0 0
  %4825 = vperm.xlu0 %4824, %v4806
  %v4826 = vpop.permute.xlu0 %4825
  %v4828 = vmul.f32 %v4741, %v4816
  %v4829 = vmul.f32 %v4746, %v4821
  %v4830 = vmul.f32 %v4751, %v4826
  %4832 = vset.pattern.permute.xlu0 0
  %4833 = vperm.xlu0 %4832, %v4810
  %v4834 = vpop.permute.xlu0 %4833
  %4837 = vset.pattern.permute.xlu0 0
  %4838 = vperm.xlu0 %4837, %v4811
  %v4839 = vpop.permute.xlu0 %4838
  %4842 = vset.pattern.permute.xlu0 0
  %4843 = vperm.xlu0 %4842, %v4812
  %v4844 = vpop.permute.xlu0 %4843
  %v4846 = vadd.f32 %v4828, %v4834
  %v4847 = vadd.f32 %v4829, %v4839
  %v4848 = vadd.f32 %v4830, %v4844
  %v4849 = vmax.f32 %v4846, 0.0
  %v4850 = vmax.f32 %v4847, 0.0
  %v4851 = vmax.f32 %v4848, 0.0
  %s4852 = scalar_lea.vmem %s1, 608
  %v4853 = vld [vmem:[%s4852] sm:$0xff]
  %v4854 = vld [vmem:[%s4852 + $0x8] sm:$0xff]
  %v4855 = vld [vmem:[%s4852 + $0x10] sm:$0xff]
  %v4856 = vld [vmem:[%s4852 + $0x18] sm:$0x7f]
  %v4860 = vrot.slane %v4849, 7
  %v4861 = vrot.slane %v4850, 7
  %v4862 = vsel %vm231, %v4860, %v4861
  %v4863 = vrot.slane %v4851, 7
  %v4864 = vsel %vm231, %v4861, %v4863
  %v4868 = vsel %vm231, 0.0, %v4860
  %v4869 = vrot.slane %v4849, 1
  %v4870 = vrot.slane %v4850, 1
  %v4871 = vsel %vm241, %v4869, %v4870
  %v4872 = vrot.slane %v4851, 1
  %v4873 = vsel %vm241, %v4870, %v4872
  %v4875 = vsel %vm231, %v4872, 0.0
  %4876 = vrot.lane.b32.xlu0 %v4849, 10
  %v4877 = vpop.permute.xlu0 %4876
  %4878 = vrot.lane.b32.xlu0 %v4850, 10
  %v4879 = vpop.permute.xlu0 %4878
  %4880 = vrot.lane.b32.xlu0 %v4851, 10
  %v4881 = vpop.permute.xlu0 %4880
  %4886 = vrot.lane.b32.xlu0 %v4871, 20
  %v4887 = vpop.permute.xlu0 %4886
  %4888 = vrot.lane.b32.xlu0 %v4873, 20
  %v4889 = vpop.permute.xlu0 %4888
  %4890 = vrot.lane.b32.xlu0 %v4875, 20
  %v4891 = vpop.permute.xlu0 %4890
  %v4895 = vsel %vm23, %v4868, %v4877
  %v4896 = vsel %vm23, %v4862, %v4879
  %v4897 = vsel %vm23, %v4864, %v4881
  %v4898 = vsel %vm271, %v4895, %v4887
  %v4899 = vsel %vm271, %v4896, %v4889
  %v4900 = vsel %vm271, %v4897, %v4891
  %v4901 = vsel %vm275, %v4898, 1.0
  %v4902 = vsel %vm275, %v4899, 1.0
  %v4903 = vsel %vm275, %v4900, 1.0
  %v4905 = vsel %vm279, %v4901, 0
  %v4908 = vsel %vm279, %v4902, 0
  %v4911 = vsel %vm279, %v4903, 0
  %v4914 = vsel %vm241, %v4856, 0
  %4916 = vmatprep.subr.mxu0 0.0
  %4917 = vmatpush1.msra.mxu0 0.0
  %4918 = vmatprep.subr.mxu0 0.0
  %4919 = vmatpush1.msra.mxu0 0.0
  %4920 = vmatprep.subr.mxu0 0.0
  %4921 = vmatpush1.msra.mxu0 0.0
  %4922 = vmatprep.subr.mxu0 0.0
  %4923 = vmatpush1.msra.mxu0 0.0
  %4924 = vmatprep.subr.mxu0 0.0
  %4925 = vmatpush1.msra.mxu0 0.0
  %4926 = vmatprep.subr.mxu0 0.0
  %4927 = vmatpush1.msra.mxu0 0.0
  %4928 = vmatprep.subr.mxu0 0.0
  %4929 = vmatpush1.msra.mxu0 0.0
  %4930 = vmatprep.subr.mxu0 0.0
  %4931 = vmatpush1.msra.mxu0 0.0
  %4932 = vmatprep.subr.mxu0 0.0
  %4933 = vmatpush1.msra.mxu0 0.0
  %4934 = vmatprep.subr.mxu0 0.0
  %4935 = vmatpush1.msra.mxu0 0.0
  %4936 = vmatprep.subr.mxu0 0.0
  %4937 = vmatpush1.msra.mxu0 0.0
  %4938 = vmatprep.subr.mxu0 0.0
  %4939 = vmatpush1.msra.mxu0 0.0
  %4940 = vmatprep.subr.mxu0 0.0
  %4941 = vmatpush1.msra.mxu0 %v4914
  %4942 = vmatprep.subr.mxu0 0.0
  %4943 = vmatpush1.msra.mxu0 %v4855
  %4944 = vmatprep.subr.mxu0 0.0
  %4945 = vmatpush1.msra.mxu0 %v4854
  %4946 = vmatprep.subr.mxu0 0.0
  %4947 = vmatpush1.msra.mxu0 %v4853
  %4948 = vmatprep.subr.mxu0 0.0
  %4949 = vmatpush2.msra.mxu0 0.0
  %4950 = vmatprep.subr.mxu0 0.0
  %4951 = vmatpush2.msra.mxu0 0.0
  %4952 = vmatprep.subr.mxu0 0.0
  %4953 = vmatpush2.msra.mxu0 0.0
  %4954 = vmatprep.subr.mxu0 0.0
  %4955 = vmatpush2.msra.mxu0 0.0
  %4956 = vmatprep.subr.mxu0 0.0
  %4957 = vmatpush2.msra.mxu0 0.0
  %4958 = vmatprep.subr.mxu0 0.0
  %4959 = vmatpush2.msra.mxu0 0.0
  %4960 = vmatprep.subr.mxu0 0.0
  %4961 = vmatpush2.msra.mxu0 0.0
  %4962 = vmatprep.subr.mxu0 0.0
  %4963 = vmatpush2.msra.mxu0 0.0
  %4964 = vmatprep.subr.mxu0 0.0
  %4965 = vmatpush2.msra.mxu0 0.0
  %4966 = vmatprep.subr.mxu0 0.0
  %4967 = vmatpush2.msra.mxu0 0.0
  %4968 = vmatprep.subr.mxu0 0.0
  %4969 = vmatpush2.msra.mxu0 0.0
  %4970 = vmatprep.subr.mxu0 0.0
  %4971 = vmatpush2.msra.mxu0 0.0
  %4972 = vmatprep.subr.mxu0 0.0
  %4973 = vmatpush2.msra.mxu0 0.0
  %4974 = vmatprep.subr.mxu0 0.0
  %4975 = vmatpush2.msra.mxu0 0.0
  %4976 = vmatprep.subr.mxu0 0.0
  %4977 = vmatpush2.msra.mxu0 0.0
  %4978 = vmatprep.subr.mxu0 0.0
  %4979 = vmatpush2.msra.mxu0 0.0
  %4980 = vmatprep.mubr.f32.mxu0 0.0
  %4981 = vmatmul.mubr.f32.gmra.mxu0 %v4905
  %v4982 = vpop.f32.mrf.mxu0
  %v4983 = vadd.f32 0.0, %v4982
  %v4984 = vpop.f32.mrf.mxu0
  %4985 = vmatprep.mubr.f32.mxu0 0.0
  %4986 = vmatmul.mubr.f32.gmra.mxu0 %v4908
  %v4987 = vpop.f32.mrf.mxu0
  %v4988 = vadd.f32 0.0, %v4987
  %v4989 = vpop.f32.mrf.mxu0
  %4990 = vmatprep.mubr.f32.mxu0 0.0
  %4991 = vmatmul.mubr.f32.gmra.mxu0 %v4911
  %v4992 = vpop.f32.mrf.mxu0
  %v4993 = vadd.f32 0.0, %v4992
  %v4994 = vpop.f32.mrf.mxu0
  %4995 = vdwg.mxu0
  %s4996 = scalar_lea.vmem %s2, 912
  %v4997 = vld [vmem:[%s4996] sm:$0xff]
  %v4998 = vld [vmem:[%s4996 + $0x8] sm:$0xff]
  %v4999 = vld [vmem:[%s4996 + $0x10] sm:$0x3]
  %s5000 = scalar_lea.vmem %s2, 936
  %v5001 = vld [vmem:[%s5000] sm:$0xff]
  %v5002 = vld [vmem:[%s5000 + $0x8] sm:$0xff]
  %v5003 = vld [vmem:[%s5000 + $0x10] sm:$0x3]
  %v5004 = vsel %vm23, %v4983, 0.0
  %5005 = vadd.xlane.f32.xlu0 %v5004
  %v5006 = vpop.xlane.xlu0 %5005
  %v5007 = vsel %vm23, %v4988, 0.0
  %5008 = vadd.xlane.f32.xlu0 %v5007
  %v5009 = vpop.xlane.xlu0 %5008
  %v5010 = vsel %vm127, %v4993, 0.0
  %5011 = vadd.xlane.f32.xlu0 %v5010
  %v5012 = vpop.xlane.xlu0 %5011
  %v5013 = vmul.f32 %v4983, %v4983
  %v5014 = vmul.f32 %v4988, %v4988
  %v5015 = vmul.f32 %v4993, %v4993
  %v5016 = vsel %vm23, %v5013, 0.0
  %5017 = vadd.xlane.f32.xlu0 %v5016
  %v5018 = vpop.xlane.xlu0 %5017
  %v5019 = vsel %vm23, %v5014, 0.0
  %5020 = vadd.xlane.f32.xlu0 %v5019
  %v5021 = vpop.xlane.xlu0 %5020
  %v5022 = vsel %vm127, %v5015, 0.0
  %5023 = vadd.xlane.f32.xlu0 %v5022
  %v5024 = vpop.xlane.xlu0 %5023
  %v5025 = vmul.f32 %v5006, 0.1
  %v5026 = vmul.f32 %v5009, 0.1
  %v5027 = vmul.f32 %v5012, 0.1
  %v5028 = vmul.f32 %v5018, 0.1
  %v5029 = vmul.f32 %v5021, 0.1
  %v5030 = vmul.f32 %v5024, 0.1
  %v5031 = vmul.f32 %v5025, %v5025
  %v5032 = vmul.f32 %v5026, %v5026
  %v5033 = vmul.f32 %v5027, %v5027
  %v5034 = vsub.f32 %v5028, %v5031
  %v5035 = vsub.f32 %v5029, %v5032
  %v5036 = vsub.f32 %v5030, %v5033
  %v5037 = vmax.f32 %v5034, 0.0
  %v5038 = vmax.f32 %v5035, 0.0
  %v5039 = vmax.f32 %v5036, 0.0
  %v5040 = vadd.f32 %v5037, 1e-05
  %v5041 = vadd.f32 %v5038, 1e-05
  %v5042 = vadd.f32 %v5039, 1e-05
  %v5043 = vrsqrt.pop %v5040
  %v5044 = vrsqrt.pop %v5041
  %v5045 = vrsqrt.pop %v5042
  %v5046 = vmul.f32 %v4997, %v5043
  %v5047 = vmul.f32 %v4998, %v5044
  %v5048 = vmul.f32 %v4999, %v5045
  %v5049 = vmul.f32 %v5025, %v5046
  %v5050 = vmul.f32 %v5026, %v5047
  %v5051 = vmul.f32 %v5027, %v5048
  %v5052 = vsub.f32 %v5001, %v5049
  %v5053 = vsub.f32 %v5002, %v5050
  %v5054 = vsub.f32 %v5003, %v5051
  %5056 = vset.pattern.permute.xlu0 0
  %5057 = vperm.xlu0 %5056, %v5046
  %v5058 = vpop.permute.xlu0 %5057
  %5061 = vset.pattern.permute.xlu0 0
  %5062 = vperm.xlu0 %5061, %v5047
  %v5063 = vpop.permute.xlu0 %5062
  %5066 = vset.pattern.permute.xlu0 0
  %5067 = vperm.xlu0 %5066, %v5048
  %v5068 = vpop.permute.xlu0 %5067
  %v5070 = vmul.f32 %v4983, %v5058
  %v5071 = vmul.f32 %v4988, %v5063
  %v5072 = vmul.f32 %v4993, %v5068
  %5074 = vset.pattern.permute.xlu0 0
  %5075 = vperm.xlu0 %5074, %v5052
  %v5076 = vpop.permute.xlu0 %5075
  %5079 = vset.pattern.permute.xlu0 0
  %5080 = vperm.xlu0 %5079, %v5053
  %v5081 = vpop.permute.xlu0 %5080
  %5084 = vset.pattern.permute.xlu0 0
  %5085 = vperm.xlu0 %5084, %v5054
  %v5086 = vpop.permute.xlu0 %5085
  %v5088 = vadd.f32 %v5070, %v5076
  %v5089 = vadd.f32 %v5071, %v5081
  %v5090 = vadd.f32 %v5072, %v5086
  %v5091 = vadd.f32 %v5088, %v4607
  %v5092 = vadd.f32 %v5089, %v4608
  %v5093 = vadd.f32 %v5090, %v4609
  %v5094 = vmax.f32 %v5091, 0.0
  %v5095 = vmax.f32 %v5092, 0.0
  %v5096 = vmax.f32 %v5093, 0.0
  %s5097 = scalar_lea.vmem %s1, 640
  %v5098 = vld [vmem:[%s5097] sm:$0xff]
  %v5099 = vld [vmem:[%s5097 + $0x8] sm:$0xff]
  %v5100 = vld [vmem:[%s5097 + $0x10] sm:$0xff]
  %v5101 = vld [vmem:[%s5097 + $0x18] sm:$0x7f]
  %v5105 = vrot.slane %v5094, 7
  %v5106 = vrot.slane %v5095, 7
  %v5107 = vsel %vm231, %v5105, %v5106
  %v5108 = vrot.slane %v5096, 7
  %v5109 = vsel %vm231, %v5106, %v5108
  %v5113 = vsel %vm231, 0.0, %v5105
  %v5114 = vrot.slane %v5094, 1
  %v5115 = vrot.slane %v5095, 1
  %v5116 = vsel %vm241, %v5114, %v5115
  %v5117 = vrot.slane %v5096, 1
  %v5118 = vsel %vm241, %v5115, %v5117
  %v5120 = vsel %vm231, %v5117, 0.0
  %5121 = vrot.lane.b32.xlu0 %v5094, 10
  %v5122 = vpop.permute.xlu0 %5121
  %5123 = vrot.lane.b32.xlu0 %v5095, 10
  %v5124 = vpop.permute.xlu0 %5123
  %5125 = vrot.lane.b32.xlu0 %v5096, 10
  %v5126 = vpop.permute.xlu0 %5125
  %5131 = vrot.lane.b32.xlu0 %v5116, 20
  %v5132 = vpop.permute.xlu0 %5131
  %5133 = vrot.lane.b32.xlu0 %v5118, 20
  %v5134 = vpop.permute.xlu0 %5133
  %5135 = vrot.lane.b32.xlu0 %v5120, 20
  %v5136 = vpop.permute.xlu0 %5135
  %v5140 = vsel %vm23, %v5113, %v5122
  %v5141 = vsel %vm23, %v5107, %v5124
  %v5142 = vsel %vm23, %v5109, %v5126
  %v5143 = vsel %vm271, %v5140, %v5132
  %v5144 = vsel %vm271, %v5141, %v5134
  %v5145 = vsel %vm271, %v5142, %v5136
  %v5146 = vsel %vm275, %v5143, 1.0
  %v5147 = vsel %vm275, %v5144, 1.0
  %v5148 = vsel %vm275, %v5145, 1.0
  %v5150 = vsel %vm279, %v5146, 0
  %v5153 = vsel %vm279, %v5147, 0
  %v5156 = vsel %vm279, %v5148, 0
  %v5159 = vsel %vm241, %v5101, 0
  %5161 = vmatprep.subr.mxu0 0.0
  %5162 = vmatpush1.msra.mxu0 0.0
  %5163 = vmatprep.subr.mxu0 0.0
  %5164 = vmatpush1.msra.mxu0 0.0
  %5165 = vmatprep.subr.mxu0 0.0
  %5166 = vmatpush1.msra.mxu0 0.0
  %5167 = vmatprep.subr.mxu0 0.0
  %5168 = vmatpush1.msra.mxu0 0.0
  %5169 = vmatprep.subr.mxu0 0.0
  %5170 = vmatpush1.msra.mxu0 0.0
  %5171 = vmatprep.subr.mxu0 0.0
  %5172 = vmatpush1.msra.mxu0 0.0
  %5173 = vmatprep.subr.mxu0 0.0
  %5174 = vmatpush1.msra.mxu0 0.0
  %5175 = vmatprep.subr.mxu0 0.0
  %5176 = vmatpush1.msra.mxu0 0.0
  %5177 = vmatprep.subr.mxu0 0.0
  %5178 = vmatpush1.msra.mxu0 0.0
  %5179 = vmatprep.subr.mxu0 0.0
  %5180 = vmatpush1.msra.mxu0 0.0
  %5181 = vmatprep.subr.mxu0 0.0
  %5182 = vmatpush1.msra.mxu0 0.0
  %5183 = vmatprep.subr.mxu0 0.0
  %5184 = vmatpush1.msra.mxu0 0.0
  %5185 = vmatprep.subr.mxu0 0.0
  %5186 = vmatpush1.msra.mxu0 %v5159
  %5187 = vmatprep.subr.mxu0 0.0
  %5188 = vmatpush1.msra.mxu0 %v5100
  %5189 = vmatprep.subr.mxu0 0.0
  %5190 = vmatpush1.msra.mxu0 %v5099
  %5191 = vmatprep.subr.mxu0 0.0
  %5192 = vmatpush1.msra.mxu0 %v5098
  %5193 = vmatprep.subr.mxu0 0.0
  %5194 = vmatpush2.msra.mxu0 0.0
  %5195 = vmatprep.subr.mxu0 0.0
  %5196 = vmatpush2.msra.mxu0 0.0
  %5197 = vmatprep.subr.mxu0 0.0
  %5198 = vmatpush2.msra.mxu0 0.0
  %5199 = vmatprep.subr.mxu0 0.0
  %5200 = vmatpush2.msra.mxu0 0.0
  %5201 = vmatprep.subr.mxu0 0.0
  %5202 = vmatpush2.msra.mxu0 0.0
  %5203 = vmatprep.subr.mxu0 0.0
  %5204 = vmatpush2.msra.mxu0 0.0
  %5205 = vmatprep.subr.mxu0 0.0
  %5206 = vmatpush2.msra.mxu0 0.0
  %5207 = vmatprep.subr.mxu0 0.0
  %5208 = vmatpush2.msra.mxu0 0.0
  %5209 = vmatprep.subr.mxu0 0.0
  %5210 = vmatpush2.msra.mxu0 0.0
  %5211 = vmatprep.subr.mxu0 0.0
  %5212 = vmatpush2.msra.mxu0 0.0
  %5213 = vmatprep.subr.mxu0 0.0
  %5214 = vmatpush2.msra.mxu0 0.0
  %5215 = vmatprep.subr.mxu0 0.0
  %5216 = vmatpush2.msra.mxu0 0.0
  %5217 = vmatprep.subr.mxu0 0.0
  %5218 = vmatpush2.msra.mxu0 0.0
  %5219 = vmatprep.subr.mxu0 0.0
  %5220 = vmatpush2.msra.mxu0 0.0
  %5221 = vmatprep.subr.mxu0 0.0
  %5222 = vmatpush2.msra.mxu0 0.0
  %5223 = vmatprep.subr.mxu0 0.0
  %5224 = vmatpush2.msra.mxu0 0.0
  %5225 = vmatprep.mubr.f32.mxu0 0.0
  %5226 = vmatmul.mubr.f32.gmra.mxu0 %v5150
  %v5227 = vpop.f32.mrf.mxu0
  %v5228 = vadd.f32 0.0, %v5227
  %v5229 = vpop.f32.mrf.mxu0
  %5230 = vmatprep.mubr.f32.mxu0 0.0
  %5231 = vmatmul.mubr.f32.gmra.mxu0 %v5153
  %v5232 = vpop.f32.mrf.mxu0
  %v5233 = vadd.f32 0.0, %v5232
  %v5234 = vpop.f32.mrf.mxu0
  %5235 = vmatprep.mubr.f32.mxu0 0.0
  %5236 = vmatmul.mubr.f32.gmra.mxu0 %v5156
  %v5237 = vpop.f32.mrf.mxu0
  %v5238 = vadd.f32 0.0, %v5237
  %v5239 = vpop.f32.mrf.mxu0
  %5240 = vdwg.mxu0
  %s5241 = scalar_lea.vmem %s2, 960
  %v5242 = vld [vmem:[%s5241] sm:$0xff]
  %v5243 = vld [vmem:[%s5241 + $0x8] sm:$0xff]
  %v5244 = vld [vmem:[%s5241 + $0x10] sm:$0x3]
  %s5245 = scalar_lea.vmem %s2, 984
  %v5246 = vld [vmem:[%s5245] sm:$0xff]
  %v5247 = vld [vmem:[%s5245 + $0x8] sm:$0xff]
  %v5248 = vld [vmem:[%s5245 + $0x10] sm:$0x3]
  %v5249 = vsel %vm23, %v5228, 0.0
  %5250 = vadd.xlane.f32.xlu0 %v5249
  %v5251 = vpop.xlane.xlu0 %5250
  %v5252 = vsel %vm23, %v5233, 0.0
  %5253 = vadd.xlane.f32.xlu0 %v5252
  %v5254 = vpop.xlane.xlu0 %5253
  %v5255 = vsel %vm127, %v5238, 0.0
  %5256 = vadd.xlane.f32.xlu0 %v5255
  %v5257 = vpop.xlane.xlu0 %5256
  %v5258 = vmul.f32 %v5228, %v5228
  %v5259 = vmul.f32 %v5233, %v5233
  %v5260 = vmul.f32 %v5238, %v5238
  %v5261 = vsel %vm23, %v5258, 0.0
  %5262 = vadd.xlane.f32.xlu0 %v5261
  %v5263 = vpop.xlane.xlu0 %5262
  %v5264 = vsel %vm23, %v5259, 0.0
  %5265 = vadd.xlane.f32.xlu0 %v5264
  %v5266 = vpop.xlane.xlu0 %5265
  %v5267 = vsel %vm127, %v5260, 0.0
  %5268 = vadd.xlane.f32.xlu0 %v5267
  %v5269 = vpop.xlane.xlu0 %5268
  %v5270 = vmul.f32 %v5251, 0.1
  %v5271 = vmul.f32 %v5254, 0.1
  %v5272 = vmul.f32 %v5257, 0.1
  %v5273 = vmul.f32 %v5263, 0.1
  %v5274 = vmul.f32 %v5266, 0.1
  %v5275 = vmul.f32 %v5269, 0.1
  %v5276 = vmul.f32 %v5270, %v5270
  %v5277 = vmul.f32 %v5271, %v5271
  %v5278 = vmul.f32 %v5272, %v5272
  %v5279 = vsub.f32 %v5273, %v5276
  %v5280 = vsub.f32 %v5274, %v5277
  %v5281 = vsub.f32 %v5275, %v5278
  %v5282 = vmax.f32 %v5279, 0.0
  %v5283 = vmax.f32 %v5280, 0.0
  %v5284 = vmax.f32 %v5281, 0.0
  %v5285 = vadd.f32 %v5282, 1e-05
  %v5286 = vadd.f32 %v5283, 1e-05
  %v5287 = vadd.f32 %v5284, 1e-05
  %v5288 = vrsqrt.pop %v5285
  %v5289 = vrsqrt.pop %v5286
  %v5290 = vrsqrt.pop %v5287
  %v5291 = vmul.f32 %v5242, %v5288
  %v5292 = vmul.f32 %v5243, %v5289
  %v5293 = vmul.f32 %v5244, %v5290
  %v5294 = vmul.f32 %v5270, %v5291
  %v5295 = vmul.f32 %v5271, %v5292
  %v5296 = vmul.f32 %v5272, %v5293
  %v5297 = vsub.f32 %v5246, %v5294
  %v5298 = vsub.f32 %v5247, %v5295
  %v5299 = vsub.f32 %v5248, %v5296
  %5301 = vset.pattern.permute.xlu0 0
  %5302 = vperm.xlu0 %5301, %v5291
  %v5303 = vpop.permute.xlu0 %5302
  %5306 = vset.pattern.permute.xlu0 0
  %5307 = vperm.xlu0 %5306, %v5292
  %v5308 = vpop.permute.xlu0 %5307
  %5311 = vset.pattern.permute.xlu0 0
  %5312 = vperm.xlu0 %5311, %v5293
  %v5313 = vpop.permute.xlu0 %5312
  %v5315 = vmul.f32 %v5228, %v5303
  %v5316 = vmul.f32 %v5233, %v5308
  %v5317 = vmul.f32 %v5238, %v5313
  %5319 = vset.pattern.permute.xlu0 0
  %5320 = vperm.xlu0 %5319, %v5297
  %v5321 = vpop.permute.xlu0 %5320
  %5324 = vset.pattern.permute.xlu0 0
  %5325 = vperm.xlu0 %5324, %v5298
  %v5326 = vpop.permute.xlu0 %5325
  %5329 = vset.pattern.permute.xlu0 0
  %5330 = vperm.xlu0 %5329, %v5299
  %v5331 = vpop.permute.xlu0 %5330
  %v5333 = vadd.f32 %v5315, %v5321
  %v5334 = vadd.f32 %v5316, %v5326
  %v5335 = vadd.f32 %v5317, %v5331
  %v5336 = vmax.f32 %v5333, 0.0
  %v5337 = vmax.f32 %v5334, 0.0
  %v5338 = vmax.f32 %v5335, 0.0
  %s5339 = scalar_lea.vmem %s1, 672
  %v5340 = vld [vmem:[%s5339] sm:$0xff]
  %v5341 = vld [vmem:[%s5339 + $0x8] sm:$0xff]
  %v5342 = vld [vmem:[%s5339 + $0x10] sm:$0xff]
  %v5343 = vld [vmem:[%s5339 + $0x18] sm:$0x7f]
  %v5347 = vrot.slane %v5336, 7
  %v5348 = vrot.slane %v5337, 7
  %v5349 = vsel %vm231, %v5347, %v5348
  %v5350 = vrot.slane %v5338, 7
  %v5351 = vsel %vm231, %v5348, %v5350
  %v5355 = vsel %vm231, 0.0, %v5347
  %v5356 = vrot.slane %v5336, 1
  %v5357 = vrot.slane %v5337, 1
  %v5358 = vsel %vm241, %v5356, %v5357
  %v5359 = vrot.slane %v5338, 1
  %v5360 = vsel %vm241, %v5357, %v5359
  %v5362 = vsel %vm231, %v5359, 0.0
  %5363 = vrot.lane.b32.xlu0 %v5336, 10
  %v5364 = vpop.permute.xlu0 %5363
  %5365 = vrot.lane.b32.xlu0 %v5337, 10
  %v5366 = vpop.permute.xlu0 %5365
  %5367 = vrot.lane.b32.xlu0 %v5338, 10
  %v5368 = vpop.permute.xlu0 %5367
  %5373 = vrot.lane.b32.xlu0 %v5358, 20
  %v5374 = vpop.permute.xlu0 %5373
  %5375 = vrot.lane.b32.xlu0 %v5360, 20
  %v5376 = vpop.permute.xlu0 %5375
  %5377 = vrot.lane.b32.xlu0 %v5362, 20
  %v5378 = vpop.permute.xlu0 %5377
  %v5382 = vsel %vm23, %v5355, %v5364
  %v5383 = vsel %vm23, %v5349, %v5366
  %v5384 = vsel %vm23, %v5351, %v5368
  %v5385 = vsel %vm271, %v5382, %v5374
  %v5386 = vsel %vm271, %v5383, %v5376
  %v5387 = vsel %vm271, %v5384, %v5378
  %v5388 = vsel %vm275, %v5385, 1.0
  %v5389 = vsel %vm275, %v5386, 1.0
  %v5390 = vsel %vm275, %v5387, 1.0
  %v5392 = vsel %vm279, %v5388, 0
  %v5395 = vsel %vm279, %v5389, 0
  %v5398 = vsel %vm279, %v5390, 0
  %v5401 = vsel %vm241, %v5343, 0
  %5403 = vmatprep.subr.mxu0 0.0
  %5404 = vmatpush1.msra.mxu0 0.0
  %5405 = vmatprep.subr.mxu0 0.0
  %5406 = vmatpush1.msra.mxu0 0.0
  %5407 = vmatprep.subr.mxu0 0.0
  %5408 = vmatpush1.msra.mxu0 0.0
  %5409 = vmatprep.subr.mxu0 0.0
  %5410 = vmatpush1.msra.mxu0 0.0
  %5411 = vmatprep.subr.mxu0 0.0
  %5412 = vmatpush1.msra.mxu0 0.0
  %5413 = vmatprep.subr.mxu0 0.0
  %5414 = vmatpush1.msra.mxu0 0.0
  %5415 = vmatprep.subr.mxu0 0.0
  %5416 = vmatpush1.msra.mxu0 0.0
  %5417 = vmatprep.subr.mxu0 0.0
  %5418 = vmatpush1.msra.mxu0 0.0
  %5419 = vmatprep.subr.mxu0 0.0
  %5420 = vmatpush1.msra.mxu0 0.0
  %5421 = vmatprep.subr.mxu0 0.0
  %5422 = vmatpush1.msra.mxu0 0.0
  %5423 = vmatprep.subr.mxu0 0.0
  %5424 = vmatpush1.msra.mxu0 0.0
  %5425 = vmatprep.subr.mxu0 0.0
  %5426 = vmatpush1.msra.mxu0 0.0
  %5427 = vmatprep.subr.mxu0 0.0
  %5428 = vmatpush1.msra.mxu0 %v5401
  %5429 = vmatprep.subr.mxu0 0.0
  %5430 = vmatpush1.msra.mxu0 %v5342
  %5431 = vmatprep.subr.mxu0 0.0
  %5432 = vmatpush1.msra.mxu0 %v5341
  %5433 = vmatprep.subr.mxu0 0.0
  %5434 = vmatpush1.msra.mxu0 %v5340
  %5435 = vmatprep.subr.mxu0 0.0
  %5436 = vmatpush2.msra.mxu0 0.0
  %5437 = vmatprep.subr.mxu0 0.0
  %5438 = vmatpush2.msra.mxu0 0.0
  %5439 = vmatprep.subr.mxu0 0.0
  %5440 = vmatpush2.msra.mxu0 0.0
  %5441 = vmatprep.subr.mxu0 0.0
  %5442 = vmatpush2.msra.mxu0 0.0
  %5443 = vmatprep.subr.mxu0 0.0
  %5444 = vmatpush2.msra.mxu0 0.0
  %5445 = vmatprep.subr.mxu0 0.0
  %5446 = vmatpush2.msra.mxu0 0.0
  %5447 = vmatprep.subr.mxu0 0.0
  %5448 = vmatpush2.msra.mxu0 0.0
  %5449 = vmatprep.subr.mxu0 0.0
  %5450 = vmatpush2.msra.mxu0 0.0
  %5451 = vmatprep.subr.mxu0 0.0
  %5452 = vmatpush2.msra.mxu0 0.0
  %5453 = vmatprep.subr.mxu0 0.0
  %5454 = vmatpush2.msra.mxu0 0.0
  %5455 = vmatprep.subr.mxu0 0.0
  %5456 = vmatpush2.msra.mxu0 0.0
  %5457 = vmatprep.subr.mxu0 0.0
  %5458 = vmatpush2.msra.mxu0 0.0
  %5459 = vmatprep.subr.mxu0 0.0
  %5460 = vmatpush2.msra.mxu0 0.0
  %5461 = vmatprep.subr.mxu0 0.0
  %5462 = vmatpush2.msra.mxu0 0.0
  %5463 = vmatprep.subr.mxu0 0.0
  %5464 = vmatpush2.msra.mxu0 0.0
  %5465 = vmatprep.subr.mxu0 0.0
  %5466 = vmatpush2.msra.mxu0 0.0
  %5467 = vmatprep.mubr.f32.mxu0 0.0
  %5468 = vmatmul.mubr.f32.gmra.mxu0 %v5392
  %v5469 = vpop.f32.mrf.mxu0
  %v5470 = vadd.f32 0.0, %v5469
  %v5471 = vpop.f32.mrf.mxu0
  %5472 = vmatprep.mubr.f32.mxu0 0.0
  %5473 = vmatmul.mubr.f32.gmra.mxu0 %v5395
  %v5474 = vpop.f32.mrf.mxu0
  %v5475 = vadd.f32 0.0, %v5474
  %v5476 = vpop.f32.mrf.mxu0
  %5477 = vmatprep.mubr.f32.mxu0 0.0
  %5478 = vmatmul.mubr.f32.gmra.mxu0 %v5398
  %v5479 = vpop.f32.mrf.mxu0
  %v5480 = vadd.f32 0.0, %v5479
  %v5481 = vpop.f32.mrf.mxu0
  %5482 = vdwg.mxu0
  %s5483 = scalar_lea.vmem %s2, 1008
  %v5484 = vld [vmem:[%s5483] sm:$0xff]
  %v5485 = vld [vmem:[%s5483 + $0x8] sm:$0xff]
  %v5486 = vld [vmem:[%s5483 + $0x10] sm:$0x3]
  %s5487 = scalar_lea.vmem %s2, 1032
  %v5488 = vld [vmem:[%s5487] sm:$0xff]
  %v5489 = vld [vmem:[%s5487 + $0x8] sm:$0xff]
  %v5490 = vld [vmem:[%s5487 + $0x10] sm:$0x3]
  %v5491 = vsel %vm23, %v5470, 0.0
  %5492 = vadd.xlane.f32.xlu0 %v5491
  %v5493 = vpop.xlane.xlu0 %5492
  %v5494 = vsel %vm23, %v5475, 0.0
  %5495 = vadd.xlane.f32.xlu0 %v5494
  %v5496 = vpop.xlane.xlu0 %5495
  %v5497 = vsel %vm127, %v5480, 0.0
  %5498 = vadd.xlane.f32.xlu0 %v5497
  %v5499 = vpop.xlane.xlu0 %5498
  %v5500 = vmul.f32 %v5470, %v5470
  %v5501 = vmul.f32 %v5475, %v5475
  %v5502 = vmul.f32 %v5480, %v5480
  %v5503 = vsel %vm23, %v5500, 0.0
  %5504 = vadd.xlane.f32.xlu0 %v5503
  %v5505 = vpop.xlane.xlu0 %5504
  %v5506 = vsel %vm23, %v5501, 0.0
  %5507 = vadd.xlane.f32.xlu0 %v5506
  %v5508 = vpop.xlane.xlu0 %5507
  %v5509 = vsel %vm127, %v5502, 0.0
  %5510 = vadd.xlane.f32.xlu0 %v5509
  %v5511 = vpop.xlane.xlu0 %5510
  %v5512 = vmul.f32 %v5493, 0.1
  %v5513 = vmul.f32 %v5496, 0.1
  %v5514 = vmul.f32 %v5499, 0.1
  %v5515 = vmul.f32 %v5505, 0.1
  %v5516 = vmul.f32 %v5508, 0.1
  %v5517 = vmul.f32 %v5511, 0.1
  %v5518 = vmul.f32 %v5512, %v5512
  %v5519 = vmul.f32 %v5513, %v5513
  %v5520 = vmul.f32 %v5514, %v5514
  %v5521 = vsub.f32 %v5515, %v5518
  %v5522 = vsub.f32 %v5516, %v5519
  %v5523 = vsub.f32 %v5517, %v5520
  %v5524 = vmax.f32 %v5521, 0.0
  %v5525 = vmax.f32 %v5522, 0.0
  %v5526 = vmax.f32 %v5523, 0.0
  %v5527 = vadd.f32 %v5524, 1e-05
  %v5528 = vadd.f32 %v5525, 1e-05
  %v5529 = vadd.f32 %v5526, 1e-05
  %v5530 = vrsqrt.pop %v5527
  %v5531 = vrsqrt.pop %v5528
  %v5532 = vrsqrt.pop %v5529
  %v5533 = vmul.f32 %v5484, %v5530
  %v5534 = vmul.f32 %v5485, %v5531
  %v5535 = vmul.f32 %v5486, %v5532
  %v5536 = vmul.f32 %v5512, %v5533
  %v5537 = vmul.f32 %v5513, %v5534
  %v5538 = vmul.f32 %v5514, %v5535
  %v5539 = vsub.f32 %v5488, %v5536
  %v5540 = vsub.f32 %v5489, %v5537
  %v5541 = vsub.f32 %v5490, %v5538
  %5543 = vset.pattern.permute.xlu0 0
  %5544 = vperm.xlu0 %5543, %v5533
  %v5545 = vpop.permute.xlu0 %5544
  %5548 = vset.pattern.permute.xlu0 0
  %5549 = vperm.xlu0 %5548, %v5534
  %v5550 = vpop.permute.xlu0 %5549
  %5553 = vset.pattern.permute.xlu0 0
  %5554 = vperm.xlu0 %5553, %v5535
  %v5555 = vpop.permute.xlu0 %5554
  %v5557 = vmul.f32 %v5470, %v5545
  %v5558 = vmul.f32 %v5475, %v5550
  %v5559 = vmul.f32 %v5480, %v5555
  %5561 = vset.pattern.permute.xlu0 0
  %5562 = vperm.xlu0 %5561, %v5539
  %v5563 = vpop.permute.xlu0 %5562
  %5566 = vset.pattern.permute.xlu0 0
  %5567 = vperm.xlu0 %5566, %v5540
  %v5568 = vpop.permute.xlu0 %5567
  %5571 = vset.pattern.permute.xlu0 0
  %5572 = vperm.xlu0 %5571, %v5541
  %v5573 = vpop.permute.xlu0 %5572
  %v5575 = vadd.f32 %v5557, %v5563
  %v5576 = vadd.f32 %v5558, %v5568
  %v5577 = vadd.f32 %v5559, %v5573
  %v5578 = vadd.f32 %v5575, %v5094
  %v5579 = vadd.f32 %v5576, %v5095
  %v5580 = vadd.f32 %v5577, %v5096
  %v5581 = vmax.f32 %v5578, 0.0
  %v5582 = vmax.f32 %v5579, 0.0
  %v5583 = vmax.f32 %v5580, 0.0
  %s5584 = scalar_lea.vmem %s1, 704
  %v5585 = vld [vmem:[%s5584] sm:$0xff]
  %v5586 = vld [vmem:[%s5584 + $0x8] sm:$0xff]
  %v5587 = vld [vmem:[%s5584 + $0x10] sm:$0xff]
  %v5588 = vld [vmem:[%s5584 + $0x18] sm:$0x7f]
  %v5592 = vrot.slane %v5581, 7
  %v5593 = vrot.slane %v5582, 7
  %v5594 = vsel %vm231, %v5592, %v5593
  %v5595 = vrot.slane %v5583, 7
  %v5596 = vsel %vm231, %v5593, %v5595
  %v5600 = vsel %vm231, 0.0, %v5592
  %v5601 = vrot.slane %v5581, 1
  %v5602 = vrot.slane %v5582, 1
  %v5603 = vsel %vm241, %v5601, %v5602
  %v5604 = vrot.slane %v5583, 1
  %v5605 = vsel %vm241, %v5602, %v5604
  %v5607 = vsel %vm231, %v5604, 0.0
  %5608 = vrot.lane.b32.xlu0 %v5581, 10
  %v5609 = vpop.permute.xlu0 %5608
  %5610 = vrot.lane.b32.xlu0 %v5582, 10
  %v5611 = vpop.permute.xlu0 %5610
  %5612 = vrot.lane.b32.xlu0 %v5583, 10
  %v5613 = vpop.permute.xlu0 %5612
  %5618 = vrot.lane.b32.xlu0 %v5603, 20
  %v5619 = vpop.permute.xlu0 %5618
  %5620 = vrot.lane.b32.xlu0 %v5605, 20
  %v5621 = vpop.permute.xlu0 %5620
  %5622 = vrot.lane.b32.xlu0 %v5607, 20
  %v5623 = vpop.permute.xlu0 %5622
  %v5627 = vsel %vm23, %v5600, %v5609
  %v5628 = vsel %vm23, %v5594, %v5611
  %v5629 = vsel %vm23, %v5596, %v5613
  %v5630 = vsel %vm271, %v5627, %v5619
  %v5631 = vsel %vm271, %v5628, %v5621
  %v5632 = vsel %vm271, %v5629, %v5623
  %v5633 = vsel %vm275, %v5630, 1.0
  %v5634 = vsel %vm275, %v5631, 1.0
  %v5635 = vsel %vm275, %v5632, 1.0
  %v5637 = vsel %vm279, %v5633, 0
  %v5640 = vsel %vm279, %v5634, 0
  %v5643 = vsel %vm279, %v5635, 0
  %v5646 = vsel %vm241, %v5588, 0
  %5648 = vmatprep.subr.mxu0 0.0
  %5649 = vmatpush1.msra.mxu0 0.0
  %5650 = vmatprep.subr.mxu0 0.0
  %5651 = vmatpush1.msra.mxu0 0.0
  %5652 = vmatprep.subr.mxu0 0.0
  %5653 = vmatpush1.msra.mxu0 0.0
  %5654 = vmatprep.subr.mxu0 0.0
  %5655 = vmatpush1.msra.mxu0 0.0
  %5656 = vmatprep.subr.mxu0 0.0
  %5657 = vmatpush1.msra.mxu0 0.0
  %5658 = vmatprep.subr.mxu0 0.0
  %5659 = vmatpush1.msra.mxu0 0.0
  %5660 = vmatprep.subr.mxu0 0.0
  %5661 = vmatpush1.msra.mxu0 0.0
  %5662 = vmatprep.subr.mxu0 0.0
  %5663 = vmatpush1.msra.mxu0 0.0
  %5664 = vmatprep.subr.mxu0 0.0
  %5665 = vmatpush1.msra.mxu0 0.0
  %5666 = vmatprep.subr.mxu0 0.0
  %5667 = vmatpush1.msra.mxu0 0.0
  %5668 = vmatprep.subr.mxu0 0.0
  %5669 = vmatpush1.msra.mxu0 0.0
  %5670 = vmatprep.subr.mxu0 0.0
  %5671 = vmatpush1.msra.mxu0 0.0
  %5672 = vmatprep.subr.mxu0 0.0
  %5673 = vmatpush1.msra.mxu0 %v5646
  %5674 = vmatprep.subr.mxu0 0.0
  %5675 = vmatpush1.msra.mxu0 %v5587
  %5676 = vmatprep.subr.mxu0 0.0
  %5677 = vmatpush1.msra.mxu0 %v5586
  %5678 = vmatprep.subr.mxu0 0.0
  %5679 = vmatpush1.msra.mxu0 %v5585
  %5680 = vmatprep.subr.mxu0 0.0
  %5681 = vmatpush2.msra.mxu0 0.0
  %5682 = vmatprep.subr.mxu0 0.0
  %5683 = vmatpush2.msra.mxu0 0.0
  %5684 = vmatprep.subr.mxu0 0.0
  %5685 = vmatpush2.msra.mxu0 0.0
  %5686 = vmatprep.subr.mxu0 0.0
  %5687 = vmatpush2.msra.mxu0 0.0
  %5688 = vmatprep.subr.mxu0 0.0
  %5689 = vmatpush2.msra.mxu0 0.0
  %5690 = vmatprep.subr.mxu0 0.0
  %5691 = vmatpush2.msra.mxu0 0.0
  %5692 = vmatprep.subr.mxu0 0.0
  %5693 = vmatpush2.msra.mxu0 0.0
  %5694 = vmatprep.subr.mxu0 0.0
  %5695 = vmatpush2.msra.mxu0 0.0
  %5696 = vmatprep.subr.mxu0 0.0
  %5697 = vmatpush2.msra.mxu0 0.0
  %5698 = vmatprep.subr.mxu0 0.0
  %5699 = vmatpush2.msra.mxu0 0.0
  %5700 = vmatprep.subr.mxu0 0.0
  %5701 = vmatpush2.msra.mxu0 0.0
  %5702 = vmatprep.subr.mxu0 0.0
  %5703 = vmatpush2.msra.mxu0 0.0
  %5704 = vmatprep.subr.mxu0 0.0
  %5705 = vmatpush2.msra.mxu0 0.0
  %5706 = vmatprep.subr.mxu0 0.0
  %5707 = vmatpush2.msra.mxu0 0.0
  %5708 = vmatprep.subr.mxu0 0.0
  %5709 = vmatpush2.msra.mxu0 0.0
  %5710 = vmatprep.subr.mxu0 0.0
  %5711 = vmatpush2.msra.mxu0 0.0
  %5712 = vmatprep.mubr.f32.mxu0 0.0
  %5713 = vmatmul.mubr.f32.gmra.mxu0 %v5637
  %v5714 = vpop.f32.mrf.mxu0
  %v5715 = vadd.f32 0.0, %v5714
  %v5716 = vpop.f32.mrf.mxu0
  %5717 = vmatprep.mubr.f32.mxu0 0.0
  %5718 = vmatmul.mubr.f32.gmra.mxu0 %v5640
  %v5719 = vpop.f32.mrf.mxu0
  %v5720 = vadd.f32 0.0, %v5719
  %v5721 = vpop.f32.mrf.mxu0
  %5722 = vmatprep.mubr.f32.mxu0 0.0
  %5723 = vmatmul.mubr.f32.gmra.mxu0 %v5643
  %v5724 = vpop.f32.mrf.mxu0
  %v5725 = vadd.f32 0.0, %v5724
  %v5726 = vpop.f32.mrf.mxu0
  %5727 = vdwg.mxu0
  %s5728 = scalar_lea.vmem %s2, 1056
  %v5729 = vld [vmem:[%s5728] sm:$0xff]
  %v5730 = vld [vmem:[%s5728 + $0x8] sm:$0xff]
  %v5731 = vld [vmem:[%s5728 + $0x10] sm:$0x3]
  %s5732 = scalar_lea.vmem %s2, 1080
  %v5733 = vld [vmem:[%s5732] sm:$0xff]
  %v5734 = vld [vmem:[%s5732 + $0x8] sm:$0xff]
  %v5735 = vld [vmem:[%s5732 + $0x10] sm:$0x3]
  %v5736 = vsel %vm23, %v5715, 0.0
  %5737 = vadd.xlane.f32.xlu0 %v5736
  %v5738 = vpop.xlane.xlu0 %5737
  %v5739 = vsel %vm23, %v5720, 0.0
  %5740 = vadd.xlane.f32.xlu0 %v5739
  %v5741 = vpop.xlane.xlu0 %5740
  %v5742 = vsel %vm127, %v5725, 0.0
  %5743 = vadd.xlane.f32.xlu0 %v5742
  %v5744 = vpop.xlane.xlu0 %5743
  %v5745 = vmul.f32 %v5715, %v5715
  %v5746 = vmul.f32 %v5720, %v5720
  %v5747 = vmul.f32 %v5725, %v5725
  %v5748 = vsel %vm23, %v5745, 0.0
  %5749 = vadd.xlane.f32.xlu0 %v5748
  %v5750 = vpop.xlane.xlu0 %5749
  %v5751 = vsel %vm23, %v5746, 0.0
  %5752 = vadd.xlane.f32.xlu0 %v5751
  %v5753 = vpop.xlane.xlu0 %5752
  %v5754 = vsel %vm127, %v5747, 0.0
  %5755 = vadd.xlane.f32.xlu0 %v5754
  %v5756 = vpop.xlane.xlu0 %5755
  %v5757 = vmul.f32 %v5738, 0.1
  %v5758 = vmul.f32 %v5741, 0.1
  %v5759 = vmul.f32 %v5744, 0.1
  %v5760 = vmul.f32 %v5750, 0.1
  %v5761 = vmul.f32 %v5753, 0.1
  %v5762 = vmul.f32 %v5756, 0.1
  %v5763 = vmul.f32 %v5757, %v5757
  %v5764 = vmul.f32 %v5758, %v5758
  %v5765 = vmul.f32 %v5759, %v5759
  %v5766 = vsub.f32 %v5760, %v5763
  %v5767 = vsub.f32 %v5761, %v5764
  %v5768 = vsub.f32 %v5762, %v5765
  %v5769 = vmax.f32 %v5766, 0.0
  %v5770 = vmax.f32 %v5767, 0.0
  %v5771 = vmax.f32 %v5768, 0.0
  %v5772 = vadd.f32 %v5769, 1e-05
  %v5773 = vadd.f32 %v5770, 1e-05
  %v5774 = vadd.f32 %v5771, 1e-05
  %v5775 = vrsqrt.pop %v5772
  %v5776 = vrsqrt.pop %v5773
  %v5777 = vrsqrt.pop %v5774
  %v5778 = vmul.f32 %v5729, %v5775
  %v5779 = vmul.f32 %v5730, %v5776
  %v5780 = vmul.f32 %v5731, %v5777
  %v5781 = vmul.f32 %v5757, %v5778
  %v5782 = vmul.f32 %v5758, %v5779
  %v5783 = vmul.f32 %v5759, %v5780
  %v5784 = vsub.f32 %v5733, %v5781
  %v5785 = vsub.f32 %v5734, %v5782
  %v5786 = vsub.f32 %v5735, %v5783
  %5788 = vset.pattern.permute.xlu0 0
  %5789 = vperm.xlu0 %5788, %v5778
  %v5790 = vpop.permute.xlu0 %5789
  %5793 = vset.pattern.permute.xlu0 0
  %5794 = vperm.xlu0 %5793, %v5779
  %v5795 = vpop.permute.xlu0 %5794
  %5798 = vset.pattern.permute.xlu0 0
  %5799 = vperm.xlu0 %5798, %v5780
  %v5800 = vpop.permute.xlu0 %5799
  %v5802 = vmul.f32 %v5715, %v5790
  %v5803 = vmul.f32 %v5720, %v5795
  %v5804 = vmul.f32 %v5725, %v5800
  %5806 = vset.pattern.permute.xlu0 0
  %5807 = vperm.xlu0 %5806, %v5784
  %v5808 = vpop.permute.xlu0 %5807
  %5811 = vset.pattern.permute.xlu0 0
  %5812 = vperm.xlu0 %5811, %v5785
  %v5813 = vpop.permute.xlu0 %5812
  %5816 = vset.pattern.permute.xlu0 0
  %5817 = vperm.xlu0 %5816, %v5786
  %v5818 = vpop.permute.xlu0 %5817
  %v5820 = vadd.f32 %v5802, %v5808
  %v5821 = vadd.f32 %v5803, %v5813
  %v5822 = vadd.f32 %v5804, %v5818
  %v5823 = vmax.f32 %v5820, 0.0
  %v5824 = vmax.f32 %v5821, 0.0
  %v5825 = vmax.f32 %v5822, 0.0
  %s5826 = scalar_lea.vmem %s1, 736
  %v5827 = vld [vmem:[%s5826] sm:$0xff]
  %v5828 = vld [vmem:[%s5826 + $0x8] sm:$0xff]
  %v5829 = vld [vmem:[%s5826 + $0x10] sm:$0xff]
  %v5830 = vld [vmem:[%s5826 + $0x18] sm:$0x7f]
  %v5834 = vrot.slane %v5823, 7
  %v5835 = vrot.slane %v5824, 7
  %v5836 = vsel %vm231, %v5834, %v5835
  %v5837 = vrot.slane %v5825, 7
  %v5838 = vsel %vm231, %v5835, %v5837
  %v5842 = vsel %vm231, 0.0, %v5834
  %v5843 = vrot.slane %v5823, 1
  %v5844 = vrot.slane %v5824, 1
  %v5845 = vsel %vm241, %v5843, %v5844
  %v5846 = vrot.slane %v5825, 1
  %v5847 = vsel %vm241, %v5844, %v5846
  %v5849 = vsel %vm231, %v5846, 0.0
  %5850 = vrot.lane.b32.xlu0 %v5823, 10
  %v5851 = vpop.permute.xlu0 %5850
  %5852 = vrot.lane.b32.xlu0 %v5824, 10
  %v5853 = vpop.permute.xlu0 %5852
  %5854 = vrot.lane.b32.xlu0 %v5825, 10
  %v5855 = vpop.permute.xlu0 %5854
  %5860 = vrot.lane.b32.xlu0 %v5845, 20
  %v5861 = vpop.permute.xlu0 %5860
  %5862 = vrot.lane.b32.xlu0 %v5847, 20
  %v5863 = vpop.permute.xlu0 %5862
  %5864 = vrot.lane.b32.xlu0 %v5849, 20
  %v5865 = vpop.permute.xlu0 %5864
  %v5869 = vsel %vm23, %v5842, %v5851
  %v5870 = vsel %vm23, %v5836, %v5853
  %v5871 = vsel %vm23, %v5838, %v5855
  %v5872 = vsel %vm271, %v5869, %v5861
  %v5873 = vsel %vm271, %v5870, %v5863
  %v5874 = vsel %vm271, %v5871, %v5865
  %v5875 = vsel %vm275, %v5872, 1.0
  %v5876 = vsel %vm275, %v5873, 1.0
  %v5877 = vsel %vm275, %v5874, 1.0
  %v5879 = vsel %vm279, %v5875, 0
  %v5882 = vsel %vm279, %v5876, 0
  %v5885 = vsel %vm279, %v5877, 0
  %v5888 = vsel %vm241, %v5830, 0
  %5890 = vmatprep.subr.mxu0 0.0
  %5891 = vmatpush1.msra.mxu0 0.0
  %5892 = vmatprep.subr.mxu0 0.0
  %5893 = vmatpush1.msra.mxu0 0.0
  %5894 = vmatprep.subr.mxu0 0.0
  %5895 = vmatpush1.msra.mxu0 0.0
  %5896 = vmatprep.subr.mxu0 0.0
  %5897 = vmatpush1.msra.mxu0 0.0
  %5898 = vmatprep.subr.mxu0 0.0
  %5899 = vmatpush1.msra.mxu0 0.0
  %5900 = vmatprep.subr.mxu0 0.0
  %5901 = vmatpush1.msra.mxu0 0.0
  %5902 = vmatprep.subr.mxu0 0.0
  %5903 = vmatpush1.msra.mxu0 0.0
  %5904 = vmatprep.subr.mxu0 0.0
  %5905 = vmatpush1.msra.mxu0 0.0
  %5906 = vmatprep.subr.mxu0 0.0
  %5907 = vmatpush1.msra.mxu0 0.0
  %5908 = vmatprep.subr.mxu0 0.0
  %5909 = vmatpush1.msra.mxu0 0.0
  %5910 = vmatprep.subr.mxu0 0.0
  %5911 = vmatpush1.msra.mxu0 0.0
  %5912 = vmatprep.subr.mxu0 0.0
  %5913 = vmatpush1.msra.mxu0 0.0
  %5914 = vmatprep.subr.mxu0 0.0
  %5915 = vmatpush1.msra.mxu0 %v5888
  %5916 = vmatprep.subr.mxu0 0.0
  %5917 = vmatpush1.msra.mxu0 %v5829
  %5918 = vmatprep.subr.mxu0 0.0
  %5919 = vmatpush1.msra.mxu0 %v5828
  %5920 = vmatprep.subr.mxu0 0.0
  %5921 = vmatpush1.msra.mxu0 %v5827
  %5922 = vmatprep.subr.mxu0 0.0
  %5923 = vmatpush2.msra.mxu0 0.0
  %5924 = vmatprep.subr.mxu0 0.0
  %5925 = vmatpush2.msra.mxu0 0.0
  %5926 = vmatprep.subr.mxu0 0.0
  %5927 = vmatpush2.msra.mxu0 0.0
  %5928 = vmatprep.subr.mxu0 0.0
  %5929 = vmatpush2.msra.mxu0 0.0
  %5930 = vmatprep.subr.mxu0 0.0
  %5931 = vmatpush2.msra.mxu0 0.0
  %5932 = vmatprep.subr.mxu0 0.0
  %5933 = vmatpush2.msra.mxu0 0.0
  %5934 = vmatprep.subr.mxu0 0.0
  %5935 = vmatpush2.msra.mxu0 0.0
  %5936 = vmatprep.subr.mxu0 0.0
  %5937 = vmatpush2.msra.mxu0 0.0
  %5938 = vmatprep.subr.mxu0 0.0
  %5939 = vmatpush2.msra.mxu0 0.0
  %5940 = vmatprep.subr.mxu0 0.0
  %5941 = vmatpush2.msra.mxu0 0.0
  %5942 = vmatprep.subr.mxu0 0.0
  %5943 = vmatpush2.msra.mxu0 0.0
  %5944 = vmatprep.subr.mxu0 0.0
  %5945 = vmatpush2.msra.mxu0 0.0
  %5946 = vmatprep.subr.mxu0 0.0
  %5947 = vmatpush2.msra.mxu0 0.0
  %5948 = vmatprep.subr.mxu0 0.0
  %5949 = vmatpush2.msra.mxu0 0.0
  %5950 = vmatprep.subr.mxu0 0.0
  %5951 = vmatpush2.msra.mxu0 0.0
  %5952 = vmatprep.subr.mxu0 0.0
  %5953 = vmatpush2.msra.mxu0 0.0
  %5954 = vmatprep.mubr.f32.mxu0 0.0
  %5955 = vmatmul.mubr.f32.gmra.mxu0 %v5879
  %v5956 = vpop.f32.mrf.mxu0
  %v5957 = vadd.f32 0.0, %v5956
  %v5958 = vpop.f32.mrf.mxu0
  %5959 = vmatprep.mubr.f32.mxu0 0.0
  %5960 = vmatmul.mubr.f32.gmra.mxu0 %v5882
  %v5961 = vpop.f32.mrf.mxu0
  %v5962 = vadd.f32 0.0, %v5961
  %v5963 = vpop.f32.mrf.mxu0
  %5964 = vmatprep.mubr.f32.mxu0 0.0
  %5965 = vmatmul.mubr.f32.gmra.mxu0 %v5885
  %v5966 = vpop.f32.mrf.mxu0
  %v5967 = vadd.f32 0.0, %v5966
  %v5968 = vpop.f32.mrf.mxu0
  %5969 = vdwg.mxu0
  %s5970 = scalar_lea.vmem %s2, 1104
  %v5971 = vld [vmem:[%s5970] sm:$0xff]
  %v5972 = vld [vmem:[%s5970 + $0x8] sm:$0xff]
  %v5973 = vld [vmem:[%s5970 + $0x10] sm:$0x3]
  %s5974 = scalar_lea.vmem %s2, 1128
  %v5975 = vld [vmem:[%s5974] sm:$0xff]
  %v5976 = vld [vmem:[%s5974 + $0x8] sm:$0xff]
  %v5977 = vld [vmem:[%s5974 + $0x10] sm:$0x3]
  %v5978 = vsel %vm23, %v5957, 0.0
  %5979 = vadd.xlane.f32.xlu0 %v5978
  %v5980 = vpop.xlane.xlu0 %5979
  %v5981 = vsel %vm23, %v5962, 0.0
  %5982 = vadd.xlane.f32.xlu0 %v5981
  %v5983 = vpop.xlane.xlu0 %5982
  %v5984 = vsel %vm127, %v5967, 0.0
  %5985 = vadd.xlane.f32.xlu0 %v5984
  %v5986 = vpop.xlane.xlu0 %5985
  %v5987 = vmul.f32 %v5957, %v5957
  %v5988 = vmul.f32 %v5962, %v5962
  %v5989 = vmul.f32 %v5967, %v5967
  %v5990 = vsel %vm23, %v5987, 0.0
  %5991 = vadd.xlane.f32.xlu0 %v5990
  %v5992 = vpop.xlane.xlu0 %5991
  %v5993 = vsel %vm23, %v5988, 0.0
  %5994 = vadd.xlane.f32.xlu0 %v5993
  %v5995 = vpop.xlane.xlu0 %5994
  %v5996 = vsel %vm127, %v5989, 0.0
  %5997 = vadd.xlane.f32.xlu0 %v5996
  %v5998 = vpop.xlane.xlu0 %5997
  %v5999 = vmul.f32 %v5980, 0.1
  %v6000 = vmul.f32 %v5983, 0.1
  %v6001 = vmul.f32 %v5986, 0.1
  %v6002 = vmul.f32 %v5992, 0.1
  %v6003 = vmul.f32 %v5995, 0.1
  %v6004 = vmul.f32 %v5998, 0.1
  %v6005 = vmul.f32 %v5999, %v5999
  %v6006 = vmul.f32 %v6000, %v6000
  %v6007 = vmul.f32 %v6001, %v6001
  %v6008 = vsub.f32 %v6002, %v6005
  %v6009 = vsub.f32 %v6003, %v6006
  %v6010 = vsub.f32 %v6004, %v6007
  %v6011 = vmax.f32 %v6008, 0.0
  %v6012 = vmax.f32 %v6009, 0.0
  %v6013 = vmax.f32 %v6010, 0.0
  %v6014 = vadd.f32 %v6011, 1e-05
  %v6015 = vadd.f32 %v6012, 1e-05
  %v6016 = vadd.f32 %v6013, 1e-05
  %v6017 = vrsqrt.pop %v6014
  %v6018 = vrsqrt.pop %v6015
  %v6019 = vrsqrt.pop %v6016
  %v6020 = vmul.f32 %v5971, %v6017
  %v6021 = vmul.f32 %v5972, %v6018
  %v6022 = vmul.f32 %v5973, %v6019
  %v6023 = vmul.f32 %v5999, %v6020
  %v6024 = vmul.f32 %v6000, %v6021
  %v6025 = vmul.f32 %v6001, %v6022
  %v6026 = vsub.f32 %v5975, %v6023
  %v6027 = vsub.f32 %v5976, %v6024
  %v6028 = vsub.f32 %v5977, %v6025
  %6030 = vset.pattern.permute.xlu0 0
  %6031 = vperm.xlu0 %6030, %v6020
  %v6032 = vpop.permute.xlu0 %6031
  %6035 = vset.pattern.permute.xlu0 0
  %6036 = vperm.xlu0 %6035, %v6021
  %v6037 = vpop.permute.xlu0 %6036
  %6040 = vset.pattern.permute.xlu0 0
  %6041 = vperm.xlu0 %6040, %v6022
  %v6042 = vpop.permute.xlu0 %6041
  %v6044 = vmul.f32 %v5957, %v6032
  %v6045 = vmul.f32 %v5962, %v6037
  %v6046 = vmul.f32 %v5967, %v6042
  %6048 = vset.pattern.permute.xlu0 0
  %6049 = vperm.xlu0 %6048, %v6026
  %v6050 = vpop.permute.xlu0 %6049
  %6053 = vset.pattern.permute.xlu0 0
  %6054 = vperm.xlu0 %6053, %v6027
  %v6055 = vpop.permute.xlu0 %6054
  %6058 = vset.pattern.permute.xlu0 0
  %6059 = vperm.xlu0 %6058, %v6028
  %v6060 = vpop.permute.xlu0 %6059
  %v6062 = vadd.f32 %v6044, %v6050
  %v6063 = vadd.f32 %v6045, %v6055
  %v6064 = vadd.f32 %v6046, %v6060
  %v6065 = vadd.f32 %v6062, %v5581
  %v6066 = vadd.f32 %v6063, %v5582
  %v6067 = vadd.f32 %v6064, %v5583
  %v6068 = vmax.f32 %v6065, 0.0
  %v6069 = vmax.f32 %v6066, 0.0
  %v6070 = vmax.f32 %v6067, 0.0
  %s6071 = scalar_lea.vmem %s1, 768
  %v6072 = vld [vmem:[%s6071] sm:$0xff]
  %v6073 = vld [vmem:[%s6071 + $0x8] sm:$0xff]
  %v6074 = vld [vmem:[%s6071 + $0x10] sm:$0xff]
  %v6075 = vld [vmem:[%s6071 + $0x18] sm:$0x7f]
  %v6079 = vrot.slane %v6068, 7
  %v6080 = vrot.slane %v6069, 7
  %v6081 = vsel %vm231, %v6079, %v6080
  %v6082 = vrot.slane %v6070, 7
  %v6083 = vsel %vm231, %v6080, %v6082
  %v6087 = vsel %vm231, 0.0, %v6079
  %v6088 = vrot.slane %v6068, 1
  %v6089 = vrot.slane %v6069, 1
  %v6090 = vsel %vm241, %v6088, %v6089
  %v6091 = vrot.slane %v6070, 1
  %v6092 = vsel %vm241, %v6089, %v6091
  %v6094 = vsel %vm231, %v6091, 0.0
  %6095 = vrot.lane.b32.xlu0 %v6068, 10
  %v6096 = vpop.permute.xlu0 %6095
  %6097 = vrot.lane.b32.xlu0 %v6069, 10
  %v6098 = vpop.permute.xlu0 %6097
  %6099 = vrot.lane.b32.xlu0 %v6070, 10
  %v6100 = vpop.permute.xlu0 %6099
  %6105 = vrot.lane.b32.xlu0 %v6090, 20
  %v6106 = vpop.permute.xlu0 %6105
  %6107 = vrot.lane.b32.xlu0 %v6092, 20
  %v6108 = vpop.permute.xlu0 %6107
  %6109 = vrot.lane.b32.xlu0 %v6094, 20
  %v6110 = vpop.permute.xlu0 %6109
  %v6114 = vsel %vm23, %v6087, %v6096
  %v6115 = vsel %vm23, %v6081, %v6098
  %v6116 = vsel %vm23, %v6083, %v6100
  %v6117 = vsel %vm271, %v6114, %v6106
  %v6118 = vsel %vm271, %v6115, %v6108
  %v6119 = vsel %vm271, %v6116, %v6110
  %v6120 = vsel %vm275, %v6117, 1.0
  %v6121 = vsel %vm275, %v6118, 1.0
  %v6122 = vsel %vm275, %v6119, 1.0
  %v6124 = vsel %vm279, %v6120, 0
  %v6127 = vsel %vm279, %v6121, 0
  %v6130 = vsel %vm279, %v6122, 0
  %v6133 = vsel %vm241, %v6075, 0
  %6135 = vmatprep.subr.mxu0 0.0
  %6136 = vmatpush1.msra.mxu0 0.0
  %6137 = vmatprep.subr.mxu0 0.0
  %6138 = vmatpush1.msra.mxu0 0.0
  %6139 = vmatprep.subr.mxu0 0.0
  %6140 = vmatpush1.msra.mxu0 0.0
  %6141 = vmatprep.subr.mxu0 0.0
  %6142 = vmatpush1.msra.mxu0 0.0
  %6143 = vmatprep.subr.mxu0 0.0
  %6144 = vmatpush1.msra.mxu0 0.0
  %6145 = vmatprep.subr.mxu0 0.0
  %6146 = vmatpush1.msra.mxu0 0.0
  %6147 = vmatprep.subr.mxu0 0.0
  %6148 = vmatpush1.msra.mxu0 0.0
  %6149 = vmatprep.subr.mxu0 0.0
  %6150 = vmatpush1.msra.mxu0 0.0
  %6151 = vmatprep.subr.mxu0 0.0
  %6152 = vmatpush1.msra.mxu0 0.0
  %6153 = vmatprep.subr.mxu0 0.0
  %6154 = vmatpush1.msra.mxu0 0.0
  %6155 = vmatprep.subr.mxu0 0.0
  %6156 = vmatpush1.msra.mxu0 0.0
  %6157 = vmatprep.subr.mxu0 0.0
  %6158 = vmatpush1.msra.mxu0 0.0
  %6159 = vmatprep.subr.mxu0 0.0
  %6160 = vmatpush1.msra.mxu0 %v6133
  %6161 = vmatprep.subr.mxu0 0.0
  %6162 = vmatpush1.msra.mxu0 %v6074
  %6163 = vmatprep.subr.mxu0 0.0
  %6164 = vmatpush1.msra.mxu0 %v6073
  %6165 = vmatprep.subr.mxu0 0.0
  %6166 = vmatpush1.msra.mxu0 %v6072
  %6167 = vmatprep.subr.mxu0 0.0
  %6168 = vmatpush2.msra.mxu0 0.0
  %6169 = vmatprep.subr.mxu0 0.0
  %6170 = vmatpush2.msra.mxu0 0.0
  %6171 = vmatprep.subr.mxu0 0.0
  %6172 = vmatpush2.msra.mxu0 0.0
  %6173 = vmatprep.subr.mxu0 0.0
  %6174 = vmatpush2.msra.mxu0 0.0
  %6175 = vmatprep.subr.mxu0 0.0
  %6176 = vmatpush2.msra.mxu0 0.0
  %6177 = vmatprep.subr.mxu0 0.0
  %6178 = vmatpush2.msra.mxu0 0.0
  %6179 = vmatprep.subr.mxu0 0.0
  %6180 = vmatpush2.msra.mxu0 0.0
  %6181 = vmatprep.subr.mxu0 0.0
  %6182 = vmatpush2.msra.mxu0 0.0
  %6183 = vmatprep.subr.mxu0 0.0
  %6184 = vmatpush2.msra.mxu0 0.0
  %6185 = vmatprep.subr.mxu0 0.0
  %6186 = vmatpush2.msra.mxu0 0.0
  %6187 = vmatprep.subr.mxu0 0.0
  %6188 = vmatpush2.msra.mxu0 0.0
  %6189 = vmatprep.subr.mxu0 0.0
  %6190 = vmatpush2.msra.mxu0 0.0
  %6191 = vmatprep.subr.mxu0 0.0
  %6192 = vmatpush2.msra.mxu0 0.0
  %6193 = vmatprep.subr.mxu0 0.0
  %6194 = vmatpush2.msra.mxu0 0.0
  %6195 = vmatprep.subr.mxu0 0.0
  %6196 = vmatpush2.msra.mxu0 0.0
  %6197 = vmatprep.subr.mxu0 0.0
  %6198 = vmatpush2.msra.mxu0 0.0
  %6199 = vmatprep.mubr.f32.mxu0 0.0
  %6200 = vmatmul.mubr.f32.gmra.mxu0 %v6124
  %v6201 = vpop.f32.mrf.mxu0
  %v6202 = vadd.f32 0.0, %v6201
  %v6203 = vpop.f32.mrf.mxu0
  %6204 = vmatprep.mubr.f32.mxu0 0.0
  %6205 = vmatmul.mubr.f32.gmra.mxu0 %v6127
  %v6206 = vpop.f32.mrf.mxu0
  %v6207 = vadd.f32 0.0, %v6206
  %v6208 = vpop.f32.mrf.mxu0
  %6209 = vmatprep.mubr.f32.mxu0 0.0
  %6210 = vmatmul.mubr.f32.gmra.mxu0 %v6130
  %v6211 = vpop.f32.mrf.mxu0
  %v6212 = vadd.f32 0.0, %v6211
  %v6213 = vpop.f32.mrf.mxu0
  %6214 = vdwg.mxu0
  %s6215 = scalar_lea.vmem %s2, 1152
  %v6216 = vld [vmem:[%s6215] sm:$0xff]
  %v6217 = vld [vmem:[%s6215 + $0x8] sm:$0xff]
  %v6218 = vld [vmem:[%s6215 + $0x10] sm:$0x3]
  %s6219 = scalar_lea.vmem %s2, 1176
  %v6220 = vld [vmem:[%s6219] sm:$0xff]
  %v6221 = vld [vmem:[%s6219 + $0x8] sm:$0xff]
  %v6222 = vld [vmem:[%s6219 + $0x10] sm:$0x3]
  %v6223 = vsel %vm23, %v6202, 0.0
  %6224 = vadd.xlane.f32.xlu0 %v6223
  %v6225 = vpop.xlane.xlu0 %6224
  %v6226 = vsel %vm23, %v6207, 0.0
  %6227 = vadd.xlane.f32.xlu0 %v6226
  %v6228 = vpop.xlane.xlu0 %6227
  %v6229 = vsel %vm127, %v6212, 0.0
  %6230 = vadd.xlane.f32.xlu0 %v6229
  %v6231 = vpop.xlane.xlu0 %6230
  %v6232 = vmul.f32 %v6202, %v6202
  %v6233 = vmul.f32 %v6207, %v6207
  %v6234 = vmul.f32 %v6212, %v6212
  %v6235 = vsel %vm23, %v6232, 0.0
  %6236 = vadd.xlane.f32.xlu0 %v6235
  %v6237 = vpop.xlane.xlu0 %6236
  %v6238 = vsel %vm23, %v6233, 0.0
  %6239 = vadd.xlane.f32.xlu0 %v6238
  %v6240 = vpop.xlane.xlu0 %6239
  %v6241 = vsel %vm127, %v6234, 0.0
  %6242 = vadd.xlane.f32.xlu0 %v6241
  %v6243 = vpop.xlane.xlu0 %6242
  %v6244 = vmul.f32 %v6225, 0.1
  %v6245 = vmul.f32 %v6228, 0.1
  %v6246 = vmul.f32 %v6231, 0.1
  %v6247 = vmul.f32 %v6237, 0.1
  %v6248 = vmul.f32 %v6240, 0.1
  %v6249 = vmul.f32 %v6243, 0.1
  %v6250 = vmul.f32 %v6244, %v6244
  %v6251 = vmul.f32 %v6245, %v6245
  %v6252 = vmul.f32 %v6246, %v6246
  %v6253 = vsub.f32 %v6247, %v6250
  %v6254 = vsub.f32 %v6248, %v6251
  %v6255 = vsub.f32 %v6249, %v6252
  %v6256 = vmax.f32 %v6253, 0.0
  %v6257 = vmax.f32 %v6254, 0.0
  %v6258 = vmax.f32 %v6255, 0.0
  %v6259 = vadd.f32 %v6256, 1e-05
  %v6260 = vadd.f32 %v6257, 1e-05
  %v6261 = vadd.f32 %v6258, 1e-05
  %v6262 = vrsqrt.pop %v6259
  %v6263 = vrsqrt.pop %v6260
  %v6264 = vrsqrt.pop %v6261
  %v6265 = vmul.f32 %v6216, %v6262
  %v6266 = vmul.f32 %v6217, %v6263
  %v6267 = vmul.f32 %v6218, %v6264
  %v6268 = vmul.f32 %v6244, %v6265
  %v6269 = vmul.f32 %v6245, %v6266
  %v6270 = vmul.f32 %v6246, %v6267
  %v6271 = vsub.f32 %v6220, %v6268
  %v6272 = vsub.f32 %v6221, %v6269
  %v6273 = vsub.f32 %v6222, %v6270
  %6275 = vset.pattern.permute.xlu0 0
  %6276 = vperm.xlu0 %6275, %v6265
  %v6277 = vpop.permute.xlu0 %6276
  %6280 = vset.pattern.permute.xlu0 0
  %6281 = vperm.xlu0 %6280, %v6266
  %v6282 = vpop.permute.xlu0 %6281
  %6285 = vset.pattern.permute.xlu0 0
  %6286 = vperm.xlu0 %6285, %v6267
  %v6287 = vpop.permute.xlu0 %6286
  %v6289 = vmul.f32 %v6202, %v6277
  %v6290 = vmul.f32 %v6207, %v6282
  %v6291 = vmul.f32 %v6212, %v6287
  %6293 = vset.pattern.permute.xlu0 0
  %6294 = vperm.xlu0 %6293, %v6271
  %v6295 = vpop.permute.xlu0 %6294
  %6298 = vset.pattern.permute.xlu0 0
  %6299 = vperm.xlu0 %6298, %v6272
  %v6300 = vpop.permute.xlu0 %6299
  %6303 = vset.pattern.permute.xlu0 0
  %6304 = vperm.xlu0 %6303, %v6273
  %v6305 = vpop.permute.xlu0 %6304
  %v6307 = vadd.f32 %v6289, %v6295
  %v6308 = vadd.f32 %v6290, %v6300
  %v6309 = vadd.f32 %v6291, %v6305
  %v6310 = vmax.f32 %v6307, 0.0
  %v6311 = vmax.f32 %v6308, 0.0
  %v6312 = vmax.f32 %v6309, 0.0
  %s6313 = scalar_lea.vmem %s1, 800
  %v6314 = vld [vmem:[%s6313] sm:$0xff]
  %v6315 = vld [vmem:[%s6313 + $0x8] sm:$0xff]
  %v6316 = vld [vmem:[%s6313 + $0x10] sm:$0xff]
  %v6317 = vld [vmem:[%s6313 + $0x18] sm:$0x7f]
  %v6321 = vrot.slane %v6310, 7
  %v6322 = vrot.slane %v6311, 7
  %v6323 = vsel %vm231, %v6321, %v6322
  %v6324 = vrot.slane %v6312, 7
  %v6325 = vsel %vm231, %v6322, %v6324
  %v6329 = vsel %vm231, 0.0, %v6321
  %v6330 = vrot.slane %v6310, 1
  %v6331 = vrot.slane %v6311, 1
  %v6332 = vsel %vm241, %v6330, %v6331
  %v6333 = vrot.slane %v6312, 1
  %v6334 = vsel %vm241, %v6331, %v6333
  %v6336 = vsel %vm231, %v6333, 0.0
  %6337 = vrot.lane.b32.xlu0 %v6310, 10
  %v6338 = vpop.permute.xlu0 %6337
  %6339 = vrot.lane.b32.xlu0 %v6311, 10
  %v6340 = vpop.permute.xlu0 %6339
  %6341 = vrot.lane.b32.xlu0 %v6312, 10
  %v6342 = vpop.permute.xlu0 %6341
  %6347 = vrot.lane.b32.xlu0 %v6332, 20
  %v6348 = vpop.permute.xlu0 %6347
  %6349 = vrot.lane.b32.xlu0 %v6334, 20
  %v6350 = vpop.permute.xlu0 %6349
  %6351 = vrot.lane.b32.xlu0 %v6336, 20
  %v6352 = vpop.permute.xlu0 %6351
  %v6356 = vsel %vm23, %v6329, %v6338
  %v6357 = vsel %vm23, %v6323, %v6340
  %v6358 = vsel %vm23, %v6325, %v6342
  %v6359 = vsel %vm271, %v6356, %v6348
  %v6360 = vsel %vm271, %v6357, %v6350
  %v6361 = vsel %vm271, %v6358, %v6352
  %v6362 = vsel %vm275, %v6359, 1.0
  %v6363 = vsel %vm275, %v6360, 1.0
  %v6364 = vsel %vm275, %v6361, 1.0
  %v6366 = vsel %vm279, %v6362, 0
  %v6369 = vsel %vm279, %v6363, 0
  %v6372 = vsel %vm279, %v6364, 0
  %v6375 = vsel %vm241, %v6317, 0
  %6377 = vmatprep.subr.mxu0 0.0
  %6378 = vmatpush1.msra.mxu0 0.0
  %6379 = vmatprep.subr.mxu0 0.0
  %6380 = vmatpush1.msra.mxu0 0.0
  %6381 = vmatprep.subr.mxu0 0.0
  %6382 = vmatpush1.msra.mxu0 0.0
  %6383 = vmatprep.subr.mxu0 0.0
  %6384 = vmatpush1.msra.mxu0 0.0
  %6385 = vmatprep.subr.mxu0 0.0
  %6386 = vmatpush1.msra.mxu0 0.0
  %6387 = vmatprep.subr.mxu0 0.0
  %6388 = vmatpush1.msra.mxu0 0.0
  %6389 = vmatprep.subr.mxu0 0.0
  %6390 = vmatpush1.msra.mxu0 0.0
  %6391 = vmatprep.subr.mxu0 0.0
  %6392 = vmatpush1.msra.mxu0 0.0
  %6393 = vmatprep.subr.mxu0 0.0
  %6394 = vmatpush1.msra.mxu0 0.0
  %6395 = vmatprep.subr.mxu0 0.0
  %6396 = vmatpush1.msra.mxu0 0.0
  %6397 = vmatprep.subr.mxu0 0.0
  %6398 = vmatpush1.msra.mxu0 0.0
  %6399 = vmatprep.subr.mxu0 0.0
  %6400 = vmatpush1.msra.mxu0 0.0
  %6401 = vmatprep.subr.mxu0 0.0
  %6402 = vmatpush1.msra.mxu0 %v6375
  %6403 = vmatprep.subr.mxu0 0.0
  %6404 = vmatpush1.msra.mxu0 %v6316
  %6405 = vmatprep.subr.mxu0 0.0
  %6406 = vmatpush1.msra.mxu0 %v6315
  %6407 = vmatprep.subr.mxu0 0.0
  %6408 = vmatpush1.msra.mxu0 %v6314
  %6409 = vmatprep.subr.mxu0 0.0
  %6410 = vmatpush2.msra.mxu0 0.0
  %6411 = vmatprep.subr.mxu0 0.0
  %6412 = vmatpush2.msra.mxu0 0.0
  %6413 = vmatprep.subr.mxu0 0.0
  %6414 = vmatpush2.msra.mxu0 0.0
  %6415 = vmatprep.subr.mxu0 0.0
  %6416 = vmatpush2.msra.mxu0 0.0
  %6417 = vmatprep.subr.mxu0 0.0
  %6418 = vmatpush2.msra.mxu0 0.0
  %6419 = vmatprep.subr.mxu0 0.0
  %6420 = vmatpush2.msra.mxu0 0.0
  %6421 = vmatprep.subr.mxu0 0.0
  %6422 = vmatpush2.msra.mxu0 0.0
  %6423 = vmatprep.subr.mxu0 0.0
  %6424 = vmatpush2.msra.mxu0 0.0
  %6425 = vmatprep.subr.mxu0 0.0
  %6426 = vmatpush2.msra.mxu0 0.0
  %6427 = vmatprep.subr.mxu0 0.0
  %6428 = vmatpush2.msra.mxu0 0.0
  %6429 = vmatprep.subr.mxu0 0.0
  %6430 = vmatpush2.msra.mxu0 0.0
  %6431 = vmatprep.subr.mxu0 0.0
  %6432 = vmatpush2.msra.mxu0 0.0
  %6433 = vmatprep.subr.mxu0 0.0
  %6434 = vmatpush2.msra.mxu0 0.0
  %6435 = vmatprep.subr.mxu0 0.0
  %6436 = vmatpush2.msra.mxu0 0.0
  %6437 = vmatprep.subr.mxu0 0.0
  %6438 = vmatpush2.msra.mxu0 0.0
  %6439 = vmatprep.subr.mxu0 0.0
  %6440 = vmatpush2.msra.mxu0 0.0
  %6441 = vmatprep.mubr.f32.mxu0 0.0
  %6442 = vmatmul.mubr.f32.gmra.mxu0 %v6366
  %v6443 = vpop.f32.mrf.mxu0
  %v6444 = vadd.f32 0.0, %v6443
  %v6445 = vpop.f32.mrf.mxu0
  %6446 = vmatprep.mubr.f32.mxu0 0.0
  %6447 = vmatmul.mubr.f32.gmra.mxu0 %v6369
  %v6448 = vpop.f32.mrf.mxu0
  %v6449 = vadd.f32 0.0, %v6448
  %v6450 = vpop.f32.mrf.mxu0
  %6451 = vmatprep.mubr.f32.mxu0 0.0
  %6452 = vmatmul.mubr.f32.gmra.mxu0 %v6372
  %v6453 = vpop.f32.mrf.mxu0
  %v6454 = vadd.f32 0.0, %v6453
  %v6455 = vpop.f32.mrf.mxu0
  %6456 = vdwg.mxu0
  %s6457 = scalar_lea.vmem %s2, 1200
  %v6458 = vld [vmem:[%s6457] sm:$0xff]
  %v6459 = vld [vmem:[%s6457 + $0x8] sm:$0xff]
  %v6460 = vld [vmem:[%s6457 + $0x10] sm:$0x3]
  %s6461 = scalar_lea.vmem %s2, 1224
  %v6462 = vld [vmem:[%s6461] sm:$0xff]
  %v6463 = vld [vmem:[%s6461 + $0x8] sm:$0xff]
  %v6464 = vld [vmem:[%s6461 + $0x10] sm:$0x3]
  %v6465 = vsel %vm23, %v6444, 0.0
  %6466 = vadd.xlane.f32.xlu0 %v6465
  %v6467 = vpop.xlane.xlu0 %6466
  %v6468 = vsel %vm23, %v6449, 0.0
  %6469 = vadd.xlane.f32.xlu0 %v6468
  %v6470 = vpop.xlane.xlu0 %6469
  %v6471 = vsel %vm127, %v6454, 0.0
  %6472 = vadd.xlane.f32.xlu0 %v6471
  %v6473 = vpop.xlane.xlu0 %6472
  %v6474 = vmul.f32 %v6444, %v6444
  %v6475 = vmul.f32 %v6449, %v6449
  %v6476 = vmul.f32 %v6454, %v6454
  %v6477 = vsel %vm23, %v6474, 0.0
  %6478 = vadd.xlane.f32.xlu0 %v6477
  %v6479 = vpop.xlane.xlu0 %6478
  %v6480 = vsel %vm23, %v6475, 0.0
  %6481 = vadd.xlane.f32.xlu0 %v6480
  %v6482 = vpop.xlane.xlu0 %6481
  %v6483 = vsel %vm127, %v6476, 0.0
  %6484 = vadd.xlane.f32.xlu0 %v6483
  %v6485 = vpop.xlane.xlu0 %6484
  %v6486 = vmul.f32 %v6467, 0.1
  %v6487 = vmul.f32 %v6470, 0.1
  %v6488 = vmul.f32 %v6473, 0.1
  %v6489 = vmul.f32 %v6479, 0.1
  %v6490 = vmul.f32 %v6482, 0.1
  %v6491 = vmul.f32 %v6485, 0.1
  %v6492 = vmul.f32 %v6486, %v6486
  %v6493 = vmul.f32 %v6487, %v6487
  %v6494 = vmul.f32 %v6488, %v6488
  %v6495 = vsub.f32 %v6489, %v6492
  %v6496 = vsub.f32 %v6490, %v6493
  %v6497 = vsub.f32 %v6491, %v6494
  %v6498 = vmax.f32 %v6495, 0.0
  %v6499 = vmax.f32 %v6496, 0.0
  %v6500 = vmax.f32 %v6497, 0.0
  %v6501 = vadd.f32 %v6498, 1e-05
  %v6502 = vadd.f32 %v6499, 1e-05
  %v6503 = vadd.f32 %v6500, 1e-05
  %v6504 = vrsqrt.pop %v6501
  %v6505 = vrsqrt.pop %v6502
  %v6506 = vrsqrt.pop %v6503
  %v6507 = vmul.f32 %v6458, %v6504
  %v6508 = vmul.f32 %v6459, %v6505
  %v6509 = vmul.f32 %v6460, %v6506
  %v6510 = vmul.f32 %v6486, %v6507
  %v6511 = vmul.f32 %v6487, %v6508
  %v6512 = vmul.f32 %v6488, %v6509
  %v6513 = vsub.f32 %v6462, %v6510
  %v6514 = vsub.f32 %v6463, %v6511
  %v6515 = vsub.f32 %v6464, %v6512
  %6517 = vset.pattern.permute.xlu0 0
  %6518 = vperm.xlu0 %6517, %v6507
  %v6519 = vpop.permute.xlu0 %6518
  %6522 = vset.pattern.permute.xlu0 0
  %6523 = vperm.xlu0 %6522, %v6508
  %v6524 = vpop.permute.xlu0 %6523
  %6527 = vset.pattern.permute.xlu0 0
  %6528 = vperm.xlu0 %6527, %v6509
  %v6529 = vpop.permute.xlu0 %6528
  %v6531 = vmul.f32 %v6444, %v6519
  %v6532 = vmul.f32 %v6449, %v6524
  %v6533 = vmul.f32 %v6454, %v6529
  %6535 = vset.pattern.permute.xlu0 0
  %6536 = vperm.xlu0 %6535, %v6513
  %v6537 = vpop.permute.xlu0 %6536
  %6540 = vset.pattern.permute.xlu0 0
  %6541 = vperm.xlu0 %6540, %v6514
  %v6542 = vpop.permute.xlu0 %6541
  %6545 = vset.pattern.permute.xlu0 0
  %6546 = vperm.xlu0 %6545, %v6515
  %v6547 = vpop.permute.xlu0 %6546
  %v6549 = vadd.f32 %v6531, %v6537
  %v6550 = vadd.f32 %v6532, %v6542
  %v6551 = vadd.f32 %v6533, %v6547
  %v6552 = vadd.f32 %v6549, %v6068
  %v6553 = vadd.f32 %v6550, %v6069
  %v6554 = vadd.f32 %v6551, %v6070
  %v6555 = vmax.f32 %v6552, 0.0
  %v6556 = vmax.f32 %v6553, 0.0
  %v6557 = vmax.f32 %v6554, 0.0
  %s6558 = scalar_lea.vmem %s1, 832
  %v6559 = vld [vmem:[%s6558] sm:$0xff]
  %v6560 = vld [vmem:[%s6558 + $0x8] sm:$0xff]
  %v6561 = vld [vmem:[%s6558 + $0x10] sm:$0xff]
  %v6562 = vld [vmem:[%s6558 + $0x18] sm:$0x7f]
  %v6566 = vrot.slane %v6555, 7
  %v6567 = vrot.slane %v6556, 7
  %v6568 = vsel %vm231, %v6566, %v6567
  %v6569 = vrot.slane %v6557, 7
  %v6570 = vsel %vm231, %v6567, %v6569
  %v6574 = vsel %vm231, 0.0, %v6566
  %v6575 = vrot.slane %v6555, 1
  %v6576 = vrot.slane %v6556, 1
  %v6577 = vsel %vm241, %v6575, %v6576
  %v6578 = vrot.slane %v6557, 1
  %v6579 = vsel %vm241, %v6576, %v6578
  %v6581 = vsel %vm231, %v6578, 0.0
  %6582 = vrot.lane.b32.xlu0 %v6555, 10
  %v6583 = vpop.permute.xlu0 %6582
  %6584 = vrot.lane.b32.xlu0 %v6556, 10
  %v6585 = vpop.permute.xlu0 %6584
  %6586 = vrot.lane.b32.xlu0 %v6557, 10
  %v6587 = vpop.permute.xlu0 %6586
  %6592 = vrot.lane.b32.xlu0 %v6577, 20
  %v6593 = vpop.permute.xlu0 %6592
  %6594 = vrot.lane.b32.xlu0 %v6579, 20
  %v6595 = vpop.permute.xlu0 %6594
  %6596 = vrot.lane.b32.xlu0 %v6581, 20
  %v6597 = vpop.permute.xlu0 %6596
  %v6601 = vsel %vm23, %v6574, %v6583
  %v6602 = vsel %vm23, %v6568, %v6585
  %v6603 = vsel %vm23, %v6570, %v6587
  %v6604 = vsel %vm271, %v6601, %v6593
  %v6605 = vsel %vm271, %v6602, %v6595
  %v6606 = vsel %vm271, %v6603, %v6597
  %v6607 = vsel %vm275, %v6604, 1.0
  %v6608 = vsel %vm275, %v6605, 1.0
  %v6609 = vsel %vm275, %v6606, 1.0
  %v6611 = vsel %vm279, %v6607, 0
  %v6614 = vsel %vm279, %v6608, 0
  %v6617 = vsel %vm279, %v6609, 0
  %v6620 = vsel %vm241, %v6562, 0
  %6622 = vmatprep.subr.mxu0 0.0
  %6623 = vmatpush1.msra.mxu0 0.0
  %6624 = vmatprep.subr.mxu0 0.0
  %6625 = vmatpush1.msra.mxu0 0.0
  %6626 = vmatprep.subr.mxu0 0.0
  %6627 = vmatpush1.msra.mxu0 0.0
  %6628 = vmatprep.subr.mxu0 0.0
  %6629 = vmatpush1.msra.mxu0 0.0
  %6630 = vmatprep.subr.mxu0 0.0
  %6631 = vmatpush1.msra.mxu0 0.0
  %6632 = vmatprep.subr.mxu0 0.0
  %6633 = vmatpush1.msra.mxu0 0.0
  %6634 = vmatprep.subr.mxu0 0.0
  %6635 = vmatpush1.msra.mxu0 0.0
  %6636 = vmatprep.subr.mxu0 0.0
  %6637 = vmatpush1.msra.mxu0 0.0
  %6638 = vmatprep.subr.mxu0 0.0
  %6639 = vmatpush1.msra.mxu0 0.0
  %6640 = vmatprep.subr.mxu0 0.0
  %6641 = vmatpush1.msra.mxu0 0.0
  %6642 = vmatprep.subr.mxu0 0.0
  %6643 = vmatpush1.msra.mxu0 0.0
  %6644 = vmatprep.subr.mxu0 0.0
  %6645 = vmatpush1.msra.mxu0 0.0
  %6646 = vmatprep.subr.mxu0 0.0
  %6647 = vmatpush1.msra.mxu0 %v6620
  %6648 = vmatprep.subr.mxu0 0.0
  %6649 = vmatpush1.msra.mxu0 %v6561
  %6650 = vmatprep.subr.mxu0 0.0
  %6651 = vmatpush1.msra.mxu0 %v6560
  %6652 = vmatprep.subr.mxu0 0.0
  %6653 = vmatpush1.msra.mxu0 %v6559
  %6654 = vmatprep.subr.mxu0 0.0
  %6655 = vmatpush2.msra.mxu0 0.0
  %6656 = vmatprep.subr.mxu0 0.0
  %6657 = vmatpush2.msra.mxu0 0.0
  %6658 = vmatprep.subr.mxu0 0.0
  %6659 = vmatpush2.msra.mxu0 0.0
  %6660 = vmatprep.subr.mxu0 0.0
  %6661 = vmatpush2.msra.mxu0 0.0
  %6662 = vmatprep.subr.mxu0 0.0
  %6663 = vmatpush2.msra.mxu0 0.0
  %6664 = vmatprep.subr.mxu0 0.0
  %6665 = vmatpush2.msra.mxu0 0.0
  %6666 = vmatprep.subr.mxu0 0.0
  %6667 = vmatpush2.msra.mxu0 0.0
  %6668 = vmatprep.subr.mxu0 0.0
  %6669 = vmatpush2.msra.mxu0 0.0
  %6670 = vmatprep.subr.mxu0 0.0
  %6671 = vmatpush2.msra.mxu0 0.0
  %6672 = vmatprep.subr.mxu0 0.0
  %6673 = vmatpush2.msra.mxu0 0.0
  %6674 = vmatprep.subr.mxu0 0.0
  %6675 = vmatpush2.msra.mxu0 0.0
  %6676 = vmatprep.subr.mxu0 0.0
  %6677 = vmatpush2.msra.mxu0 0.0
  %6678 = vmatprep.subr.mxu0 0.0
  %6679 = vmatpush2.msra.mxu0 0.0
  %6680 = vmatprep.subr.mxu0 0.0
  %6681 = vmatpush2.msra.mxu0 0.0
  %6682 = vmatprep.subr.mxu0 0.0
  %6683 = vmatpush2.msra.mxu0 0.0
  %6684 = vmatprep.subr.mxu0 0.0
  %6685 = vmatpush2.msra.mxu0 0.0
  %6686 = vmatprep.mubr.f32.mxu0 0.0
  %6687 = vmatmul.mubr.f32.gmra.mxu0 %v6611
  %v6688 = vpop.f32.mrf.mxu0
  %v6689 = vadd.f32 0.0, %v6688
  %v6690 = vpop.f32.mrf.mxu0
  %6691 = vmatprep.mubr.f32.mxu0 0.0
  %6692 = vmatmul.mubr.f32.gmra.mxu0 %v6614
  %v6693 = vpop.f32.mrf.mxu0
  %v6694 = vadd.f32 0.0, %v6693
  %v6695 = vpop.f32.mrf.mxu0
  %6696 = vmatprep.mubr.f32.mxu0 0.0
  %6697 = vmatmul.mubr.f32.gmra.mxu0 %v6617
  %v6698 = vpop.f32.mrf.mxu0
  %v6699 = vadd.f32 0.0, %v6698
  %v6700 = vpop.f32.mrf.mxu0
  %6701 = vdwg.mxu0
  %s6702 = scalar_lea.vmem %s2, 1248
  %v6703 = vld [vmem:[%s6702] sm:$0xff]
  %v6704 = vld [vmem:[%s6702 + $0x8] sm:$0xff]
  %v6705 = vld [vmem:[%s6702 + $0x10] sm:$0x3]
  %s6706 = scalar_lea.vmem %s2, 1272
  %v6707 = vld [vmem:[%s6706] sm:$0xff]
  %v6708 = vld [vmem:[%s6706 + $0x8] sm:$0xff]
  %v6709 = vld [vmem:[%s6706 + $0x10] sm:$0x3]
  %v6710 = vsel %vm23, %v6689, 0.0
  %6711 = vadd.xlane.f32.xlu0 %v6710
  %v6712 = vpop.xlane.xlu0 %6711
  %v6713 = vsel %vm23, %v6694, 0.0
  %6714 = vadd.xlane.f32.xlu0 %v6713
  %v6715 = vpop.xlane.xlu0 %6714
  %v6716 = vsel %vm127, %v6699, 0.0
  %6717 = vadd.xlane.f32.xlu0 %v6716
  %v6718 = vpop.xlane.xlu0 %6717
  %v6719 = vmul.f32 %v6689, %v6689
  %v6720 = vmul.f32 %v6694, %v6694
  %v6721 = vmul.f32 %v6699, %v6699
  %v6722 = vsel %vm23, %v6719, 0.0
  %6723 = vadd.xlane.f32.xlu0 %v6722
  %v6724 = vpop.xlane.xlu0 %6723
  %v6725 = vsel %vm23, %v6720, 0.0
  %6726 = vadd.xlane.f32.xlu0 %v6725
  %v6727 = vpop.xlane.xlu0 %6726
  %v6728 = vsel %vm127, %v6721, 0.0
  %6729 = vadd.xlane.f32.xlu0 %v6728
  %v6730 = vpop.xlane.xlu0 %6729
  %v6731 = vmul.f32 %v6712, 0.1
  %v6732 = vmul.f32 %v6715, 0.1
  %v6733 = vmul.f32 %v6718, 0.1
  %v6734 = vmul.f32 %v6724, 0.1
  %v6735 = vmul.f32 %v6727, 0.1
  %v6736 = vmul.f32 %v6730, 0.1
  %v6737 = vmul.f32 %v6731, %v6731
  %v6738 = vmul.f32 %v6732, %v6732
  %v6739 = vmul.f32 %v6733, %v6733
  %v6740 = vsub.f32 %v6734, %v6737
  %v6741 = vsub.f32 %v6735, %v6738
  %v6742 = vsub.f32 %v6736, %v6739
  %v6743 = vmax.f32 %v6740, 0.0
  %v6744 = vmax.f32 %v6741, 0.0
  %v6745 = vmax.f32 %v6742, 0.0
  %v6746 = vadd.f32 %v6743, 1e-05
  %v6747 = vadd.f32 %v6744, 1e-05
  %v6748 = vadd.f32 %v6745, 1e-05
  %v6749 = vrsqrt.pop %v6746
  %v6750 = vrsqrt.pop %v6747
  %v6751 = vrsqrt.pop %v6748
  %v6752 = vmul.f32 %v6703, %v6749
  %v6753 = vmul.f32 %v6704, %v6750
  %v6754 = vmul.f32 %v6705, %v6751
  %v6755 = vmul.f32 %v6731, %v6752
  %v6756 = vmul.f32 %v6732, %v6753
  %v6757 = vmul.f32 %v6733, %v6754
  %v6758 = vsub.f32 %v6707, %v6755
  %v6759 = vsub.f32 %v6708, %v6756
  %v6760 = vsub.f32 %v6709, %v6757
  %6762 = vset.pattern.permute.xlu0 0
  %6763 = vperm.xlu0 %6762, %v6752
  %v6764 = vpop.permute.xlu0 %6763
  %6767 = vset.pattern.permute.xlu0 0
  %6768 = vperm.xlu0 %6767, %v6753
  %v6769 = vpop.permute.xlu0 %6768
  %6772 = vset.pattern.permute.xlu0 0
  %6773 = vperm.xlu0 %6772, %v6754
  %v6774 = vpop.permute.xlu0 %6773
  %v6776 = vmul.f32 %v6689, %v6764
  %v6777 = vmul.f32 %v6694, %v6769
  %v6778 = vmul.f32 %v6699, %v6774
  %6780 = vset.pattern.permute.xlu0 0
  %6781 = vperm.xlu0 %6780, %v6758
  %v6782 = vpop.permute.xlu0 %6781
  %6785 = vset.pattern.permute.xlu0 0
  %6786 = vperm.xlu0 %6785, %v6759
  %v6787 = vpop.permute.xlu0 %6786
  %6790 = vset.pattern.permute.xlu0 0
  %6791 = vperm.xlu0 %6790, %v6760
  %v6792 = vpop.permute.xlu0 %6791
  %v6794 = vadd.f32 %v6776, %v6782
  %v6795 = vadd.f32 %v6777, %v6787
  %v6796 = vadd.f32 %v6778, %v6792
  %v6797 = vmax.f32 %v6794, 0.0
  %v6798 = vmax.f32 %v6795, 0.0
  %v6799 = vmax.f32 %v6796, 0.0
  %s6800 = scalar_lea.vmem %s1, 864
  %v6801 = vld [vmem:[%s6800] sm:$0xff]
  %v6802 = vld [vmem:[%s6800 + $0x8] sm:$0xff]
  %v6803 = vld [vmem:[%s6800 + $0x10] sm:$0xff]
  %v6804 = vld [vmem:[%s6800 + $0x18] sm:$0x7f]
  %v6808 = vrot.slane %v6797, 7
  %v6809 = vrot.slane %v6798, 7
  %v6810 = vsel %vm231, %v6808, %v6809
  %v6811 = vrot.slane %v6799, 7
  %v6812 = vsel %vm231, %v6809, %v6811
  %v6816 = vsel %vm231, 0.0, %v6808
  %v6817 = vrot.slane %v6797, 1
  %v6818 = vrot.slane %v6798, 1
  %v6819 = vsel %vm241, %v6817, %v6818
  %v6820 = vrot.slane %v6799, 1
  %v6821 = vsel %vm241, %v6818, %v6820
  %v6823 = vsel %vm231, %v6820, 0.0
  %6824 = vrot.lane.b32.xlu0 %v6797, 10
  %v6825 = vpop.permute.xlu0 %6824
  %6826 = vrot.lane.b32.xlu0 %v6798, 10
  %v6827 = vpop.permute.xlu0 %6826
  %6828 = vrot.lane.b32.xlu0 %v6799, 10
  %v6829 = vpop.permute.xlu0 %6828
  %6834 = vrot.lane.b32.xlu0 %v6819, 20
  %v6835 = vpop.permute.xlu0 %6834
  %6836 = vrot.lane.b32.xlu0 %v6821, 20
  %v6837 = vpop.permute.xlu0 %6836
  %6838 = vrot.lane.b32.xlu0 %v6823, 20
  %v6839 = vpop.permute.xlu0 %6838
  %v6843 = vsel %vm23, %v6816, %v6825
  %v6844 = vsel %vm23, %v6810, %v6827
  %v6845 = vsel %vm23, %v6812, %v6829
  %v6846 = vsel %vm271, %v6843, %v6835
  %v6847 = vsel %vm271, %v6844, %v6837
  %v6848 = vsel %vm271, %v6845, %v6839
  %v6849 = vsel %vm275, %v6846, 1.0
  %v6850 = vsel %vm275, %v6847, 1.0
  %v6851 = vsel %vm275, %v6848, 1.0
  %v6853 = vsel %vm279, %v6849, 0
  %v6856 = vsel %vm279, %v6850, 0
  %v6859 = vsel %vm279, %v6851, 0
  %v6862 = vsel %vm241, %v6804, 0
  %6864 = vmatprep.subr.mxu0 0.0
  %6865 = vmatpush1.msra.mxu0 0.0
  %6866 = vmatprep.subr.mxu0 0.0
  %6867 = vmatpush1.msra.mxu0 0.0
  %6868 = vmatprep.subr.mxu0 0.0
  %6869 = vmatpush1.msra.mxu0 0.0
  %6870 = vmatprep.subr.mxu0 0.0
  %6871 = vmatpush1.msra.mxu0 0.0
  %6872 = vmatprep.subr.mxu0 0.0
  %6873 = vmatpush1.msra.mxu0 0.0
  %6874 = vmatprep.subr.mxu0 0.0
  %6875 = vmatpush1.msra.mxu0 0.0
  %6876 = vmatprep.subr.mxu0 0.0
  %6877 = vmatpush1.msra.mxu0 0.0
  %6878 = vmatprep.subr.mxu0 0.0
  %6879 = vmatpush1.msra.mxu0 0.0
  %6880 = vmatprep.subr.mxu0 0.0
  %6881 = vmatpush1.msra.mxu0 0.0
  %6882 = vmatprep.subr.mxu0 0.0
  %6883 = vmatpush1.msra.mxu0 0.0
  %6884 = vmatprep.subr.mxu0 0.0
  %6885 = vmatpush1.msra.mxu0 0.0
  %6886 = vmatprep.subr.mxu0 0.0
  %6887 = vmatpush1.msra.mxu0 0.0
  %6888 = vmatprep.subr.mxu0 0.0
  %6889 = vmatpush1.msra.mxu0 %v6862
  %6890 = vmatprep.subr.mxu0 0.0
  %6891 = vmatpush1.msra.mxu0 %v6803
  %6892 = vmatprep.subr.mxu0 0.0
  %6893 = vmatpush1.msra.mxu0 %v6802
  %6894 = vmatprep.subr.mxu0 0.0
  %6895 = vmatpush1.msra.mxu0 %v6801
  %6896 = vmatprep.subr.mxu0 0.0
  %6897 = vmatpush2.msra.mxu0 0.0
  %6898 = vmatprep.subr.mxu0 0.0
  %6899 = vmatpush2.msra.mxu0 0.0
  %6900 = vmatprep.subr.mxu0 0.0
  %6901 = vmatpush2.msra.mxu0 0.0
  %6902 = vmatprep.subr.mxu0 0.0
  %6903 = vmatpush2.msra.mxu0 0.0
  %6904 = vmatprep.subr.mxu0 0.0
  %6905 = vmatpush2.msra.mxu0 0.0
  %6906 = vmatprep.subr.mxu0 0.0
  %6907 = vmatpush2.msra.mxu0 0.0
  %6908 = vmatprep.subr.mxu0 0.0
  %6909 = vmatpush2.msra.mxu0 0.0
  %6910 = vmatprep.subr.mxu0 0.0
  %6911 = vmatpush2.msra.mxu0 0.0
  %6912 = vmatprep.subr.mxu0 0.0
  %6913 = vmatpush2.msra.mxu0 0.0
  %6914 = vmatprep.subr.mxu0 0.0
  %6915 = vmatpush2.msra.mxu0 0.0
  %6916 = vmatprep.subr.mxu0 0.0
  %6917 = vmatpush2.msra.mxu0 0.0
  %6918 = vmatprep.subr.mxu0 0.0
  %6919 = vmatpush2.msra.mxu0 0.0
  %6920 = vmatprep.subr.mxu0 0.0
  %6921 = vmatpush2.msra.mxu0 0.0
  %6922 = vmatprep.subr.mxu0 0.0
  %6923 = vmatpush2.msra.mxu0 0.0
  %6924 = vmatprep.subr.mxu0 0.0
  %6925 = vmatpush2.msra.mxu0 0.0
  %6926 = vmatprep.subr.mxu0 0.0
  %6927 = vmatpush2.msra.mxu0 0.0
  %6928 = vmatprep.mubr.f32.mxu0 0.0
  %6929 = vmatmul.mubr.f32.gmra.mxu0 %v6853
  %v6930 = vpop.f32.mrf.mxu0
  %v6931 = vadd.f32 0.0, %v6930
  %v6932 = vpop.f32.mrf.mxu0
  %6933 = vmatprep.mubr.f32.mxu0 0.0
  %6934 = vmatmul.mubr.f32.gmra.mxu0 %v6856
  %v6935 = vpop.f32.mrf.mxu0
  %v6936 = vadd.f32 0.0, %v6935
  %v6937 = vpop.f32.mrf.mxu0
  %6938 = vmatprep.mubr.f32.mxu0 0.0
  %6939 = vmatmul.mubr.f32.gmra.mxu0 %v6859
  %v6940 = vpop.f32.mrf.mxu0
  %v6941 = vadd.f32 0.0, %v6940
  %v6942 = vpop.f32.mrf.mxu0
  %6943 = vdwg.mxu0
  %s6944 = scalar_lea.vmem %s2, 1296
  %v6945 = vld [vmem:[%s6944] sm:$0xff]
  %v6946 = vld [vmem:[%s6944 + $0x8] sm:$0xff]
  %v6947 = vld [vmem:[%s6944 + $0x10] sm:$0x3]
  %s6948 = scalar_lea.vmem %s2, 1320
  %v6949 = vld [vmem:[%s6948] sm:$0xff]
  %v6950 = vld [vmem:[%s6948 + $0x8] sm:$0xff]
  %v6951 = vld [vmem:[%s6948 + $0x10] sm:$0x3]
  %v6952 = vsel %vm23, %v6931, 0.0
  %6953 = vadd.xlane.f32.xlu0 %v6952
  %v6954 = vpop.xlane.xlu0 %6953
  %v6955 = vsel %vm23, %v6936, 0.0
  %6956 = vadd.xlane.f32.xlu0 %v6955
  %v6957 = vpop.xlane.xlu0 %6956
  %v6958 = vsel %vm127, %v6941, 0.0
  %6959 = vadd.xlane.f32.xlu0 %v6958
  %v6960 = vpop.xlane.xlu0 %6959
  %v6961 = vmul.f32 %v6931, %v6931
  %v6962 = vmul.f32 %v6936, %v6936
  %v6963 = vmul.f32 %v6941, %v6941
  %v6964 = vsel %vm23, %v6961, 0.0
  %6965 = vadd.xlane.f32.xlu0 %v6964
  %v6966 = vpop.xlane.xlu0 %6965
  %v6967 = vsel %vm23, %v6962, 0.0
  %6968 = vadd.xlane.f32.xlu0 %v6967
  %v6969 = vpop.xlane.xlu0 %6968
  %v6970 = vsel %vm127, %v6963, 0.0
  %6971 = vadd.xlane.f32.xlu0 %v6970
  %v6972 = vpop.xlane.xlu0 %6971
  %v6973 = vmul.f32 %v6954, 0.1
  %v6974 = vmul.f32 %v6957, 0.1
  %v6975 = vmul.f32 %v6960, 0.1
  %v6976 = vmul.f32 %v6966, 0.1
  %v6977 = vmul.f32 %v6969, 0.1
  %v6978 = vmul.f32 %v6972, 0.1
  %v6979 = vmul.f32 %v6973, %v6973
  %v6980 = vmul.f32 %v6974, %v6974
  %v6981 = vmul.f32 %v6975, %v6975
  %v6982 = vsub.f32 %v6976, %v6979
  %v6983 = vsub.f32 %v6977, %v6980
  %v6984 = vsub.f32 %v6978, %v6981
  %v6985 = vmax.f32 %v6982, 0.0
  %v6986 = vmax.f32 %v6983, 0.0
  %v6987 = vmax.f32 %v6984, 0.0
  %v6988 = vadd.f32 %v6985, 1e-05
  %v6989 = vadd.f32 %v6986, 1e-05
  %v6990 = vadd.f32 %v6987, 1e-05
  %v6991 = vrsqrt.pop %v6988
  %v6992 = vrsqrt.pop %v6989
  %v6993 = vrsqrt.pop %v6990
  %v6994 = vmul.f32 %v6945, %v6991
  %v6995 = vmul.f32 %v6946, %v6992
  %v6996 = vmul.f32 %v6947, %v6993
  %v6997 = vmul.f32 %v6973, %v6994
  %v6998 = vmul.f32 %v6974, %v6995
  %v6999 = vmul.f32 %v6975, %v6996
  %v7000 = vsub.f32 %v6949, %v6997
  %v7001 = vsub.f32 %v6950, %v6998
  %v7002 = vsub.f32 %v6951, %v6999
  %7004 = vset.pattern.permute.xlu0 0
  %7005 = vperm.xlu0 %7004, %v6994
  %v7006 = vpop.permute.xlu0 %7005
  %7009 = vset.pattern.permute.xlu0 0
  %7010 = vperm.xlu0 %7009, %v6995
  %v7011 = vpop.permute.xlu0 %7010
  %7014 = vset.pattern.permute.xlu0 0
  %7015 = vperm.xlu0 %7014, %v6996
  %v7016 = vpop.permute.xlu0 %7015
  %v7018 = vmul.f32 %v6931, %v7006
  %v7019 = vmul.f32 %v6936, %v7011
  %v7020 = vmul.f32 %v6941, %v7016
  %7022 = vset.pattern.permute.xlu0 0
  %7023 = vperm.xlu0 %7022, %v7000
  %v7024 = vpop.permute.xlu0 %7023
  %7027 = vset.pattern.permute.xlu0 0
  %7028 = vperm.xlu0 %7027, %v7001
  %v7029 = vpop.permute.xlu0 %7028
  %7032 = vset.pattern.permute.xlu0 0
  %7033 = vperm.xlu0 %7032, %v7002
  %v7034 = vpop.permute.xlu0 %7033
  %v7036 = vadd.f32 %v7018, %v7024
  %v7037 = vadd.f32 %v7019, %v7029
  %v7038 = vadd.f32 %v7020, %v7034
  %v7039 = vadd.f32 %v7036, %v6555
  %v7040 = vadd.f32 %v7037, %v6556
  %v7041 = vadd.f32 %v7038, %v6557
  %v7042 = vmax.f32 %v7039, 0.0
  %v7043 = vmax.f32 %v7040, 0.0
  %v7044 = vmax.f32 %v7041, 0.0
  %s7045 = scalar_lea.vmem %s1, 896
  %v7046 = vld [vmem:[%s7045] sm:$0xff]
  %v7047 = vld [vmem:[%s7045 + $0x8] sm:$0xff]
  %v7048 = vld [vmem:[%s7045 + $0x10] sm:$0xff]
  %v7049 = vld [vmem:[%s7045 + $0x18] sm:$0x7f]
  %v7053 = vrot.slane %v7042, 7
  %v7054 = vrot.slane %v7043, 7
  %v7055 = vsel %vm231, %v7053, %v7054
  %v7056 = vrot.slane %v7044, 7
  %v7057 = vsel %vm231, %v7054, %v7056
  %v7061 = vsel %vm231, 0.0, %v7053
  %v7062 = vrot.slane %v7042, 1
  %v7063 = vrot.slane %v7043, 1
  %v7064 = vsel %vm241, %v7062, %v7063
  %v7065 = vrot.slane %v7044, 1
  %v7066 = vsel %vm241, %v7063, %v7065
  %v7068 = vsel %vm231, %v7065, 0.0
  %7069 = vrot.lane.b32.xlu0 %v7042, 10
  %v7070 = vpop.permute.xlu0 %7069
  %7071 = vrot.lane.b32.xlu0 %v7043, 10
  %v7072 = vpop.permute.xlu0 %7071
  %7073 = vrot.lane.b32.xlu0 %v7044, 10
  %v7074 = vpop.permute.xlu0 %7073
  %7079 = vrot.lane.b32.xlu0 %v7064, 20
  %v7080 = vpop.permute.xlu0 %7079
  %7081 = vrot.lane.b32.xlu0 %v7066, 20
  %v7082 = vpop.permute.xlu0 %7081
  %7083 = vrot.lane.b32.xlu0 %v7068, 20
  %v7084 = vpop.permute.xlu0 %7083
  %v7088 = vsel %vm23, %v7061, %v7070
  %v7089 = vsel %vm23, %v7055, %v7072
  %v7090 = vsel %vm23, %v7057, %v7074
  %v7091 = vsel %vm271, %v7088, %v7080
  %v7092 = vsel %vm271, %v7089, %v7082
  %v7093 = vsel %vm271, %v7090, %v7084
  %v7094 = vsel %vm275, %v7091, 1.0
  %v7095 = vsel %vm275, %v7092, 1.0
  %v7096 = vsel %vm275, %v7093, 1.0
  %v7098 = vsel %vm279, %v7094, 0
  %v7101 = vsel %vm279, %v7095, 0
  %v7104 = vsel %vm279, %v7096, 0
  %v7107 = vsel %vm241, %v7049, 0
  %7109 = vmatprep.subr.mxu0 0.0
  %7110 = vmatpush1.msra.mxu0 0.0
  %7111 = vmatprep.subr.mxu0 0.0
  %7112 = vmatpush1.msra.mxu0 0.0
  %7113 = vmatprep.subr.mxu0 0.0
  %7114 = vmatpush1.msra.mxu0 0.0
  %7115 = vmatprep.subr.mxu0 0.0
  %7116 = vmatpush1.msra.mxu0 0.0
  %7117 = vmatprep.subr.mxu0 0.0
  %7118 = vmatpush1.msra.mxu0 0.0
  %7119 = vmatprep.subr.mxu0 0.0
  %7120 = vmatpush1.msra.mxu0 0.0
  %7121 = vmatprep.subr.mxu0 0.0
  %7122 = vmatpush1.msra.mxu0 0.0
  %7123 = vmatprep.subr.mxu0 0.0
  %7124 = vmatpush1.msra.mxu0 0.0
  %7125 = vmatprep.subr.mxu0 0.0
  %7126 = vmatpush1.msra.mxu0 0.0
  %7127 = vmatprep.subr.mxu0 0.0
  %7128 = vmatpush1.msra.mxu0 0.0
  %7129 = vmatprep.subr.mxu0 0.0
  %7130 = vmatpush1.msra.mxu0 0.0
  %7131 = vmatprep.subr.mxu0 0.0
  %7132 = vmatpush1.msra.mxu0 0.0
  %7133 = vmatprep.subr.mxu0 0.0
  %7134 = vmatpush1.msra.mxu0 %v7107
  %7135 = vmatprep.subr.mxu0 0.0
  %7136 = vmatpush1.msra.mxu0 %v7048
  %7137 = vmatprep.subr.mxu0 0.0
  %7138 = vmatpush1.msra.mxu0 %v7047
  %7139 = vmatprep.subr.mxu0 0.0
  %7140 = vmatpush1.msra.mxu0 %v7046
  %7141 = vmatprep.subr.mxu0 0.0
  %7142 = vmatpush2.msra.mxu0 0.0
  %7143 = vmatprep.subr.mxu0 0.0
  %7144 = vmatpush2.msra.mxu0 0.0
  %7145 = vmatprep.subr.mxu0 0.0
  %7146 = vmatpush2.msra.mxu0 0.0
  %7147 = vmatprep.subr.mxu0 0.0
  %7148 = vmatpush2.msra.mxu0 0.0
  %7149 = vmatprep.subr.mxu0 0.0
  %7150 = vmatpush2.msra.mxu0 0.0
  %7151 = vmatprep.subr.mxu0 0.0
  %7152 = vmatpush2.msra.mxu0 0.0
  %7153 = vmatprep.subr.mxu0 0.0
  %7154 = vmatpush2.msra.mxu0 0.0
  %7155 = vmatprep.subr.mxu0 0.0
  %7156 = vmatpush2.msra.mxu0 0.0
  %7157 = vmatprep.subr.mxu0 0.0
  %7158 = vmatpush2.msra.mxu0 0.0
  %7159 = vmatprep.subr.mxu0 0.0
  %7160 = vmatpush2.msra.mxu0 0.0
  %7161 = vmatprep.subr.mxu0 0.0
  %7162 = vmatpush2.msra.mxu0 0.0
  %7163 = vmatprep.subr.mxu0 0.0
  %7164 = vmatpush2.msra.mxu0 0.0
  %7165 = vmatprep.subr.mxu0 0.0
  %7166 = vmatpush2.msra.mxu0 0.0
  %7167 = vmatprep.subr.mxu0 0.0
  %7168 = vmatpush2.msra.mxu0 0.0
  %7169 = vmatprep.subr.mxu0 0.0
  %7170 = vmatpush2.msra.mxu0 0.0
  %7171 = vmatprep.subr.mxu0 0.0
  %7172 = vmatpush2.msra.mxu0 0.0
  %7173 = vmatprep.mubr.f32.mxu0 0.0
  %7174 = vmatmul.mubr.f32.gmra.mxu0 %v7098
  %v7175 = vpop.f32.mrf.mxu0
  %v7176 = vadd.f32 0.0, %v7175
  %v7177 = vpop.f32.mrf.mxu0
  %7178 = vmatprep.mubr.f32.mxu0 0.0
  %7179 = vmatmul.mubr.f32.gmra.mxu0 %v7101
  %v7180 = vpop.f32.mrf.mxu0
  %v7181 = vadd.f32 0.0, %v7180
  %v7182 = vpop.f32.mrf.mxu0
  %7183 = vmatprep.mubr.f32.mxu0 0.0
  %7184 = vmatmul.mubr.f32.gmra.mxu0 %v7104
  %v7185 = vpop.f32.mrf.mxu0
  %v7186 = vadd.f32 0.0, %v7185
  %v7187 = vpop.f32.mrf.mxu0
  %7188 = vdwg.mxu0
  %s7189 = scalar_lea.vmem %s2, 1344
  %v7190 = vld [vmem:[%s7189] sm:$0xff]
  %v7191 = vld [vmem:[%s7189 + $0x8] sm:$0xff]
  %v7192 = vld [vmem:[%s7189 + $0x10] sm:$0x3]
  %s7193 = scalar_lea.vmem %s2, 1368
  %v7194 = vld [vmem:[%s7193] sm:$0xff]
  %v7195 = vld [vmem:[%s7193 + $0x8] sm:$0xff]
  %v7196 = vld [vmem:[%s7193 + $0x10] sm:$0x3]
  %v7197 = vsel %vm23, %v7176, 0.0
  %7198 = vadd.xlane.f32.xlu0 %v7197
  %v7199 = vpop.xlane.xlu0 %7198
  %v7200 = vsel %vm23, %v7181, 0.0
  %7201 = vadd.xlane.f32.xlu0 %v7200
  %v7202 = vpop.xlane.xlu0 %7201
  %v7203 = vsel %vm127, %v7186, 0.0
  %7204 = vadd.xlane.f32.xlu0 %v7203
  %v7205 = vpop.xlane.xlu0 %7204
  %v7206 = vmul.f32 %v7176, %v7176
  %v7207 = vmul.f32 %v7181, %v7181
  %v7208 = vmul.f32 %v7186, %v7186
  %v7209 = vsel %vm23, %v7206, 0.0
  %7210 = vadd.xlane.f32.xlu0 %v7209
  %v7211 = vpop.xlane.xlu0 %7210
  %v7212 = vsel %vm23, %v7207, 0.0
  %7213 = vadd.xlane.f32.xlu0 %v7212
  %v7214 = vpop.xlane.xlu0 %7213
  %v7215 = vsel %vm127, %v7208, 0.0
  %7216 = vadd.xlane.f32.xlu0 %v7215
  %v7217 = vpop.xlane.xlu0 %7216
  %v7218 = vmul.f32 %v7199, 0.1
  %v7219 = vmul.f32 %v7202, 0.1
  %v7220 = vmul.f32 %v7205, 0.1
  %v7221 = vmul.f32 %v7211, 0.1
  %v7222 = vmul.f32 %v7214, 0.1
  %v7223 = vmul.f32 %v7217, 0.1
  %v7224 = vmul.f32 %v7218, %v7218
  %v7225 = vmul.f32 %v7219, %v7219
  %v7226 = vmul.f32 %v7220, %v7220
  %v7227 = vsub.f32 %v7221, %v7224
  %v7228 = vsub.f32 %v7222, %v7225
  %v7229 = vsub.f32 %v7223, %v7226
  %v7230 = vmax.f32 %v7227, 0.0
  %v7231 = vmax.f32 %v7228, 0.0
  %v7232 = vmax.f32 %v7229, 0.0
  %v7233 = vadd.f32 %v7230, 1e-05
  %v7234 = vadd.f32 %v7231, 1e-05
  %v7235 = vadd.f32 %v7232, 1e-05
  %v7236 = vrsqrt.pop %v7233
  %v7237 = vrsqrt.pop %v7234
  %v7238 = vrsqrt.pop %v7235
  %v7239 = vmul.f32 %v7190, %v7236
  %v7240 = vmul.f32 %v7191, %v7237
  %v7241 = vmul.f32 %v7192, %v7238
  %v7242 = vmul.f32 %v7218, %v7239
  %v7243 = vmul.f32 %v7219, %v7240
  %v7244 = vmul.f32 %v7220, %v7241
  %v7245 = vsub.f32 %v7194, %v7242
  %v7246 = vsub.f32 %v7195, %v7243
  %v7247 = vsub.f32 %v7196, %v7244
  %7249 = vset.pattern.permute.xlu0 0
  %7250 = vperm.xlu0 %7249, %v7239
  %v7251 = vpop.permute.xlu0 %7250
  %7254 = vset.pattern.permute.xlu0 0
  %7255 = vperm.xlu0 %7254, %v7240
  %v7256 = vpop.permute.xlu0 %7255
  %7259 = vset.pattern.permute.xlu0 0
  %7260 = vperm.xlu0 %7259, %v7241
  %v7261 = vpop.permute.xlu0 %7260
  %v7263 = vmul.f32 %v7176, %v7251
  %v7264 = vmul.f32 %v7181, %v7256
  %v7265 = vmul.f32 %v7186, %v7261
  %7267 = vset.pattern.permute.xlu0 0
  %7268 = vperm.xlu0 %7267, %v7245
  %v7269 = vpop.permute.xlu0 %7268
  %7272 = vset.pattern.permute.xlu0 0
  %7273 = vperm.xlu0 %7272, %v7246
  %v7274 = vpop.permute.xlu0 %7273
  %7277 = vset.pattern.permute.xlu0 0
  %7278 = vperm.xlu0 %7277, %v7247
  %v7279 = vpop.permute.xlu0 %7278
  %v7281 = vadd.f32 %v7263, %v7269
  %v7282 = vadd.f32 %v7264, %v7274
  %v7283 = vadd.f32 %v7265, %v7279
  %v7284 = vmax.f32 %v7281, 0.0
  %v7285 = vmax.f32 %v7282, 0.0
  %v7286 = vmax.f32 %v7283, 0.0
  %s7287 = scalar_lea.vmem %s1, 928
  %v7288 = vld [vmem:[%s7287] sm:$0xff]
  %v7289 = vld [vmem:[%s7287 + $0x8] sm:$0xff]
  %v7290 = vld [vmem:[%s7287 + $0x10] sm:$0xff]
  %v7291 = vld [vmem:[%s7287 + $0x18] sm:$0x7f]
  %v7295 = vrot.slane %v7284, 7
  %v7296 = vrot.slane %v7285, 7
  %v7297 = vsel %vm231, %v7295, %v7296
  %v7298 = vrot.slane %v7286, 7
  %v7299 = vsel %vm231, %v7296, %v7298
  %v7303 = vsel %vm231, 0.0, %v7295
  %v7304 = vrot.slane %v7284, 1
  %v7305 = vrot.slane %v7285, 1
  %v7306 = vsel %vm241, %v7304, %v7305
  %v7307 = vrot.slane %v7286, 1
  %v7308 = vsel %vm241, %v7305, %v7307
  %v7310 = vsel %vm231, %v7307, 0.0
  %7311 = vrot.lane.b32.xlu0 %v7284, 10
  %v7312 = vpop.permute.xlu0 %7311
  %7313 = vrot.lane.b32.xlu0 %v7285, 10
  %v7314 = vpop.permute.xlu0 %7313
  %7315 = vrot.lane.b32.xlu0 %v7286, 10
  %v7316 = vpop.permute.xlu0 %7315
  %7321 = vrot.lane.b32.xlu0 %v7306, 20
  %v7322 = vpop.permute.xlu0 %7321
  %7323 = vrot.lane.b32.xlu0 %v7308, 20
  %v7324 = vpop.permute.xlu0 %7323
  %7325 = vrot.lane.b32.xlu0 %v7310, 20
  %v7326 = vpop.permute.xlu0 %7325
  %v7330 = vsel %vm23, %v7303, %v7312
  %v7331 = vsel %vm23, %v7297, %v7314
  %v7332 = vsel %vm23, %v7299, %v7316
  %v7333 = vsel %vm271, %v7330, %v7322
  %v7334 = vsel %vm271, %v7331, %v7324
  %v7335 = vsel %vm271, %v7332, %v7326
  %v7336 = vsel %vm275, %v7333, 1.0
  %v7337 = vsel %vm275, %v7334, 1.0
  %v7338 = vsel %vm275, %v7335, 1.0
  %v7340 = vsel %vm279, %v7336, 0
  %v7343 = vsel %vm279, %v7337, 0
  %v7346 = vsel %vm279, %v7338, 0
  %v7349 = vsel %vm241, %v7291, 0
  %7351 = vmatprep.subr.mxu0 0.0
  %7352 = vmatpush1.msra.mxu0 0.0
  %7353 = vmatprep.subr.mxu0 0.0
  %7354 = vmatpush1.msra.mxu0 0.0
  %7355 = vmatprep.subr.mxu0 0.0
  %7356 = vmatpush1.msra.mxu0 0.0
  %7357 = vmatprep.subr.mxu0 0.0
  %7358 = vmatpush1.msra.mxu0 0.0
  %7359 = vmatprep.subr.mxu0 0.0
  %7360 = vmatpush1.msra.mxu0 0.0
  %7361 = vmatprep.subr.mxu0 0.0
  %7362 = vmatpush1.msra.mxu0 0.0
  %7363 = vmatprep.subr.mxu0 0.0
  %7364 = vmatpush1.msra.mxu0 0.0
  %7365 = vmatprep.subr.mxu0 0.0
  %7366 = vmatpush1.msra.mxu0 0.0
  %7367 = vmatprep.subr.mxu0 0.0
  %7368 = vmatpush1.msra.mxu0 0.0
  %7369 = vmatprep.subr.mxu0 0.0
  %7370 = vmatpush1.msra.mxu0 0.0
  %7371 = vmatprep.subr.mxu0 0.0
  %7372 = vmatpush1.msra.mxu0 0.0
  %7373 = vmatprep.subr.mxu0 0.0
  %7374 = vmatpush1.msra.mxu0 0.0
  %7375 = vmatprep.subr.mxu0 0.0
  %7376 = vmatpush1.msra.mxu0 %v7349
  %7377 = vmatprep.subr.mxu0 0.0
  %7378 = vmatpush1.msra.mxu0 %v7290
  %7379 = vmatprep.subr.mxu0 0.0
  %7380 = vmatpush1.msra.mxu0 %v7289
  %7381 = vmatprep.subr.mxu0 0.0
  %7382 = vmatpush1.msra.mxu0 %v7288
  %7383 = vmatprep.subr.mxu0 0.0
  %7384 = vmatpush2.msra.mxu0 0.0
  %7385 = vmatprep.subr.mxu0 0.0
  %7386 = vmatpush2.msra.mxu0 0.0
  %7387 = vmatprep.subr.mxu0 0.0
  %7388 = vmatpush2.msra.mxu0 0.0
  %7389 = vmatprep.subr.mxu0 0.0
  %7390 = vmatpush2.msra.mxu0 0.0
  %7391 = vmatprep.subr.mxu0 0.0
  %7392 = vmatpush2.msra.mxu0 0.0
  %7393 = vmatprep.subr.mxu0 0.0
  %7394 = vmatpush2.msra.mxu0 0.0
  %7395 = vmatprep.subr.mxu0 0.0
  %7396 = vmatpush2.msra.mxu0 0.0
  %7397 = vmatprep.subr.mxu0 0.0
  %7398 = vmatpush2.msra.mxu0 0.0
  %7399 = vmatprep.subr.mxu0 0.0
  %7400 = vmatpush2.msra.mxu0 0.0
  %7401 = vmatprep.subr.mxu0 0.0
  %7402 = vmatpush2.msra.mxu0 0.0
  %7403 = vmatprep.subr.mxu0 0.0
  %7404 = vmatpush2.msra.mxu0 0.0
  %7405 = vmatprep.subr.mxu0 0.0
  %7406 = vmatpush2.msra.mxu0 0.0
  %7407 = vmatprep.subr.mxu0 0.0
  %7408 = vmatpush2.msra.mxu0 0.0
  %7409 = vmatprep.subr.mxu0 0.0
  %7410 = vmatpush2.msra.mxu0 0.0
  %7411 = vmatprep.subr.mxu0 0.0
  %7412 = vmatpush2.msra.mxu0 0.0
  %7413 = vmatprep.subr.mxu0 0.0
  %7414 = vmatpush2.msra.mxu0 0.0
  %7415 = vmatprep.mubr.f32.mxu0 0.0
  %7416 = vmatmul.mubr.f32.gmra.mxu0 %v7340
  %v7417 = vpop.f32.mrf.mxu0
  %v7418 = vadd.f32 0.0, %v7417
  %v7419 = vpop.f32.mrf.mxu0
  %7420 = vmatprep.mubr.f32.mxu0 0.0
  %7421 = vmatmul.mubr.f32.gmra.mxu0 %v7343
  %v7422 = vpop.f32.mrf.mxu0
  %v7423 = vadd.f32 0.0, %v7422
  %v7424 = vpop.f32.mrf.mxu0
  %7425 = vmatprep.mubr.f32.mxu0 0.0
  %7426 = vmatmul.mubr.f32.gmra.mxu0 %v7346
  %v7427 = vpop.f32.mrf.mxu0
  %v7428 = vadd.f32 0.0, %v7427
  %v7429 = vpop.f32.mrf.mxu0
  %7430 = vdwg.mxu0
  %s7431 = scalar_lea.vmem %s2, 1392
  %v7432 = vld [vmem:[%s7431] sm:$0xff]
  %v7433 = vld [vmem:[%s7431 + $0x8] sm:$0xff]
  %v7434 = vld [vmem:[%s7431 + $0x10] sm:$0x3]
  %s7435 = scalar_lea.vmem %s2, 1416
  %v7436 = vld [vmem:[%s7435] sm:$0xff]
  %v7437 = vld [vmem:[%s7435 + $0x8] sm:$0xff]
  %v7438 = vld [vmem:[%s7435 + $0x10] sm:$0x3]
  %v7439 = vsel %vm23, %v7418, 0.0
  %7440 = vadd.xlane.f32.xlu0 %v7439
  %v7441 = vpop.xlane.xlu0 %7440
  %v7442 = vsel %vm23, %v7423, 0.0
  %7443 = vadd.xlane.f32.xlu0 %v7442
  %v7444 = vpop.xlane.xlu0 %7443
  %v7445 = vsel %vm127, %v7428, 0.0
  %7446 = vadd.xlane.f32.xlu0 %v7445
  %v7447 = vpop.xlane.xlu0 %7446
  %v7448 = vmul.f32 %v7418, %v7418
  %v7449 = vmul.f32 %v7423, %v7423
  %v7450 = vmul.f32 %v7428, %v7428
  %v7451 = vsel %vm23, %v7448, 0.0
  %7452 = vadd.xlane.f32.xlu0 %v7451
  %v7453 = vpop.xlane.xlu0 %7452
  %v7454 = vsel %vm23, %v7449, 0.0
  %7455 = vadd.xlane.f32.xlu0 %v7454
  %v7456 = vpop.xlane.xlu0 %7455
  %v7457 = vsel %vm127, %v7450, 0.0
  %7458 = vadd.xlane.f32.xlu0 %v7457
  %v7459 = vpop.xlane.xlu0 %7458
  %v7460 = vmul.f32 %v7441, 0.1
  %v7461 = vmul.f32 %v7444, 0.1
  %v7462 = vmul.f32 %v7447, 0.1
  %v7463 = vmul.f32 %v7453, 0.1
  %v7464 = vmul.f32 %v7456, 0.1
  %v7465 = vmul.f32 %v7459, 0.1
  %v7466 = vmul.f32 %v7460, %v7460
  %v7467 = vmul.f32 %v7461, %v7461
  %v7468 = vmul.f32 %v7462, %v7462
  %v7469 = vsub.f32 %v7463, %v7466
  %v7470 = vsub.f32 %v7464, %v7467
  %v7471 = vsub.f32 %v7465, %v7468
  %v7472 = vmax.f32 %v7469, 0.0
  %v7473 = vmax.f32 %v7470, 0.0
  %v7474 = vmax.f32 %v7471, 0.0
  %v7475 = vadd.f32 %v7472, 1e-05
  %v7476 = vadd.f32 %v7473, 1e-05
  %v7477 = vadd.f32 %v7474, 1e-05
  %v7478 = vrsqrt.pop %v7475
  %v7479 = vrsqrt.pop %v7476
  %v7480 = vrsqrt.pop %v7477
  %v7481 = vmul.f32 %v7432, %v7478
  %v7482 = vmul.f32 %v7433, %v7479
  %v7483 = vmul.f32 %v7434, %v7480
  %v7484 = vmul.f32 %v7460, %v7481
  %v7485 = vmul.f32 %v7461, %v7482
  %v7486 = vmul.f32 %v7462, %v7483
  %v7487 = vsub.f32 %v7436, %v7484
  %v7488 = vsub.f32 %v7437, %v7485
  %v7489 = vsub.f32 %v7438, %v7486
  %7491 = vset.pattern.permute.xlu0 0
  %7492 = vperm.xlu0 %7491, %v7481
  %v7493 = vpop.permute.xlu0 %7492
  %7496 = vset.pattern.permute.xlu0 0
  %7497 = vperm.xlu0 %7496, %v7482
  %v7498 = vpop.permute.xlu0 %7497
  %7501 = vset.pattern.permute.xlu0 0
  %7502 = vperm.xlu0 %7501, %v7483
  %v7503 = vpop.permute.xlu0 %7502
  %v7505 = vmul.f32 %v7418, %v7493
  %v7506 = vmul.f32 %v7423, %v7498
  %v7507 = vmul.f32 %v7428, %v7503
  %7509 = vset.pattern.permute.xlu0 0
  %7510 = vperm.xlu0 %7509, %v7487
  %v7511 = vpop.permute.xlu0 %7510
  %7514 = vset.pattern.permute.xlu0 0
  %7515 = vperm.xlu0 %7514, %v7488
  %v7516 = vpop.permute.xlu0 %7515
  %7519 = vset.pattern.permute.xlu0 0
  %7520 = vperm.xlu0 %7519, %v7489
  %v7521 = vpop.permute.xlu0 %7520
  %v7523 = vadd.f32 %v7505, %v7511
  %v7524 = vadd.f32 %v7506, %v7516
  %v7525 = vadd.f32 %v7507, %v7521
  %v7526 = vadd.f32 %v7523, %v7042
  %v7527 = vadd.f32 %v7524, %v7043
  %v7528 = vadd.f32 %v7525, %v7044
  %v7529 = vmax.f32 %v7526, 0.0
  %v7530 = vmax.f32 %v7527, 0.0
  %v7531 = vmax.f32 %v7528, 0.0
  %s7532 = scalar_lea.vmem %s1, 960
  %v7533 = vld [vmem:[%s7532] sm:$0xff]
  %v7534 = vld [vmem:[%s7532 + $0x8] sm:$0xff]
  %v7535 = vld [vmem:[%s7532 + $0x10] sm:$0xff]
  %v7536 = vld [vmem:[%s7532 + $0x18] sm:$0x7f]
  %v7540 = vrot.slane %v7529, 7
  %v7541 = vrot.slane %v7530, 7
  %v7542 = vsel %vm231, %v7540, %v7541
  %v7543 = vrot.slane %v7531, 7
  %v7544 = vsel %vm231, %v7541, %v7543
  %v7548 = vsel %vm231, 0.0, %v7540
  %v7549 = vrot.slane %v7529, 1
  %v7550 = vrot.slane %v7530, 1
  %v7551 = vsel %vm241, %v7549, %v7550
  %v7552 = vrot.slane %v7531, 1
  %v7553 = vsel %vm241, %v7550, %v7552
  %v7555 = vsel %vm231, %v7552, 0.0
  %7556 = vrot.lane.b32.xlu0 %v7529, 10
  %v7557 = vpop.permute.xlu0 %7556
  %7558 = vrot.lane.b32.xlu0 %v7530, 10
  %v7559 = vpop.permute.xlu0 %7558
  %7560 = vrot.lane.b32.xlu0 %v7531, 10
  %v7561 = vpop.permute.xlu0 %7560
  %7566 = vrot.lane.b32.xlu0 %v7551, 20
  %v7567 = vpop.permute.xlu0 %7566
  %7568 = vrot.lane.b32.xlu0 %v7553, 20
  %v7569 = vpop.permute.xlu0 %7568
  %7570 = vrot.lane.b32.xlu0 %v7555, 20
  %v7571 = vpop.permute.xlu0 %7570
  %v7575 = vsel %vm23, %v7548, %v7557
  %v7576 = vsel %vm23, %v7542, %v7559
  %v7577 = vsel %vm23, %v7544, %v7561
  %v7578 = vsel %vm271, %v7575, %v7567
  %v7579 = vsel %vm271, %v7576, %v7569
  %v7580 = vsel %vm271, %v7577, %v7571
  %v7581 = vsel %vm275, %v7578, 1.0
  %v7582 = vsel %vm275, %v7579, 1.0
  %v7583 = vsel %vm275, %v7580, 1.0
  %v7585 = vsel %vm279, %v7581, 0
  %v7588 = vsel %vm279, %v7582, 0
  %v7591 = vsel %vm279, %v7583, 0
  %v7594 = vsel %vm241, %v7536, 0
  %7596 = vmatprep.subr.mxu0 0.0
  %7597 = vmatpush1.msra.mxu0 0.0
  %7598 = vmatprep.subr.mxu0 0.0
  %7599 = vmatpush1.msra.mxu0 0.0
  %7600 = vmatprep.subr.mxu0 0.0
  %7601 = vmatpush1.msra.mxu0 0.0
  %7602 = vmatprep.subr.mxu0 0.0
  %7603 = vmatpush1.msra.mxu0 0.0
  %7604 = vmatprep.subr.mxu0 0.0
  %7605 = vmatpush1.msra.mxu0 0.0
  %7606 = vmatprep.subr.mxu0 0.0
  %7607 = vmatpush1.msra.mxu0 0.0
  %7608 = vmatprep.subr.mxu0 0.0
  %7609 = vmatpush1.msra.mxu0 0.0
  %7610 = vmatprep.subr.mxu0 0.0
  %7611 = vmatpush1.msra.mxu0 0.0
  %7612 = vmatprep.subr.mxu0 0.0
  %7613 = vmatpush1.msra.mxu0 0.0
  %7614 = vmatprep.subr.mxu0 0.0
  %7615 = vmatpush1.msra.mxu0 0.0
  %7616 = vmatprep.subr.mxu0 0.0
  %7617 = vmatpush1.msra.mxu0 0.0
  %7618 = vmatprep.subr.mxu0 0.0
  %7619 = vmatpush1.msra.mxu0 0.0
  %7620 = vmatprep.subr.mxu0 0.0
  %7621 = vmatpush1.msra.mxu0 %v7594
  %7622 = vmatprep.subr.mxu0 0.0
  %7623 = vmatpush1.msra.mxu0 %v7535
  %7624 = vmatprep.subr.mxu0 0.0
  %7625 = vmatpush1.msra.mxu0 %v7534
  %7626 = vmatprep.subr.mxu0 0.0
  %7627 = vmatpush1.msra.mxu0 %v7533
  %7628 = vmatprep.subr.mxu0 0.0
  %7629 = vmatpush2.msra.mxu0 0.0
  %7630 = vmatprep.subr.mxu0 0.0
  %7631 = vmatpush2.msra.mxu0 0.0
  %7632 = vmatprep.subr.mxu0 0.0
  %7633 = vmatpush2.msra.mxu0 0.0
  %7634 = vmatprep.subr.mxu0 0.0
  %7635 = vmatpush2.msra.mxu0 0.0
  %7636 = vmatprep.subr.mxu0 0.0
  %7637 = vmatpush2.msra.mxu0 0.0
  %7638 = vmatprep.subr.mxu0 0.0
  %7639 = vmatpush2.msra.mxu0 0.0
  %7640 = vmatprep.subr.mxu0 0.0
  %7641 = vmatpush2.msra.mxu0 0.0
  %7642 = vmatprep.subr.mxu0 0.0
  %7643 = vmatpush2.msra.mxu0 0.0
  %7644 = vmatprep.subr.mxu0 0.0
  %7645 = vmatpush2.msra.mxu0 0.0
  %7646 = vmatprep.subr.mxu0 0.0
  %7647 = vmatpush2.msra.mxu0 0.0
  %7648 = vmatprep.subr.mxu0 0.0
  %7649 = vmatpush2.msra.mxu0 0.0
  %7650 = vmatprep.subr.mxu0 0.0
  %7651 = vmatpush2.msra.mxu0 0.0
  %7652 = vmatprep.subr.mxu0 0.0
  %7653 = vmatpush2.msra.mxu0 0.0
  %7654 = vmatprep.subr.mxu0 0.0
  %7655 = vmatpush2.msra.mxu0 0.0
  %7656 = vmatprep.subr.mxu0 0.0
  %7657 = vmatpush2.msra.mxu0 0.0
  %7658 = vmatprep.subr.mxu0 0.0
  %7659 = vmatpush2.msra.mxu0 0.0
  %7660 = vmatprep.mubr.f32.mxu0 0.0
  %7661 = vmatmul.mubr.f32.gmra.mxu0 %v7585
  %v7662 = vpop.f32.mrf.mxu0
  %v7663 = vadd.f32 0.0, %v7662
  %v7664 = vpop.f32.mrf.mxu0
  %7665 = vmatprep.mubr.f32.mxu0 0.0
  %7666 = vmatmul.mubr.f32.gmra.mxu0 %v7588
  %v7667 = vpop.f32.mrf.mxu0
  %v7668 = vadd.f32 0.0, %v7667
  %v7669 = vpop.f32.mrf.mxu0
  %7670 = vmatprep.mubr.f32.mxu0 0.0
  %7671 = vmatmul.mubr.f32.gmra.mxu0 %v7591
  %v7672 = vpop.f32.mrf.mxu0
  %v7673 = vadd.f32 0.0, %v7672
  %v7674 = vpop.f32.mrf.mxu0
  %7675 = vdwg.mxu0
  %s7676 = scalar_lea.vmem %s2, 1440
  %v7677 = vld [vmem:[%s7676] sm:$0xff]
  %v7678 = vld [vmem:[%s7676 + $0x8] sm:$0xff]
  %v7679 = vld [vmem:[%s7676 + $0x10] sm:$0x3]
  %s7680 = scalar_lea.vmem %s2, 1464
  %v7681 = vld [vmem:[%s7680] sm:$0xff]
  %v7682 = vld [vmem:[%s7680 + $0x8] sm:$0xff]
  %v7683 = vld [vmem:[%s7680 + $0x10] sm:$0x3]
  %v7684 = vsel %vm23, %v7663, 0.0
  %7685 = vadd.xlane.f32.xlu0 %v7684
  %v7686 = vpop.xlane.xlu0 %7685
  %v7687 = vsel %vm23, %v7668, 0.0
  %7688 = vadd.xlane.f32.xlu0 %v7687
  %v7689 = vpop.xlane.xlu0 %7688
  %v7690 = vsel %vm127, %v7673, 0.0
  %7691 = vadd.xlane.f32.xlu0 %v7690
  %v7692 = vpop.xlane.xlu0 %7691
  %v7693 = vmul.f32 %v7663, %v7663
  %v7694 = vmul.f32 %v7668, %v7668
  %v7695 = vmul.f32 %v7673, %v7673
  %v7696 = vsel %vm23, %v7693, 0.0
  %7697 = vadd.xlane.f32.xlu0 %v7696
  %v7698 = vpop.xlane.xlu0 %7697
  %v7699 = vsel %vm23, %v7694, 0.0
  %7700 = vadd.xlane.f32.xlu0 %v7699
  %v7701 = vpop.xlane.xlu0 %7700
  %v7702 = vsel %vm127, %v7695, 0.0
  %7703 = vadd.xlane.f32.xlu0 %v7702
  %v7704 = vpop.xlane.xlu0 %7703
  %v7705 = vmul.f32 %v7686, 0.1
  %v7706 = vmul.f32 %v7689, 0.1
  %v7707 = vmul.f32 %v7692, 0.1
  %v7708 = vmul.f32 %v7698, 0.1
  %v7709 = vmul.f32 %v7701, 0.1
  %v7710 = vmul.f32 %v7704, 0.1
  %v7711 = vmul.f32 %v7705, %v7705
  %v7712 = vmul.f32 %v7706, %v7706
  %v7713 = vmul.f32 %v7707, %v7707
  %v7714 = vsub.f32 %v7708, %v7711
  %v7715 = vsub.f32 %v7709, %v7712
  %v7716 = vsub.f32 %v7710, %v7713
  %v7717 = vmax.f32 %v7714, 0.0
  %v7718 = vmax.f32 %v7715, 0.0
  %v7719 = vmax.f32 %v7716, 0.0
  %v7720 = vadd.f32 %v7717, 1e-05
  %v7721 = vadd.f32 %v7718, 1e-05
  %v7722 = vadd.f32 %v7719, 1e-05
  %v7723 = vrsqrt.pop %v7720
  %v7724 = vrsqrt.pop %v7721
  %v7725 = vrsqrt.pop %v7722
  %v7726 = vmul.f32 %v7677, %v7723
  %v7727 = vmul.f32 %v7678, %v7724
  %v7728 = vmul.f32 %v7679, %v7725
  %v7729 = vmul.f32 %v7705, %v7726
  %v7730 = vmul.f32 %v7706, %v7727
  %v7731 = vmul.f32 %v7707, %v7728
  %v7732 = vsub.f32 %v7681, %v7729
  %v7733 = vsub.f32 %v7682, %v7730
  %v7734 = vsub.f32 %v7683, %v7731
  %7736 = vset.pattern.permute.xlu0 0
  %7737 = vperm.xlu0 %7736, %v7726
  %v7738 = vpop.permute.xlu0 %7737
  %7741 = vset.pattern.permute.xlu0 0
  %7742 = vperm.xlu0 %7741, %v7727
  %v7743 = vpop.permute.xlu0 %7742
  %7746 = vset.pattern.permute.xlu0 0
  %7747 = vperm.xlu0 %7746, %v7728
  %v7748 = vpop.permute.xlu0 %7747
  %v7750 = vmul.f32 %v7663, %v7738
  %v7751 = vmul.f32 %v7668, %v7743
  %v7752 = vmul.f32 %v7673, %v7748
  %7754 = vset.pattern.permute.xlu0 0
  %7755 = vperm.xlu0 %7754, %v7732
  %v7756 = vpop.permute.xlu0 %7755
  %7759 = vset.pattern.permute.xlu0 0
  %7760 = vperm.xlu0 %7759, %v7733
  %v7761 = vpop.permute.xlu0 %7760
  %7764 = vset.pattern.permute.xlu0 0
  %7765 = vperm.xlu0 %7764, %v7734
  %v7766 = vpop.permute.xlu0 %7765
  %v7768 = vadd.f32 %v7750, %v7756
  %v7769 = vadd.f32 %v7751, %v7761
  %v7770 = vadd.f32 %v7752, %v7766
  %v7771 = vmax.f32 %v7768, 0.0
  %v7772 = vmax.f32 %v7769, 0.0
  %v7773 = vmax.f32 %v7770, 0.0
  %s7774 = scalar_lea.vmem %s1, 992
  %v7775 = vld [vmem:[%s7774] sm:$0xff]
  %v7776 = vld [vmem:[%s7774 + $0x8] sm:$0xff]
  %v7777 = vld [vmem:[%s7774 + $0x10] sm:$0xff]
  %v7778 = vld [vmem:[%s7774 + $0x18] sm:$0x7f]
  %v7782 = vrot.slane %v7771, 7
  %v7783 = vrot.slane %v7772, 7
  %v7784 = vsel %vm231, %v7782, %v7783
  %v7785 = vrot.slane %v7773, 7
  %v7786 = vsel %vm231, %v7783, %v7785
  %v7790 = vsel %vm231, 0.0, %v7782
  %v7791 = vrot.slane %v7771, 1
  %v7792 = vrot.slane %v7772, 1
  %v7793 = vsel %vm241, %v7791, %v7792
  %v7794 = vrot.slane %v7773, 1
  %v7795 = vsel %vm241, %v7792, %v7794
  %v7797 = vsel %vm231, %v7794, 0.0
  %7798 = vrot.lane.b32.xlu0 %v7771, 10
  %v7799 = vpop.permute.xlu0 %7798
  %7800 = vrot.lane.b32.xlu0 %v7772, 10
  %v7801 = vpop.permute.xlu0 %7800
  %7802 = vrot.lane.b32.xlu0 %v7773, 10
  %v7803 = vpop.permute.xlu0 %7802
  %7808 = vrot.lane.b32.xlu0 %v7793, 20
  %v7809 = vpop.permute.xlu0 %7808
  %7810 = vrot.lane.b32.xlu0 %v7795, 20
  %v7811 = vpop.permute.xlu0 %7810
  %7812 = vrot.lane.b32.xlu0 %v7797, 20
  %v7813 = vpop.permute.xlu0 %7812
  %v7817 = vsel %vm23, %v7790, %v7799
  %v7818 = vsel %vm23, %v7784, %v7801
  %v7819 = vsel %vm23, %v7786, %v7803
  %v7820 = vsel %vm271, %v7817, %v7809
  %v7821 = vsel %vm271, %v7818, %v7811
  %v7822 = vsel %vm271, %v7819, %v7813
  %v7823 = vsel %vm275, %v7820, 1.0
  %v7824 = vsel %vm275, %v7821, 1.0
  %v7825 = vsel %vm275, %v7822, 1.0
  %v7827 = vsel %vm279, %v7823, 0
  %v7830 = vsel %vm279, %v7824, 0
  %v7833 = vsel %vm279, %v7825, 0
  %v7836 = vsel %vm241, %v7778, 0
  %7838 = vmatprep.subr.mxu0 0.0
  %7839 = vmatpush1.msra.mxu0 0.0
  %7840 = vmatprep.subr.mxu0 0.0
  %7841 = vmatpush1.msra.mxu0 0.0
  %7842 = vmatprep.subr.mxu0 0.0
  %7843 = vmatpush1.msra.mxu0 0.0
  %7844 = vmatprep.subr.mxu0 0.0
  %7845 = vmatpush1.msra.mxu0 0.0
  %7846 = vmatprep.subr.mxu0 0.0
  %7847 = vmatpush1.msra.mxu0 0.0
  %7848 = vmatprep.subr.mxu0 0.0
  %7849 = vmatpush1.msra.mxu0 0.0
  %7850 = vmatprep.subr.mxu0 0.0
  %7851 = vmatpush1.msra.mxu0 0.0
  %7852 = vmatprep.subr.mxu0 0.0
  %7853 = vmatpush1.msra.mxu0 0.0
  %7854 = vmatprep.subr.mxu0 0.0
  %7855 = vmatpush1.msra.mxu0 0.0
  %7856 = vmatprep.subr.mxu0 0.0
  %7857 = vmatpush1.msra.mxu0 0.0
  %7858 = vmatprep.subr.mxu0 0.0
  %7859 = vmatpush1.msra.mxu0 0.0
  %7860 = vmatprep.subr.mxu0 0.0
  %7861 = vmatpush1.msra.mxu0 0.0
  %7862 = vmatprep.subr.mxu0 0.0
  %7863 = vmatpush1.msra.mxu0 %v7836
  %7864 = vmatprep.subr.mxu0 0.0
  %7865 = vmatpush1.msra.mxu0 %v7777
  %7866 = vmatprep.subr.mxu0 0.0
  %7867 = vmatpush1.msra.mxu0 %v7776
  %7868 = vmatprep.subr.mxu0 0.0
  %7869 = vmatpush1.msra.mxu0 %v7775
  %7870 = vmatprep.subr.mxu0 0.0
  %7871 = vmatpush2.msra.mxu0 0.0
  %7872 = vmatprep.subr.mxu0 0.0
  %7873 = vmatpush2.msra.mxu0 0.0
  %7874 = vmatprep.subr.mxu0 0.0
  %7875 = vmatpush2.msra.mxu0 0.0
  %7876 = vmatprep.subr.mxu0 0.0
  %7877 = vmatpush2.msra.mxu0 0.0
  %7878 = vmatprep.subr.mxu0 0.0
  %7879 = vmatpush2.msra.mxu0 0.0
  %7880 = vmatprep.subr.mxu0 0.0
  %7881 = vmatpush2.msra.mxu0 0.0
  %7882 = vmatprep.subr.mxu0 0.0
  %7883 = vmatpush2.msra.mxu0 0.0
  %7884 = vmatprep.subr.mxu0 0.0
  %7885 = vmatpush2.msra.mxu0 0.0
  %7886 = vmatprep.subr.mxu0 0.0
  %7887 = vmatpush2.msra.mxu0 0.0
  %7888 = vmatprep.subr.mxu0 0.0
  %7889 = vmatpush2.msra.mxu0 0.0
  %7890 = vmatprep.subr.mxu0 0.0
  %7891 = vmatpush2.msra.mxu0 0.0
  %7892 = vmatprep.subr.mxu0 0.0
  %7893 = vmatpush2.msra.mxu0 0.0
  %7894 = vmatprep.subr.mxu0 0.0
  %7895 = vmatpush2.msra.mxu0 0.0
  %7896 = vmatprep.subr.mxu0 0.0
  %7897 = vmatpush2.msra.mxu0 0.0
  %7898 = vmatprep.subr.mxu0 0.0
  %7899 = vmatpush2.msra.mxu0 0.0
  %7900 = vmatprep.subr.mxu0 0.0
  %7901 = vmatpush2.msra.mxu0 0.0
  %7902 = vmatprep.mubr.f32.mxu0 0.0
  %7903 = vmatmul.mubr.f32.gmra.mxu0 %v7827
  %v7904 = vpop.f32.mrf.mxu0
  %v7905 = vadd.f32 0.0, %v7904
  %v7906 = vpop.f32.mrf.mxu0
  %7907 = vmatprep.mubr.f32.mxu0 0.0
  %7908 = vmatmul.mubr.f32.gmra.mxu0 %v7830
  %v7909 = vpop.f32.mrf.mxu0
  %v7910 = vadd.f32 0.0, %v7909
  %v7911 = vpop.f32.mrf.mxu0
  %7912 = vmatprep.mubr.f32.mxu0 0.0
  %7913 = vmatmul.mubr.f32.gmra.mxu0 %v7833
  %v7914 = vpop.f32.mrf.mxu0
  %v7915 = vadd.f32 0.0, %v7914
  %v7916 = vpop.f32.mrf.mxu0
  %7917 = vdwg.mxu0
  %s7918 = scalar_lea.vmem %s2, 1488
  %v7919 = vld [vmem:[%s7918] sm:$0xff]
  %v7920 = vld [vmem:[%s7918 + $0x8] sm:$0xff]
  %v7921 = vld [vmem:[%s7918 + $0x10] sm:$0x3]
  %s7922 = scalar_lea.vmem %s2, 1512
  %v7923 = vld [vmem:[%s7922] sm:$0xff]
  %v7924 = vld [vmem:[%s7922 + $0x8] sm:$0xff]
  %v7925 = vld [vmem:[%s7922 + $0x10] sm:$0x3]
  %v7926 = vsel %vm23, %v7905, 0.0
  %7927 = vadd.xlane.f32.xlu0 %v7926
  %v7928 = vpop.xlane.xlu0 %7927
  %v7929 = vsel %vm23, %v7910, 0.0
  %7930 = vadd.xlane.f32.xlu0 %v7929
  %v7931 = vpop.xlane.xlu0 %7930
  %v7932 = vsel %vm127, %v7915, 0.0
  %7933 = vadd.xlane.f32.xlu0 %v7932
  %v7934 = vpop.xlane.xlu0 %7933
  %v7935 = vmul.f32 %v7905, %v7905
  %v7936 = vmul.f32 %v7910, %v7910
  %v7937 = vmul.f32 %v7915, %v7915
  %v7938 = vsel %vm23, %v7935, 0.0
  %7939 = vadd.xlane.f32.xlu0 %v7938
  %v7940 = vpop.xlane.xlu0 %7939
  %v7941 = vsel %vm23, %v7936, 0.0
  %7942 = vadd.xlane.f32.xlu0 %v7941
  %v7943 = vpop.xlane.xlu0 %7942
  %v7944 = vsel %vm127, %v7937, 0.0
  %7945 = vadd.xlane.f32.xlu0 %v7944
  %v7946 = vpop.xlane.xlu0 %7945
  %v7947 = vmul.f32 %v7928, 0.1
  %v7948 = vmul.f32 %v7931, 0.1
  %v7949 = vmul.f32 %v7934, 0.1
  %v7950 = vmul.f32 %v7940, 0.1
  %v7951 = vmul.f32 %v7943, 0.1
  %v7952 = vmul.f32 %v7946, 0.1
  %v7953 = vmul.f32 %v7947, %v7947
  %v7954 = vmul.f32 %v7948, %v7948
  %v7955 = vmul.f32 %v7949, %v7949
  %v7956 = vsub.f32 %v7950, %v7953
  %v7957 = vsub.f32 %v7951, %v7954
  %v7958 = vsub.f32 %v7952, %v7955
  %v7959 = vmax.f32 %v7956, 0.0
  %v7960 = vmax.f32 %v7957, 0.0
  %v7961 = vmax.f32 %v7958, 0.0
  %v7962 = vadd.f32 %v7959, 1e-05
  %v7963 = vadd.f32 %v7960, 1e-05
  %v7964 = vadd.f32 %v7961, 1e-05
  %v7965 = vrsqrt.pop %v7962
  %v7966 = vrsqrt.pop %v7963
  %v7967 = vrsqrt.pop %v7964
  %v7968 = vmul.f32 %v7919, %v7965
  %v7969 = vmul.f32 %v7920, %v7966
  %v7970 = vmul.f32 %v7921, %v7967
  %v7971 = vmul.f32 %v7947, %v7968
  %v7972 = vmul.f32 %v7948, %v7969
  %v7973 = vmul.f32 %v7949, %v7970
  %v7974 = vsub.f32 %v7923, %v7971
  %v7975 = vsub.f32 %v7924, %v7972
  %v7976 = vsub.f32 %v7925, %v7973
  %7978 = vset.pattern.permute.xlu0 0
  %7979 = vperm.xlu0 %7978, %v7968
  %v7980 = vpop.permute.xlu0 %7979
  %7983 = vset.pattern.permute.xlu0 0
  %7984 = vperm.xlu0 %7983, %v7969
  %v7985 = vpop.permute.xlu0 %7984
  %7988 = vset.pattern.permute.xlu0 0
  %7989 = vperm.xlu0 %7988, %v7970
  %v7990 = vpop.permute.xlu0 %7989
  %v7992 = vmul.f32 %v7905, %v7980
  %v7993 = vmul.f32 %v7910, %v7985
  %v7994 = vmul.f32 %v7915, %v7990
  %7996 = vset.pattern.permute.xlu0 0
  %7997 = vperm.xlu0 %7996, %v7974
  %v7998 = vpop.permute.xlu0 %7997
  %8001 = vset.pattern.permute.xlu0 0
  %8002 = vperm.xlu0 %8001, %v7975
  %v8003 = vpop.permute.xlu0 %8002
  %8006 = vset.pattern.permute.xlu0 0
  %8007 = vperm.xlu0 %8006, %v7976
  %v8008 = vpop.permute.xlu0 %8007
  %v8010 = vadd.f32 %v7992, %v7998
  %v8011 = vadd.f32 %v7993, %v8003
  %v8012 = vadd.f32 %v7994, %v8008
  %v8013 = vadd.f32 %v8010, %v7529
  %v8014 = vadd.f32 %v8011, %v7530
  %v8015 = vadd.f32 %v8012, %v7531
  %v8016 = vmax.f32 %v8013, 0.0
  %v8017 = vmax.f32 %v8014, 0.0
  %v8018 = vmax.f32 %v8015, 0.0
  %s8019 = scalar_lea.vmem %s1, 1024
  %v8020 = vld [vmem:[%s8019] sm:$0xff]
  %v8021 = vld [vmem:[%s8019 + $0x8] sm:$0xff]
  %v8022 = vld [vmem:[%s8019 + $0x10] sm:$0xff]
  %v8023 = vld [vmem:[%s8019 + $0x18] sm:$0x7f]
  %v8027 = vrot.slane %v8016, 7
  %v8028 = vrot.slane %v8017, 7
  %v8029 = vsel %vm231, %v8027, %v8028
  %v8030 = vrot.slane %v8018, 7
  %v8031 = vsel %vm231, %v8028, %v8030
  %v8035 = vsel %vm231, 0.0, %v8027
  %v8036 = vrot.slane %v8016, 1
  %v8037 = vrot.slane %v8017, 1
  %v8038 = vsel %vm241, %v8036, %v8037
  %v8039 = vrot.slane %v8018, 1
  %v8040 = vsel %vm241, %v8037, %v8039
  %v8042 = vsel %vm231, %v8039, 0.0
  %8043 = vrot.lane.b32.xlu0 %v8016, 10
  %v8044 = vpop.permute.xlu0 %8043
  %8045 = vrot.lane.b32.xlu0 %v8017, 10
  %v8046 = vpop.permute.xlu0 %8045
  %8047 = vrot.lane.b32.xlu0 %v8018, 10
  %v8048 = vpop.permute.xlu0 %8047
  %8053 = vrot.lane.b32.xlu0 %v8038, 20
  %v8054 = vpop.permute.xlu0 %8053
  %8055 = vrot.lane.b32.xlu0 %v8040, 20
  %v8056 = vpop.permute.xlu0 %8055
  %8057 = vrot.lane.b32.xlu0 %v8042, 20
  %v8058 = vpop.permute.xlu0 %8057
  %v8062 = vsel %vm23, %v8035, %v8044
  %v8063 = vsel %vm23, %v8029, %v8046
  %v8064 = vsel %vm23, %v8031, %v8048
  %v8065 = vsel %vm271, %v8062, %v8054
  %v8066 = vsel %vm271, %v8063, %v8056
  %v8067 = vsel %vm271, %v8064, %v8058
  %v8068 = vsel %vm275, %v8065, 1.0
  %v8069 = vsel %vm275, %v8066, 1.0
  %v8070 = vsel %vm275, %v8067, 1.0
  %v8072 = vsel %vm279, %v8068, 0
  %v8075 = vsel %vm279, %v8069, 0
  %v8078 = vsel %vm279, %v8070, 0
  %v8081 = vsel %vm241, %v8023, 0
  %8083 = vmatprep.subr.mxu0 0.0
  %8084 = vmatpush1.msra.mxu0 0.0
  %8085 = vmatprep.subr.mxu0 0.0
  %8086 = vmatpush1.msra.mxu0 0.0
  %8087 = vmatprep.subr.mxu0 0.0
  %8088 = vmatpush1.msra.mxu0 0.0
  %8089 = vmatprep.subr.mxu0 0.0
  %8090 = vmatpush1.msra.mxu0 0.0
  %8091 = vmatprep.subr.mxu0 0.0
  %8092 = vmatpush1.msra.mxu0 0.0
  %8093 = vmatprep.subr.mxu0 0.0
  %8094 = vmatpush1.msra.mxu0 0.0
  %8095 = vmatprep.subr.mxu0 0.0
  %8096 = vmatpush1.msra.mxu0 0.0
  %8097 = vmatprep.subr.mxu0 0.0
  %8098 = vmatpush1.msra.mxu0 0.0
  %8099 = vmatprep.subr.mxu0 0.0
  %8100 = vmatpush1.msra.mxu0 0.0
  %8101 = vmatprep.subr.mxu0 0.0
  %8102 = vmatpush1.msra.mxu0 0.0
  %8103 = vmatprep.subr.mxu0 0.0
  %8104 = vmatpush1.msra.mxu0 0.0
  %8105 = vmatprep.subr.mxu0 0.0
  %8106 = vmatpush1.msra.mxu0 0.0
  %8107 = vmatprep.subr.mxu0 0.0
  %8108 = vmatpush1.msra.mxu0 %v8081
  %8109 = vmatprep.subr.mxu0 0.0
  %8110 = vmatpush1.msra.mxu0 %v8022
  %8111 = vmatprep.subr.mxu0 0.0
  %8112 = vmatpush1.msra.mxu0 %v8021
  %8113 = vmatprep.subr.mxu0 0.0
  %8114 = vmatpush1.msra.mxu0 %v8020
  %8115 = vmatprep.subr.mxu0 0.0
  %8116 = vmatpush2.msra.mxu0 0.0
  %8117 = vmatprep.subr.mxu0 0.0
  %8118 = vmatpush2.msra.mxu0 0.0
  %8119 = vmatprep.subr.mxu0 0.0
  %8120 = vmatpush2.msra.mxu0 0.0
  %8121 = vmatprep.subr.mxu0 0.0
  %8122 = vmatpush2.msra.mxu0 0.0
  %8123 = vmatprep.subr.mxu0 0.0
  %8124 = vmatpush2.msra.mxu0 0.0
  %8125 = vmatprep.subr.mxu0 0.0
  %8126 = vmatpush2.msra.mxu0 0.0
  %8127 = vmatprep.subr.mxu0 0.0
  %8128 = vmatpush2.msra.mxu0 0.0
  %8129 = vmatprep.subr.mxu0 0.0
  %8130 = vmatpush2.msra.mxu0 0.0
  %8131 = vmatprep.subr.mxu0 0.0
  %8132 = vmatpush2.msra.mxu0 0.0
  %8133 = vmatprep.subr.mxu0 0.0
  %8134 = vmatpush2.msra.mxu0 0.0
  %8135 = vmatprep.subr.mxu0 0.0
  %8136 = vmatpush2.msra.mxu0 0.0
  %8137 = vmatprep.subr.mxu0 0.0
  %8138 = vmatpush2.msra.mxu0 0.0
  %8139 = vmatprep.subr.mxu0 0.0
  %8140 = vmatpush2.msra.mxu0 0.0
  %8141 = vmatprep.subr.mxu0 0.0
  %8142 = vmatpush2.msra.mxu0 0.0
  %8143 = vmatprep.subr.mxu0 0.0
  %8144 = vmatpush2.msra.mxu0 0.0
  %8145 = vmatprep.subr.mxu0 0.0
  %8146 = vmatpush2.msra.mxu0 0.0
  %8147 = vmatprep.mubr.f32.mxu0 0.0
  %8148 = vmatmul.mubr.f32.gmra.mxu0 %v8072
  %v8149 = vpop.f32.mrf.mxu0
  %v8150 = vadd.f32 0.0, %v8149
  %v8151 = vpop.f32.mrf.mxu0
  %8152 = vmatprep.mubr.f32.mxu0 0.0
  %8153 = vmatmul.mubr.f32.gmra.mxu0 %v8075
  %v8154 = vpop.f32.mrf.mxu0
  %v8155 = vadd.f32 0.0, %v8154
  %v8156 = vpop.f32.mrf.mxu0
  %8157 = vmatprep.mubr.f32.mxu0 0.0
  %8158 = vmatmul.mubr.f32.gmra.mxu0 %v8078
  %v8159 = vpop.f32.mrf.mxu0
  %v8160 = vadd.f32 0.0, %v8159
  %v8161 = vpop.f32.mrf.mxu0
  %8162 = vdwg.mxu0
  %s8163 = scalar_lea.vmem %s2, 1536
  %v8164 = vld [vmem:[%s8163] sm:$0xff]
  %v8165 = vld [vmem:[%s8163 + $0x8] sm:$0xff]
  %v8166 = vld [vmem:[%s8163 + $0x10] sm:$0x3]
  %s8167 = scalar_lea.vmem %s2, 1560
  %v8168 = vld [vmem:[%s8167] sm:$0xff]
  %v8169 = vld [vmem:[%s8167 + $0x8] sm:$0xff]
  %v8170 = vld [vmem:[%s8167 + $0x10] sm:$0x3]
  %v8171 = vsel %vm23, %v8150, 0.0
  %8172 = vadd.xlane.f32.xlu0 %v8171
  %v8173 = vpop.xlane.xlu0 %8172
  %v8174 = vsel %vm23, %v8155, 0.0
  %8175 = vadd.xlane.f32.xlu0 %v8174
  %v8176 = vpop.xlane.xlu0 %8175
  %v8177 = vsel %vm127, %v8160, 0.0
  %8178 = vadd.xlane.f32.xlu0 %v8177
  %v8179 = vpop.xlane.xlu0 %8178
  %v8180 = vmul.f32 %v8150, %v8150
  %v8181 = vmul.f32 %v8155, %v8155
  %v8182 = vmul.f32 %v8160, %v8160
  %v8183 = vsel %vm23, %v8180, 0.0
  %8184 = vadd.xlane.f32.xlu0 %v8183
  %v8185 = vpop.xlane.xlu0 %8184
  %v8186 = vsel %vm23, %v8181, 0.0
  %8187 = vadd.xlane.f32.xlu0 %v8186
  %v8188 = vpop.xlane.xlu0 %8187
  %v8189 = vsel %vm127, %v8182, 0.0
  %8190 = vadd.xlane.f32.xlu0 %v8189
  %v8191 = vpop.xlane.xlu0 %8190
  %v8192 = vmul.f32 %v8173, 0.1
  %v8193 = vmul.f32 %v8176, 0.1
  %v8194 = vmul.f32 %v8179, 0.1
  %v8195 = vmul.f32 %v8185, 0.1
  %v8196 = vmul.f32 %v8188, 0.1
  %v8197 = vmul.f32 %v8191, 0.1
  %v8198 = vmul.f32 %v8192, %v8192
  %v8199 = vmul.f32 %v8193, %v8193
  %v8200 = vmul.f32 %v8194, %v8194
  %v8201 = vsub.f32 %v8195, %v8198
  %v8202 = vsub.f32 %v8196, %v8199
  %v8203 = vsub.f32 %v8197, %v8200
  %v8204 = vmax.f32 %v8201, 0.0
  %v8205 = vmax.f32 %v8202, 0.0
  %v8206 = vmax.f32 %v8203, 0.0
  %v8207 = vadd.f32 %v8204, 1e-05
  %v8208 = vadd.f32 %v8205, 1e-05
  %v8209 = vadd.f32 %v8206, 1e-05
  %v8210 = vrsqrt.pop %v8207
  %v8211 = vrsqrt.pop %v8208
  %v8212 = vrsqrt.pop %v8209
  %v8213 = vmul.f32 %v8164, %v8210
  %v8214 = vmul.f32 %v8165, %v8211
  %v8215 = vmul.f32 %v8166, %v8212
  %v8216 = vmul.f32 %v8192, %v8213
  %v8217 = vmul.f32 %v8193, %v8214
  %v8218 = vmul.f32 %v8194, %v8215
  %v8219 = vsub.f32 %v8168, %v8216
  %v8220 = vsub.f32 %v8169, %v8217
  %v8221 = vsub.f32 %v8170, %v8218
  %8223 = vset.pattern.permute.xlu0 0
  %8224 = vperm.xlu0 %8223, %v8213
  %v8225 = vpop.permute.xlu0 %8224
  %8228 = vset.pattern.permute.xlu0 0
  %8229 = vperm.xlu0 %8228, %v8214
  %v8230 = vpop.permute.xlu0 %8229
  %8233 = vset.pattern.permute.xlu0 0
  %8234 = vperm.xlu0 %8233, %v8215
  %v8235 = vpop.permute.xlu0 %8234
  %v8237 = vmul.f32 %v8150, %v8225
  %v8238 = vmul.f32 %v8155, %v8230
  %v8239 = vmul.f32 %v8160, %v8235
  %8241 = vset.pattern.permute.xlu0 0
  %8242 = vperm.xlu0 %8241, %v8219
  %v8243 = vpop.permute.xlu0 %8242
  %8246 = vset.pattern.permute.xlu0 0
  %8247 = vperm.xlu0 %8246, %v8220
  %v8248 = vpop.permute.xlu0 %8247
  %8251 = vset.pattern.permute.xlu0 0
  %8252 = vperm.xlu0 %8251, %v8221
  %v8253 = vpop.permute.xlu0 %8252
  %v8255 = vadd.f32 %v8237, %v8243
  %v8256 = vadd.f32 %v8238, %v8248
  %v8257 = vadd.f32 %v8239, %v8253
  %v8258 = vmax.f32 %v8255, 0.0
  %v8259 = vmax.f32 %v8256, 0.0
  %v8260 = vmax.f32 %v8257, 0.0
  %s8261 = scalar_lea.vmem %s1, 1056
  %v8262 = vld [vmem:[%s8261] sm:$0xff]
  %v8263 = vld [vmem:[%s8261 + $0x8] sm:$0xff]
  %v8264 = vld [vmem:[%s8261 + $0x10] sm:$0xff]
  %v8265 = vld [vmem:[%s8261 + $0x18] sm:$0x7f]
  %v8269 = vrot.slane %v8258, 7
  %v8270 = vrot.slane %v8259, 7
  %v8271 = vsel %vm231, %v8269, %v8270
  %v8272 = vrot.slane %v8260, 7
  %v8273 = vsel %vm231, %v8270, %v8272
  %v8277 = vsel %vm231, 0.0, %v8269
  %v8278 = vrot.slane %v8258, 1
  %v8279 = vrot.slane %v8259, 1
  %v8280 = vsel %vm241, %v8278, %v8279
  %v8281 = vrot.slane %v8260, 1
  %v8282 = vsel %vm241, %v8279, %v8281
  %v8284 = vsel %vm231, %v8281, 0.0
  %8285 = vrot.lane.b32.xlu0 %v8258, 10
  %v8286 = vpop.permute.xlu0 %8285
  %8287 = vrot.lane.b32.xlu0 %v8259, 10
  %v8288 = vpop.permute.xlu0 %8287
  %8289 = vrot.lane.b32.xlu0 %v8260, 10
  %v8290 = vpop.permute.xlu0 %8289
  %8295 = vrot.lane.b32.xlu0 %v8280, 20
  %v8296 = vpop.permute.xlu0 %8295
  %8297 = vrot.lane.b32.xlu0 %v8282, 20
  %v8298 = vpop.permute.xlu0 %8297
  %8299 = vrot.lane.b32.xlu0 %v8284, 20
  %v8300 = vpop.permute.xlu0 %8299
  %v8304 = vsel %vm23, %v8277, %v8286
  %v8305 = vsel %vm23, %v8271, %v8288
  %v8306 = vsel %vm23, %v8273, %v8290
  %v8307 = vsel %vm271, %v8304, %v8296
  %v8308 = vsel %vm271, %v8305, %v8298
  %v8309 = vsel %vm271, %v8306, %v8300
  %v8310 = vsel %vm275, %v8307, 1.0
  %v8311 = vsel %vm275, %v8308, 1.0
  %v8312 = vsel %vm275, %v8309, 1.0
  %v8314 = vsel %vm279, %v8310, 0
  %v8317 = vsel %vm279, %v8311, 0
  %v8320 = vsel %vm279, %v8312, 0
  %v8323 = vsel %vm241, %v8265, 0
  %8325 = vmatprep.subr.mxu0 0.0
  %8326 = vmatpush1.msra.mxu0 0.0
  %8327 = vmatprep.subr.mxu0 0.0
  %8328 = vmatpush1.msra.mxu0 0.0
  %8329 = vmatprep.subr.mxu0 0.0
  %8330 = vmatpush1.msra.mxu0 0.0
  %8331 = vmatprep.subr.mxu0 0.0
  %8332 = vmatpush1.msra.mxu0 0.0
  %8333 = vmatprep.subr.mxu0 0.0
  %8334 = vmatpush1.msra.mxu0 0.0
  %8335 = vmatprep.subr.mxu0 0.0
  %8336 = vmatpush1.msra.mxu0 0.0
  %8337 = vmatprep.subr.mxu0 0.0
  %8338 = vmatpush1.msra.mxu0 0.0
  %8339 = vmatprep.subr.mxu0 0.0
  %8340 = vmatpush1.msra.mxu0 0.0
  %8341 = vmatprep.subr.mxu0 0.0
  %8342 = vmatpush1.msra.mxu0 0.0
  %8343 = vmatprep.subr.mxu0 0.0
  %8344 = vmatpush1.msra.mxu0 0.0
  %8345 = vmatprep.subr.mxu0 0.0
  %8346 = vmatpush1.msra.mxu0 0.0
  %8347 = vmatprep.subr.mxu0 0.0
  %8348 = vmatpush1.msra.mxu0 0.0
  %8349 = vmatprep.subr.mxu0 0.0
  %8350 = vmatpush1.msra.mxu0 %v8323
  %8351 = vmatprep.subr.mxu0 0.0
  %8352 = vmatpush1.msra.mxu0 %v8264
  %8353 = vmatprep.subr.mxu0 0.0
  %8354 = vmatpush1.msra.mxu0 %v8263
  %8355 = vmatprep.subr.mxu0 0.0
  %8356 = vmatpush1.msra.mxu0 %v8262
  %8357 = vmatprep.subr.mxu0 0.0
  %8358 = vmatpush2.msra.mxu0 0.0
  %8359 = vmatprep.subr.mxu0 0.0
  %8360 = vmatpush2.msra.mxu0 0.0
  %8361 = vmatprep.subr.mxu0 0.0
  %8362 = vmatpush2.msra.mxu0 0.0
  %8363 = vmatprep.subr.mxu0 0.0
  %8364 = vmatpush2.msra.mxu0 0.0
  %8365 = vmatprep.subr.mxu0 0.0
  %8366 = vmatpush2.msra.mxu0 0.0
  %8367 = vmatprep.subr.mxu0 0.0
  %8368 = vmatpush2.msra.mxu0 0.0
  %8369 = vmatprep.subr.mxu0 0.0
  %8370 = vmatpush2.msra.mxu0 0.0
  %8371 = vmatprep.subr.mxu0 0.0
  %8372 = vmatpush2.msra.mxu0 0.0
  %8373 = vmatprep.subr.mxu0 0.0
  %8374 = vmatpush2.msra.mxu0 0.0
  %8375 = vmatprep.subr.mxu0 0.0
  %8376 = vmatpush2.msra.mxu0 0.0
  %8377 = vmatprep.subr.mxu0 0.0
  %8378 = vmatpush2.msra.mxu0 0.0
  %8379 = vmatprep.subr.mxu0 0.0
  %8380 = vmatpush2.msra.mxu0 0.0
  %8381 = vmatprep.subr.mxu0 0.0
  %8382 = vmatpush2.msra.mxu0 0.0
  %8383 = vmatprep.subr.mxu0 0.0
  %8384 = vmatpush2.msra.mxu0 0.0
  %8385 = vmatprep.subr.mxu0 0.0
  %8386 = vmatpush2.msra.mxu0 0.0
  %8387 = vmatprep.subr.mxu0 0.0
  %8388 = vmatpush2.msra.mxu0 0.0
  %8389 = vmatprep.mubr.f32.mxu0 0.0
  %8390 = vmatmul.mubr.f32.gmra.mxu0 %v8314
  %v8391 = vpop.f32.mrf.mxu0
  %v8392 = vadd.f32 0.0, %v8391
  %v8393 = vpop.f32.mrf.mxu0
  %8394 = vmatprep.mubr.f32.mxu0 0.0
  %8395 = vmatmul.mubr.f32.gmra.mxu0 %v8317
  %v8396 = vpop.f32.mrf.mxu0
  %v8397 = vadd.f32 0.0, %v8396
  %v8398 = vpop.f32.mrf.mxu0
  %8399 = vmatprep.mubr.f32.mxu0 0.0
  %8400 = vmatmul.mubr.f32.gmra.mxu0 %v8320
  %v8401 = vpop.f32.mrf.mxu0
  %v8402 = vadd.f32 0.0, %v8401
  %v8403 = vpop.f32.mrf.mxu0
  %8404 = vdwg.mxu0
  %s8405 = scalar_lea.vmem %s2, 1584
  %v8406 = vld [vmem:[%s8405] sm:$0xff]
  %v8407 = vld [vmem:[%s8405 + $0x8] sm:$0xff]
  %v8408 = vld [vmem:[%s8405 + $0x10] sm:$0x3]
  %s8409 = scalar_lea.vmem %s2, 1608
  %v8410 = vld [vmem:[%s8409] sm:$0xff]
  %v8411 = vld [vmem:[%s8409 + $0x8] sm:$0xff]
  %v8412 = vld [vmem:[%s8409 + $0x10] sm:$0x3]
  %v8413 = vsel %vm23, %v8392, 0.0
  %8414 = vadd.xlane.f32.xlu0 %v8413
  %v8415 = vpop.xlane.xlu0 %8414
  %v8416 = vsel %vm23, %v8397, 0.0
  %8417 = vadd.xlane.f32.xlu0 %v8416
  %v8418 = vpop.xlane.xlu0 %8417
  %v8419 = vsel %vm127, %v8402, 0.0
  %8420 = vadd.xlane.f32.xlu0 %v8419
  %v8421 = vpop.xlane.xlu0 %8420
  %v8422 = vmul.f32 %v8392, %v8392
  %v8423 = vmul.f32 %v8397, %v8397
  %v8424 = vmul.f32 %v8402, %v8402
  %v8425 = vsel %vm23, %v8422, 0.0
  %8426 = vadd.xlane.f32.xlu0 %v8425
  %v8427 = vpop.xlane.xlu0 %8426
  %v8428 = vsel %vm23, %v8423, 0.0
  %8429 = vadd.xlane.f32.xlu0 %v8428
  %v8430 = vpop.xlane.xlu0 %8429
  %v8431 = vsel %vm127, %v8424, 0.0
  %8432 = vadd.xlane.f32.xlu0 %v8431
  %v8433 = vpop.xlane.xlu0 %8432
  %v8434 = vmul.f32 %v8415, 0.1
  %v8435 = vmul.f32 %v8418, 0.1
  %v8436 = vmul.f32 %v8421, 0.1
  %v8437 = vmul.f32 %v8427, 0.1
  %v8438 = vmul.f32 %v8430, 0.1
  %v8439 = vmul.f32 %v8433, 0.1
  %v8440 = vmul.f32 %v8434, %v8434
  %v8441 = vmul.f32 %v8435, %v8435
  %v8442 = vmul.f32 %v8436, %v8436
  %v8443 = vsub.f32 %v8437, %v8440
  %v8444 = vsub.f32 %v8438, %v8441
  %v8445 = vsub.f32 %v8439, %v8442
  %v8446 = vmax.f32 %v8443, 0.0
  %v8447 = vmax.f32 %v8444, 0.0
  %v8448 = vmax.f32 %v8445, 0.0
  %v8449 = vadd.f32 %v8446, 1e-05
  %v8450 = vadd.f32 %v8447, 1e-05
  %v8451 = vadd.f32 %v8448, 1e-05
  %v8452 = vrsqrt.pop %v8449
  %v8453 = vrsqrt.pop %v8450
  %v8454 = vrsqrt.pop %v8451
  %v8455 = vmul.f32 %v8406, %v8452
  %v8456 = vmul.f32 %v8407, %v8453
  %v8457 = vmul.f32 %v8408, %v8454
  %v8458 = vmul.f32 %v8434, %v8455
  %v8459 = vmul.f32 %v8435, %v8456
  %v8460 = vmul.f32 %v8436, %v8457
  %v8461 = vsub.f32 %v8410, %v8458
  %v8462 = vsub.f32 %v8411, %v8459
  %v8463 = vsub.f32 %v8412, %v8460
  %8465 = vset.pattern.permute.xlu0 0
  %8466 = vperm.xlu0 %8465, %v8455
  %v8467 = vpop.permute.xlu0 %8466
  %8470 = vset.pattern.permute.xlu0 0
  %8471 = vperm.xlu0 %8470, %v8456
  %v8472 = vpop.permute.xlu0 %8471
  %8475 = vset.pattern.permute.xlu0 0
  %8476 = vperm.xlu0 %8475, %v8457
  %v8477 = vpop.permute.xlu0 %8476
  %v8479 = vmul.f32 %v8392, %v8467
  %v8480 = vmul.f32 %v8397, %v8472
  %v8481 = vmul.f32 %v8402, %v8477
  %8483 = vset.pattern.permute.xlu0 0
  %8484 = vperm.xlu0 %8483, %v8461
  %v8485 = vpop.permute.xlu0 %8484
  %8488 = vset.pattern.permute.xlu0 0
  %8489 = vperm.xlu0 %8488, %v8462
  %v8490 = vpop.permute.xlu0 %8489
  %8493 = vset.pattern.permute.xlu0 0
  %8494 = vperm.xlu0 %8493, %v8463
  %v8495 = vpop.permute.xlu0 %8494
  %v8497 = vadd.f32 %v8479, %v8485
  %v8498 = vadd.f32 %v8480, %v8490
  %v8499 = vadd.f32 %v8481, %v8495
  %v8500 = vadd.f32 %v8497, %v8016
  %v8501 = vadd.f32 %v8498, %v8017
  %v8502 = vadd.f32 %v8499, %v8018
  %v8503 = vmax.f32 %v8500, 0.0
  %v8504 = vmax.f32 %v8501, 0.0
  %v8505 = vmax.f32 %v8502, 0.0
  %s8506 = scalar_lea.vmem %s1, 1088
  %v8507 = vld [vmem:[%s8506] sm:$0xff]
  %v8508 = vld [vmem:[%s8506 + $0x8] sm:$0xff]
  %v8509 = vld [vmem:[%s8506 + $0x10] sm:$0xff]
  %v8510 = vld [vmem:[%s8506 + $0x18] sm:$0x7f]
  %v8514 = vrot.slane %v8503, 7
  %v8515 = vrot.slane %v8504, 7
  %v8516 = vsel %vm231, %v8514, %v8515
  %v8517 = vrot.slane %v8505, 7
  %v8518 = vsel %vm231, %v8515, %v8517
  %v8522 = vsel %vm231, 0.0, %v8514
  %v8523 = vrot.slane %v8503, 1
  %v8524 = vrot.slane %v8504, 1
  %v8525 = vsel %vm241, %v8523, %v8524
  %v8526 = vrot.slane %v8505, 1
  %v8527 = vsel %vm241, %v8524, %v8526
  %v8529 = vsel %vm231, %v8526, 0.0
  %8530 = vrot.lane.b32.xlu0 %v8503, 10
  %v8531 = vpop.permute.xlu0 %8530
  %8532 = vrot.lane.b32.xlu0 %v8504, 10
  %v8533 = vpop.permute.xlu0 %8532
  %8534 = vrot.lane.b32.xlu0 %v8505, 10
  %v8535 = vpop.permute.xlu0 %8534
  %8540 = vrot.lane.b32.xlu0 %v8525, 20
  %v8541 = vpop.permute.xlu0 %8540
  %8542 = vrot.lane.b32.xlu0 %v8527, 20
  %v8543 = vpop.permute.xlu0 %8542
  %8544 = vrot.lane.b32.xlu0 %v8529, 20
  %v8545 = vpop.permute.xlu0 %8544
  %v8549 = vsel %vm23, %v8522, %v8531
  %v8550 = vsel %vm23, %v8516, %v8533
  %v8551 = vsel %vm23, %v8518, %v8535
  %v8552 = vsel %vm271, %v8549, %v8541
  %v8553 = vsel %vm271, %v8550, %v8543
  %v8554 = vsel %vm271, %v8551, %v8545
  %v8555 = vsel %vm275, %v8552, 1.0
  %v8556 = vsel %vm275, %v8553, 1.0
  %v8557 = vsel %vm275, %v8554, 1.0
  %v8559 = vsel %vm279, %v8555, 0
  %v8562 = vsel %vm279, %v8556, 0
  %v8565 = vsel %vm279, %v8557, 0
  %v8568 = vsel %vm241, %v8510, 0
  %8570 = vmatprep.subr.mxu0 0.0
  %8571 = vmatpush1.msra.mxu0 0.0
  %8572 = vmatprep.subr.mxu0 0.0
  %8573 = vmatpush1.msra.mxu0 0.0
  %8574 = vmatprep.subr.mxu0 0.0
  %8575 = vmatpush1.msra.mxu0 0.0
  %8576 = vmatprep.subr.mxu0 0.0
  %8577 = vmatpush1.msra.mxu0 0.0
  %8578 = vmatprep.subr.mxu0 0.0
  %8579 = vmatpush1.msra.mxu0 0.0
  %8580 = vmatprep.subr.mxu0 0.0
  %8581 = vmatpush1.msra.mxu0 0.0
  %8582 = vmatprep.subr.mxu0 0.0
  %8583 = vmatpush1.msra.mxu0 0.0
  %8584 = vmatprep.subr.mxu0 0.0
  %8585 = vmatpush1.msra.mxu0 0.0
  %8586 = vmatprep.subr.mxu0 0.0
  %8587 = vmatpush1.msra.mxu0 0.0
  %8588 = vmatprep.subr.mxu0 0.0
  %8589 = vmatpush1.msra.mxu0 0.0
  %8590 = vmatprep.subr.mxu0 0.0
  %8591 = vmatpush1.msra.mxu0 0.0
  %8592 = vmatprep.subr.mxu0 0.0
  %8593 = vmatpush1.msra.mxu0 0.0
  %8594 = vmatprep.subr.mxu0 0.0
  %8595 = vmatpush1.msra.mxu0 %v8568
  %8596 = vmatprep.subr.mxu0 0.0
  %8597 = vmatpush1.msra.mxu0 %v8509
  %8598 = vmatprep.subr.mxu0 0.0
  %8599 = vmatpush1.msra.mxu0 %v8508
  %8600 = vmatprep.subr.mxu0 0.0
  %8601 = vmatpush1.msra.mxu0 %v8507
  %8602 = vmatprep.subr.mxu0 0.0
  %8603 = vmatpush2.msra.mxu0 0.0
  %8604 = vmatprep.subr.mxu0 0.0
  %8605 = vmatpush2.msra.mxu0 0.0
  %8606 = vmatprep.subr.mxu0 0.0
  %8607 = vmatpush2.msra.mxu0 0.0
  %8608 = vmatprep.subr.mxu0 0.0
  %8609 = vmatpush2.msra.mxu0 0.0
  %8610 = vmatprep.subr.mxu0 0.0
  %8611 = vmatpush2.msra.mxu0 0.0
  %8612 = vmatprep.subr.mxu0 0.0
  %8613 = vmatpush2.msra.mxu0 0.0
  %8614 = vmatprep.subr.mxu0 0.0
  %8615 = vmatpush2.msra.mxu0 0.0
  %8616 = vmatprep.subr.mxu0 0.0
  %8617 = vmatpush2.msra.mxu0 0.0
  %8618 = vmatprep.subr.mxu0 0.0
  %8619 = vmatpush2.msra.mxu0 0.0
  %8620 = vmatprep.subr.mxu0 0.0
  %8621 = vmatpush2.msra.mxu0 0.0
  %8622 = vmatprep.subr.mxu0 0.0
  %8623 = vmatpush2.msra.mxu0 0.0
  %8624 = vmatprep.subr.mxu0 0.0
  %8625 = vmatpush2.msra.mxu0 0.0
  %8626 = vmatprep.subr.mxu0 0.0
  %8627 = vmatpush2.msra.mxu0 0.0
  %8628 = vmatprep.subr.mxu0 0.0
  %8629 = vmatpush2.msra.mxu0 0.0
  %8630 = vmatprep.subr.mxu0 0.0
  %8631 = vmatpush2.msra.mxu0 0.0
  %8632 = vmatprep.subr.mxu0 0.0
  %8633 = vmatpush2.msra.mxu0 0.0
  %8634 = vmatprep.mubr.f32.mxu0 0.0
  %8635 = vmatmul.mubr.f32.gmra.mxu0 %v8559
  %v8636 = vpop.f32.mrf.mxu0
  %v8637 = vadd.f32 0.0, %v8636
  %v8638 = vpop.f32.mrf.mxu0
  %8639 = vmatprep.mubr.f32.mxu0 0.0
  %8640 = vmatmul.mubr.f32.gmra.mxu0 %v8562
  %v8641 = vpop.f32.mrf.mxu0
  %v8642 = vadd.f32 0.0, %v8641
  %v8643 = vpop.f32.mrf.mxu0
  %8644 = vmatprep.mubr.f32.mxu0 0.0
  %8645 = vmatmul.mubr.f32.gmra.mxu0 %v8565
  %v8646 = vpop.f32.mrf.mxu0
  %v8647 = vadd.f32 0.0, %v8646
  %v8648 = vpop.f32.mrf.mxu0
  %8649 = vdwg.mxu0
  %s8650 = scalar_lea.vmem %s2, 1632
  %v8651 = vld [vmem:[%s8650] sm:$0xff]
  %v8652 = vld [vmem:[%s8650 + $0x8] sm:$0xff]
  %v8653 = vld [vmem:[%s8650 + $0x10] sm:$0x3]
  %s8654 = scalar_lea.vmem %s2, 1656
  %v8655 = vld [vmem:[%s8654] sm:$0xff]
  %v8656 = vld [vmem:[%s8654 + $0x8] sm:$0xff]
  %v8657 = vld [vmem:[%s8654 + $0x10] sm:$0x3]
  %v8658 = vsel %vm23, %v8637, 0.0
  %8659 = vadd.xlane.f32.xlu0 %v8658
  %v8660 = vpop.xlane.xlu0 %8659
  %v8661 = vsel %vm23, %v8642, 0.0
  %8662 = vadd.xlane.f32.xlu0 %v8661
  %v8663 = vpop.xlane.xlu0 %8662
  %v8664 = vsel %vm127, %v8647, 0.0
  %8665 = vadd.xlane.f32.xlu0 %v8664
  %v8666 = vpop.xlane.xlu0 %8665
  %v8667 = vmul.f32 %v8637, %v8637
  %v8668 = vmul.f32 %v8642, %v8642
  %v8669 = vmul.f32 %v8647, %v8647
  %v8670 = vsel %vm23, %v8667, 0.0
  %8671 = vadd.xlane.f32.xlu0 %v8670
  %v8672 = vpop.xlane.xlu0 %8671
  %v8673 = vsel %vm23, %v8668, 0.0
  %8674 = vadd.xlane.f32.xlu0 %v8673
  %v8675 = vpop.xlane.xlu0 %8674
  %v8676 = vsel %vm127, %v8669, 0.0
  %8677 = vadd.xlane.f32.xlu0 %v8676
  %v8678 = vpop.xlane.xlu0 %8677
  %v8679 = vmul.f32 %v8660, 0.1
  %v8680 = vmul.f32 %v8663, 0.1
  %v8681 = vmul.f32 %v8666, 0.1
  %v8682 = vmul.f32 %v8672, 0.1
  %v8683 = vmul.f32 %v8675, 0.1
  %v8684 = vmul.f32 %v8678, 0.1
  %v8685 = vmul.f32 %v8679, %v8679
  %v8686 = vmul.f32 %v8680, %v8680
  %v8687 = vmul.f32 %v8681, %v8681
  %v8688 = vsub.f32 %v8682, %v8685
  %v8689 = vsub.f32 %v8683, %v8686
  %v8690 = vsub.f32 %v8684, %v8687
  %v8691 = vmax.f32 %v8688, 0.0
  %v8692 = vmax.f32 %v8689, 0.0
  %v8693 = vmax.f32 %v8690, 0.0
  %v8694 = vadd.f32 %v8691, 1e-05
  %v8695 = vadd.f32 %v8692, 1e-05
  %v8696 = vadd.f32 %v8693, 1e-05
  %v8697 = vrsqrt.pop %v8694
  %v8698 = vrsqrt.pop %v8695
  %v8699 = vrsqrt.pop %v8696
  %v8700 = vmul.f32 %v8651, %v8697
  %v8701 = vmul.f32 %v8652, %v8698
  %v8702 = vmul.f32 %v8653, %v8699
  %v8703 = vmul.f32 %v8679, %v8700
  %v8704 = vmul.f32 %v8680, %v8701
  %v8705 = vmul.f32 %v8681, %v8702
  %v8706 = vsub.f32 %v8655, %v8703
  %v8707 = vsub.f32 %v8656, %v8704
  %v8708 = vsub.f32 %v8657, %v8705
  %8710 = vset.pattern.permute.xlu0 0
  %8711 = vperm.xlu0 %8710, %v8700
  %v8712 = vpop.permute.xlu0 %8711
  %8715 = vset.pattern.permute.xlu0 0
  %8716 = vperm.xlu0 %8715, %v8701
  %v8717 = vpop.permute.xlu0 %8716
  %8720 = vset.pattern.permute.xlu0 0
  %8721 = vperm.xlu0 %8720, %v8702
  %v8722 = vpop.permute.xlu0 %8721
  %v8724 = vmul.f32 %v8637, %v8712
  %v8725 = vmul.f32 %v8642, %v8717
  %v8726 = vmul.f32 %v8647, %v8722
  %8728 = vset.pattern.permute.xlu0 0
  %8729 = vperm.xlu0 %8728, %v8706
  %v8730 = vpop.permute.xlu0 %8729
  %8733 = vset.pattern.permute.xlu0 0
  %8734 = vperm.xlu0 %8733, %v8707
  %v8735 = vpop.permute.xlu0 %8734
  %8738 = vset.pattern.permute.xlu0 0
  %8739 = vperm.xlu0 %8738, %v8708
  %v8740 = vpop.permute.xlu0 %8739
  %v8742 = vadd.f32 %v8724, %v8730
  %v8743 = vadd.f32 %v8725, %v8735
  %v8744 = vadd.f32 %v8726, %v8740
  %v8745 = vmax.f32 %v8742, 0.0
  %v8746 = vmax.f32 %v8743, 0.0
  %v8747 = vmax.f32 %v8744, 0.0
  %s8748 = scalar_lea.vmem %s1, 1120
  %v8749 = vld [vmem:[%s8748] sm:$0xff]
  %v8750 = vld [vmem:[%s8748 + $0x8] sm:$0xff]
  %v8751 = vld [vmem:[%s8748 + $0x10] sm:$0xff]
  %v8752 = vld [vmem:[%s8748 + $0x18] sm:$0x7f]
  %v8756 = vrot.slane %v8745, 7
  %v8757 = vrot.slane %v8746, 7
  %v8758 = vsel %vm231, %v8756, %v8757
  %v8759 = vrot.slane %v8747, 7
  %v8760 = vsel %vm231, %v8757, %v8759
  %v8764 = vsel %vm231, 0.0, %v8756
  %v8765 = vrot.slane %v8745, 1
  %v8766 = vrot.slane %v8746, 1
  %v8767 = vsel %vm241, %v8765, %v8766
  %v8768 = vrot.slane %v8747, 1
  %v8769 = vsel %vm241, %v8766, %v8768
  %v8771 = vsel %vm231, %v8768, 0.0
  %8772 = vrot.lane.b32.xlu0 %v8745, 10
  %v8773 = vpop.permute.xlu0 %8772
  %8774 = vrot.lane.b32.xlu0 %v8746, 10
  %v8775 = vpop.permute.xlu0 %8774
  %8776 = vrot.lane.b32.xlu0 %v8747, 10
  %v8777 = vpop.permute.xlu0 %8776
  %8782 = vrot.lane.b32.xlu0 %v8767, 20
  %v8783 = vpop.permute.xlu0 %8782
  %8784 = vrot.lane.b32.xlu0 %v8769, 20
  %v8785 = vpop.permute.xlu0 %8784
  %8786 = vrot.lane.b32.xlu0 %v8771, 20
  %v8787 = vpop.permute.xlu0 %8786
  %v8791 = vsel %vm23, %v8764, %v8773
  %v8792 = vsel %vm23, %v8758, %v8775
  %v8793 = vsel %vm23, %v8760, %v8777
  %v8794 = vsel %vm271, %v8791, %v8783
  %v8795 = vsel %vm271, %v8792, %v8785
  %v8796 = vsel %vm271, %v8793, %v8787
  %v8797 = vsel %vm275, %v8794, 1.0
  %v8798 = vsel %vm275, %v8795, 1.0
  %v8799 = vsel %vm275, %v8796, 1.0
  %v8801 = vsel %vm279, %v8797, 0
  %v8804 = vsel %vm279, %v8798, 0
  %v8807 = vsel %vm279, %v8799, 0
  %v8810 = vsel %vm241, %v8752, 0
  %8812 = vmatprep.subr.mxu0 0.0
  %8813 = vmatpush1.msra.mxu0 0.0
  %8814 = vmatprep.subr.mxu0 0.0
  %8815 = vmatpush1.msra.mxu0 0.0
  %8816 = vmatprep.subr.mxu0 0.0
  %8817 = vmatpush1.msra.mxu0 0.0
  %8818 = vmatprep.subr.mxu0 0.0
  %8819 = vmatpush1.msra.mxu0 0.0
  %8820 = vmatprep.subr.mxu0 0.0
  %8821 = vmatpush1.msra.mxu0 0.0
  %8822 = vmatprep.subr.mxu0 0.0
  %8823 = vmatpush1.msra.mxu0 0.0
  %8824 = vmatprep.subr.mxu0 0.0
  %8825 = vmatpush1.msra.mxu0 0.0
  %8826 = vmatprep.subr.mxu0 0.0
  %8827 = vmatpush1.msra.mxu0 0.0
  %8828 = vmatprep.subr.mxu0 0.0
  %8829 = vmatpush1.msra.mxu0 0.0
  %8830 = vmatprep.subr.mxu0 0.0
  %8831 = vmatpush1.msra.mxu0 0.0
  %8832 = vmatprep.subr.mxu0 0.0
  %8833 = vmatpush1.msra.mxu0 0.0
  %8834 = vmatprep.subr.mxu0 0.0
  %8835 = vmatpush1.msra.mxu0 0.0
  %8836 = vmatprep.subr.mxu0 0.0
  %8837 = vmatpush1.msra.mxu0 %v8810
  %8838 = vmatprep.subr.mxu0 0.0
  %8839 = vmatpush1.msra.mxu0 %v8751
  %8840 = vmatprep.subr.mxu0 0.0
  %8841 = vmatpush1.msra.mxu0 %v8750
  %8842 = vmatprep.subr.mxu0 0.0
  %8843 = vmatpush1.msra.mxu0 %v8749
  %8844 = vmatprep.subr.mxu0 0.0
  %8845 = vmatpush2.msra.mxu0 0.0
  %8846 = vmatprep.subr.mxu0 0.0
  %8847 = vmatpush2.msra.mxu0 0.0
  %8848 = vmatprep.subr.mxu0 0.0
  %8849 = vmatpush2.msra.mxu0 0.0
  %8850 = vmatprep.subr.mxu0 0.0
  %8851 = vmatpush2.msra.mxu0 0.0
  %8852 = vmatprep.subr.mxu0 0.0
  %8853 = vmatpush2.msra.mxu0 0.0
  %8854 = vmatprep.subr.mxu0 0.0
  %8855 = vmatpush2.msra.mxu0 0.0
  %8856 = vmatprep.subr.mxu0 0.0
  %8857 = vmatpush2.msra.mxu0 0.0
  %8858 = vmatprep.subr.mxu0 0.0
  %8859 = vmatpush2.msra.mxu0 0.0
  %8860 = vmatprep.subr.mxu0 0.0
  %8861 = vmatpush2.msra.mxu0 0.0
  %8862 = vmatprep.subr.mxu0 0.0
  %8863 = vmatpush2.msra.mxu0 0.0
  %8864 = vmatprep.subr.mxu0 0.0
  %8865 = vmatpush2.msra.mxu0 0.0
  %8866 = vmatprep.subr.mxu0 0.0
  %8867 = vmatpush2.msra.mxu0 0.0
  %8868 = vmatprep.subr.mxu0 0.0
  %8869 = vmatpush2.msra.mxu0 0.0
  %8870 = vmatprep.subr.mxu0 0.0
  %8871 = vmatpush2.msra.mxu0 0.0
  %8872 = vmatprep.subr.mxu0 0.0
  %8873 = vmatpush2.msra.mxu0 0.0
  %8874 = vmatprep.subr.mxu0 0.0
  %8875 = vmatpush2.msra.mxu0 0.0
  %8876 = vmatprep.mubr.f32.mxu0 0.0
  %8877 = vmatmul.mubr.f32.gmra.mxu0 %v8801
  %v8878 = vpop.f32.mrf.mxu0
  %v8879 = vadd.f32 0.0, %v8878
  %v8880 = vpop.f32.mrf.mxu0
  %8881 = vmatprep.mubr.f32.mxu0 0.0
  %8882 = vmatmul.mubr.f32.gmra.mxu0 %v8804
  %v8883 = vpop.f32.mrf.mxu0
  %v8884 = vadd.f32 0.0, %v8883
  %v8885 = vpop.f32.mrf.mxu0
  %8886 = vmatprep.mubr.f32.mxu0 0.0
  %8887 = vmatmul.mubr.f32.gmra.mxu0 %v8807
  %v8888 = vpop.f32.mrf.mxu0
  %v8889 = vadd.f32 0.0, %v8888
  %v8890 = vpop.f32.mrf.mxu0
  %8891 = vdwg.mxu0
  %s8892 = scalar_lea.vmem %s2, 1680
  %v8893 = vld [vmem:[%s8892] sm:$0xff]
  %v8894 = vld [vmem:[%s8892 + $0x8] sm:$0xff]
  %v8895 = vld [vmem:[%s8892 + $0x10] sm:$0x3]
  %s8896 = scalar_lea.vmem %s2, 1704
  %v8897 = vld [vmem:[%s8896] sm:$0xff]
  %v8898 = vld [vmem:[%s8896 + $0x8] sm:$0xff]
  %v8899 = vld [vmem:[%s8896 + $0x10] sm:$0x3]
  %v8900 = vsel %vm23, %v8879, 0.0
  %8901 = vadd.xlane.f32.xlu0 %v8900
  %v8902 = vpop.xlane.xlu0 %8901
  %v8903 = vsel %vm23, %v8884, 0.0
  %8904 = vadd.xlane.f32.xlu0 %v8903
  %v8905 = vpop.xlane.xlu0 %8904
  %v8906 = vsel %vm127, %v8889, 0.0
  %8907 = vadd.xlane.f32.xlu0 %v8906
  %v8908 = vpop.xlane.xlu0 %8907
  %v8909 = vmul.f32 %v8879, %v8879
  %v8910 = vmul.f32 %v8884, %v8884
  %v8911 = vmul.f32 %v8889, %v8889
  %v8912 = vsel %vm23, %v8909, 0.0
  %8913 = vadd.xlane.f32.xlu0 %v8912
  %v8914 = vpop.xlane.xlu0 %8913
  %v8915 = vsel %vm23, %v8910, 0.0
  %8916 = vadd.xlane.f32.xlu0 %v8915
  %v8917 = vpop.xlane.xlu0 %8916
  %v8918 = vsel %vm127, %v8911, 0.0
  %8919 = vadd.xlane.f32.xlu0 %v8918
  %v8920 = vpop.xlane.xlu0 %8919
  %v8921 = vmul.f32 %v8902, 0.1
  %v8922 = vmul.f32 %v8905, 0.1
  %v8923 = vmul.f32 %v8908, 0.1
  %v8924 = vmul.f32 %v8914, 0.1
  %v8925 = vmul.f32 %v8917, 0.1
  %v8926 = vmul.f32 %v8920, 0.1
  %v8927 = vmul.f32 %v8921, %v8921
  %v8928 = vmul.f32 %v8922, %v8922
  %v8929 = vmul.f32 %v8923, %v8923
  %v8930 = vsub.f32 %v8924, %v8927
  %v8931 = vsub.f32 %v8925, %v8928
  %v8932 = vsub.f32 %v8926, %v8929
  %v8933 = vmax.f32 %v8930, 0.0
  %v8934 = vmax.f32 %v8931, 0.0
  %v8935 = vmax.f32 %v8932, 0.0
  %v8936 = vadd.f32 %v8933, 1e-05
  %v8937 = vadd.f32 %v8934, 1e-05
  %v8938 = vadd.f32 %v8935, 1e-05
  %v8939 = vrsqrt.pop %v8936
  %v8940 = vrsqrt.pop %v8937
  %v8941 = vrsqrt.pop %v8938
  %v8942 = vmul.f32 %v8893, %v8939
  %v8943 = vmul.f32 %v8894, %v8940
  %v8944 = vmul.f32 %v8895, %v8941
  %v8945 = vmul.f32 %v8921, %v8942
  %v8946 = vmul.f32 %v8922, %v8943
  %v8947 = vmul.f32 %v8923, %v8944
  %v8948 = vsub.f32 %v8897, %v8945
  %v8949 = vsub.f32 %v8898, %v8946
  %v8950 = vsub.f32 %v8899, %v8947
  %8952 = vset.pattern.permute.xlu0 0
  %8953 = vperm.xlu0 %8952, %v8942
  %v8954 = vpop.permute.xlu0 %8953
  %8957 = vset.pattern.permute.xlu0 0
  %8958 = vperm.xlu0 %8957, %v8943
  %v8959 = vpop.permute.xlu0 %8958
  %8962 = vset.pattern.permute.xlu0 0
  %8963 = vperm.xlu0 %8962, %v8944
  %v8964 = vpop.permute.xlu0 %8963
  %v8966 = vmul.f32 %v8879, %v8954
  %v8967 = vmul.f32 %v8884, %v8959
  %v8968 = vmul.f32 %v8889, %v8964
  %8970 = vset.pattern.permute.xlu0 0
  %8971 = vperm.xlu0 %8970, %v8948
  %v8972 = vpop.permute.xlu0 %8971
  %8975 = vset.pattern.permute.xlu0 0
  %8976 = vperm.xlu0 %8975, %v8949
  %v8977 = vpop.permute.xlu0 %8976
  %8980 = vset.pattern.permute.xlu0 0
  %8981 = vperm.xlu0 %8980, %v8950
  %v8982 = vpop.permute.xlu0 %8981
  %v8984 = vadd.f32 %v8966, %v8972
  %v8985 = vadd.f32 %v8967, %v8977
  %v8986 = vadd.f32 %v8968, %v8982
  %v8987 = vadd.f32 %v8984, %v8503
  %v8988 = vadd.f32 %v8985, %v8504
  %v8989 = vadd.f32 %v8986, %v8505
  %v8990 = vmax.f32 %v8987, 0.0
  %v8991 = vmax.f32 %v8988, 0.0
  %v8992 = vmax.f32 %v8989, 0.0
  %8994 = vrot.lane.b32.xlu0 %v17, 116
  %v8995 = vpop.permute.xlu0 %8994
  %8996 = vrot.lane.b32.xlu0 %v18, 116
  %v8997 = vpop.permute.xlu0 %8996
  %v9000 = vsel %vm23, %v8990, 0
  %v9003 = vsel %vm23, %v8991, 0
  %v9006 = vsel %vm23, %v8992, 0
  %vm9008 = vcmask 1041408
  %v9009 = vsel %vm9008, %v8997, 0
  %9011 = vmatprep.subr.mxu0 0.0
  %9012 = vmatpush1.msra.mxu0 0.0
  %9013 = vmatprep.subr.mxu0 0.0
  %9014 = vmatpush1.msra.mxu0 0.0
  %9015 = vmatprep.subr.mxu0 0.0
  %9016 = vmatpush1.msra.mxu0 0.0
  %9017 = vmatprep.subr.mxu0 0.0
  %9018 = vmatpush1.msra.mxu0 0.0
  %9019 = vmatprep.subr.mxu0 0.0
  %9020 = vmatpush1.msra.mxu0 0.0
  %9021 = vmatprep.subr.mxu0 0.0
  %9022 = vmatpush1.msra.mxu0 0.0
  %9023 = vmatprep.subr.mxu0 0.0
  %9024 = vmatpush1.msra.mxu0 0.0
  %9025 = vmatprep.subr.mxu0 0.0
  %9026 = vmatpush1.msra.mxu0 0.0
  %9027 = vmatprep.subr.mxu0 0.0
  %9028 = vmatpush1.msra.mxu0 0.0
  %9029 = vmatprep.subr.mxu0 0.0
  %9030 = vmatpush1.msra.mxu0 0.0
  %9031 = vmatprep.subr.mxu0 0.0
  %9032 = vmatpush1.msra.mxu0 0.0
  %9033 = vmatprep.subr.mxu0 0.0
  %9034 = vmatpush1.msra.mxu0 0.0
  %9035 = vmatprep.subr.mxu0 0.0
  %9036 = vmatpush1.msra.mxu0 0.0
  %9037 = vmatprep.subr.mxu0 0.0
  %9038 = vmatpush1.msra.mxu0 0.0
  %9039 = vmatprep.subr.mxu0 0.0
  %9040 = vmatpush1.msra.mxu0 %v9009
  %9041 = vmatprep.subr.mxu0 0.0
  %9042 = vmatpush1.msra.mxu0 %v8995
  %9043 = vmatprep.subr.mxu0 0.0
  %9044 = vmatpush2.msra.mxu0 0.0
  %9045 = vmatprep.subr.mxu0 0.0
  %9046 = vmatpush2.msra.mxu0 0.0
  %9047 = vmatprep.subr.mxu0 0.0
  %9048 = vmatpush2.msra.mxu0 0.0
  %9049 = vmatprep.subr.mxu0 0.0
  %9050 = vmatpush2.msra.mxu0 0.0
  %9051 = vmatprep.subr.mxu0 0.0
  %9052 = vmatpush2.msra.mxu0 0.0
  %9053 = vmatprep.subr.mxu0 0.0
  %9054 = vmatpush2.msra.mxu0 0.0
  %9055 = vmatprep.subr.mxu0 0.0
  %9056 = vmatpush2.msra.mxu0 0.0
  %9057 = vmatprep.subr.mxu0 0.0
  %9058 = vmatpush2.msra.mxu0 0.0
  %9059 = vmatprep.subr.mxu0 0.0
  %9060 = vmatpush2.msra.mxu0 0.0
  %9061 = vmatprep.subr.mxu0 0.0
  %9062 = vmatpush2.msra.mxu0 0.0
  %9063 = vmatprep.subr.mxu0 0.0
  %9064 = vmatpush2.msra.mxu0 0.0
  %9065 = vmatprep.subr.mxu0 0.0
  %9066 = vmatpush2.msra.mxu0 0.0
  %9067 = vmatprep.subr.mxu0 0.0
  %9068 = vmatpush2.msra.mxu0 0.0
  %9069 = vmatprep.subr.mxu0 0.0
  %9070 = vmatpush2.msra.mxu0 0.0
  %9071 = vmatprep.subr.mxu0 0.0
  %9072 = vmatpush2.msra.mxu0 0.0
  %9073 = vmatprep.subr.mxu0 0.0
  %9074 = vmatpush2.msra.mxu0 0.0
  %9075 = vmatprep.mubr.f32.mxu0 0.0
  %9076 = vmatmul.mubr.f32.gmra.mxu0 %v9000
  %v9077 = vpop.f32.mrf.mxu0
  %v9078 = vadd.f32 0.0, %v9077
  %v9079 = vpop.f32.mrf.mxu0
  %9080 = vmatprep.mubr.f32.mxu0 0.0
  %9081 = vmatmul.mubr.f32.gmra.mxu0 %v9003
  %v9082 = vpop.f32.mrf.mxu0
  %v9083 = vadd.f32 0.0, %v9082
  %v9084 = vpop.f32.mrf.mxu0
  %9085 = vmatprep.mubr.f32.mxu0 0.0
  %9086 = vmatmul.mubr.f32.gmra.mxu0 %v9006
  %v9087 = vpop.f32.mrf.mxu0
  %v9088 = vadd.f32 0.0, %v9087
  %v9089 = vpop.f32.mrf.mxu0
  %9090 = vdwg.mxu0
  %9091 = vrot.lane.b32.xlu0 %v17, 115
  %v9092 = vpop.permute.xlu0 %9091
  %9093 = vrot.lane.b32.xlu0 %v18, 115
  %v9094 = vpop.permute.xlu0 %9093
  %9095 = vrot.lane.b32.xlu0 %v17, 97
  %v9096 = vpop.permute.xlu0 %9095
  %9097 = vrot.lane.b32.xlu0 %v18, 97
  %v9098 = vpop.permute.xlu0 %9097
  %vm9101 = vcmask 146432
  %v9102 = vsel %vm9101, %v9092, 0
  %v9104 = vsel %vm9101, %v9094, 0
  %v9107 = vsel %vm9008, %v9088, 0
  %9109 = vmatprep.subr.mxu0 0.0
  %9110 = vmatpush1.msra.mxu0 0.0
  %9111 = vmatprep.subr.mxu0 0.0
  %9112 = vmatpush1.msra.mxu0 0.0
  %9113 = vmatprep.subr.mxu0 0.0
  %9114 = vmatpush1.msra.mxu0 0.0
  %9115 = vmatprep.subr.mxu0 0.0
  %9116 = vmatpush1.msra.mxu0 0.0
  %9117 = vmatprep.subr.mxu0 0.0
  %9118 = vmatpush1.msra.mxu0 0.0
  %9119 = vmatprep.subr.mxu0 0.0
  %9120 = vmatpush1.msra.mxu0 0.0
  %9121 = vmatprep.subr.mxu0 0.0
  %9122 = vmatpush1.msra.mxu0 0.0
  %9123 = vmatprep.subr.mxu0 0.0
  %9124 = vmatpush1.msra.mxu0 0.0
  %9125 = vmatprep.subr.mxu0 0.0
  %9126 = vmatpush1.msra.mxu0 0.0
  %9127 = vmatprep.subr.mxu0 0.0
  %9128 = vmatpush1.msra.mxu0 0.0
  %9129 = vmatprep.subr.mxu0 0.0
  %9130 = vmatpush1.msra.mxu0 0.0
  %9131 = vmatprep.subr.mxu0 0.0
  %9132 = vmatpush1.msra.mxu0 0.0
  %9133 = vmatprep.subr.mxu0 0.0
  %9134 = vmatpush1.msra.mxu0 0.0
  %9135 = vmatprep.subr.mxu0 0.0
  %9136 = vmatpush1.msra.mxu0 %v9107
  %9137 = vmatprep.subr.mxu0 0.0
  %9138 = vmatpush1.msra.mxu0 %v9083
  %9139 = vmatprep.subr.mxu0 0.0
  %9140 = vmatpush1.msra.mxu0 %v9078
  %9141 = vmatprep.subr.mxu0 0.0
  %9142 = vmatpush2.msra.mxu0 0.0
  %9143 = vmatprep.subr.mxu0 0.0
  %9144 = vmatpush2.msra.mxu0 0.0
  %9145 = vmatprep.subr.mxu0 0.0
  %9146 = vmatpush2.msra.mxu0 0.0
  %9147 = vmatprep.subr.mxu0 0.0
  %9148 = vmatpush2.msra.mxu0 0.0
  %9149 = vmatprep.subr.mxu0 0.0
  %9150 = vmatpush2.msra.mxu0 0.0
  %9151 = vmatprep.subr.mxu0 0.0
  %9152 = vmatpush2.msra.mxu0 0.0
  %9153 = vmatprep.subr.mxu0 0.0
  %9154 = vmatpush2.msra.mxu0 0.0
  %9155 = vmatprep.subr.mxu0 0.0
  %9156 = vmatpush2.msra.mxu0 0.0
  %9157 = vmatprep.subr.mxu0 0.0
  %9158 = vmatpush2.msra.mxu0 0.0
  %9159 = vmatprep.subr.mxu0 0.0
  %9160 = vmatpush2.msra.mxu0 0.0
  %9161 = vmatprep.subr.mxu0 0.0
  %9162 = vmatpush2.msra.mxu0 0.0
  %9163 = vmatprep.subr.mxu0 0.0
  %9164 = vmatpush2.msra.mxu0 0.0
  %9165 = vmatprep.subr.mxu0 0.0
  %9166 = vmatpush2.msra.mxu0 0.0
  %9167 = vmatprep.subr.mxu0 0.0
  %9168 = vmatpush2.msra.mxu0 0.0
  %9169 = vmatprep.subr.mxu0 0.0
  %9170 = vmatpush2.msra.mxu0 0.0
  %9171 = vmatprep.subr.mxu0 0.0
  %9172 = vmatpush2.msra.mxu0 0.0
  %9173 = vmatprep.mubr.f32.mxu0 0.0
  %9174 = vmatmul.mubr.f32.gmra.mxu0 %v9102
  %v9175 = vpop.f32.mrf.mxu0
  %v9176 = vadd.f32 %v9096, %v9175
  %v9177 = vpop.f32.mrf.mxu0
  %9178 = vmatprep.mubr.f32.mxu0 0.0
  %9179 = vmatmul.mubr.f32.gmra.mxu0 %v9104
  %v9180 = vpop.f32.mrf.mxu0
  %v9181 = vadd.f32 %v9098, %v9180
  %v9182 = vpop.f32.mrf.mxu0
  %9183 = vdwg.mxu0
  %vm9184 = vcmask 7168
  %9185 = vst.msk [vmem:[%s4] sm:$0xff] %vm9184, %v9176
  %vm9186 = vcmask 1024
  %9187 = vst.msk [vmem:[%s4 + $0x8] sm:$0x3] %vm9186, %v9181
  // Predicated region
  $region18: #{resnet_forward.1} parent=0 // pred_check
    _
  $region19: #{resnet_forward.1} parent=0 // pred_check_branch
    %9189 = sbr.rel (0) target = $region21
  $region20: #{resnet_forward.1} parent=0 // pred_region
    _
  $region21: #{resnet_forward.1} parent=0 // pred_fallthru
    _
  // Predicated region
  $region22: #{resnet_forward.1} parent=0 // pred_check
    _
  $region23: #{resnet_forward.1} parent=0 // pred_check_branch
    %9191 = sbr.rel (0) target = $region25
  $region24: #{resnet_forward.1} parent=0 // pred_region
    _
  $region25: #{resnet_forward.1} parent=0 // pred_fallthru
    _

</llo_original>
